<compile_context>
chip_gen: v7x
topology: tpu7x:2x2x1
jax: 0.10.0
libtpu: 0.0.40
codegen_flags: <defaults>
</compile_context>

<pallas_src>
import jax
import jax.numpy as jnp
import numpy as np
from jax.experimental import pallas as pl
from jax.experimental.pallas import tpu as pltpu

EPS = 1e-5  # BatchNorm2d default eps


# ---------------------------------------------------------------------------
# Kernel 1: MaxPool2d(2) + Conv2d(Cin->Cmid, k=3, padding=2, bias=False) + BN1 partial stats.
# One grid step == one batch sample (batch axis is "parallel").
# ---------------------------------------------------------------------------
def pool_conv1_kernel(x_ref, w1_ref, y1_ref, stat1_ref, pad_ref):
    Hh, _, Wh, two_cin = x_ref.shape
    cin = two_cin // 2
    H1, W1 = Hh + 2, Wh + 2

    # MaxPool2d(2): the 2x2 window was pre-split into axis 1 (row pair) and channel halves.
    xv = x_ref[...]                                            # (Hh, 2, Wh, 2*Cin)
    r0 = jnp.maximum(xv[:, 0, :, :cin], xv[:, 0, :, cin:])
    r1 = jnp.maximum(xv[:, 1, :, :cin], xv[:, 1, :, cin:])
    pooled = jnp.maximum(r0, r1)                               # (Hh, Wh, Cin) f32

    # Zero-padded conv1 input (padding=2): one full-width zero fill + one interior write.
    pad_ref[...] = jnp.zeros_like(pad_ref)
    pad_ref[2:2 + Hh, 2:2 + Wh, :] = pooled

    # Conv1: nine shifted bf16 MXU matmuls accumulated in-place into the f32 output block
    # (no im2col scratch, accumulator lives in VMEM not vregs).
    for p in range(9):
        ky, kx = divmod(p, 3)
        win = pad_ref[ky:ky + H1, kx:kx + W1, :].reshape(H1 * W1, cin).astype(jnp.bfloat16)
        part = jnp.dot(win, w1_ref[p], preferred_element_type=jnp.float32)
        if p == 0:
            y1_ref[...] = part
        else:
            y1_ref[...] += part

    # Per-sample BatchNorm partials (sum / sum-of-squares), reduced across the batch in glue.
    a = y1_ref[...]
    stat1_ref[0:1, :] = jnp.sum(a, axis=0, keepdims=True)
    stat1_ref[1:2, :] = jnp.sum(a * a, axis=0, keepdims=True)


# ---------------------------------------------------------------------------
# Kernel 2: BatchNorm1 (precomputed scale/shift) + ReLU + Conv2d(Cmid->Cout, k=3) + BN2 partials.
# ---------------------------------------------------------------------------
def bn1_conv2_kernel(y1_ref, sc1_ref, sh1_ref, w2_ref, y2_ref, stat2_ref, mid_ref):
    H1, W1, cmid = y1_ref.shape
    Hh, Wh = H1 - 2, W1 - 2

    # Fused BatchNorm1 + ReLU (global batch statistics folded into scale/shift in glue).
    mid_ref[...] = jnp.maximum(y1_ref[...] * sc1_ref[...] + sh1_ref[...], 0.0)

    # Conv2 (VALID): nine shifted bf16 matmuls accumulated into the f32 output block.
    # conv2's bias is skipped: the train-mode BatchNorm that follows cancels it exactly.
    for p in range(9):
        ky, kx = divmod(p, 3)
        win = mid_ref[ky:ky + Hh, kx:kx + Wh, :].reshape(Hh * Wh, cmid).astype(jnp.bfloat16)
        part = jnp.dot(win, w2_ref[p], preferred_element_type=jnp.float32)
        if p == 0:
            y2_ref[...] = part
        else:
            y2_ref[...] += part

    a = y2_ref[...]
    stat2_ref[0:1, :] = jnp.sum(a, axis=0, keepdims=True)
    stat2_ref[1:2, :] = jnp.sum(a * a, axis=0, keepdims=True)


# ---------------------------------------------------------------------------
# Kernel 3: BatchNorm2 + ReLU in a lane-fused (Hh, Wh*Cout) layout (lane-dense stores).
# ---------------------------------------------------------------------------
def bn2_relu_kernel(y2_ref, sc2_ref, sh2_ref, out_ref):
    out_ref[...] = jnp.maximum(y2_ref[...] * sc2_ref[...] + sh2_ref[...], 0.0)


def _padded_vmem_bytes(shape, dtype):
    """Per-buffer VMEM footprint: last dim padded to 128 lanes, 2nd-last to 8 sublanes."""
    shape = list(shape)
    if len(shape) == 1:
        shape = [1] + shape
    shape[-1] = -(-shape[-1] // 128) * 128
    shape[-2] = -(-shape[-2] // 8) * 8
    n = 1
    for s in shape:
        n *= s
    return n * np.dtype(dtype).itemsize


def _vmem_limit(block_descrs, scratch_descrs=()):
    """2x double-buffered blocks + scratch + 50% relayout headroom, capped per TPU generation."""
    need = 2 * sum(_padded_vmem_bytes(s, d) for s, d in block_descrs)
    need += sum(_padded_vmem_bytes(s, d) for s, d in scratch_descrs)
    need = (3 * need) // 2
    try:
        cap = int(pltpu.get_tpu_info().vmem_capacity_bytes) * 3 // 4
    except Exception:
        cap = 48 * 2**20  # conservative fallback: fits v7x's 64 MiB per-core VMEM
    return int(min(cap, max(32 * 2**20, need)))


def down_pallas(x_nchw, params):
    """Down.forward: NCHW in -> NCHW out, shape (N, Cout, H//2, W//2). Train-mode BatchNorm."""
    w1, g1, b1, w2, bias2, g2, b2 = params
    del bias2  # exactly cancelled by the train-mode BatchNorm that follows conv2
    N, Cin, H, W = x_nchw.shape
    Hh, Wh = H // 2, W // 2
    Cmid, Cout = w1.shape[-1], w2.shape[-1]
    H1, W1 = Hh + 2, Wh + 2            # conv1 output grid (k=3, padding=2)
    M1, M2 = N * H1 * W1, N * Hh * Wh  # BN1 / BN2 populations

    # glue: NCHW -> NHWC, 2x2 pooling windows split into (row-pair axis, channel halves).
    x5 = jnp.transpose(x_nchw, (0, 2, 3, 1)).reshape(N, Hh, 2, Wh, 2 * Cin)
    # HWIO conv weights -> (tap, Cin, Cout), bf16 MXU operands.
    w1_k = w1.reshape(9, Cin, Cmid).astype(jnp.bfloat16)
    w2_k = w2.reshape(9, Cmid, Cout).astype(jnp.bfloat16)

    # ---- pass 1: maxpool + conv1 + BN1 partial sums, gridded over the batch ----
    vlim1 = _vmem_limit(
        block_descrs=[((Hh, 2, Wh, 2 * Cin), jnp.float32),
                      ((9, Cin, Cmid), jnp.bfloat16),
                      ((H1 * W1, Cmid), jnp.float32),
                      ((2, Cmid), jnp.float32)],
        scratch_descrs=[((Hh + 4, Wh + 4, Cin), jnp.float32)])
    y1, stat1 = pl.pallas_call(
        pool_conv1_kernel,
        grid=(N,),
        in_specs=[
            pl.BlockSpec((None, Hh, 2, Wh, 2 * Cin), lambda n: (n, 0, 0, 0, 0)),
            pl.BlockSpec((9, Cin, Cmid), lambda n: (0, 0, 0)),
        ],
        out_specs=[
            pl.BlockSpec((None, H1 * W1, Cmid), lambda n: (n, 0, 0)),
            pl.BlockSpec((None, 2, Cmid), lambda n: (n, 0, 0)),
        ],
        out_shape=[
            jax.ShapeDtypeStruct((N, H1 * W1, Cmid), jnp.float32),
            jax.ShapeDtypeStruct((N, 2, Cmid), jnp.float32),
        ],
        scratch_shapes=[pltpu.VMEM((Hh + 4, Wh + 4, Cin), jnp.float32)],
        compiler_params=pltpu.CompilerParams(dimension_semantics=("parallel",),
                                             vmem_limit_bytes=vlim1),
    )(x5, w1_k)

    # ---- BN1 global stats (O(C) XLA glue) -> fused scale/shift ----
    s1, q1 = jnp.sum(stat1[:, 0, :], axis=0), jnp.sum(stat1[:, 1, :], axis=0)
    mean1 = s1 / M1
    var1 = jnp.maximum(q1 / M1 - mean1 * mean1, 0.0)
    scale1 = g1 * jax.lax.rsqrt(var1 + EPS)
    shift1 = b1 - mean1 * scale1

    # ---- pass 2: BN1+ReLU + conv2 + BN2 partial sums, gridded over the batch ----
    y1_4d = y1.reshape(N, H1, W1, Cmid)  # HBM-level relayout handled by XLA
    vlim2 = _vmem_limit(
        block_descrs=[((H1, W1, Cmid), jnp.float32),
                      ((1, 1, Cmid), jnp.float32), ((1, 1, Cmid), jnp.float32),
                      ((9, Cmid, Cout), jnp.bfloat16),
                      ((Hh * Wh, Cout), jnp.float32),
                      ((2, Cout), jnp.float32)],
        scratch_descrs=[((H1, W1, Cmid), jnp.float32)])
    y2, stat2 = pl.pallas_call(
        bn1_conv2_kernel,
        grid=(N,),
        in_specs=[
            pl.BlockSpec((None, H1, W1, Cmid), lambda n: (n, 0, 0, 0)),
            pl.BlockSpec((1, 1, Cmid), lambda n: (0, 0, 0)),
            pl.BlockSpec((1, 1, Cmid), lambda n: (0, 0, 0)),
            pl.BlockSpec((9, Cmid, Cout), lambda n: (0, 0, 0)),
        ],
        out_specs=[
            pl.BlockSpec((None, Hh * Wh, Cout), lambda n: (n, 0, 0)),
            pl.BlockSpec((None, 2, Cout), lambda n: (n, 0, 0)),
        ],
        out_shape=[
            jax.ShapeDtypeStruct((N, Hh * Wh, Cout), jnp.float32),
            jax.ShapeDtypeStruct((N, 2, Cout), jnp.float32),
        ],
        scratch_shapes=[pltpu.VMEM((H1, W1, Cmid), jnp.float32)],
        compiler_params=pltpu.CompilerParams(dimension_semantics=("parallel",),
                                             vmem_limit_bytes=vlim2),
    )(y1_4d, scale1.reshape(1, 1, Cmid), shift1.reshape(1, 1, Cmid), w2_k)

    # ---- BN2 global stats (O(C) glue) -> scale/shift, tiled for the lane-fused layout ----
    s2, q2 = jnp.sum(stat2[:, 0, :], axis=0), jnp.sum(stat2[:, 1, :], axis=0)
    mean2 = s2 / M2
    var2 = jnp.maximum(q2 / M2 - mean2 * mean2, 0.0)
    scale2 = g2 * jax.lax.rsqrt(var2 + EPS)
    shift2 = b2 - mean2 * scale2
    sc2t = jnp.tile(scale2[None, None, :], (1, Wh, 1)).reshape(1, Wh * Cout)
    sh2t = jnp.tile(shift2[None, None, :], (1, Wh, 1)).reshape(1, Wh * Cout)

    # ---- pass 3: BN2 + ReLU in a lane-fused (Hh, Wh*Cout) layout ----
    y2_f = y2.reshape(N, Hh, Wh * Cout)
    vlim3 = _vmem_limit(
        block_descrs=[((Hh, Wh * Cout), jnp.float32),
                      ((1, Wh * Cout), jnp.float32), ((1, Wh * Cout), jnp.float32),
                      ((Hh, Wh * Cout), jnp.float32)])
    out_f = pl.pallas_call(
        bn2_relu_kernel,
        grid=(N,),
        in_specs=[
            pl.BlockSpec((None, Hh, Wh * Cout), lambda n: (n, 0, 0)),
            pl.BlockSpec((1, Wh * Cout), lambda n: (0, 0)),
            pl.BlockSpec((1, Wh * Cout), lambda n: (0, 0)),
        ],
        out_specs=pl.BlockSpec((None, Hh, Wh * Cout), lambda n: (n, 0, 0)),
        out_shape=jax.ShapeDtypeStruct((N, Hh, Wh * Cout), jnp.float32),
        compiler_params=pltpu.CompilerParams(dimension_semantics=("parallel",),
                                             vmem_limit_bytes=vlim3),
    )(y2_f, sc2t, sh2t)

    return jnp.transpose(out_f.reshape(N, Hh, Wh, Cout), (0, 3, 1, 2))


def down_reference(x_nchw, params):
    """Pure-JAX fp32 reference matching torch semantics (train-mode BatchNorm)."""
    w1, g1, b1, w2, bias2, g2, b2 = params
    N, C, H, W = x_nchw.shape
    x = jnp.transpose(x_nchw, (0, 2, 3, 1))
    pooled = jnp.max(x.reshape(N, H // 2, 2, W // 2, 2, C), axis=(2, 4))
    dn = ('NHWC', 'HWIO', 'NHWC')
    y = jax.lax.conv_general_dilated(pooled, w1, (1, 1), ((2, 2), (2, 2)),
                                     dimension_numbers=dn,
                                     precision=jax.lax.Precision.HIGHEST)
    m = jnp.mean(y, axis=(0, 1, 2))
    v = jnp.mean((y - m) ** 2, axis=(0, 1, 2))
    y = jnp.maximum((y - m) * jax.lax.rsqrt(v + EPS) * g1 + b1, 0.0)
    y2 = jax.lax.conv_general_dilated(y, w2, (1, 1), 'VALID',
                                      dimension_numbers=dn,
                                      precision=jax.lax.Precision.HIGHEST) + bias2
    m2 = jnp.mean(y2, axis=(0, 1, 2))
    v2 = jnp.mean((y2 - m2) ** 2, axis=(0, 1, 2))
    y2 = jnp.maximum((y2 - m2) * jax.lax.rsqrt(v2 + EPS) * g2 + b2, 0.0)
    return jnp.transpose(y2, (0, 3, 1, 2))


if __name__ == "__main__":
    # Down(in_channels=4, out_channels=8); DoubleConv mid_channels defaults to out_channels.
    N, Cin, H, W = 2, 4, 16, 16
    Cmid = Cout = 8

    key = jax.random.PRNGKey(0)
    kxk, k1, k2, k3, k4, k5, k6, k7 = jax.random.split(key, 8)
    x = jax.random.normal(kxk, (N, Cin, H, W), jnp.float32)
    # deterministic synthetic parameters (HWIO conv weights)
    w1 = 0.2 * jax.random.normal(k1, (3, 3, Cin, Cmid), jnp.float32)   # conv1, bias=False
    g1 = 1.0 + 0.1 * jax.random.normal(k2, (Cmid,), jnp.float32)       # BN1 gamma
    b1 = 0.1 * jax.random.normal(k3, (Cmid,), jnp.float32)             # BN1 beta
    w2 = 0.2 * jax.random.normal(k4, (3, 3, Cmid, Cout), jnp.float32)  # conv2
    bias2 = 0.1 * jax.random.normal(k5, (Cout,), jnp.float32)          # conv2 bias (cancelled by BN2)
    g2 = 1.0 + 0.1 * jax.random.normal(k6, (Cout,), jnp.float32)       # BN2 gamma
    b2 = 0.1 * jax.random.normal(k7, (Cout,), jnp.float32)             # BN2 beta
    params = (w1, g1, b1, w2, bias2, g2, b2)

    out = jax.block_until_ready(jax.jit(down_pallas)(x, params))
    ref = jax.block_until_ready(down_reference(x, params))

    assert out.shape == (N, Cout, H // 2, W // 2), out.shape
    # Tolerance reflects bf16 MXU operands in the kernels vs the fp32 HIGHEST-precision reference.
    np.testing.assert_allclose(np.asarray(out), np.asarray(ref), rtol=5e-2, atol=5e-2)
    print("KERNEL_OK")
</pallas_src>

<mosaic_0001>
module attributes {stable_mosaic.version = 11 : i64} {
  func.func @pool_conv1_kernel(%arg0: i32, %arg1: memref<1x8x2x8x8xf32, #tpu.memory_space<vmem>>, %arg2: memref<9x4x8xbf16, #tpu.memory_space<vmem>>, %arg3: memref<1x100x8xf32, #tpu.memory_space<vmem>>, %arg4: memref<1x2x8xf32, #tpu.memory_space<vmem>>, %arg5: memref<12x12x4xf32, #tpu.memory_space<vmem>>) attributes {dimension_semantics = [#tpu.dimension_semantics<parallel>], iteration_bounds = array<i64: 2>, scalar_prefetch = 0 : i64, scratch_operands = 1 : i64, tpu.core_type = #tpu.core_type<tc>, window_params = [{transform_indices = @transform_0, window_bounds = array<i64: 1, 8, 2, 8, 8>}, {pipeline_mode = #tpu.pipeline_mode<synchronous>, transform_indices = @transform_1, window_bounds = array<i64: 9, 4, 8>}, {transform_indices = @transform_2, window_bounds = array<i64: 1, 100, 8>}, {transform_indices = @transform_3, window_bounds = array<i64: 1, 2, 8>}]} {
    %c0 = arith.constant 0 : index
    %c0_0 = arith.constant 0 : index
    %c0_1 = arith.constant 0 : index
    %c0_2 = arith.constant 0 : index
    %c0_3 = arith.constant 0 : index
    %0 = vector.load %arg1[%c0, %c0_0, %c0_1, %c0_2, %c0_3] : memref<1x8x2x8x8xf32, #tpu.memory_space<vmem>>, vector<1x8x2x8x8xf32>
    %1 = vector.shape_cast %0 : vector<1x8x2x8x8xf32> to vector<8x2x8x8xf32>
    %2 = vector.extract_strided_slice %1 {offsets = [0, 0, 0, 0], sizes = [8, 1, 8, 4], strides = [1, 1, 1, 1]} : vector<8x2x8x8xf32> to vector<8x1x8x4xf32>
    %3 = vector.shape_cast %2 : vector<8x1x8x4xf32> to vector<8x8x4xf32>
    %4 = vector.extract_strided_slice %1 {offsets = [0, 0, 0, 4], sizes = [8, 1, 8, 4], strides = [1, 1, 1, 1]} : vector<8x2x8x8xf32> to vector<8x1x8x4xf32>
    %5 = vector.shape_cast %4 : vector<8x1x8x4xf32> to vector<8x8x4xf32>
    %6 = arith.maximumf %3, %5 : vector<8x8x4xf32>
    %7 = vector.extract_strided_slice %1 {offsets = [0, 1, 0, 0], sizes = [8, 1, 8, 4], strides = [1, 1, 1, 1]} : vector<8x2x8x8xf32> to vector<8x1x8x4xf32>
    %8 = vector.shape_cast %7 : vector<8x1x8x4xf32> to vector<8x8x4xf32>
    %9 = vector.extract_strided_slice %1 {offsets = [0, 1, 0, 4], sizes = [8, 1, 8, 4], strides = [1, 1, 1, 1]} : vector<8x2x8x8xf32> to vector<8x1x8x4xf32>
    %10 = vector.shape_cast %9 : vector<8x1x8x4xf32> to vector<8x8x4xf32>
    %11 = arith.maximumf %8, %10 : vector<8x8x4xf32>
    %12 = arith.maximumf %6, %11 : vector<8x8x4xf32>
    %cst = arith.constant 0.000000e+00 : f32
    %13 = vector.broadcast %cst : f32 to vector<12x12x4xf32>
    %c0_4 = arith.constant 0 : index
    %c0_5 = arith.constant 0 : index
    %c0_6 = arith.constant 0 : index
    %14 = vector.load %arg5[%c0_4, %c0_5, %c0_6] : memref<12x12x4xf32, #tpu.memory_space<vmem>>, vector<12x12x4xf32>
    tpu.vector_store %arg5[%c0_4, %c0_5, %c0_6], %13 {strides = array<i32>} : memref<12x12x4xf32, #tpu.memory_space<vmem>>, vector<12x12x4xf32>,
    %c2 = arith.constant 2 : index
    %c2_7 = arith.constant 2 : index
    %c0_8 = arith.constant 0 : index
    %15 = vector.load %arg5[%c2, %c2_7, %c0_8] : memref<12x12x4xf32, #tpu.memory_space<vmem>>, vector<8x8x4xf32>
    tpu.vector_store %arg5[%c2, %c2_7, %c0_8], %12 {strides = array<i32>} : memref<12x12x4xf32, #tpu.memory_space<vmem>>, vector<8x8x4xf32>,
    %c0_9 = arith.constant 0 : index
    %c0_10 = arith.constant 0 : index
    %c0_11 = arith.constant 0 : index
    %16 = vector.load %arg5[%c0_9, %c0_10, %c0_11] : memref<12x12x4xf32, #tpu.memory_space<vmem>>, vector<10x10x4xf32>
    %17 = vector.shape_cast %16 : vector<10x10x4xf32> to vector<100x4xf32>
    %18 = arith.truncf %17 : vector<100x4xf32> to vector<100x4xbf16>
    %c0_12 = arith.constant 0 : index
    %c0_13 = arith.constant 0 : index
    %c0_14 = arith.constant 0 : index
    %19 = vector.load %arg2[%c0_12, %c0_13, %c0_14] : memref<9x4x8xbf16, #tpu.memory_space<vmem>>, vector<1x4x8xbf16>
    %20 = vector.shape_cast %19 : vector<1x4x8xbf16> to vector<4x8xbf16>
    %cst_15 = arith.constant dense<0.000000e+00> : vector<100x8xf32>
    %21 = tpu.matmul %18, %20, %cst_15 {dimension_numbers = #tpu.dot_dimension_numbers<[1], [0], [0], [1], [0, 0, 1, 1], [], []>} : vector<100x4xbf16>, vector<4x8xbf16>, vector<100x8xf32> -> vector<100x8xf32>
    %c0_16 = arith.constant 0 : index
    %c0_17 = arith.constant 0 : index
    %c0_18 = arith.constant 0 : index
    %22 = vector.load %arg3[%c0_16, %c0_17, %c0_18] : memref<1x100x8xf32, #tpu.memory_space<vmem>>, vector<1x100x8xf32>
    %23 = vector.shape_cast %22 : vector<1x100x8xf32> to vector<100x8xf32>
    %24 = vector.shape_cast %21 : vector<100x8xf32> to vector<1x100x8xf32>
    tpu.vector_store %arg3[%c0_16, %c0_17, %c0_18], %24 {strides = array<i32>} : memref<1x100x8xf32, #tpu.memory_space<vmem>>, vector<1x100x8xf32>,
    %c0_19 = arith.constant 0 : index
    %c1 = arith.constant 1 : index
    %c0_20 = arith.constant 0 : index
    %25 = vector.load %arg5[%c0_19, %c1, %c0_20] : memref<12x12x4xf32, #tpu.memory_space<vmem>>, vector<10x10x4xf32>
    %26 = vector.shape_cast %25 : vector<10x10x4xf32> to vector<100x4xf32>
    %27 = arith.truncf %26 : vector<100x4xf32> to vector<100x4xbf16>
    %c1_21 = arith.constant 1 : index
    %c0_22 = arith.constant 0 : index
    %c0_23 = arith.constant 0 : index
    %28 = vector.load %arg2[%c1_21, %c0_22, %c0_23] : memref<9x4x8xbf16, #tpu.memory_space<vmem>>, vector<1x4x8xbf16>
    %29 = vector.shape_cast %28 : vector<1x4x8xbf16> to vector<4x8xbf16>
    %cst_24 = arith.constant dense<0.000000e+00> : vector<100x8xf32>
    %30 = tpu.matmul %27, %29, %cst_24 {dimension_numbers = #tpu.dot_dimension_numbers<[1], [0], [0], [1], [0, 0, 1, 1], [], []>} : vector<100x4xbf16>, vector<4x8xbf16>, vector<100x8xf32> -> vector<100x8xf32>
    %c0_25 = arith.constant 0 : index
    %c0_26 = arith.constant 0 : index
    %c0_27 = arith.constant 0 : index
    %31 = vector.load %arg3[%c0_25, %c0_26, %c0_27] : memref<1x100x8xf32, #tpu.memory_space<vmem>>, vector<1x100x8xf32>
    %32 = vector.shape_cast %31 : vector<1x100x8xf32> to vector<100x8xf32>
    %33 = arith.addf %32, %30 : vector<100x8xf32>
    %c0_28 = arith.constant 0 : index
    %c0_29 = arith.constant 0 : index
    %c0_30 = arith.constant 0 : index
    %34 = vector.load %arg3[%c0_28, %c0_29, %c0_30] : memref<1x100x8xf32, #tpu.memory_space<vmem>>, vector<1x100x8xf32>
    %35 = vector.shape_cast %34 : vector<1x100x8xf32> to vector<100x8xf32>
    %36 = vector.shape_cast %33 : vector<100x8xf32> to vector<1x100x8xf32>
    tpu.vector_store %arg3[%c0_28, %c0_29, %c0_30], %36 {strides = array<i32>} : memref<1x100x8xf32, #tpu.memory_space<vmem>>, vector<1x100x8xf32>,
    %c0_31 = arith.constant 0 : index
    %c2_32 = arith.constant 2 : index
    %c0_33 = arith.constant 0 : index
    %37 = vector.load %arg5[%c0_31, %c2_32, %c0_33] : memref<12x12x4xf32, #tpu.memory_space<vmem>>, vector<10x10x4xf32>
    %38 = vector.shape_cast %37 : vector<10x10x4xf32> to vector<100x4xf32>
    %39 = arith.truncf %38 : vector<100x4xf32> to vector<100x4xbf16>
    %c2_34 = arith.constant 2 : index
    %c0_35 = arith.constant 0 : index
    %c0_36 = arith.constant 0 : index
    %40 = vector.load %arg2[%c2_34, %c0_35, %c0_36] : memref<9x4x8xbf16, #tpu.memory_space<vmem>>, vector<1x4x8xbf16>
    %41 = vector.shape_cast %40 : vector<1x4x8xbf16> to vector<4x8xbf16>
    %cst_37 = arith.constant dense<0.000000e+00> : vector<100x8xf32>
    %42 = tpu.matmul %39, %41, %cst_37 {dimension_numbers = #tpu.dot_dimension_numbers<[1], [0], [0], [1], [0, 0, 1, 1], [], []>} : vector<100x4xbf16>, vector<4x8xbf16>, vector<100x8xf32> -> vector<100x8xf32>
    %c0_38 = arith.constant 0 : index
    %c0_39 = arith.constant 0 : index
    %c0_40 = arith.constant 0 : index
    %43 = vector.load %arg3[%c0_38, %c0_39, %c0_40] : memref<1x100x8xf32, #tpu.memory_space<vmem>>, vector<1x100x8xf32>
    %44 = vector.shape_cast %43 : vector<1x100x8xf32> to vector<100x8xf32>
    %45 = arith.addf %44, %42 : vector<100x8xf32>
    %c0_41 = arith.constant 0 : index
    %c0_42 = arith.constant 0 : index
    %c0_43 = arith.constant 0 : index
    %46 = vector.load %arg3[%c0_41, %c0_42, %c0_43] : memref<1x100x8xf32, #tpu.memory_space<vmem>>, vector<1x100x8xf32>
    %47 = vector.shape_cast %46 : vector<1x100x8xf32> to vector<100x8xf32>
    %48 = vector.shape_cast %45 : vector<100x8xf32> to vector<1x100x8xf32>
    tpu.vector_store %arg3[%c0_41, %c0_42, %c0_43], %48 {strides = array<i32>} : memref<1x100x8xf32, #tpu.memory_space<vmem>>, vector<1x100x8xf32>,
    %c1_44 = arith.constant 1 : index
    %c0_45 = arith.constant 0 : index
    %c0_46 = arith.constant 0 : index
    %49 = vector.load %arg5[%c1_44, %c0_45, %c0_46] : memref<12x12x4xf32, #tpu.memory_space<vmem>>, vector<10x10x4xf32>
    %50 = vector.shape_cast %49 : vector<10x10x4xf32> to vector<100x4xf32>
    %51 = arith.truncf %50 : vector<100x4xf32> to vector<100x4xbf16>
    %c3 = arith.constant 3 : index
    %c0_47 = arith.constant 0 : index
    %c0_48 = arith.constant 0 : index
    %52 = vector.load %arg2[%c3, %c0_47, %c0_48] : memref<9x4x8xbf16, #tpu.memory_space<vmem>>, vector<1x4x8xbf16>
    %53 = vector.shape_cast %52 : vector<1x4x8xbf16> to vector<4x8xbf16>
    %cst_49 = arith.constant dense<0.000000e+00> : vector<100x8xf32>
    %54 = tpu.matmul %51, %53, %cst_49 {dimension_numbers = #tpu.dot_dimension_numbers<[1], [0], [0], [1], [0, 0, 1, 1], [], []>} : vector<100x4xbf16>, vector<4x8xbf16>, vector<100x8xf32> -> vector<100x8xf32>
    %c0_50 = arith.constant 0 : index
    %c0_51 = arith.constant 0 : index
    %c0_52 = arith.constant 0 : index
    %55 = vector.load %arg3[%c0_50, %c0_51, %c0_52] : memref<1x100x8xf32, #tpu.memory_space<vmem>>, vector<1x100x8xf32>
    %56 = vector.shape_cast %55 : vector<1x100x8xf32> to vector<100x8xf32>
    %57 = arith.addf %56, %54 : vector<100x8xf32>
    %c0_53 = arith.constant 0 : index
    %c0_54 = arith.constant 0 : index
    %c0_55 = arith.constant 0 : index
    %58 = vector.load %arg3[%c0_53, %c0_54, %c0_55] : memref<1x100x8xf32, #tpu.memory_space<vmem>>, vector<1x100x8xf32>
    %59 = vector.shape_cast %58 : vector<1x100x8xf32> to vector<100x8xf32>
    %60 = vector.shape_cast %57 : vector<100x8xf32> to vector<1x100x8xf32>
    tpu.vector_store %arg3[%c0_53, %c0_54, %c0_55], %60 {strides = array<i32>} : memref<1x100x8xf32, #tpu.memory_space<vmem>>, vector<1x100x8xf32>,
    %c1_56 = arith.constant 1 : index
    %c1_57 = arith.constant 1 : index
    %c0_58 = arith.constant 0 : index
    %61 = vector.load %arg5[%c1_56, %c1_57, %c0_58] : memref<12x12x4xf32, #tpu.memory_space<vmem>>, vector<10x10x4xf32>
    %62 = vector.shape_cast %61 : vector<10x10x4xf32> to vector<100x4xf32>
    %63 = arith.truncf %62 : vector<100x4xf32> to vector<100x4xbf16>
    %c4 = arith.constant 4 : index
    %c0_59 = arith.constant 0 : index
    %c0_60 = arith.constant 0 : index
    %64 = vector.load %arg2[%c4, %c0_59, %c0_60] : memref<9x4x8xbf16, #tpu.memory_space<vmem>>, vector<1x4x8xbf16>
    %65 = vector.shape_cast %64 : vector<1x4x8xbf16> to vector<4x8xbf16>
    %cst_61 = arith.constant dense<0.000000e+00> : vector<100x8xf32>
    %66 = tpu.matmul %63, %65, %cst_61 {dimension_numbers = #tpu.dot_dimension_numbers<[1], [0], [0], [1], [0, 0, 1, 1], [], []>} : vector<100x4xbf16>, vector<4x8xbf16>, vector<100x8xf32> -> vector<100x8xf32>
    %c0_62 = arith.constant 0 : index
    %c0_63 = arith.constant 0 : index
    %c0_64 = arith.constant 0 : index
    %67 = vector.load %arg3[%c0_62, %c0_63, %c0_64] : memref<1x100x8xf32, #tpu.memory_space<vmem>>, vector<1x100x8xf32>
    %68 = vector.shape_cast %67 : vector<1x100x8xf32> to vector<100x8xf32>
    %69 = arith.addf %68, %66 : vector<100x8xf32>
    %c0_65 = arith.constant 0 : index
    %c0_66 = arith.constant 0 : index
    %c0_67 = arith.constant 0 : index
    %70 = vector.load %arg3[%c0_65, %c0_66, %c0_67] : memref<1x100x8xf32, #tpu.memory_space<vmem>>, vector<1x100x8xf32>
    %71 = vector.shape_cast %70 : vector<1x100x8xf32> to vector<100x8xf32>
    %72 = vector.shape_cast %69 : vector<100x8xf32> to vector<1x100x8xf32>
    tpu.vector_store %arg3[%c0_65, %c0_66, %c0_67], %72 {strides = array<i32>} : memref<1x100x8xf32, #tpu.memory_space<vmem>>, vector<1x100x8xf32>,
    %c1_68 = arith.constant 1 : index
    %c2_69 = arith.constant 2 : index
    %c0_70 = arith.constant 0 : index
    %73 = vector.load %arg5[%c1_68, %c2_69, %c0_70] : memref<12x12x4xf32, #tpu.memory_space<vmem>>, vector<10x10x4xf32>
    %74 = vector.shape_cast %73 : vector<10x10x4xf32> to vector<100x4xf32>
    %75 = arith.truncf %74 : vector<100x4xf32> to vector<100x4xbf16>
    %c5 = arith.constant 5 : index
    %c0_71 = arith.constant 0 : index
    %c0_72 = arith.constant 0 : index
    %76 = vector.load %arg2[%c5, %c0_71, %c0_72] : memref<9x4x8xbf16, #tpu.memory_space<vmem>>, vector<1x4x8xbf16>
    %77 = vector.shape_cast %76 : vector<1x4x8xbf16> to vector<4x8xbf16>
    %cst_73 = arith.constant dense<0.000000e+00> : vector<100x8xf32>
    %78 = tpu.matmul %75, %77, %cst_73 {dimension_numbers = #tpu.dot_dimension_numbers<[1], [0], [0], [1], [0, 0, 1, 1], [], []>} : vector<100x4xbf16>, vector<4x8xbf16>, vector<100x8xf32> -> vector<100x8xf32>
    %c0_74 = arith.constant 0 : index
    %c0_75 = arith.constant 0 : index
    %c0_76 = arith.constant 0 : index
    %79 = vector.load %arg3[%c0_74, %c0_75, %c0_76] : memref<1x100x8xf32, #tpu.memory_space<vmem>>, vector<1x100x8xf32>
    %80 = vector.shape_cast %79 : vector<1x100x8xf32> to vector<100x8xf32>
    %81 = arith.addf %80, %78 : vector<100x8xf32>
    %c0_77 = arith.constant 0 : index
    %c0_78 = arith.constant 0 : index
    %c0_79 = arith.constant 0 : index
    %82 = vector.load %arg3[%c0_77, %c0_78, %c0_79] : memref<1x100x8xf32, #tpu.memory_space<vmem>>, vector<1x100x8xf32>
    %83 = vector.shape_cast %82 : vector<1x100x8xf32> to vector<100x8xf32>
    %84 = vector.shape_cast %81 : vector<100x8xf32> to vector<1x100x8xf32>
    tpu.vector_store %arg3[%c0_77, %c0_78, %c0_79], %84 {strides = array<i32>} : memref<1x100x8xf32, #tpu.memory_space<vmem>>, vector<1x100x8xf32>,
    %c2_80 = arith.constant 2 : index
    %c0_81 = arith.constant 0 : index
    %c0_82 = arith.constant 0 : index
    %85 = vector.load %arg5[%c2_80, %c0_81, %c0_82] : memref<12x12x4xf32, #tpu.memory_space<vmem>>, vector<10x10x4xf32>
    %86 = vector.shape_cast %85 : vector<10x10x4xf32> to vector<100x4xf32>
    %87 = arith.truncf %86 : vector<100x4xf32> to vector<100x4xbf16>
    %c6 = arith.constant 6 : index
    %c0_83 = arith.constant 0 : index
    %c0_84 = arith.constant 0 : index
    %88 = vector.load %arg2[%c6, %c0_83, %c0_84] : memref<9x4x8xbf16, #tpu.memory_space<vmem>>, vector<1x4x8xbf16>
    %89 = vector.shape_cast %88 : vector<1x4x8xbf16> to vector<4x8xbf16>
    %cst_85 = arith.constant dense<0.000000e+00> : vector<100x8xf32>
    %90 = tpu.matmul %87, %89, %cst_85 {dimension_numbers = #tpu.dot_dimension_numbers<[1], [0], [0], [1], [0, 0, 1, 1], [], []>} : vector<100x4xbf16>, vector<4x8xbf16>, vector<100x8xf32> -> vector<100x8xf32>
    %c0_86 = arith.constant 0 : index
    %c0_87 = arith.constant 0 : index
    %c0_88 = arith.constant 0 : index
    %91 = vector.load %arg3[%c0_86, %c0_87, %c0_88] : memref<1x100x8xf32, #tpu.memory_space<vmem>>, vector<1x100x8xf32>
    %92 = vector.shape_cast %91 : vector<1x100x8xf32> to vector<100x8xf32>
    %93 = arith.addf %92, %90 : vector<100x8xf32>
    %c0_89 = arith.constant 0 : index
    %c0_90 = arith.constant 0 : index
    %c0_91 = arith.constant 0 : index
    %94 = vector.load %arg3[%c0_89, %c0_90, %c0_91] : memref<1x100x8xf32, #tpu.memory_space<vmem>>, vector<1x100x8xf32>
    %95 = vector.shape_cast %94 : vector<1x100x8xf32> to vector<100x8xf32>
    %96 = vector.shape_cast %93 : vector<100x8xf32> to vector<1x100x8xf32>
    tpu.vector_store %arg3[%c0_89, %c0_90, %c0_91], %96 {strides = array<i32>} : memref<1x100x8xf32, #tpu.memory_space<vmem>>, vector<1x100x8xf32>,
    %c2_92 = arith.constant 2 : index
    %c1_93 = arith.constant 1 : index
    %c0_94 = arith.constant 0 : index
    %97 = vector.load %arg5[%c2_92, %c1_93, %c0_94] : memref<12x12x4xf32, #tpu.memory_space<vmem>>, vector<10x10x4xf32>
    %98 = vector.shape_cast %97 : vector<10x10x4xf32> to vector<100x4xf32>
    %99 = arith.truncf %98 : vector<100x4xf32> to vector<100x4xbf16>
    %c7 = arith.constant 7 : index
    %c0_95 = arith.constant 0 : index
    %c0_96 = arith.constant 0 : index
    %100 = vector.load %arg2[%c7, %c0_95, %c0_96] : memref<9x4x8xbf16, #tpu.memory_space<vmem>>, vector<1x4x8xbf16>
    %101 = vector.shape_cast %100 : vector<1x4x8xbf16> to vector<4x8xbf16>
    %cst_97 = arith.constant dense<0.000000e+00> : vector<100x8xf32>
    %102 = tpu.matmul %99, %101, %cst_97 {dimension_numbers = #tpu.dot_dimension_numbers<[1], [0], [0], [1], [0, 0, 1, 1], [], []>} : vector<100x4xbf16>, vector<4x8xbf16>, vector<100x8xf32> -> vector<100x8xf32>
    %c0_98 = arith.constant 0 : index
    %c0_99 = arith.constant 0 : index
    %c0_100 = arith.constant 0 : index
    %103 = vector.load %arg3[%c0_98, %c0_99, %c0_100] : memref<1x100x8xf32, #tpu.memory_space<vmem>>, vector<1x100x8xf32>
    %104 = vector.shape_cast %103 : vector<1x100x8xf32> to vector<100x8xf32>
    %105 = arith.addf %104, %102 : vector<100x8xf32>
    %c0_101 = arith.constant 0 : index
    %c0_102 = arith.constant 0 : index
    %c0_103 = arith.constant 0 : index
    %106 = vector.load %arg3[%c0_101, %c0_102, %c0_103] : memref<1x100x8xf32, #tpu.memory_space<vmem>>, vector<1x100x8xf32>
    %107 = vector.shape_cast %106 : vector<1x100x8xf32> to vector<100x8xf32>
    %108 = vector.shape_cast %105 : vector<100x8xf32> to vector<1x100x8xf32>
    tpu.vector_store %arg3[%c0_101, %c0_102, %c0_103], %108 {strides = array<i32>} : memref<1x100x8xf32, #tpu.memory_space<vmem>>, vector<1x100x8xf32>,
    %c2_104 = arith.constant 2 : index
    %c2_105 = arith.constant 2 : index
    %c0_106 = arith.constant 0 : index
    %109 = vector.load %arg5[%c2_104, %c2_105, %c0_106] : memref<12x12x4xf32, #tpu.memory_space<vmem>>, vector<10x10x4xf32>
    %110 = vector.shape_cast %109 : vector<10x10x4xf32> to vector<100x4xf32>
    %111 = arith.truncf %110 : vector<100x4xf32> to vector<100x4xbf16>
    %c8 = arith.constant 8 : index
    %c0_107 = arith.constant 0 : index
    %c0_108 = arith.constant 0 : index
    %112 = vector.load %arg2[%c8, %c0_107, %c0_108] : memref<9x4x8xbf16, #tpu.memory_space<vmem>>, vector<1x4x8xbf16>
    %113 = vector.shape_cast %112 : vector<1x4x8xbf16> to vector<4x8xbf16>
    %cst_109 = arith.constant dense<0.000000e+00> : vector<100x8xf32>
    %114 = tpu.matmul %111, %113, %cst_109 {dimension_numbers = #tpu.dot_dimension_numbers<[1], [0], [0], [1], [0, 0, 1, 1], [], []>} : vector<100x4xbf16>, vector<4x8xbf16>, vector<100x8xf32> -> vector<100x8xf32>
    %c0_110 = arith.constant 0 : index
    %c0_111 = arith.constant 0 : index
    %c0_112 = arith.constant 0 : index
    %115 = vector.load %arg3[%c0_110, %c0_111, %c0_112] : memref<1x100x8xf32, #tpu.memory_space<vmem>>, vector<1x100x8xf32>
    %116 = vector.shape_cast %115 : vector<1x100x8xf32> to vector<100x8xf32>
    %117 = arith.addf %116, %114 : vector<100x8xf32>
    %c0_113 = arith.constant 0 : index
    %c0_114 = arith.constant 0 : index
    %c0_115 = arith.constant 0 : index
    %118 = vector.load %arg3[%c0_113, %c0_114, %c0_115] : memref<1x100x8xf32, #tpu.memory_space<vmem>>, vector<1x100x8xf32>
    %119 = vector.shape_cast %118 : vector<1x100x8xf32> to vector<100x8xf32>
    %120 = vector.shape_cast %117 : vector<100x8xf32> to vector<1x100x8xf32>
    tpu.vector_store %arg3[%c0_113, %c0_114, %c0_115], %120 {strides = array<i32>} : memref<1x100x8xf32, #tpu.memory_space<vmem>>, vector<1x100x8xf32>,
    %c0_116 = arith.constant 0 : index
    %c0_117 = arith.constant 0 : index
    %c0_118 = arith.constant 0 : index
    %121 = vector.load %arg3[%c0_116, %c0_117, %c0_118] : memref<1x100x8xf32, #tpu.memory_space<vmem>>, vector<1x100x8xf32>
    %122 = vector.shape_cast %121 : vector<1x100x8xf32> to vector<100x8xf32>
    %cst_119 = arith.constant dense<0.000000e+00> : vector<8xf32>
    %123 = vector.multi_reduction <add>, %122, %cst_119 [0] : vector<100x8xf32> to vector<8xf32>
    %124 = vector.shape_cast %123 : vector<8xf32> to vector<1x8xf32>
    %c0_120 = arith.constant 0 : index
    %c0_121 = arith.constant 0 : index
    %c0_122 = arith.constant 0 : index
    %125 = vector.load %arg4[%c0_120, %c0_121, %c0_122] : memref<1x2x8xf32, #tpu.memory_space<vmem>>, vector<1x1x8xf32>
    %126 = vector.shape_cast %125 : vector<1x1x8xf32> to vector<1x8xf32>
    %127 = vector.shape_cast %124 : vector<1x8xf32> to vector<1x1x8xf32>
    tpu.vector_store %arg4[%c0_120, %c0_121, %c0_122], %127 {strides = array<i32>} : memref<1x2x8xf32, #tpu.memory_space<vmem>>, vector<1x1x8xf32>,
    %128 = arith.mulf %122, %122 : vector<100x8xf32>
    %cst_123 = arith.constant dense<0.000000e+00> : vector<8xf32>
    %129 = vector.multi_reduction <add>, %128, %cst_123 [0] : vector<100x8xf32> to vector<8xf32>
    %130 = vector.shape_cast %129 : vector<8xf32> to vector<1x8xf32>
    %c0_124 = arith.constant 0 : index
    %c1_125 = arith.constant 1 : index
    %c0_126 = arith.constant 0 : index
    %131 = vector.load %arg4[%c0_124, %c1_125, %c0_126] : memref<1x2x8xf32, #tpu.memory_space<vmem>>, vector<1x1x8xf32>
    %132 = vector.shape_cast %131 : vector<1x1x8xf32> to vector<1x8xf32>
    %133 = vector.shape_cast %130 : vector<1x8xf32> to vector<1x1x8xf32>
    tpu.vector_store %arg4[%c0_124, %c1_125, %c0_126], %133 {strides = array<i32>} : memref<1x2x8xf32, #tpu.memory_space<vmem>>, vector<1x1x8xf32>,
    return
  }
  func.func @transform_0(%arg0: i32) -> (i32, i32, i32, i32, i32) {
    %c0_i32 = arith.constant 0 : i32
    %c0_i32_0 = arith.constant 0 : i32
    %c0_i32_1 = arith.constant 0 : i32
    %c0_i32_2 = arith.constant 0 : i32
    %c0_i32_3 = arith.constant 0 : i32
    return %arg0, %c0_i32, %c0_i32_0, %c0_i32_1, %c0_i32_2 : i32, i32, i32, i32, i32
  }
  func.func @transform_1(%arg0: i32) -> (i32, i32, i32) {
    %c0_i32 = arith.constant 0 : i32
    %c0_i32_0 = arith.constant 0 : i32
    %c0_i32_1 = arith.constant 0 : i32
    %c0_i32_2 = arith.constant 0 : i32
    return %c0_i32, %c0_i32_0, %c0_i32_1 : i32, i32, i32
  }
  func.func @transform_2(%arg0: i32) -> (i32, i32, i32) {
    %c0_i32 = arith.constant 0 : i32
    %c0_i32_0 = arith.constant 0 : i32
    %c0_i32_1 = arith.constant 0 : i32
    return %arg0, %c0_i32, %c0_i32_0 : i32, i32, i32
  }
  func.func @transform_3(%arg0: i32) -> (i32, i32, i32) {
    %c0_i32 = arith.constant 0 : i32
    %c0_i32_0 = arith.constant 0 : i32
    %c0_i32_1 = arith.constant 0 : i32
    return %arg0, %c0_i32, %c0_i32_0 : i32, i32, i32
  }
}

module attributes {stable_mosaic.version = 11 : i64} {
  func.func @bn2_relu_kernel(%arg0: i32, %arg1: memref<1x8x64xf32, #tpu.memory_space<vmem>>, %arg2: memref<1x64xf32, #tpu.memory_space<vmem>>, %arg3: memref<1x64xf32, #tpu.memory_space<vmem>>, %arg4: memref<1x8x64xf32, #tpu.memory_space<vmem>>) attributes {dimension_semantics = [#tpu.dimension_semantics<parallel>], iteration_bounds = array<i64: 2>, scalar_prefetch = 0 : i64, scratch_operands = 0 : i64, tpu.core_type = #tpu.core_type<tc>, window_params = [{transform_indices = @transform_0, window_bounds = array<i64: 1, 8, 64>}, {pipeline_mode = #tpu.pipeline_mode<synchronous>, transform_indices = @transform_1, window_bounds = array<i64: 1, 64>}, {pipeline_mode = #tpu.pipeline_mode<synchronous>, transform_indices = @transform_2, window_bounds = array<i64: 1, 64>}, {transform_indices = @transform_3, window_bounds = array<i64: 1, 8, 64>}]} {
    %c0 = arith.constant 0 : index
    %c0_0 = arith.constant 0 : index
    %c0_1 = arith.constant 0 : index
    %0 = vector.load %arg1[%c0, %c0_0, %c0_1] : memref<1x8x64xf32, #tpu.memory_space<vmem>>, vector<1x8x64xf32>
    %1 = vector.shape_cast %0 : vector<1x8x64xf32> to vector<8x64xf32>
    %c0_2 = arith.constant 0 : index
    %c0_3 = arith.constant 0 : index
    %2 = vector.load %arg2[%c0_2, %c0_3] : memref<1x64xf32, #tpu.memory_space<vmem>>, vector<1x64xf32>
    %3 = vector.broadcast %2 : vector<1x64xf32> to vector<8x64xf32>
    %4 = arith.mulf %1, %3 : vector<8x64xf32>
    %c0_4 = arith.constant 0 : index
    %c0_5 = arith.constant 0 : index
    %5 = vector.load %arg3[%c0_4, %c0_5] : memref<1x64xf32, #tpu.memory_space<vmem>>, vector<1x64xf32>
    %6 = vector.broadcast %5 : vector<1x64xf32> to vector<8x64xf32>
    %7 = arith.addf %4, %6 : vector<8x64xf32>
    %cst = arith.constant 0.000000e+00 : f32
    %8 = vector.broadcast %cst : f32 to vector<8x64xf32>
    %9 = arith.maximumf %7, %8 : vector<8x64xf32>
    %c0_6 = arith.constant 0 : index
    %c0_7 = arith.constant 0 : index
    %c0_8 = arith.constant 0 : index
    %10 = vector.load %arg4[%c0_6, %c0_7, %c0_8] : memref<1x8x64xf32, #tpu.memory_space<vmem>>, vector<1x8x64xf32>
    %11 = vector.shape_cast %10 : vector<1x8x64xf32> to vector<8x64xf32>
    %12 = vector.shape_cast %9 : vector<8x64xf32> to vector<1x8x64xf32>
    tpu.vector_store %arg4[%c0_6, %c0_7, %c0_8], %12 {strides = array<i32>} : memref<1x8x64xf32, #tpu.memory_space<vmem>>, vector<1x8x64xf32>,
    return
  }
  func.func @transform_0(%arg0: i32) -> (i32, i32, i32) {
    %c0_i32 = arith.constant 0 : i32
    %c0_i32_0 = arith.constant 0 : i32
    %c0_i32_1 = arith.constant 0 : i32
    return %arg0, %c0_i32, %c0_i32_0 : i32, i32, i32
  }
  func.func @transform_1(%arg0: i32) -> (i32, i32) {
    %c0_i32 = arith.constant 0 : i32
    %c0_i32_0 = arith.constant 0 : i32
    %c0_i32_1 = arith.constant 0 : i32
    return %c0_i32, %c0_i32_0 : i32, i32
  }
  func.func @transform_2(%arg0: i32) -> (i32, i32) {
    %c0_i32 = arith.constant 0 : i32
    %c0_i32_0 = arith.constant 0 : i32
    %c0_i32_1 = arith.constant 0 : i32
    return %c0_i32, %c0_i32_0 : i32, i32
  }
  func.func @transform_3(%arg0: i32) -> (i32, i32, i32) {
    %c0_i32 = arith.constant 0 : i32
    %c0_i32_0 = arith.constant 0 : i32
    %c0_i32_1 = arith.constant 0 : i32
    return %arg0, %c0_i32, %c0_i32_0 : i32, i32, i32
  }
}

module attributes {stable_mosaic.version = 11 : i64} {
  func.func @bn1_conv2_kernel(%arg0: i32, %arg1: memref<1x10x10x8xf32, #tpu.memory_space<vmem>>, %arg2: memref<1x1x8xf32, #tpu.memory_space<vmem>>, %arg3: memref<1x1x8xf32, #tpu.memory_space<vmem>>, %arg4: memref<9x8x8xbf16, #tpu.memory_space<vmem>>, %arg5: memref<1x64x8xf32, #tpu.memory_space<vmem>>, %arg6: memref<1x2x8xf32, #tpu.memory_space<vmem>>, %arg7: memref<10x10x8xf32, #tpu.memory_space<vmem>>) attributes {dimension_semantics = [#tpu.dimension_semantics<parallel>], iteration_bounds = array<i64: 2>, scalar_prefetch = 0 : i64, scratch_operands = 1 : i64, tpu.core_type = #tpu.core_type<tc>, window_params = [{transform_indices = @transform_0, window_bounds = array<i64: 1, 10, 10, 8>}, {pipeline_mode = #tpu.pipeline_mode<synchronous>, transform_indices = @transform_1, window_bounds = array<i64: 1, 1, 8>}, {pipeline_mode = #tpu.pipeline_mode<synchronous>, transform_indices = @transform_2, window_bounds = array<i64: 1, 1, 8>}, {pipeline_mode = #tpu.pipeline_mode<synchronous>, transform_indices = @transform_3, window_bounds = array<i64: 9, 8, 8>}, {transform_indices = @transform_4, window_bounds = array<i64: 1, 64, 8>}, {transform_indices = @transform_5, window_bounds = array<i64: 1, 2, 8>}]} {
    %c0 = arith.constant 0 : index
    %c0_0 = arith.constant 0 : index
    %c0_1 = arith.constant 0 : index
    %c0_2 = arith.constant 0 : index
    %0 = vector.load %arg1[%c0, %c0_0, %c0_1, %c0_2] : memref<1x10x10x8xf32, #tpu.memory_space<vmem>>, vector<1x10x10x8xf32>
    %1 = vector.shape_cast %0 : vector<1x10x10x8xf32> to vector<10x10x8xf32>
    %c0_3 = arith.constant 0 : index
    %c0_4 = arith.constant 0 : index
    %c0_5 = arith.constant 0 : index
    %2 = vector.load %arg2[%c0_3, %c0_4, %c0_5] : memref<1x1x8xf32, #tpu.memory_space<vmem>>, vector<1x1x8xf32>
    %3 = vector.broadcast %2 : vector<1x1x8xf32> to vector<10x10x8xf32>
    %4 = arith.mulf %1, %3 : vector<10x10x8xf32>
    %c0_6 = arith.constant 0 : index
    %c0_7 = arith.constant 0 : index
    %c0_8 = arith.constant 0 : index
    %5 = vector.load %arg3[%c0_6, %c0_7, %c0_8] : memref<1x1x8xf32, #tpu.memory_space<vmem>>, vector<1x1x8xf32>
    %6 = vector.broadcast %5 : vector<1x1x8xf32> to vector<10x10x8xf32>
    %7 = arith.addf %4, %6 : vector<10x10x8xf32>
    %cst = arith.constant 0.000000e+00 : f32
    %8 = vector.broadcast %cst : f32 to vector<10x10x8xf32>
    %9 = arith.maximumf %7, %8 : vector<10x10x8xf32>
    %c0_9 = arith.constant 0 : index
    %c0_10 = arith.constant 0 : index
    %c0_11 = arith.constant 0 : index
    %10 = vector.load %arg7[%c0_9, %c0_10, %c0_11] : memref<10x10x8xf32, #tpu.memory_space<vmem>>, vector<10x10x8xf32>
    tpu.vector_store %arg7[%c0_9, %c0_10, %c0_11], %9 {strides = array<i32>} : memref<10x10x8xf32, #tpu.memory_space<vmem>>, vector<10x10x8xf32>,
    %c0_12 = arith.constant 0 : index
    %c0_13 = arith.constant 0 : index
    %c0_14 = arith.constant 0 : index
    %11 = vector.load %arg7[%c0_12, %c0_13, %c0_14] : memref<10x10x8xf32, #tpu.memory_space<vmem>>, vector<8x8x8xf32>
    %12 = vector.shape_cast %11 : vector<8x8x8xf32> to vector<64x8xf32>
    %13 = arith.truncf %12 : vector<64x8xf32> to vector<64x8xbf16>
    %c0_15 = arith.constant 0 : index
    %c0_16 = arith.constant 0 : index
    %c0_17 = arith.constant 0 : index
    %14 = vector.load %arg4[%c0_15, %c0_16, %c0_17] : memref<9x8x8xbf16, #tpu.memory_space<vmem>>, vector<1x8x8xbf16>
    %15 = vector.shape_cast %14 : vector<1x8x8xbf16> to vector<8x8xbf16>
    %cst_18 = arith.constant dense<0.000000e+00> : vector<64x8xf32>
    %16 = tpu.matmul %13, %15, %cst_18 {dimension_numbers = #tpu.dot_dimension_numbers<[1], [0], [0], [1], [0, 0, 1, 1], [], []>} : vector<64x8xbf16>, vector<8x8xbf16>, vector<64x8xf32> -> vector<64x8xf32>
    %c0_19 = arith.constant 0 : index
    %c0_20 = arith.constant 0 : index
    %c0_21 = arith.constant 0 : index
    %17 = vector.load %arg5[%c0_19, %c0_20, %c0_21] : memref<1x64x8xf32, #tpu.memory_space<vmem>>, vector<1x64x8xf32>
    %18 = vector.shape_cast %17 : vector<1x64x8xf32> to vector<64x8xf32>
    %19 = vector.shape_cast %16 : vector<64x8xf32> to vector<1x64x8xf32>
    tpu.vector_store %arg5[%c0_19, %c0_20, %c0_21], %19 {strides = array<i32>} : memref<1x64x8xf32, #tpu.memory_space<vmem>>, vector<1x64x8xf32>,
    %c0_22 = arith.constant 0 : index
    %c1 = arith.constant 1 : index
    %c0_23 = arith.constant 0 : index
    %20 = vector.load %arg7[%c0_22, %c1, %c0_23] : memref<10x10x8xf32, #tpu.memory_space<vmem>>, vector<8x8x8xf32>
    %21 = vector.shape_cast %20 : vector<8x8x8xf32> to vector<64x8xf32>
    %22 = arith.truncf %21 : vector<64x8xf32> to vector<64x8xbf16>
    %c1_24 = arith.constant 1 : index
    %c0_25 = arith.constant 0 : index
    %c0_26 = arith.constant 0 : index
    %23 = vector.load %arg4[%c1_24, %c0_25, %c0_26] : memref<9x8x8xbf16, #tpu.memory_space<vmem>>, vector<1x8x8xbf16>
    %24 = vector.shape_cast %23 : vector<1x8x8xbf16> to vector<8x8xbf16>
    %cst_27 = arith.constant dense<0.000000e+00> : vector<64x8xf32>
    %25 = tpu.matmul %22, %24, %cst_27 {dimension_numbers = #tpu.dot_dimension_numbers<[1], [0], [0], [1], [0, 0, 1, 1], [], []>} : vector<64x8xbf16>, vector<8x8xbf16>, vector<64x8xf32> -> vector<64x8xf32>
    %c0_28 = arith.constant 0 : index
    %c0_29 = arith.constant 0 : index
    %c0_30 = arith.constant 0 : index
    %26 = vector.load %arg5[%c0_28, %c0_29, %c0_30] : memref<1x64x8xf32, #tpu.memory_space<vmem>>, vector<1x64x8xf32>
    %27 = vector.shape_cast %26 : vector<1x64x8xf32> to vector<64x8xf32>
    %28 = arith.addf %27, %25 : vector<64x8xf32>
    %c0_31 = arith.constant 0 : index
    %c0_32 = arith.constant 0 : index
    %c0_33 = arith.constant 0 : index
    %29 = vector.load %arg5[%c0_31, %c0_32, %c0_33] : memref<1x64x8xf32, #tpu.memory_space<vmem>>, vector<1x64x8xf32>
    %30 = vector.shape_cast %29 : vector<1x64x8xf32> to vector<64x8xf32>
    %31 = vector.shape_cast %28 : vector<64x8xf32> to vector<1x64x8xf32>
    tpu.vector_store %arg5[%c0_31, %c0_32, %c0_33], %31 {strides = array<i32>} : memref<1x64x8xf32, #tpu.memory_space<vmem>>, vector<1x64x8xf32>,
    %c0_34 = arith.constant 0 : index
    %c2 = arith.constant 2 : index
    %c0_35 = arith.constant 0 : index
    %32 = vector.load %arg7[%c0_34, %c2, %c0_35] : memref<10x10x8xf32, #tpu.memory_space<vmem>>, vector<8x8x8xf32>
    %33 = vector.shape_cast %32 : vector<8x8x8xf32> to vector<64x8xf32>
    %34 = arith.truncf %33 : vector<64x8xf32> to vector<64x8xbf16>
    %c2_36 = arith.constant 2 : index
    %c0_37 = arith.constant 0 : index
    %c0_38 = arith.constant 0 : index
    %35 = vector.load %arg4[%c2_36, %c0_37, %c0_38] : memref<9x8x8xbf16, #tpu.memory_space<vmem>>, vector<1x8x8xbf16>
    %36 = vector.shape_cast %35 : vector<1x8x8xbf16> to vector<8x8xbf16>
    %cst_39 = arith.constant dense<0.000000e+00> : vector<64x8xf32>
    %37 = tpu.matmul %34, %36, %cst_39 {dimension_numbers = #tpu.dot_dimension_numbers<[1], [0], [0], [1], [0, 0, 1, 1], [], []>} : vector<64x8xbf16>, vector<8x8xbf16>, vector<64x8xf32> -> vector<64x8xf32>
    %c0_40 = arith.constant 0 : index
    %c0_41 = arith.constant 0 : index
    %c0_42 = arith.constant 0 : index
    %38 = vector.load %arg5[%c0_40, %c0_41, %c0_42] : memref<1x64x8xf32, #tpu.memory_space<vmem>>, vector<1x64x8xf32>
    %39 = vector.shape_cast %38 : vector<1x64x8xf32> to vector<64x8xf32>
    %40 = arith.addf %39, %37 : vector<64x8xf32>
    %c0_43 = arith.constant 0 : index
    %c0_44 = arith.constant 0 : index
    %c0_45 = arith.constant 0 : index
    %41 = vector.load %arg5[%c0_43, %c0_44, %c0_45] : memref<1x64x8xf32, #tpu.memory_space<vmem>>, vector<1x64x8xf32>
    %42 = vector.shape_cast %41 : vector<1x64x8xf32> to vector<64x8xf32>
    %43 = vector.shape_cast %40 : vector<64x8xf32> to vector<1x64x8xf32>
    tpu.vector_store %arg5[%c0_43, %c0_44, %c0_45], %43 {strides = array<i32>} : memref<1x64x8xf32, #tpu.memory_space<vmem>>, vector<1x64x8xf32>,
    %c1_46 = arith.constant 1 : index
    %c0_47 = arith.constant 0 : index
    %c0_48 = arith.constant 0 : index
    %44 = vector.load %arg7[%c1_46, %c0_47, %c0_48] : memref<10x10x8xf32, #tpu.memory_space<vmem>>, vector<8x8x8xf32>
    %45 = vector.shape_cast %44 : vector<8x8x8xf32> to vector<64x8xf32>
    %46 = arith.truncf %45 : vector<64x8xf32> to vector<64x8xbf16>
    %c3 = arith.constant 3 : index
    %c0_49 = arith.constant 0 : index
    %c0_50 = arith.constant 0 : index
    %47 = vector.load %arg4[%c3, %c0_49, %c0_50] : memref<9x8x8xbf16, #tpu.memory_space<vmem>>, vector<1x8x8xbf16>
    %48 = vector.shape_cast %47 : vector<1x8x8xbf16> to vector<8x8xbf16>
    %cst_51 = arith.constant dense<0.000000e+00> : vector<64x8xf32>
    %49 = tpu.matmul %46, %48, %cst_51 {dimension_numbers = #tpu.dot_dimension_numbers<[1], [0], [0], [1], [0, 0, 1, 1], [], []>} : vector<64x8xbf16>, vector<8x8xbf16>, vector<64x8xf32> -> vector<64x8xf32>
    %c0_52 = arith.constant 0 : index
    %c0_53 = arith.constant 0 : index
    %c0_54 = arith.constant 0 : index
    %50 = vector.load %arg5[%c0_52, %c0_53, %c0_54] : memref<1x64x8xf32, #tpu.memory_space<vmem>>, vector<1x64x8xf32>
    %51 = vector.shape_cast %50 : vector<1x64x8xf32> to vector<64x8xf32>
    %52 = arith.addf %51, %49 : vector<64x8xf32>
    %c0_55 = arith.constant 0 : index
    %c0_56 = arith.constant 0 : index
    %c0_57 = arith.constant 0 : index
    %53 = vector.load %arg5[%c0_55, %c0_56, %c0_57] : memref<1x64x8xf32, #tpu.memory_space<vmem>>, vector<1x64x8xf32>
    %54 = vector.shape_cast %53 : vector<1x64x8xf32> to vector<64x8xf32>
    %55 = vector.shape_cast %52 : vector<64x8xf32> to vector<1x64x8xf32>
    tpu.vector_store %arg5[%c0_55, %c0_56, %c0_57], %55 {strides = array<i32>} : memref<1x64x8xf32, #tpu.memory_space<vmem>>, vector<1x64x8xf32>,
    %c1_58 = arith.constant 1 : index
    %c1_59 = arith.constant 1 : index
    %c0_60 = arith.constant 0 : index
    %56 = vector.load %arg7[%c1_58, %c1_59, %c0_60] : memref<10x10x8xf32, #tpu.memory_space<vmem>>, vector<8x8x8xf32>
    %57 = vector.shape_cast %56 : vector<8x8x8xf32> to vector<64x8xf32>
    %58 = arith.truncf %57 : vector<64x8xf32> to vector<64x8xbf16>
    %c4 = arith.constant 4 : index
    %c0_61 = arith.constant 0 : index
    %c0_62 = arith.constant 0 : index
    %59 = vector.load %arg4[%c4, %c0_61, %c0_62] : memref<9x8x8xbf16, #tpu.memory_space<vmem>>, vector<1x8x8xbf16>
    %60 = vector.shape_cast %59 : vector<1x8x8xbf16> to vector<8x8xbf16>
    %cst_63 = arith.constant dense<0.000000e+00> : vector<64x8xf32>
    %61 = tpu.matmul %58, %60, %cst_63 {dimension_numbers = #tpu.dot_dimension_numbers<[1], [0], [0], [1], [0, 0, 1, 1], [], []>} : vector<64x8xbf16>, vector<8x8xbf16>, vector<64x8xf32> -> vector<64x8xf32>
    %c0_64 = arith.constant 0 : index
    %c0_65 = arith.constant 0 : index
    %c0_66 = arith.constant 0 : index
    %62 = vector.load %arg5[%c0_64, %c0_65, %c0_66] : memref<1x64x8xf32, #tpu.memory_space<vmem>>, vector<1x64x8xf32>
    %63 = vector.shape_cast %62 : vector<1x64x8xf32> to vector<64x8xf32>
    %64 = arith.addf %63, %61 : vector<64x8xf32>
    %c0_67 = arith.constant 0 : index
    %c0_68 = arith.constant 0 : index
    %c0_69 = arith.constant 0 : index
    %65 = vector.load %arg5[%c0_67, %c0_68, %c0_69] : memref<1x64x8xf32, #tpu.memory_space<vmem>>, vector<1x64x8xf32>
    %66 = vector.shape_cast %65 : vector<1x64x8xf32> to vector<64x8xf32>
    %67 = vector.shape_cast %64 : vector<64x8xf32> to vector<1x64x8xf32>
    tpu.vector_store %arg5[%c0_67, %c0_68, %c0_69], %67 {strides = array<i32>} : memref<1x64x8xf32, #tpu.memory_space<vmem>>, vector<1x64x8xf32>,
    %c1_70 = arith.constant 1 : index
    %c2_71 = arith.constant 2 : index
    %c0_72 = arith.constant 0 : index
    %68 = vector.load %arg7[%c1_70, %c2_71, %c0_72] : memref<10x10x8xf32, #tpu.memory_space<vmem>>, vector<8x8x8xf32>
    %69 = vector.shape_cast %68 : vector<8x8x8xf32> to vector<64x8xf32>
    %70 = arith.truncf %69 : vector<64x8xf32> to vector<64x8xbf16>
    %c5 = arith.constant 5 : index
    %c0_73 = arith.constant 0 : index
    %c0_74 = arith.constant 0 : index
    %71 = vector.load %arg4[%c5, %c0_73, %c0_74] : memref<9x8x8xbf16, #tpu.memory_space<vmem>>, vector<1x8x8xbf16>
    %72 = vector.shape_cast %71 : vector<1x8x8xbf16> to vector<8x8xbf16>
    %cst_75 = arith.constant dense<0.000000e+00> : vector<64x8xf32>
    %73 = tpu.matmul %70, %72, %cst_75 {dimension_numbers = #tpu.dot_dimension_numbers<[1], [0], [0], [1], [0, 0, 1, 1], [], []>} : vector<64x8xbf16>, vector<8x8xbf16>, vector<64x8xf32> -> vector<64x8xf32>
    %c0_76 = arith.constant 0 : index
    %c0_77 = arith.constant 0 : index
    %c0_78 = arith.constant 0 : index
    %74 = vector.load %arg5[%c0_76, %c0_77, %c0_78] : memref<1x64x8xf32, #tpu.memory_space<vmem>>, vector<1x64x8xf32>
    %75 = vector.shape_cast %74 : vector<1x64x8xf32> to vector<64x8xf32>
    %76 = arith.addf %75, %73 : vector<64x8xf32>
    %c0_79 = arith.constant 0 : index
    %c0_80 = arith.constant 0 : index
    %c0_81 = arith.constant 0 : index
    %77 = vector.load %arg5[%c0_79, %c0_80, %c0_81] : memref<1x64x8xf32, #tpu.memory_space<vmem>>, vector<1x64x8xf32>
    %78 = vector.shape_cast %77 : vector<1x64x8xf32> to vector<64x8xf32>
    %79 = vector.shape_cast %76 : vector<64x8xf32> to vector<1x64x8xf32>
    tpu.vector_store %arg5[%c0_79, %c0_80, %c0_81], %79 {strides = array<i32>} : memref<1x64x8xf32, #tpu.memory_space<vmem>>, vector<1x64x8xf32>,
    %c2_82 = arith.constant 2 : index
    %c0_83 = arith.constant 0 : index
    %c0_84 = arith.constant 0 : index
    %80 = vector.load %arg7[%c2_82, %c0_83, %c0_84] : memref<10x10x8xf32, #tpu.memory_space<vmem>>, vector<8x8x8xf32>
    %81 = vector.shape_cast %80 : vector<8x8x8xf32> to vector<64x8xf32>
    %82 = arith.truncf %81 : vector<64x8xf32> to vector<64x8xbf16>
    %c6 = arith.constant 6 : index
    %c0_85 = arith.constant 0 : index
    %c0_86 = arith.constant 0 : index
    %83 = vector.load %arg4[%c6, %c0_85, %c0_86] : memref<9x8x8xbf16, #tpu.memory_space<vmem>>, vector<1x8x8xbf16>
    %84 = vector.shape_cast %83 : vector<1x8x8xbf16> to vector<8x8xbf16>
    %cst_87 = arith.constant dense<0.000000e+00> : vector<64x8xf32>
    %85 = tpu.matmul %82, %84, %cst_87 {dimension_numbers = #tpu.dot_dimension_numbers<[1], [0], [0], [1], [0, 0, 1, 1], [], []>} : vector<64x8xbf16>, vector<8x8xbf16>, vector<64x8xf32> -> vector<64x8xf32>
    %c0_88 = arith.constant 0 : index
    %c0_89 = arith.constant 0 : index
    %c0_90 = arith.constant 0 : index
    %86 = vector.load %arg5[%c0_88, %c0_89, %c0_90] : memref<1x64x8xf32, #tpu.memory_space<vmem>>, vector<1x64x8xf32>
    %87 = vector.shape_cast %86 : vector<1x64x8xf32> to vector<64x8xf32>
    %88 = arith.addf %87, %85 : vector<64x8xf32>
    %c0_91 = arith.constant 0 : index
    %c0_92 = arith.constant 0 : index
    %c0_93 = arith.constant 0 : index
    %89 = vector.load %arg5[%c0_91, %c0_92, %c0_93] : memref<1x64x8xf32, #tpu.memory_space<vmem>>, vector<1x64x8xf32>
    %90 = vector.shape_cast %89 : vector<1x64x8xf32> to vector<64x8xf32>
    %91 = vector.shape_cast %88 : vector<64x8xf32> to vector<1x64x8xf32>
    tpu.vector_store %arg5[%c0_91, %c0_92, %c0_93], %91 {strides = array<i32>} : memref<1x64x8xf32, #tpu.memory_space<vmem>>, vector<1x64x8xf32>,
    %c2_94 = arith.constant 2 : index
    %c1_95 = arith.constant 1 : index
    %c0_96 = arith.constant 0 : index
    %92 = vector.load %arg7[%c2_94, %c1_95, %c0_96] : memref<10x10x8xf32, #tpu.memory_space<vmem>>, vector<8x8x8xf32>
    %93 = vector.shape_cast %92 : vector<8x8x8xf32> to vector<64x8xf32>
    %94 = arith.truncf %93 : vector<64x8xf32> to vector<64x8xbf16>
    %c7 = arith.constant 7 : index
    %c0_97 = arith.constant 0 : index
    %c0_98 = arith.constant 0 : index
    %95 = vector.load %arg4[%c7, %c0_97, %c0_98] : memref<9x8x8xbf16, #tpu.memory_space<vmem>>, vector<1x8x8xbf16>
    %96 = vector.shape_cast %95 : vector<1x8x8xbf16> to vector<8x8xbf16>
    %cst_99 = arith.constant dense<0.000000e+00> : vector<64x8xf32>
    %97 = tpu.matmul %94, %96, %cst_99 {dimension_numbers = #tpu.dot_dimension_numbers<[1], [0], [0], [1], [0, 0, 1, 1], [], []>} : vector<64x8xbf16>, vector<8x8xbf16>, vector<64x8xf32> -> vector<64x8xf32>
    %c0_100 = arith.constant 0 : index
    %c0_101 = arith.constant 0 : index
    %c0_102 = arith.constant 0 : index
    %98 = vector.load %arg5[%c0_100, %c0_101, %c0_102] : memref<1x64x8xf32, #tpu.memory_space<vmem>>, vector<1x64x8xf32>
    %99 = vector.shape_cast %98 : vector<1x64x8xf32> to vector<64x8xf32>
    %100 = arith.addf %99, %97 : vector<64x8xf32>
    %c0_103 = arith.constant 0 : index
    %c0_104 = arith.constant 0 : index
    %c0_105 = arith.constant 0 : index
    %101 = vector.load %arg5[%c0_103, %c0_104, %c0_105] : memref<1x64x8xf32, #tpu.memory_space<vmem>>, vector<1x64x8xf32>
    %102 = vector.shape_cast %101 : vector<1x64x8xf32> to vector<64x8xf32>
    %103 = vector.shape_cast %100 : vector<64x8xf32> to vector<1x64x8xf32>
    tpu.vector_store %arg5[%c0_103, %c0_104, %c0_105], %103 {strides = array<i32>} : memref<1x64x8xf32, #tpu.memory_space<vmem>>, vector<1x64x8xf32>,
    %c2_106 = arith.constant 2 : index
    %c2_107 = arith.constant 2 : index
    %c0_108 = arith.constant 0 : index
    %104 = vector.load %arg7[%c2_106, %c2_107, %c0_108] : memref<10x10x8xf32, #tpu.memory_space<vmem>>, vector<8x8x8xf32>
    %105 = vector.shape_cast %104 : vector<8x8x8xf32> to vector<64x8xf32>
    %106 = arith.truncf %105 : vector<64x8xf32> to vector<64x8xbf16>
    %c8 = arith.constant 8 : index
    %c0_109 = arith.constant 0 : index
    %c0_110 = arith.constant 0 : index
    %107 = vector.load %arg4[%c8, %c0_109, %c0_110] : memref<9x8x8xbf16, #tpu.memory_space<vmem>>, vector<1x8x8xbf16>
    %108 = vector.shape_cast %107 : vector<1x8x8xbf16> to vector<8x8xbf16>
    %cst_111 = arith.constant dense<0.000000e+00> : vector<64x8xf32>
    %109 = tpu.matmul %106, %108, %cst_111 {dimension_numbers = #tpu.dot_dimension_numbers<[1], [0], [0], [1], [0, 0, 1, 1], [], []>} : vector<64x8xbf16>, vector<8x8xbf16>, vector<64x8xf32> -> vector<64x8xf32>
    %c0_112 = arith.constant 0 : index
    %c0_113 = arith.constant 0 : index
    %c0_114 = arith.constant 0 : index
    %110 = vector.load %arg5[%c0_112, %c0_113, %c0_114] : memref<1x64x8xf32, #tpu.memory_space<vmem>>, vector<1x64x8xf32>
    %111 = vector.shape_cast %110 : vector<1x64x8xf32> to vector<64x8xf32>
    %112 = arith.addf %111, %109 : vector<64x8xf32>
    %c0_115 = arith.constant 0 : index
    %c0_116 = arith.constant 0 : index
    %c0_117 = arith.constant 0 : index
    %113 = vector.load %arg5[%c0_115, %c0_116, %c0_117] : memref<1x64x8xf32, #tpu.memory_space<vmem>>, vector<1x64x8xf32>
    %114 = vector.shape_cast %113 : vector<1x64x8xf32> to vector<64x8xf32>
    %115 = vector.shape_cast %112 : vector<64x8xf32> to vector<1x64x8xf32>
    tpu.vector_store %arg5[%c0_115, %c0_116, %c0_117], %115 {strides = array<i32>} : memref<1x64x8xf32, #tpu.memory_space<vmem>>, vector<1x64x8xf32>,
    %c0_118 = arith.constant 0 : index
    %c0_119 = arith.constant 0 : index
    %c0_120 = arith.constant 0 : index
    %116 = vector.load %arg5[%c0_118, %c0_119, %c0_120] : memref<1x64x8xf32, #tpu.memory_space<vmem>>, vector<1x64x8xf32>
    %117 = vector.shape_cast %116 : vector<1x64x8xf32> to vector<64x8xf32>
    %cst_121 = arith.constant dense<0.000000e+00> : vector<8xf32>
    %118 = vector.multi_reduction <add>, %117, %cst_121 [0] : vector<64x8xf32> to vector<8xf32>
    %119 = vector.shape_cast %118 : vector<8xf32> to vector<1x8xf32>
    %c0_122 = arith.constant 0 : index
    %c0_123 = arith.constant 0 : index
    %c0_124 = arith.constant 0 : index
    %120 = vector.load %arg6[%c0_122, %c0_123, %c0_124] : memref<1x2x8xf32, #tpu.memory_space<vmem>>, vector<1x1x8xf32>
    %121 = vector.shape_cast %120 : vector<1x1x8xf32> to vector<1x8xf32>
    %122 = vector.shape_cast %119 : vector<1x8xf32> to vector<1x1x8xf32>
    tpu.vector_store %arg6[%c0_122, %c0_123, %c0_124], %122 {strides = array<i32>} : memref<1x2x8xf32, #tpu.memory_space<vmem>>, vector<1x1x8xf32>,
    %123 = arith.mulf %117, %117 : vector<64x8xf32>
    %cst_125 = arith.constant dense<0.000000e+00> : vector<8xf32>
    %124 = vector.multi_reduction <add>, %123, %cst_125 [0] : vector<64x8xf32> to vector<8xf32>
    %125 = vector.shape_cast %124 : vector<8xf32> to vector<1x8xf32>
    %c0_126 = arith.constant 0 : index
    %c1_127 = arith.constant 1 : index
    %c0_128 = arith.constant 0 : index
    %126 = vector.load %arg6[%c0_126, %c1_127, %c0_128] : memref<1x2x8xf32, #tpu.memory_space<vmem>>, vector<1x1x8xf32>
    %127 = vector.shape_cast %126 : vector<1x1x8xf32> to vector<1x8xf32>
    %128 = vector.shape_cast %125 : vector<1x8xf32> to vector<1x1x8xf32>
    tpu.vector_store %arg6[%c0_126, %c1_127, %c0_128], %128 {strides = array<i32>} : memref<1x2x8xf32, #tpu.memory_space<vmem>>, vector<1x1x8xf32>,
    return
  }
  func.func @transform_0(%arg0: i32) -> (i32, i32, i32, i32) {
    %c0_i32 = arith.constant 0 : i32
    %c0_i32_0 = arith.constant 0 : i32
    %c0_i32_1 = arith.constant 0 : i32
    %c0_i32_2 = arith.constant 0 : i32
    return %arg0, %c0_i32, %c0_i32_0, %c0_i32_1 : i32, i32, i32, i32
  }
  func.func @transform_1(%arg0: i32) -> (i32, i32, i32) {
    %c0_i32 = arith.constant 0 : i32
    %c0_i32_0 = arith.constant 0 : i32
    %c0_i32_1 = arith.constant 0 : i32
    %c0_i32_2 = arith.constant 0 : i32
    return %c0_i32, %c0_i32_0, %c0_i32_1 : i32, i32, i32
  }
  func.func @transform_2(%arg0: i32) -> (i32, i32, i32) {
    %c0_i32 = arith.constant 0 : i32
    %c0_i32_0 = arith.constant 0 : i32
    %c0_i32_1 = arith.constant 0 : i32
    %c0_i32_2 = arith.constant 0 : i32
    return %c0_i32, %c0_i32_0, %c0_i32_1 : i32, i32, i32
  }
  func.func @transform_3(%arg0: i32) -> (i32, i32, i32) {
    %c0_i32 = arith.constant 0 : i32
    %c0_i32_0 = arith.constant 0 : i32
    %c0_i32_1 = arith.constant 0 : i32
    %c0_i32_2 = arith.constant 0 : i32
    return %c0_i32, %c0_i32_0, %c0_i32_1 : i32, i32, i32
  }
  func.func @transform_4(%arg0: i32) -> (i32, i32, i32) {
    %c0_i32 = arith.constant 0 : i32
    %c0_i32_0 = arith.constant 0 : i32
    %c0_i32_1 = arith.constant 0 : i32
    return %arg0, %c0_i32, %c0_i32_0 : i32, i32, i32
  }
  func.func @transform_5(%arg0: i32) -> (i32, i32, i32) {
    %c0_i32 = arith.constant 0 : i32
    %c0_i32_0 = arith.constant 0 : i32
    %c0_i32_1 = arith.constant 0 : i32
    return %arg0, %c0_i32, %c0_i32_0 : i32, i32, i32
  }
}

</mosaic_0001>

<llo_original>
// kernel: down_pallas.5
$region0: #{down_pallas.5}
  #allocation0 [shape = 'u32[]', space=smem, size = 0x4, offset = 0x4, fixed_abs, tag = 'smem constant byte address 0x4 - core index']
  #allocation1 [shape = 'u32[144,128]{1,0:T(1,128)}', space=vmem, size = 0x12000, scoped, tag = 'internal scratch']
  %s0 = inlined_call_operand.vmem [shape: f32[2,8,64], index: 0, kind: input, shape index: {}]
  %s1 = inlined_call_operand.vmem [shape: f32[1,64], index: 1, kind: input, shape index: {}]
  %s2 = inlined_call_operand.vmem [shape: f32[1,64], index: 2, kind: input, shape index: {}]
  %s3 = inlined_call_operand.vmem [shape: f32[2,8,64], index: 3, kind: output, shape index: {}]
  %s4 = sld [smem:[#allocation0]]
  $region45: #{down_pallas.5} parent=0
    _
  %s6 = ssub.s32 1, %s4
  %s7 = scalar_select 0, %s6, %s4
  loop: start=0, step=1, limit=4
  $region2: #{down_pallas.5} parent=0 // loop_pre_header
    _
  $region3: #{down_pallas.5} parent=0 // loop_header
    %s9 = sphi 0, %s13
    %p10 = scmp.ge.s32.totalorder %s9, 4
    %s19 = sphi 0, %s21
    %s22 = sphi 0, %s19
    %s23 = sphi 0, %s22
    %s39 = sphi 0, %s23
    %s43 = sphi 0, %s43
    %s45 = sphi 0, %s43
    %s46 = sphi 0, %s45
    %s60 = sphi 0, %s46
    %s64 = sphi 0, %s64
    %s66 = sphi 0, %s64
    %s67 = sphi 0, %s66
    %s81 = sphi 0, %s67
    %s87 = sphi 0, %s89
    %s90 = sphi 0, %s87
    %s91 = sphi 0, %s90
    %s107 = sphi 0, %s91
  $region4: #{down_pallas.5} parent=0 // loop_header_branch
    %12 = sbr.rel (%p10) target = $region8
  $region5: #{down_pallas.5} parent=0 // loop_body
    %s14 = ssub.s32 %s9, 1
    %s15 = ssub.s32 %s9, 2
    %s16 = sadd.s32 %s9, 1
    %s17 = ssub.s32 %s9, %s16
    %p18 = scmp.eq.s32.totalorder %s17, 0
    %s20 = sadd.s32 %s19, 1
    %s21 = scalar_select %p18, %s19, %s20
    %p24 = pneg %p18
    %p25 = scmp.eq.s32.totalorder %s9, 1
    %p26 = por %p24, %p25
    %p27 = scmp.ne.s32.totalorder %s19, %s22
    %p28 = scmp.eq.s32.totalorder %s9, 0
    %p29 = por %p27, %p28
    %p30 = scmp.ne.s32.totalorder %s19, %s22
    %p31 = scmp.eq.s32.totalorder %s14, 1
    %p32 = por %p30, %p31
    %p33 = scmp.ne.s32.totalorder %s22, %s23
    %p34 = scmp.eq.s32.totalorder %s14, 0
    %p35 = por %p33, %p34
    %p36 = scmp.ne.s32.totalorder %s22, %s23
    %p37 = scmp.eq.s32.totalorder %s15, 1
    %p38 = por %p36, %p37
    %p40 = scmp.ne.s32.totalorder %s23, %s39
    %p41 = scmp.eq.s32.totalorder %s15, 0
    %p42 = por %p40, %p41
    %s44 = sadd.s32 %s43, 1
    %p47 = scmp.eq.s32.totalorder %s9, 1
    %p48 = scmp.ne.s32.totalorder %s43, %s45
    %p49 = scmp.eq.s32.totalorder %s9, 0
    %p50 = por %p48, %p49
    %p51 = scmp.ne.s32.totalorder %s43, %s45
    %p52 = scmp.eq.s32.totalorder %s14, 1
    %p53 = por %p51, %p52
    %p54 = scmp.ne.s32.totalorder %s45, %s46
    %p55 = scmp.eq.s32.totalorder %s14, 0
    %p56 = por %p54, %p55
    %p57 = scmp.ne.s32.totalorder %s45, %s46
    %p58 = scmp.eq.s32.totalorder %s15, 1
    %p59 = por %p57, %p58
    %p61 = scmp.ne.s32.totalorder %s46, %s60
    %p62 = scmp.eq.s32.totalorder %s15, 0
    %p63 = por %p61, %p62
    %s65 = sadd.s32 %s64, 1
    %p68 = scmp.eq.s32.totalorder %s9, 1
    %p69 = scmp.ne.s32.totalorder %s64, %s66
    %p70 = scmp.eq.s32.totalorder %s9, 0
    %p71 = por %p69, %p70
    %p72 = scmp.ne.s32.totalorder %s64, %s66
    %p73 = scmp.eq.s32.totalorder %s14, 1
    %p74 = por %p72, %p73
    %p75 = scmp.ne.s32.totalorder %s66, %s67
    %p76 = scmp.eq.s32.totalorder %s14, 0
    %p77 = por %p75, %p76
    %p78 = scmp.ne.s32.totalorder %s66, %s67
    %p79 = scmp.eq.s32.totalorder %s15, 1
    %p80 = por %p78, %p79
    %p82 = scmp.ne.s32.totalorder %s67, %s81
    %p83 = scmp.eq.s32.totalorder %s15, 0
    %p84 = por %p82, %p83
    %s85 = ssub.s32 %s9, %s16
    %p86 = scmp.eq.s32.totalorder %s85, 0
    %s88 = sadd.s32 %s87, 1
    %s89 = scalar_select %p86, %s87, %s88
    %p92 = pneg %p86
    %p93 = scmp.eq.s32.totalorder %s9, 1
    %p94 = por %p92, %p93
    %p95 = scmp.ne.s32.totalorder %s87, %s90
    %p96 = scmp.eq.s32.totalorder %s9, 0
    %p97 = por %p95, %p96
    %p98 = scmp.ne.s32.totalorder %s87, %s90
    %p99 = scmp.eq.s32.totalorder %s14, 1
    %p100 = por %p98, %p99
    %p101 = scmp.ne.s32.totalorder %s90, %s91
    %p102 = scmp.eq.s32.totalorder %s14, 0
    %p103 = por %p101, %p102
    %p104 = scmp.ne.s32.totalorder %s90, %s91
    %p105 = scmp.eq.s32.totalorder %s15, 1
    %p106 = por %p104, %p105
    %p108 = scmp.ne.s32.totalorder %s91, %s107
    %p109 = scmp.eq.s32.totalorder %s15, 0
    %p110 = por %p108, %p109
    %p111 = scmp.le.s32.totalorder 1, %s9
    %p112 = scmp.lt.s32.totalorder %s9, 3
    %p113 = pnand %p111, %p112
    %p114 = pneg %p113
    // Predicated region
    $region9: #{down_pallas.5} parent=5 // pred_check
      _
    $region10: #{down_pallas.5} parent=5 // pred_check_branch
      %116 = sbr.rel (%p113) target = $region12
    $region11: #{down_pallas.5} parent=5 // pred_region
      %s117 = ssub.s32 %s9, 1
      // Predicated region
      $region13: #{down_pallas.5} parent=11 // pred_check
        %p118 = pneg %p56
      $region14: #{down_pallas.5} parent=11 // pred_check_branch
        %120 = sbr.rel (%p118) target = $region16
      $region15: #{down_pallas.5} parent=11 // pred_region
        _
      $region16: #{down_pallas.5} parent=11 // pred_fallthru
        _
      // Predicated region
      $region17: #{down_pallas.5} parent=11 // pred_check
        %p121 = pneg %p77
      $region18: #{down_pallas.5} parent=11 // pred_check_branch
        %123 = sbr.rel (%p121) target = $region20
      $region19: #{down_pallas.5} parent=11 // pred_region
        _
      $region20: #{down_pallas.5} parent=11 // pred_fallthru
        _
    $region12: #{down_pallas.5} parent=5 // pred_fallthru
      _
    %p124 = scmp.lt.s32.totalorder %s9, 2
    // Predicated region
    $region21: #{down_pallas.5} parent=5 // pred_check
      %p125 = pneg %p124
    $region22: #{down_pallas.5} parent=5 // pred_check_branch
      %127 = sbr.rel (%p125) target = $region24
    $region23: #{down_pallas.5} parent=5 // pred_region
      // Predicated region
      $region25: #{down_pallas.5} parent=23 // pred_check
        %p128 = pneg %p29
      $region26: #{down_pallas.5} parent=23 // pred_check_branch
        %130 = sbr.rel (%p128) target = $region28
      $region27: #{down_pallas.5} parent=23 // pred_region
        %p131 = scmp.lt.s32.totalorder %s9, 1
        %s132 = scalar_select %p131, %s9, 1
        %s133 = smul.addr %s132, 8
        %s134 = scalar_lea.vmem %s0, %s133
      $region28: #{down_pallas.5} parent=23 // pred_fallthru
        _
    $region24: #{down_pallas.5} parent=5 // pred_fallthru
      _
    %p135 = scmp.le.s32.totalorder 1, %s9
    %p136 = scmp.lt.s32.totalorder %s9, 3
    %p137 = pnand %p135, %p136
    %p138 = pneg %p137
    // Predicated region
    $region29: #{down_pallas.5} parent=5 // pred_check
      _
    $region30: #{down_pallas.5} parent=5 // pred_check_branch
      %140 = sbr.rel (%p137) target = $region32
    $region31: #{down_pallas.5} parent=5 // pred_region
      %s141 = ssub.s32 %s9, 1
      %p142 = scmp.lt.s32.totalorder %s14, 1
      %s143 = scalar_select %p142, %s14, 1
      %s144 = smul.addr %s143, 8
      %s145 = scalar_lea.vmem %s0, %s144
      %p146 = pneg %p35
      %p147 = pneg %p32
      %p148 = pneg %p56
      %p149 = pneg %p53
      %p150 = pneg %p77
      %p151 = pneg %p74
      %p152 = pneg %p103
      %p153 = pneg %p100
      %p154 = scmp.lt.s32.totalorder %s14, 1
      %s155 = scalar_select %p154, %s14, 1
      %s156 = smul.addr %s155, 8
      %s157 = scalar_lea.vmem %s3, %s156
      %p158 = scmp.lt.s32.totalorder %s14, 1
      %s159 = scalar_select %p158, %s14, 1
      %s160 = smul.addr %s159, 8
      %s161 = scalar_lea.vmem %s0, %s160
      %p162 = scmp.lt.s32.totalorder %s14, 1
      %s163 = scalar_select %p162, %s14, 1
      %s164 = smul.addr %s163, 8
      %s165 = scalar_lea.vmem %s3, %s164
      %v166 = vld [vmem:[%s161] sm:$0xff]
      %v167 = vld [vmem:[%s1] sm:$0x1]
      %v169 = vlaneseq
      %v170 = vshrl.u32 %v169, 7
      %v171 = vsub.s32 0, %v170
      %v172 = vrot.slane %v167, %v171
      %v174 = vmul.f32 %v166, %v172
      %v175 = vld [vmem:[%s2] sm:$0x1]
      %v177 = vlaneseq
      %v178 = vshrl.u32 %v177, 7
      %v179 = vsub.s32 0, %v178
      %v180 = vrot.slane %v175, %v179
      %v182 = vadd.f32 %v174, %v180
      %v183 = vmax.f32 %v182, 0.0
      %vm184 = vcmask 523264
      %185 = vst.msk [vmem:[%s165] sm:$0xff] %vm184, %v183
      %p186 = scmp.lt.s32.totalorder %s14, 1
      %s187 = scalar_select %p186, %s14, 1
      %s188 = smul.addr %s187, 8
      %s189 = scalar_lea.vmem %s3, %s188
      // Predicated region
      $region33: #{down_pallas.5} parent=31 // pred_check
        %p190 = pneg %p100
      $region34: #{down_pallas.5} parent=31 // pred_check_branch
        %192 = sbr.rel (%p190) target = $region36
      $region35: #{down_pallas.5} parent=31 // pred_region
        _
      $region36: #{down_pallas.5} parent=31 // pred_fallthru
        _
    $region32: #{down_pallas.5} parent=5 // pred_fallthru
      _
    %p193 = scmp.le.s32.totalorder 2, %s9
    // Predicated region
    $region37: #{down_pallas.5} parent=5 // pred_check
      %p194 = pneg %p193
    $region38: #{down_pallas.5} parent=5 // pred_check_branch
      %196 = sbr.rel (%p194) target = $region40
    $region39: #{down_pallas.5} parent=5 // pred_region
      %s197 = ssub.s32 %s9, 2
      // Predicated region
      $region41: #{down_pallas.5} parent=39 // pred_check
        %p198 = pneg %p106
      $region42: #{down_pallas.5} parent=39 // pred_check_branch
        %200 = sbr.rel (%p198) target = $region44
      $region43: #{down_pallas.5} parent=39 // pred_region
        %p201 = scmp.lt.s32.totalorder %s15, 1
        %s202 = scalar_select %p201, %s15, 1
        %s203 = smul.addr %s202, 8
        %s204 = scalar_lea.vmem %s3, %s203
      $region44: #{down_pallas.5} parent=39 // pred_fallthru
        _
    $region40: #{down_pallas.5} parent=5 // pred_fallthru
      _
  $region6: #{down_pallas.5} parent=0 // loop_footer
    %s13 = sadd.s32 1, %s9
  $region7: #{down_pallas.5} parent=0 // loop_footer_branch
    %8 = sbr.rel target = $region3
  $region8: #{down_pallas.5} parent=0 // loop_exit
    _

// kernel: down_pallas.4
$region0: #{down_pallas.4}
  #allocation0 [shape = 'u32[]', space=smem, size = 0x4, offset = 0x4, fixed_abs, tag = 'smem constant byte address 0x4 - core index']
  #allocation1 [shape = 'u32[144,128]{1,0:T(1,128)}', space=vmem, size = 0x12000, scoped, tag = 'internal scratch']
  #allocation2 [shape = 'f32[10,10,8]{2,1,0:T(8,128)}', space=vmem, size = 0x14000, scoped, tag = 'scratch operand']
  %s0 = inlined_call_operand.vmem [shape: f32[2,10,10,8], index: 0, kind: input, shape index: {}]
  %s1 = inlined_call_operand.vmem [shape: f32[1,1,8], index: 1, kind: input, shape index: {}]
  %s2 = inlined_call_operand.vmem [shape: f32[1,1,8], index: 2, kind: input, shape index: {}]
  %s3 = inlined_call_operand.vmem [shape: bf16[9,8,8], index: 3, kind: input, shape index: {}]
  %s4 = inlined_call_operand.vmem [shape: f32[2,64,8], index: 4, kind: output, shape index: {0}]
  %s5 = inlined_call_operand.vmem [shape: f32[2,2,8], index: 5, kind: output, shape index: {1}]
  %6 = xla_tuple %s4, %s5
  %s7 = sld [smem:[#allocation0]]
  $region57: #{down_pallas.4} parent=0
    _
  %s9 = ssub.s32 1, %s7
  %s10 = scalar_select 0, %s9, %s7
  loop: start=0, step=1, limit=4
  $region2: #{down_pallas.4} parent=0 // loop_pre_header
    _
  $region3: #{down_pallas.4} parent=0 // loop_header
    %s12 = sphi 0, %s16
    %p13 = scmp.ge.s32.totalorder %s12, 4
    %s22 = sphi 0, %s24
    %s25 = sphi 0, %s22
    %s26 = sphi 0, %s25
    %s42 = sphi 0, %s26
    %s46 = sphi 0, %s46
    %s48 = sphi 0, %s46
    %s49 = sphi 0, %s48
    %s63 = sphi 0, %s49
    %s67 = sphi 0, %s67
    %s69 = sphi 0, %s67
    %s70 = sphi 0, %s69
    %s84 = sphi 0, %s70
    %s88 = sphi 0, %s88
    %s90 = sphi 0, %s88
    %s91 = sphi 0, %s90
    %s105 = sphi 0, %s91
    %s111 = sphi 0, %s113
    %s114 = sphi 0, %s111
    %s115 = sphi 0, %s114
    %s131 = sphi 0, %s115
    %s137 = sphi 0, %s139
    %s140 = sphi 0, %s137
    %s141 = sphi 0, %s140
    %s157 = sphi 0, %s141
  $region4: #{down_pallas.4} parent=0 // loop_header_branch
    %15 = sbr.rel (%p13) target = $region8
  $region5: #{down_pallas.4} parent=0 // loop_body
    %s17 = ssub.s32 %s12, 1
    %s18 = ssub.s32 %s12, 2
    %s19 = sadd.s32 %s12, 1
    %s20 = ssub.s32 %s12, %s19
    %p21 = scmp.eq.s32.totalorder %s20, 0
    %s23 = sadd.s32 %s22, 1
    %s24 = scalar_select %p21, %s22, %s23
    %p27 = pneg %p21
    %p28 = scmp.eq.s32.totalorder %s12, 1
    %p29 = por %p27, %p28
    %p30 = scmp.ne.s32.totalorder %s22, %s25
    %p31 = scmp.eq.s32.totalorder %s12, 0
    %p32 = por %p30, %p31
    %p33 = scmp.ne.s32.totalorder %s22, %s25
    %p34 = scmp.eq.s32.totalorder %s17, 1
    %p35 = por %p33, %p34
    %p36 = scmp.ne.s32.totalorder %s25, %s26
    %p37 = scmp.eq.s32.totalorder %s17, 0
    %p38 = por %p36, %p37
    %p39 = scmp.ne.s32.totalorder %s25, %s26
    %p40 = scmp.eq.s32.totalorder %s18, 1
    %p41 = por %p39, %p40
    %p43 = scmp.ne.s32.totalorder %s26, %s42
    %p44 = scmp.eq.s32.totalorder %s18, 0
    %p45 = por %p43, %p44
    %s47 = sadd.s32 %s46, 1
    %p50 = scmp.eq.s32.totalorder %s12, 1
    %p51 = scmp.ne.s32.totalorder %s46, %s48
    %p52 = scmp.eq.s32.totalorder %s12, 0
    %p53 = por %p51, %p52
    %p54 = scmp.ne.s32.totalorder %s46, %s48
    %p55 = scmp.eq.s32.totalorder %s17, 1
    %p56 = por %p54, %p55
    %p57 = scmp.ne.s32.totalorder %s48, %s49
    %p58 = scmp.eq.s32.totalorder %s17, 0
    %p59 = por %p57, %p58
    %p60 = scmp.ne.s32.totalorder %s48, %s49
    %p61 = scmp.eq.s32.totalorder %s18, 1
    %p62 = por %p60, %p61
    %p64 = scmp.ne.s32.totalorder %s49, %s63
    %p65 = scmp.eq.s32.totalorder %s18, 0
    %p66 = por %p64, %p65
    %s68 = sadd.s32 %s67, 1
    %p71 = scmp.eq.s32.totalorder %s12, 1
    %p72 = scmp.ne.s32.totalorder %s67, %s69
    %p73 = scmp.eq.s32.totalorder %s12, 0
    %p74 = por %p72, %p73
    %p75 = scmp.ne.s32.totalorder %s67, %s69
    %p76 = scmp.eq.s32.totalorder %s17, 1
    %p77 = por %p75, %p76
    %p78 = scmp.ne.s32.totalorder %s69, %s70
    %p79 = scmp.eq.s32.totalorder %s17, 0
    %p80 = por %p78, %p79
    %p81 = scmp.ne.s32.totalorder %s69, %s70
    %p82 = scmp.eq.s32.totalorder %s18, 1
    %p83 = por %p81, %p82
    %p85 = scmp.ne.s32.totalorder %s70, %s84
    %p86 = scmp.eq.s32.totalorder %s18, 0
    %p87 = por %p85, %p86
    %s89 = sadd.s32 %s88, 1
    %p92 = scmp.eq.s32.totalorder %s12, 1
    %p93 = scmp.ne.s32.totalorder %s88, %s90
    %p94 = scmp.eq.s32.totalorder %s12, 0
    %p95 = por %p93, %p94
    %p96 = scmp.ne.s32.totalorder %s88, %s90
    %p97 = scmp.eq.s32.totalorder %s17, 1
    %p98 = por %p96, %p97
    %p99 = scmp.ne.s32.totalorder %s90, %s91
    %p100 = scmp.eq.s32.totalorder %s17, 0
    %p101 = por %p99, %p100
    %p102 = scmp.ne.s32.totalorder %s90, %s91
    %p103 = scmp.eq.s32.totalorder %s18, 1
    %p104 = por %p102, %p103
    %p106 = scmp.ne.s32.totalorder %s91, %s105
    %p107 = scmp.eq.s32.totalorder %s18, 0
    %p108 = por %p106, %p107
    %s109 = ssub.s32 %s12, %s19
    %p110 = scmp.eq.s32.totalorder %s109, 0
    %s112 = sadd.s32 %s111, 1
    %s113 = scalar_select %p110, %s111, %s112
    %p116 = pneg %p110
    %p117 = scmp.eq.s32.totalorder %s12, 1
    %p118 = por %p116, %p117
    %p119 = scmp.ne.s32.totalorder %s111, %s114
    %p120 = scmp.eq.s32.totalorder %s12, 0
    %p121 = por %p119, %p120
    %p122 = scmp.ne.s32.totalorder %s111, %s114
    %p123 = scmp.eq.s32.totalorder %s17, 1
    %p124 = por %p122, %p123
    %p125 = scmp.ne.s32.totalorder %s114, %s115
    %p126 = scmp.eq.s32.totalorder %s17, 0
    %p127 = por %p125, %p126
    %p128 = scmp.ne.s32.totalorder %s114, %s115
    %p129 = scmp.eq.s32.totalorder %s18, 1
    %p130 = por %p128, %p129
    %p132 = scmp.ne.s32.totalorder %s115, %s131
    %p133 = scmp.eq.s32.totalorder %s18, 0
    %p134 = por %p132, %p133
    %s135 = ssub.s32 %s12, %s19
    %p136 = scmp.eq.s32.totalorder %s135, 0
    %s138 = sadd.s32 %s137, 1
    %s139 = scalar_select %p136, %s137, %s138
    %p142 = pneg %p136
    %p143 = scmp.eq.s32.totalorder %s12, 1
    %p144 = por %p142, %p143
    %p145 = scmp.ne.s32.totalorder %s137, %s140
    %p146 = scmp.eq.s32.totalorder %s12, 0
    %p147 = por %p145, %p146
    %p148 = scmp.ne.s32.totalorder %s137, %s140
    %p149 = scmp.eq.s32.totalorder %s17, 1
    %p150 = por %p148, %p149
    %p151 = scmp.ne.s32.totalorder %s140, %s141
    %p152 = scmp.eq.s32.totalorder %s17, 0
    %p153 = por %p151, %p152
    %p154 = scmp.ne.s32.totalorder %s140, %s141
    %p155 = scmp.eq.s32.totalorder %s18, 1
    %p156 = por %p154, %p155
    %p158 = scmp.ne.s32.totalorder %s141, %s157
    %p159 = scmp.eq.s32.totalorder %s18, 0
    %p160 = por %p158, %p159
    %p161 = scmp.le.s32.totalorder 1, %s12
    %p162 = scmp.lt.s32.totalorder %s12, 3
    %p163 = pnand %p161, %p162
    %p164 = pneg %p163
    // Predicated region
    $region9: #{down_pallas.4} parent=5 // pred_check
      _
    $region10: #{down_pallas.4} parent=5 // pred_check_branch
      %166 = sbr.rel (%p163) target = $region12
    $region11: #{down_pallas.4} parent=5 // pred_region
      %s167 = ssub.s32 %s12, 1
      // Predicated region
      $region13: #{down_pallas.4} parent=11 // pred_check
        %p168 = pneg %p59
      $region14: #{down_pallas.4} parent=11 // pred_check_branch
        %170 = sbr.rel (%p168) target = $region16
      $region15: #{down_pallas.4} parent=11 // pred_region
        _
      $region16: #{down_pallas.4} parent=11 // pred_fallthru
        _
      // Predicated region
      $region17: #{down_pallas.4} parent=11 // pred_check
        %p171 = pneg %p80
      $region18: #{down_pallas.4} parent=11 // pred_check_branch
        %173 = sbr.rel (%p171) target = $region20
      $region19: #{down_pallas.4} parent=11 // pred_region
        _
      $region20: #{down_pallas.4} parent=11 // pred_fallthru
        _
      // Predicated region
      $region21: #{down_pallas.4} parent=11 // pred_check
        %p174 = pneg %p101
      $region22: #{down_pallas.4} parent=11 // pred_check_branch
        %176 = sbr.rel (%p174) target = $region24
      $region23: #{down_pallas.4} parent=11 // pred_region
        _
      $region24: #{down_pallas.4} parent=11 // pred_fallthru
        _
    $region12: #{down_pallas.4} parent=5 // pred_fallthru
      _
    %p177 = scmp.lt.s32.totalorder %s12, 2
    // Predicated region
    $region25: #{down_pallas.4} parent=5 // pred_check
      %p178 = pneg %p177
    $region26: #{down_pallas.4} parent=5 // pred_check_branch
      %180 = sbr.rel (%p178) target = $region28
    $region27: #{down_pallas.4} parent=5 // pred_region
      // Predicated region
      $region29: #{down_pallas.4} parent=27 // pred_check
        %p181 = pneg %p32
      $region30: #{down_pallas.4} parent=27 // pred_check_branch
        %183 = sbr.rel (%p181) target = $region32
      $region31: #{down_pallas.4} parent=27 // pred_region
        %p184 = scmp.lt.s32.totalorder %s12, 1
        %s185 = scalar_select %p184, %s12, 1
        %s186 = smul.addr %s185, 20
        %s187 = smul.addr %s186, 8
        %s188 = scalar_lea.vmem %s0, %s187
      $region32: #{down_pallas.4} parent=27 // pred_fallthru
        _
    $region28: #{down_pallas.4} parent=5 // pred_fallthru
      _
    %p189 = scmp.le.s32.totalorder 1, %s12
    %p190 = scmp.lt.s32.totalorder %s12, 3
    %p191 = pnand %p189, %p190
    %p192 = pneg %p191
    // Predicated region
    $region33: #{down_pallas.4} parent=5 // pred_check
      _
    $region34: #{down_pallas.4} parent=5 // pred_check_branch
      %194 = sbr.rel (%p191) target = $region36
    $region35: #{down_pallas.4} parent=5 // pred_region
      %s195 = ssub.s32 %s12, 1
      %p196 = scmp.lt.s32.totalorder %s17, 1
      %s197 = scalar_select %p196, %s17, 1
      %s198 = smul.addr %s197, 20
      %s199 = smul.addr %s198, 8
      %s200 = scalar_lea.vmem %s0, %s199
      %p201 = pneg %p38
      %p202 = pneg %p35
      %p203 = pneg %p59
      %p204 = pneg %p56
      %p205 = pneg %p80
      %p206 = pneg %p77
      %p207 = pneg %p101
      %p208 = pneg %p98
      %p209 = pneg %p127
      %p210 = pneg %p124
      %p211 = scmp.lt.s32.totalorder %s17, 1
      %s212 = scalar_select %p211, %s17, 1
      %s213 = smul.addr %s212, 8
      %s214 = smul.addr %s213, 8
      %s215 = scalar_lea.vmem %s4, %s214
      %p216 = pneg %p153
      %p217 = pneg %p150
      %p218 = scmp.lt.s32.totalorder %s17, 1
      %s219 = scalar_select %p218, %s17, 1
      %s220 = smul.addr %s219, 2
      %s221 = scalar_lea.vmem %s5, %s220
      %p222 = scmp.lt.s32.totalorder %s17, 1
      %s223 = scalar_select %p222, %s17, 1
      %s224 = smul.addr %s223, 20
      %s225 = smul.addr %s224, 8
      %s226 = scalar_lea.vmem %s0, %s225
      %p227 = scmp.lt.s32.totalorder %s17, 1
      %s228 = scalar_select %p227, %s17, 1
      %s229 = smul.addr %s228, 8
      %s230 = smul.addr %s229, 8
      %s231 = scalar_lea.vmem %s4, %s230
      %p232 = scmp.lt.s32.totalorder %s17, 1
      %s233 = scalar_select %p232, %s17, 1
      %s234 = smul.addr %s233, 2
      %s235 = scalar_lea.vmem %s5, %s234
      %v237 = vld [vmem:[%s226] sm:$0xff]
      %v238 = vld [vmem:[%s226 + $0x8] sm:$0x3]
      %v239 = vld [vmem:[%s226 + $0x10] sm:$0xff]
      %v240 = vld [vmem:[%s226 + $0x18] sm:$0x3]
      %v241 = vld [vmem:[%s226 + $0x20] sm:$0xff]
      %v242 = vld [vmem:[%s226 + $0x28] sm:$0x3]
      %v243 = vld [vmem:[%s226 + $0x30] sm:$0xff]
      %v244 = vld [vmem:[%s226 + $0x38] sm:$0x3]
      %v245 = vld [vmem:[%s226 + $0x40] sm:$0xff]
      %v246 = vld [vmem:[%s226 + $0x48] sm:$0x3]
      %v247 = vld [vmem:[%s226 + $0x50] sm:$0xff]
      %v248 = vld [vmem:[%s226 + $0x58] sm:$0x3]
      %v249 = vld [vmem:[%s226 + $0x60] sm:$0xff]
      %v250 = vld [vmem:[%s226 + $0x68] sm:$0x3]
      %v251 = vld [vmem:[%s226 + $0x70] sm:$0xff]
      %v252 = vld [vmem:[%s226 + $0x78] sm:$0x3]
      %v253 = vld [vmem:[%s226 + $0x80] sm:$0xff]
      %v254 = vld [vmem:[%s226 + $0x88] sm:$0x3]
      %v255 = vld [vmem:[%s226 + $0x90] sm:$0xff]
      %v256 = vld [vmem:[%s226 + $0x98] sm:$0x3]
      %v257 = vld [vmem:[%s1] sm:$0x1]
      %v259 = vlaneseq
      %v260 = vshrl.u32 %v259, 7
      %v261 = vsub.s32 0, %v260
      %v262 = vrot.slane %v257, %v261
      %v264 = vmul.f32 %v237, %v262
      %v265 = vmul.f32 %v238, %v262
      %v266 = vmul.f32 %v239, %v262
      %v267 = vmul.f32 %v240, %v262
      %v268 = vmul.f32 %v241, %v262
      %v269 = vmul.f32 %v242, %v262
      %v270 = vmul.f32 %v243, %v262
      %v271 = vmul.f32 %v244, %v262
      %v272 = vmul.f32 %v245, %v262
      %v273 = vmul.f32 %v246, %v262
      %v274 = vmul.f32 %v247, %v262
      %v275 = vmul.f32 %v248, %v262
      %v276 = vmul.f32 %v249, %v262
      %v277 = vmul.f32 %v250, %v262
      %v278 = vmul.f32 %v251, %v262
      %v279 = vmul.f32 %v252, %v262
      %v280 = vmul.f32 %v253, %v262
      %v281 = vmul.f32 %v254, %v262
      %v282 = vmul.f32 %v255, %v262
      %v283 = vmul.f32 %v256, %v262
      %v284 = vld [vmem:[%s2] sm:$0x1]
      %v286 = vlaneseq
      %v287 = vshrl.u32 %v286, 7
      %v288 = vsub.s32 0, %v287
      %v289 = vrot.slane %v284, %v288
      %v291 = vadd.f32 %v264, %v289
      %v292 = vadd.f32 %v265, %v289
      %v293 = vadd.f32 %v266, %v289
      %v294 = vadd.f32 %v267, %v289
      %v295 = vadd.f32 %v268, %v289
      %v296 = vadd.f32 %v269, %v289
      %v297 = vadd.f32 %v270, %v289
      %v298 = vadd.f32 %v271, %v289
      %v299 = vadd.f32 %v272, %v289
      %v300 = vadd.f32 %v273, %v289
      %v301 = vadd.f32 %v274, %v289
      %v302 = vadd.f32 %v275, %v289
      %v303 = vadd.f32 %v276, %v289
      %v304 = vadd.f32 %v277, %v289
      %v305 = vadd.f32 %v278, %v289
      %v306 = vadd.f32 %v279, %v289
      %v307 = vadd.f32 %v280, %v289
      %v308 = vadd.f32 %v281, %v289
      %v309 = vadd.f32 %v282, %v289
      %v310 = vadd.f32 %v283, %v289
      %v311 = vmax.f32 %v291, 0.0
      %v312 = vmax.f32 %v292, 0.0
      %v313 = vmax.f32 %v293, 0.0
      %v314 = vmax.f32 %v294, 0.0
      %v315 = vmax.f32 %v295, 0.0
      %v316 = vmax.f32 %v296, 0.0
      %v317 = vmax.f32 %v297, 0.0
      %v318 = vmax.f32 %v298, 0.0
      %v319 = vmax.f32 %v299, 0.0
      %v320 = vmax.f32 %v300, 0.0
      %v321 = vmax.f32 %v301, 0.0
      %v322 = vmax.f32 %v302, 0.0
      %v323 = vmax.f32 %v303, 0.0
      %v324 = vmax.f32 %v304, 0.0
      %v325 = vmax.f32 %v305, 0.0
      %v326 = vmax.f32 %v306, 0.0
      %v327 = vmax.f32 %v307, 0.0
      %v328 = vmax.f32 %v308, 0.0
      %v329 = vmax.f32 %v309, 0.0
      %v330 = vmax.f32 %v310, 0.0
      %vm331 = vcmask 64512
      %332 = vst.msk [vmem:[#allocation2] sm:$0xff] %vm331, %v311
      %vm333 = vcmask 58368
      %334 = vst.msk [vmem:[#allocation2 + $0x8] sm:$0x3] %vm333, %v312
      %335 = vst.msk [vmem:[#allocation2 + $0x10] sm:$0xff] %vm331, %v313
      %336 = vst.msk [vmem:[#allocation2 + $0x18] sm:$0x3] %vm333, %v314
      %337 = vst.msk [vmem:[#allocation2 + $0x20] sm:$0xff] %vm331, %v315
      %338 = vst.msk [vmem:[#allocation2 + $0x28] sm:$0x3] %vm333, %v316
      %339 = vst.msk [vmem:[#allocation2 + $0x30] sm:$0xff] %vm331, %v317
      %340 = vst.msk [vmem:[#allocation2 + $0x38] sm:$0x3] %vm333, %v318
      %341 = vst.msk [vmem:[#allocation2 + $0x40] sm:$0xff] %vm331, %v319
      %342 = vst.msk [vmem:[#allocation2 + $0x48] sm:$0x3] %vm333, %v320
      %343 = vst.msk [vmem:[#allocation2 + $0x50] sm:$0xff] %vm331, %v321
      %344 = vst.msk [vmem:[#allocation2 + $0x58] sm:$0x3] %vm333, %v322
      %345 = vst.msk [vmem:[#allocation2 + $0x60] sm:$0xff] %vm331, %v323
      %346 = vst.msk [vmem:[#allocation2 + $0x68] sm:$0x3] %vm333, %v324
      %347 = vst.msk [vmem:[#allocation2 + $0x70] sm:$0xff] %vm331, %v325
      %348 = vst.msk [vmem:[#allocation2 + $0x78] sm:$0x3] %vm333, %v326
      %349 = vst.msk [vmem:[#allocation2 + $0x80] sm:$0xff] %vm331, %v327
      %350 = vst.msk [vmem:[#allocation2 + $0x88] sm:$0x3] %vm333, %v328
      %351 = vst.msk [vmem:[#allocation2 + $0x90] sm:$0xff] %vm331, %v329
      %352 = vst.msk [vmem:[#allocation2 + $0x98] sm:$0x3] %vm333, %v330
      %v353 = vld [vmem:[#allocation2] sm:$0xff]
      %v354 = vld [vmem:[#allocation2 + $0x10] sm:$0xff]
      %v355 = vld [vmem:[#allocation2 + $0x20] sm:$0xff]
      %v356 = vld [vmem:[#allocation2 + $0x30] sm:$0xff]
      %v357 = vld [vmem:[#allocation2 + $0x40] sm:$0xff]
      %v358 = vld [vmem:[#allocation2 + $0x50] sm:$0xff]
      %v359 = vld [vmem:[#allocation2 + $0x60] sm:$0xff]
      %v360 = vld [vmem:[#allocation2 + $0x70] sm:$0xff]
      %v361 = vpack.c.bf16 %v354, %v353
      %v362 = vpack.c.bf16 %v356, %v355
      %v363 = vpack.c.bf16 %v358, %v357
      %v364 = vpack.c.bf16 %v360, %v359
      %v365 = vld [vmem:[%s3] sm:$0xf]
      %v367 = vsel %vm331, %v361, 0
      %v370 = vsel %vm331, %v362, 0
      %v373 = vsel %vm331, %v363, 0
      %v376 = vsel %vm331, %v364, 0
      %vm378 = vcmask 1043456
      %v380 = vsel %vm378, %v365, 0
      %382 = vmatprep.subr.bf16.mxu0 0
      %383 = vmatpush1.bf16.msra.mxu0 %v380
      %384 = vmatprep.subr.bf16.mxu0 0
      %385 = vmatpush1.bf16.msra.mxu0 0
      %386 = vmatprep.subr.bf16.mxu0 0
      %387 = vmatpush1.bf16.msra.mxu0 0
      %388 = vmatprep.subr.bf16.mxu0 0
      %389 = vmatpush1.bf16.msra.mxu0 0
      %390 = vmatprep.subr.bf16.mxu0 0
      %391 = vmatpush1.bf16.msra.mxu0 0
      %392 = vmatprep.subr.bf16.mxu0 0
      %393 = vmatpush1.bf16.msra.mxu0 0
      %394 = vmatprep.subr.bf16.mxu0 0
      %395 = vmatpush1.bf16.msra.mxu0 0
      %396 = vmatprep.subr.bf16.mxu0 0
      %397 = vmatpush1.bf16.msra.mxu0 0
      %398 = vmatprep.subr.bf16.mxu0 0
      %399 = vmatpush1.bf16.msra.mxu0 0
      %400 = vmatprep.subr.bf16.mxu0 0
      %401 = vmatpush1.bf16.msra.mxu0 0
      %402 = vmatprep.subr.bf16.mxu0 0
      %403 = vmatpush1.bf16.msra.mxu0 0
      %404 = vmatprep.subr.bf16.mxu0 0
      %405 = vmatpush1.bf16.msra.mxu0 0
      %406 = vmatprep.subr.bf16.mxu0 0
      %407 = vmatpush1.bf16.msra.mxu0 0
      %408 = vmatprep.subr.bf16.mxu0 0
      %409 = vmatpush1.bf16.msra.mxu0 0
      %410 = vmatprep.subr.bf16.mxu0 0
      %411 = vmatpush1.bf16.msra.mxu0 0
      %412 = vmatprep.subr.bf16.mxu0 0
      %413 = vmatpush1.bf16.msra.mxu0 0
      %414 = vmatprep.mubr.bf16.mxu0 0
      %415 = vmatmul.mubr.bf16.gmra.mrb[0].mxu0 %v367
      %v416 = vpop.f32.mrb[0].mxu0
      %v417 = vadd.f32 0.0, %v416
      %v418 = vpop.f32.mrb[0].mxu0
      %v419 = vpop.f32.mrb[0].mxu0
      %v420 = vadd.f32 0.0, %v419
      %v421 = vpop.f32.mrb[0].mxu0
      %422 = vmatprep.mubr.bf16.mxu0 0
      %423 = vmatmul.mubr.bf16.gmra.mrb[0].mxu0 %v370
      %v424 = vpop.f32.mrb[0].mxu0
      %v425 = vadd.f32 0.0, %v424
      %v426 = vpop.f32.mrb[0].mxu0
      %v427 = vpop.f32.mrb[0].mxu0
      %v428 = vadd.f32 0.0, %v427
      %v429 = vpop.f32.mrb[0].mxu0
      %430 = vmatprep.mubr.bf16.mxu0 0
      %431 = vmatmul.mubr.bf16.gmra.mrb[0].mxu0 %v373
      %v432 = vpop.f32.mrb[0].mxu0
      %v433 = vadd.f32 0.0, %v432
      %v434 = vpop.f32.mrb[0].mxu0
      %v435 = vpop.f32.mrb[0].mxu0
      %v436 = vadd.f32 0.0, %v435
      %v437 = vpop.f32.mrb[0].mxu0
      %438 = vmatprep.mubr.bf16.mxu0 0
      %439 = vmatmul.mubr.bf16.gmra.mrb[0].mxu0 %v376
      %v440 = vpop.f32.mrb[0].mxu0
      %v441 = vadd.f32 0.0, %v440
      %v442 = vpop.f32.mrb[0].mxu0
      %v443 = vpop.f32.mrb[0].mxu0
      %v444 = vadd.f32 0.0, %v443
      %v445 = vpop.f32.mrb[0].mxu0
      %446 = vdwg.mxu0
      %447 = vst.msk [vmem:[%s231] sm:$0xff] %vm331, %v417
      %448 = vst.msk [vmem:[%s231 + $0x8] sm:$0xff] %vm331, %v420
      %449 = vst.msk [vmem:[%s231 + $0x10] sm:$0xff] %vm331, %v425
      %450 = vst.msk [vmem:[%s231 + $0x18] sm:$0xff] %vm331, %v428
      %451 = vst.msk [vmem:[%s231 + $0x20] sm:$0xff] %vm331, %v433
      %452 = vst.msk [vmem:[%s231 + $0x28] sm:$0xff] %vm331, %v436
      %453 = vst.msk [vmem:[%s231 + $0x30] sm:$0xff] %vm331, %v441
      %454 = vst.msk [vmem:[%s231 + $0x38] sm:$0xff] %vm331, %v444
      %v455 = vld [vmem:[#allocation2 + $0x1] sm:$0xff]
      %v456 = vld [vmem:[#allocation2 + $0x11] sm:$0xff]
      %v457 = vld [vmem:[#allocation2 + $0x21] sm:$0xff]
      %v458 = vld [vmem:[#allocation2 + $0x31] sm:$0xff]
      %v459 = vld [vmem:[#allocation2 + $0x41] sm:$0xff]
      %v460 = vld [vmem:[#allocation2 + $0x51] sm:$0xff]
      %v461 = vld [vmem:[#allocation2 + $0x61] sm:$0xff]
      %v462 = vld [vmem:[#allocation2 + $0x71] sm:$0xff]
      %v463 = vpack.c.bf16 %v456, %v455
      %v464 = vpack.c.bf16 %v458, %v457
      %v465 = vpack.c.bf16 %v460, %v459
      %v466 = vpack.c.bf16 %v462, %v461
      %s467 = scalar_lea.vmem %s3, 4
      %v468 = vld [vmem:[%s467] sm:$0xf]
      %v470 = vsel %vm331, %v463, 0
      %v473 = vsel %vm331, %v464, 0
      %v476 = vsel %vm331, %v465, 0
      %v479 = vsel %vm331, %v466, 0
      %v482 = vsel %vm378, %v468, 0
      %484 = vmatprep.subr.bf16.mxu0 0
      %485 = vmatpush1.bf16.msra.mxu0 %v482
      %486 = vmatprep.subr.bf16.mxu0 0
      %487 = vmatpush1.bf16.msra.mxu0 0
      %488 = vmatprep.subr.bf16.mxu0 0
      %489 = vmatpush1.bf16.msra.mxu0 0
      %490 = vmatprep.subr.bf16.mxu0 0
      %491 = vmatpush1.bf16.msra.mxu0 0
      %492 = vmatprep.subr.bf16.mxu0 0
      %493 = vmatpush1.bf16.msra.mxu0 0
      %494 = vmatprep.subr.bf16.mxu0 0
      %495 = vmatpush1.bf16.msra.mxu0 0
      %496 = vmatprep.subr.bf16.mxu0 0
      %497 = vmatpush1.bf16.msra.mxu0 0
      %498 = vmatprep.subr.bf16.mxu0 0
      %499 = vmatpush1.bf16.msra.mxu0 0
      %500 = vmatprep.subr.bf16.mxu0 0
      %501 = vmatpush1.bf16.msra.mxu0 0
      %502 = vmatprep.subr.bf16.mxu0 0
      %503 = vmatpush1.bf16.msra.mxu0 0
      %504 = vmatprep.subr.bf16.mxu0 0
      %505 = vmatpush1.bf16.msra.mxu0 0
      %506 = vmatprep.subr.bf16.mxu0 0
      %507 = vmatpush1.bf16.msra.mxu0 0
      %508 = vmatprep.subr.bf16.mxu0 0
      %509 = vmatpush1.bf16.msra.mxu0 0
      %510 = vmatprep.subr.bf16.mxu0 0
      %511 = vmatpush1.bf16.msra.mxu0 0
      %512 = vmatprep.subr.bf16.mxu0 0
      %513 = vmatpush1.bf16.msra.mxu0 0
      %514 = vmatprep.subr.bf16.mxu0 0
      %515 = vmatpush1.bf16.msra.mxu0 0
      %516 = vmatprep.mubr.bf16.mxu0 0
      %517 = vmatmul.mubr.bf16.gmra.mrb[0].mxu0 %v470
      %v518 = vpop.f32.mrb[0].mxu0
      %v519 = vadd.f32 0.0, %v518
      %v520 = vpop.f32.mrb[0].mxu0
      %v521 = vpop.f32.mrb[0].mxu0
      %v522 = vadd.f32 0.0, %v521
      %v523 = vpop.f32.mrb[0].mxu0
      %524 = vmatprep.mubr.bf16.mxu0 0
      %525 = vmatmul.mubr.bf16.gmra.mrb[0].mxu0 %v473
      %v526 = vpop.f32.mrb[0].mxu0
      %v527 = vadd.f32 0.0, %v526
      %v528 = vpop.f32.mrb[0].mxu0
      %v529 = vpop.f32.mrb[0].mxu0
      %v530 = vadd.f32 0.0, %v529
      %v531 = vpop.f32.mrb[0].mxu0
      %532 = vmatprep.mubr.bf16.mxu0 0
      %533 = vmatmul.mubr.bf16.gmra.mrb[0].mxu0 %v476
      %v534 = vpop.f32.mrb[0].mxu0
      %v535 = vadd.f32 0.0, %v534
      %v536 = vpop.f32.mrb[0].mxu0
      %v537 = vpop.f32.mrb[0].mxu0
      %v538 = vadd.f32 0.0, %v537
      %v539 = vpop.f32.mrb[0].mxu0
      %540 = vmatprep.mubr.bf16.mxu0 0
      %541 = vmatmul.mubr.bf16.gmra.mrb[0].mxu0 %v479
      %v542 = vpop.f32.mrb[0].mxu0
      %v543 = vadd.f32 0.0, %v542
      %v544 = vpop.f32.mrb[0].mxu0
      %v545 = vpop.f32.mrb[0].mxu0
      %v546 = vadd.f32 0.0, %v545
      %v547 = vpop.f32.mrb[0].mxu0
      %548 = vdwg.mxu0
      %v549 = vld [vmem:[%s231] sm:$0xff]
      %v550 = vld [vmem:[%s231 + $0x8] sm:$0xff]
      %v551 = vld [vmem:[%s231 + $0x10] sm:$0xff]
      %v552 = vld [vmem:[%s231 + $0x18] sm:$0xff]
      %v553 = vld [vmem:[%s231 + $0x20] sm:$0xff]
      %v554 = vld [vmem:[%s231 + $0x28] sm:$0xff]
      %v555 = vld [vmem:[%s231 + $0x30] sm:$0xff]
      %v556 = vld [vmem:[%s231 + $0x38] sm:$0xff]
      %v557 = vadd.f32 %v549, %v519
      %v558 = vadd.f32 %v550, %v522
      %v559 = vadd.f32 %v551, %v527
      %v560 = vadd.f32 %v552, %v530
      %v561 = vadd.f32 %v553, %v535
      %v562 = vadd.f32 %v554, %v538
      %v563 = vadd.f32 %v555, %v543
      %v564 = vadd.f32 %v556, %v546
      %565 = vst.msk [vmem:[%s231] sm:$0xff] %vm331, %v557
      %566 = vst.msk [vmem:[%s231 + $0x8] sm:$0xff] %vm331, %v558
      %567 = vst.msk [vmem:[%s231 + $0x10] sm:$0xff] %vm331, %v559
      %568 = vst.msk [vmem:[%s231 + $0x18] sm:$0xff] %vm331, %v560
      %569 = vst.msk [vmem:[%s231 + $0x20] sm:$0xff] %vm331, %v561
      %570 = vst.msk [vmem:[%s231 + $0x28] sm:$0xff] %vm331, %v562
      %571 = vst.msk [vmem:[%s231 + $0x30] sm:$0xff] %vm331, %v563
      %572 = vst.msk [vmem:[%s231 + $0x38] sm:$0xff] %vm331, %v564
      %v573 = vld [vmem:[#allocation2 + $0x2] sm:$0xff]
      %v574 = vld [vmem:[#allocation2 + $0x12] sm:$0xff]
      %v575 = vld [vmem:[#allocation2 + $0x22] sm:$0xff]
      %v576 = vld [vmem:[#allocation2 + $0x32] sm:$0xff]
      %v577 = vld [vmem:[#allocation2 + $0x42] sm:$0xff]
      %v578 = vld [vmem:[#allocation2 + $0x52] sm:$0xff]
      %v579 = vld [vmem:[#allocation2 + $0x62] sm:$0xff]
      %v580 = vld [vmem:[#allocation2 + $0x72] sm:$0xff]
      %v581 = vpack.c.bf16 %v574, %v573
      %v582 = vpack.c.bf16 %v576, %v575
      %v583 = vpack.c.bf16 %v578, %v577
      %v584 = vpack.c.bf16 %v580, %v579
      %s585 = scalar_lea.vmem %s3, 8
      %v586 = vld [vmem:[%s585] sm:$0xf]
      %v588 = vsel %vm331, %v581, 0
      %v591 = vsel %vm331, %v582, 0
      %v594 = vsel %vm331, %v583, 0
      %v597 = vsel %vm331, %v584, 0
      %v600 = vsel %vm378, %v586, 0
      %602 = vmatprep.subr.bf16.mxu0 0
      %603 = vmatpush1.bf16.msra.mxu0 %v600
      %604 = vmatprep.subr.bf16.mxu0 0
      %605 = vmatpush1.bf16.msra.mxu0 0
      %606 = vmatprep.subr.bf16.mxu0 0
      %607 = vmatpush1.bf16.msra.mxu0 0
      %608 = vmatprep.subr.bf16.mxu0 0
      %609 = vmatpush1.bf16.msra.mxu0 0
      %610 = vmatprep.subr.bf16.mxu0 0
      %611 = vmatpush1.bf16.msra.mxu0 0
      %612 = vmatprep.subr.bf16.mxu0 0
      %613 = vmatpush1.bf16.msra.mxu0 0
      %614 = vmatprep.subr.bf16.mxu0 0
      %615 = vmatpush1.bf16.msra.mxu0 0
      %616 = vmatprep.subr.bf16.mxu0 0
      %617 = vmatpush1.bf16.msra.mxu0 0
      %618 = vmatprep.subr.bf16.mxu0 0
      %619 = vmatpush1.bf16.msra.mxu0 0
      %620 = vmatprep.subr.bf16.mxu0 0
      %621 = vmatpush1.bf16.msra.mxu0 0
      %622 = vmatprep.subr.bf16.mxu0 0
      %623 = vmatpush1.bf16.msra.mxu0 0
      %624 = vmatprep.subr.bf16.mxu0 0
      %625 = vmatpush1.bf16.msra.mxu0 0
      %626 = vmatprep.subr.bf16.mxu0 0
      %627 = vmatpush1.bf16.msra.mxu0 0
      %628 = vmatprep.subr.bf16.mxu0 0
      %629 = vmatpush1.bf16.msra.mxu0 0
      %630 = vmatprep.subr.bf16.mxu0 0
      %631 = vmatpush1.bf16.msra.mxu0 0
      %632 = vmatprep.subr.bf16.mxu0 0
      %633 = vmatpush1.bf16.msra.mxu0 0
      %634 = vmatprep.mubr.bf16.mxu0 0
      %635 = vmatmul.mubr.bf16.gmra.mrb[0].mxu0 %v588
      %v636 = vpop.f32.mrb[0].mxu0
      %v637 = vadd.f32 0.0, %v636
      %v638 = vpop.f32.mrb[0].mxu0
      %v639 = vpop.f32.mrb[0].mxu0
      %v640 = vadd.f32 0.0, %v639
      %v641 = vpop.f32.mrb[0].mxu0
      %642 = vmatprep.mubr.bf16.mxu0 0
      %643 = vmatmul.mubr.bf16.gmra.mrb[0].mxu0 %v591
      %v644 = vpop.f32.mrb[0].mxu0
      %v645 = vadd.f32 0.0, %v644
      %v646 = vpop.f32.mrb[0].mxu0
      %v647 = vpop.f32.mrb[0].mxu0
      %v648 = vadd.f32 0.0, %v647
      %v649 = vpop.f32.mrb[0].mxu0
      %650 = vmatprep.mubr.bf16.mxu0 0
      %651 = vmatmul.mubr.bf16.gmra.mrb[0].mxu0 %v594
      %v652 = vpop.f32.mrb[0].mxu0
      %v653 = vadd.f32 0.0, %v652
      %v654 = vpop.f32.mrb[0].mxu0
      %v655 = vpop.f32.mrb[0].mxu0
      %v656 = vadd.f32 0.0, %v655
      %v657 = vpop.f32.mrb[0].mxu0
      %658 = vmatprep.mubr.bf16.mxu0 0
      %659 = vmatmul.mubr.bf16.gmra.mrb[0].mxu0 %v597
      %v660 = vpop.f32.mrb[0].mxu0
      %v661 = vadd.f32 0.0, %v660
      %v662 = vpop.f32.mrb[0].mxu0
      %v663 = vpop.f32.mrb[0].mxu0
      %v664 = vadd.f32 0.0, %v663
      %v665 = vpop.f32.mrb[0].mxu0
      %666 = vdwg.mxu0
      %v667 = vld [vmem:[%s231] sm:$0xff]
      %v668 = vld [vmem:[%s231 + $0x8] sm:$0xff]
      %v669 = vld [vmem:[%s231 + $0x10] sm:$0xff]
      %v670 = vld [vmem:[%s231 + $0x18] sm:$0xff]
      %v671 = vld [vmem:[%s231 + $0x20] sm:$0xff]
      %v672 = vld [vmem:[%s231 + $0x28] sm:$0xff]
      %v673 = vld [vmem:[%s231 + $0x30] sm:$0xff]
      %v674 = vld [vmem:[%s231 + $0x38] sm:$0xff]
      %v675 = vadd.f32 %v667, %v637
      %v676 = vadd.f32 %v668, %v640
      %v677 = vadd.f32 %v669, %v645
      %v678 = vadd.f32 %v670, %v648
      %v679 = vadd.f32 %v671, %v653
      %v680 = vadd.f32 %v672, %v656
      %v681 = vadd.f32 %v673, %v661
      %v682 = vadd.f32 %v674, %v664
      %683 = vst.msk [vmem:[%s231] sm:$0xff] %vm331, %v675
      %684 = vst.msk [vmem:[%s231 + $0x8] sm:$0xff] %vm331, %v676
      %685 = vst.msk [vmem:[%s231 + $0x10] sm:$0xff] %vm331, %v677
      %686 = vst.msk [vmem:[%s231 + $0x18] sm:$0xff] %vm331, %v678
      %687 = vst.msk [vmem:[%s231 + $0x20] sm:$0xff] %vm331, %v679
      %688 = vst.msk [vmem:[%s231 + $0x28] sm:$0xff] %vm331, %v680
      %689 = vst.msk [vmem:[%s231 + $0x30] sm:$0xff] %vm331, %v681
      %690 = vst.msk [vmem:[%s231 + $0x38] sm:$0xff] %vm331, %v682
      %s691 = scalar_lea.vmem [#allocation2], 16
      %v692 = vld [vmem:[%s691] sm:$0xff]
      %v693 = vld [vmem:[%s691 + $0x10] sm:$0xff]
      %v694 = vld [vmem:[%s691 + $0x20] sm:$0xff]
      %v695 = vld [vmem:[%s691 + $0x30] sm:$0xff]
      %v696 = vld [vmem:[%s691 + $0x40] sm:$0xff]
      %v697 = vld [vmem:[%s691 + $0x50] sm:$0xff]
      %v698 = vld [vmem:[%s691 + $0x60] sm:$0xff]
      %v699 = vld [vmem:[%s691 + $0x70] sm:$0xff]
      %v700 = vpack.c.bf16 %v693, %v692
      %v701 = vpack.c.bf16 %v695, %v694
      %v702 = vpack.c.bf16 %v697, %v696
      %v703 = vpack.c.bf16 %v699, %v698
      %s704 = scalar_lea.vmem %s3, 12
      %v705 = vld [vmem:[%s704] sm:$0xf]
      %v707 = vsel %vm331, %v700, 0
      %v710 = vsel %vm331, %v701, 0
      %v713 = vsel %vm331, %v702, 0
      %v716 = vsel %vm331, %v703, 0
      %v719 = vsel %vm378, %v705, 0
      %721 = vmatprep.subr.bf16.mxu0 0
      %722 = vmatpush1.bf16.msra.mxu0 %v719
      %723 = vmatprep.subr.bf16.mxu0 0
      %724 = vmatpush1.bf16.msra.mxu0 0
      %725 = vmatprep.subr.bf16.mxu0 0
      %726 = vmatpush1.bf16.msra.mxu0 0
      %727 = vmatprep.subr.bf16.mxu0 0
      %728 = vmatpush1.bf16.msra.mxu0 0
      %729 = vmatprep.subr.bf16.mxu0 0
      %730 = vmatpush1.bf16.msra.mxu0 0
      %731 = vmatprep.subr.bf16.mxu0 0
      %732 = vmatpush1.bf16.msra.mxu0 0
      %733 = vmatprep.subr.bf16.mxu0 0
      %734 = vmatpush1.bf16.msra.mxu0 0
      %735 = vmatprep.subr.bf16.mxu0 0
      %736 = vmatpush1.bf16.msra.mxu0 0
      %737 = vmatprep.subr.bf16.mxu0 0
      %738 = vmatpush1.bf16.msra.mxu0 0
      %739 = vmatprep.subr.bf16.mxu0 0
      %740 = vmatpush1.bf16.msra.mxu0 0
      %741 = vmatprep.subr.bf16.mxu0 0
      %742 = vmatpush1.bf16.msra.mxu0 0
      %743 = vmatprep.subr.bf16.mxu0 0
      %744 = vmatpush1.bf16.msra.mxu0 0
      %745 = vmatprep.subr.bf16.mxu0 0
      %746 = vmatpush1.bf16.msra.mxu0 0
      %747 = vmatprep.subr.bf16.mxu0 0
      %748 = vmatpush1.bf16.msra.mxu0 0
      %749 = vmatprep.subr.bf16.mxu0 0
      %750 = vmatpush1.bf16.msra.mxu0 0
      %751 = vmatprep.subr.bf16.mxu0 0
      %752 = vmatpush1.bf16.msra.mxu0 0
      %753 = vmatprep.mubr.bf16.mxu0 0
      %754 = vmatmul.mubr.bf16.gmra.mrb[0].mxu0 %v707
      %v755 = vpop.f32.mrb[0].mxu0
      %v756 = vadd.f32 0.0, %v755
      %v757 = vpop.f32.mrb[0].mxu0
      %v758 = vpop.f32.mrb[0].mxu0
      %v759 = vadd.f32 0.0, %v758
      %v760 = vpop.f32.mrb[0].mxu0
      %761 = vmatprep.mubr.bf16.mxu0 0
      %762 = vmatmul.mubr.bf16.gmra.mrb[0].mxu0 %v710
      %v763 = vpop.f32.mrb[0].mxu0
      %v764 = vadd.f32 0.0, %v763
      %v765 = vpop.f32.mrb[0].mxu0
      %v766 = vpop.f32.mrb[0].mxu0
      %v767 = vadd.f32 0.0, %v766
      %v768 = vpop.f32.mrb[0].mxu0
      %769 = vmatprep.mubr.bf16.mxu0 0
      %770 = vmatmul.mubr.bf16.gmra.mrb[0].mxu0 %v713
      %v771 = vpop.f32.mrb[0].mxu0
      %v772 = vadd.f32 0.0, %v771
      %v773 = vpop.f32.mrb[0].mxu0
      %v774 = vpop.f32.mrb[0].mxu0
      %v775 = vadd.f32 0.0, %v774
      %v776 = vpop.f32.mrb[0].mxu0
      %777 = vmatprep.mubr.bf16.mxu0 0
      %778 = vmatmul.mubr.bf16.gmra.mrb[0].mxu0 %v716
      %v779 = vpop.f32.mrb[0].mxu0
      %v780 = vadd.f32 0.0, %v779
      %v781 = vpop.f32.mrb[0].mxu0
      %v782 = vpop.f32.mrb[0].mxu0
      %v783 = vadd.f32 0.0, %v782
      %v784 = vpop.f32.mrb[0].mxu0
      %785 = vdwg.mxu0
      %v786 = vld [vmem:[%s231] sm:$0xff]
      %v787 = vld [vmem:[%s231 + $0x8] sm:$0xff]
      %v788 = vld [vmem:[%s231 + $0x10] sm:$0xff]
      %v789 = vld [vmem:[%s231 + $0x18] sm:$0xff]
      %v790 = vld [vmem:[%s231 + $0x20] sm:$0xff]
      %v791 = vld [vmem:[%s231 + $0x28] sm:$0xff]
      %v792 = vld [vmem:[%s231 + $0x30] sm:$0xff]
      %v793 = vld [vmem:[%s231 + $0x38] sm:$0xff]
      %v794 = vadd.f32 %v786, %v756
      %v795 = vadd.f32 %v787, %v759
      %v796 = vadd.f32 %v788, %v764
      %v797 = vadd.f32 %v789, %v767
      %v798 = vadd.f32 %v790, %v772
      %v799 = vadd.f32 %v791, %v775
      %v800 = vadd.f32 %v792, %v780
      %v801 = vadd.f32 %v793, %v783
      %802 = vst.msk [vmem:[%s231] sm:$0xff] %vm331, %v794
      %803 = vst.msk [vmem:[%s231 + $0x8] sm:$0xff] %vm331, %v795
      %804 = vst.msk [vmem:[%s231 + $0x10] sm:$0xff] %vm331, %v796
      %805 = vst.msk [vmem:[%s231 + $0x18] sm:$0xff] %vm331, %v797
      %806 = vst.msk [vmem:[%s231 + $0x20] sm:$0xff] %vm331, %v798
      %807 = vst.msk [vmem:[%s231 + $0x28] sm:$0xff] %vm331, %v799
      %808 = vst.msk [vmem:[%s231 + $0x30] sm:$0xff] %vm331, %v800
      %809 = vst.msk [vmem:[%s231 + $0x38] sm:$0xff] %vm331, %v801
      %v810 = vld [vmem:[%s691 + $0x1] sm:$0xff]
      %v811 = vld [vmem:[%s691 + $0x11] sm:$0xff]
      %v812 = vld [vmem:[%s691 + $0x21] sm:$0xff]
      %v813 = vld [vmem:[%s691 + $0x31] sm:$0xff]
      %v814 = vld [vmem:[%s691 + $0x41] sm:$0xff]
      %v815 = vld [vmem:[%s691 + $0x51] sm:$0xff]
      %v816 = vld [vmem:[%s691 + $0x61] sm:$0xff]
      %v817 = vld [vmem:[%s691 + $0x71] sm:$0xff]
      %v818 = vpack.c.bf16 %v811, %v810
      %v819 = vpack.c.bf16 %v813, %v812
      %v820 = vpack.c.bf16 %v815, %v814
      %v821 = vpack.c.bf16 %v817, %v816
      %s822 = scalar_lea.vmem %s3, 16
      %v823 = vld [vmem:[%s822] sm:$0xf]
      %v825 = vsel %vm331, %v818, 0
      %v828 = vsel %vm331, %v819, 0
      %v831 = vsel %vm331, %v820, 0
      %v834 = vsel %vm331, %v821, 0
      %v837 = vsel %vm378, %v823, 0
      %839 = vmatprep.subr.bf16.mxu0 0
      %840 = vmatpush1.bf16.msra.mxu0 %v837
      %841 = vmatprep.subr.bf16.mxu0 0
      %842 = vmatpush1.bf16.msra.mxu0 0
      %843 = vmatprep.subr.bf16.mxu0 0
      %844 = vmatpush1.bf16.msra.mxu0 0
      %845 = vmatprep.subr.bf16.mxu0 0
      %846 = vmatpush1.bf16.msra.mxu0 0
      %847 = vmatprep.subr.bf16.mxu0 0
      %848 = vmatpush1.bf16.msra.mxu0 0
      %849 = vmatprep.subr.bf16.mxu0 0
      %850 = vmatpush1.bf16.msra.mxu0 0
      %851 = vmatprep.subr.bf16.mxu0 0
      %852 = vmatpush1.bf16.msra.mxu0 0
      %853 = vmatprep.subr.bf16.mxu0 0
      %854 = vmatpush1.bf16.msra.mxu0 0
      %855 = vmatprep.subr.bf16.mxu0 0
      %856 = vmatpush1.bf16.msra.mxu0 0
      %857 = vmatprep.subr.bf16.mxu0 0
      %858 = vmatpush1.bf16.msra.mxu0 0
      %859 = vmatprep.subr.bf16.mxu0 0
      %860 = vmatpush1.bf16.msra.mxu0 0
      %861 = vmatprep.subr.bf16.mxu0 0
      %862 = vmatpush1.bf16.msra.mxu0 0
      %863 = vmatprep.subr.bf16.mxu0 0
      %864 = vmatpush1.bf16.msra.mxu0 0
      %865 = vmatprep.subr.bf16.mxu0 0
      %866 = vmatpush1.bf16.msra.mxu0 0
      %867 = vmatprep.subr.bf16.mxu0 0
      %868 = vmatpush1.bf16.msra.mxu0 0
      %869 = vmatprep.subr.bf16.mxu0 0
      %870 = vmatpush1.bf16.msra.mxu0 0
      %871 = vmatprep.mubr.bf16.mxu0 0
      %872 = vmatmul.mubr.bf16.gmra.mrb[0].mxu0 %v825
      %v873 = vpop.f32.mrb[0].mxu0
      %v874 = vadd.f32 0.0, %v873
      %v875 = vpop.f32.mrb[0].mxu0
      %v876 = vpop.f32.mrb[0].mxu0
      %v877 = vadd.f32 0.0, %v876
      %v878 = vpop.f32.mrb[0].mxu0
      %879 = vmatprep.mubr.bf16.mxu0 0
      %880 = vmatmul.mubr.bf16.gmra.mrb[0].mxu0 %v828
      %v881 = vpop.f32.mrb[0].mxu0
      %v882 = vadd.f32 0.0, %v881
      %v883 = vpop.f32.mrb[0].mxu0
      %v884 = vpop.f32.mrb[0].mxu0
      %v885 = vadd.f32 0.0, %v884
      %v886 = vpop.f32.mrb[0].mxu0
      %887 = vmatprep.mubr.bf16.mxu0 0
      %888 = vmatmul.mubr.bf16.gmra.mrb[0].mxu0 %v831
      %v889 = vpop.f32.mrb[0].mxu0
      %v890 = vadd.f32 0.0, %v889
      %v891 = vpop.f32.mrb[0].mxu0
      %v892 = vpop.f32.mrb[0].mxu0
      %v893 = vadd.f32 0.0, %v892
      %v894 = vpop.f32.mrb[0].mxu0
      %895 = vmatprep.mubr.bf16.mxu0 0
      %896 = vmatmul.mubr.bf16.gmra.mrb[0].mxu0 %v834
      %v897 = vpop.f32.mrb[0].mxu0
      %v898 = vadd.f32 0.0, %v897
      %v899 = vpop.f32.mrb[0].mxu0
      %v900 = vpop.f32.mrb[0].mxu0
      %v901 = vadd.f32 0.0, %v900
      %v902 = vpop.f32.mrb[0].mxu0
      %903 = vdwg.mxu0
      %v904 = vld [vmem:[%s231] sm:$0xff]
      %v905 = vld [vmem:[%s231 + $0x8] sm:$0xff]
      %v906 = vld [vmem:[%s231 + $0x10] sm:$0xff]
      %v907 = vld [vmem:[%s231 + $0x18] sm:$0xff]
      %v908 = vld [vmem:[%s231 + $0x20] sm:$0xff]
      %v909 = vld [vmem:[%s231 + $0x28] sm:$0xff]
      %v910 = vld [vmem:[%s231 + $0x30] sm:$0xff]
      %v911 = vld [vmem:[%s231 + $0x38] sm:$0xff]
      %v912 = vadd.f32 %v904, %v874
      %v913 = vadd.f32 %v905, %v877
      %v914 = vadd.f32 %v906, %v882
      %v915 = vadd.f32 %v907, %v885
      %v916 = vadd.f32 %v908, %v890
      %v917 = vadd.f32 %v909, %v893
      %v918 = vadd.f32 %v910, %v898
      %v919 = vadd.f32 %v911, %v901
      %920 = vst.msk [vmem:[%s231] sm:$0xff] %vm331, %v912
      %921 = vst.msk [vmem:[%s231 + $0x8] sm:$0xff] %vm331, %v913
      %922 = vst.msk [vmem:[%s231 + $0x10] sm:$0xff] %vm331, %v914
      %923 = vst.msk [vmem:[%s231 + $0x18] sm:$0xff] %vm331, %v915
      %924 = vst.msk [vmem:[%s231 + $0x20] sm:$0xff] %vm331, %v916
      %925 = vst.msk [vmem:[%s231 + $0x28] sm:$0xff] %vm331, %v917
      %926 = vst.msk [vmem:[%s231 + $0x30] sm:$0xff] %vm331, %v918
      %927 = vst.msk [vmem:[%s231 + $0x38] sm:$0xff] %vm331, %v919
      %v928 = vld [vmem:[%s691 + $0x2] sm:$0xff]
      %v929 = vld [vmem:[%s691 + $0x12] sm:$0xff]
      %v930 = vld [vmem:[%s691 + $0x22] sm:$0xff]
      %v931 = vld [vmem:[%s691 + $0x32] sm:$0xff]
      %v932 = vld [vmem:[%s691 + $0x42] sm:$0xff]
      %v933 = vld [vmem:[%s691 + $0x52] sm:$0xff]
      %v934 = vld [vmem:[%s691 + $0x62] sm:$0xff]
      %v935 = vld [vmem:[%s691 + $0x72] sm:$0xff]
      %v936 = vpack.c.bf16 %v929, %v928
      %v937 = vpack.c.bf16 %v931, %v930
      %v938 = vpack.c.bf16 %v933, %v932
      %v939 = vpack.c.bf16 %v935, %v934
      %s940 = scalar_lea.vmem %s3, 20
      %v941 = vld [vmem:[%s940] sm:$0xf]
      %v943 = vsel %vm331, %v936, 0
      %v946 = vsel %vm331, %v937, 0
      %v949 = vsel %vm331, %v938, 0
      %v952 = vsel %vm331, %v939, 0
      %v955 = vsel %vm378, %v941, 0
      %957 = vmatprep.subr.bf16.mxu0 0
      %958 = vmatpush1.bf16.msra.mxu0 %v955
      %959 = vmatprep.subr.bf16.mxu0 0
      %960 = vmatpush1.bf16.msra.mxu0 0
      %961 = vmatprep.subr.bf16.mxu0 0
      %962 = vmatpush1.bf16.msra.mxu0 0
      %963 = vmatprep.subr.bf16.mxu0 0
      %964 = vmatpush1.bf16.msra.mxu0 0
      %965 = vmatprep.subr.bf16.mxu0 0
      %966 = vmatpush1.bf16.msra.mxu0 0
      %967 = vmatprep.subr.bf16.mxu0 0
      %968 = vmatpush1.bf16.msra.mxu0 0
      %969 = vmatprep.subr.bf16.mxu0 0
      %970 = vmatpush1.bf16.msra.mxu0 0
      %971 = vmatprep.subr.bf16.mxu0 0
      %972 = vmatpush1.bf16.msra.mxu0 0
      %973 = vmatprep.subr.bf16.mxu0 0
      %974 = vmatpush1.bf16.msra.mxu0 0
      %975 = vmatprep.subr.bf16.mxu0 0
      %976 = vmatpush1.bf16.msra.mxu0 0
      %977 = vmatprep.subr.bf16.mxu0 0
      %978 = vmatpush1.bf16.msra.mxu0 0
      %979 = vmatprep.subr.bf16.mxu0 0
      %980 = vmatpush1.bf16.msra.mxu0 0
      %981 = vmatprep.subr.bf16.mxu0 0
      %982 = vmatpush1.bf16.msra.mxu0 0
      %983 = vmatprep.subr.bf16.mxu0 0
      %984 = vmatpush1.bf16.msra.mxu0 0
      %985 = vmatprep.subr.bf16.mxu0 0
      %986 = vmatpush1.bf16.msra.mxu0 0
      %987 = vmatprep.subr.bf16.mxu0 0
      %988 = vmatpush1.bf16.msra.mxu0 0
      %989 = vmatprep.mubr.bf16.mxu0 0
      %990 = vmatmul.mubr.bf16.gmra.mrb[0].mxu0 %v943
      %v991 = vpop.f32.mrb[0].mxu0
      %v992 = vadd.f32 0.0, %v991
      %v993 = vpop.f32.mrb[0].mxu0
      %v994 = vpop.f32.mrb[0].mxu0
      %v995 = vadd.f32 0.0, %v994
      %v996 = vpop.f32.mrb[0].mxu0
      %997 = vmatprep.mubr.bf16.mxu0 0
      %998 = vmatmul.mubr.bf16.gmra.mrb[0].mxu0 %v946
      %v999 = vpop.f32.mrb[0].mxu0
      %v1000 = vadd.f32 0.0, %v999
      %v1001 = vpop.f32.mrb[0].mxu0
      %v1002 = vpop.f32.mrb[0].mxu0
      %v1003 = vadd.f32 0.0, %v1002
      %v1004 = vpop.f32.mrb[0].mxu0
      %1005 = vmatprep.mubr.bf16.mxu0 0
      %1006 = vmatmul.mubr.bf16.gmra.mrb[0].mxu0 %v949
      %v1007 = vpop.f32.mrb[0].mxu0
      %v1008 = vadd.f32 0.0, %v1007
      %v1009 = vpop.f32.mrb[0].mxu0
      %v1010 = vpop.f32.mrb[0].mxu0
      %v1011 = vadd.f32 0.0, %v1010
      %v1012 = vpop.f32.mrb[0].mxu0
      %1013 = vmatprep.mubr.bf16.mxu0 0
      %1014 = vmatmul.mubr.bf16.gmra.mrb[0].mxu0 %v952
      %v1015 = vpop.f32.mrb[0].mxu0
      %v1016 = vadd.f32 0.0, %v1015
      %v1017 = vpop.f32.mrb[0].mxu0
      %v1018 = vpop.f32.mrb[0].mxu0
      %v1019 = vadd.f32 0.0, %v1018
      %v1020 = vpop.f32.mrb[0].mxu0
      %1021 = vdwg.mxu0
      %v1022 = vld [vmem:[%s231] sm:$0xff]
      %v1023 = vld [vmem:[%s231 + $0x8] sm:$0xff]
      %v1024 = vld [vmem:[%s231 + $0x10] sm:$0xff]
      %v1025 = vld [vmem:[%s231 + $0x18] sm:$0xff]
      %v1026 = vld [vmem:[%s231 + $0x20] sm:$0xff]
      %v1027 = vld [vmem:[%s231 + $0x28] sm:$0xff]
      %v1028 = vld [vmem:[%s231 + $0x30] sm:$0xff]
      %v1029 = vld [vmem:[%s231 + $0x38] sm:$0xff]
      %v1030 = vadd.f32 %v1022, %v992
      %v1031 = vadd.f32 %v1023, %v995
      %v1032 = vadd.f32 %v1024, %v1000
      %v1033 = vadd.f32 %v1025, %v1003
      %v1034 = vadd.f32 %v1026, %v1008
      %v1035 = vadd.f32 %v1027, %v1011
      %v1036 = vadd.f32 %v1028, %v1016
      %v1037 = vadd.f32 %v1029, %v1019
      %1038 = vst.msk [vmem:[%s231] sm:$0xff] %vm331, %v1030
      %1039 = vst.msk [vmem:[%s231 + $0x8] sm:$0xff] %vm331, %v1031
      %1040 = vst.msk [vmem:[%s231 + $0x10] sm:$0xff] %vm331, %v1032
      %1041 = vst.msk [vmem:[%s231 + $0x18] sm:$0xff] %vm331, %v1033
      %1042 = vst.msk [vmem:[%s231 + $0x20] sm:$0xff] %vm331, %v1034
      %1043 = vst.msk [vmem:[%s231 + $0x28] sm:$0xff] %vm331, %v1035
      %1044 = vst.msk [vmem:[%s231 + $0x30] sm:$0xff] %vm331, %v1036
      %1045 = vst.msk [vmem:[%s231 + $0x38] sm:$0xff] %vm331, %v1037
      %s1046 = scalar_lea.vmem [#allocation2], 32
      %v1047 = vld [vmem:[%s1046] sm:$0xff]
      %v1048 = vld [vmem:[%s1046 + $0x10] sm:$0xff]
      %v1049 = vld [vmem:[%s1046 + $0x20] sm:$0xff]
      %v1050 = vld [vmem:[%s1046 + $0x30] sm:$0xff]
      %v1051 = vld [vmem:[%s1046 + $0x40] sm:$0xff]
      %v1052 = vld [vmem:[%s1046 + $0x50] sm:$0xff]
      %v1053 = vld [vmem:[%s1046 + $0x60] sm:$0xff]
      %v1054 = vld [vmem:[%s1046 + $0x70] sm:$0xff]
      %v1055 = vpack.c.bf16 %v1048, %v1047
      %v1056 = vpack.c.bf16 %v1050, %v1049
      %v1057 = vpack.c.bf16 %v1052, %v1051
      %v1058 = vpack.c.bf16 %v1054, %v1053
      %s1059 = scalar_lea.vmem %s3, 24
      %v1060 = vld [vmem:[%s1059] sm:$0xf]
      %v1062 = vsel %vm331, %v1055, 0
      %v1065 = vsel %vm331, %v1056, 0
      %v1068 = vsel %vm331, %v1057, 0
      %v1071 = vsel %vm331, %v1058, 0
      %v1074 = vsel %vm378, %v1060, 0
      %1076 = vmatprep.subr.bf16.mxu0 0
      %1077 = vmatpush1.bf16.msra.mxu0 %v1074
      %1078 = vmatprep.subr.bf16.mxu0 0
      %1079 = vmatpush1.bf16.msra.mxu0 0
      %1080 = vmatprep.subr.bf16.mxu0 0
      %1081 = vmatpush1.bf16.msra.mxu0 0
      %1082 = vmatprep.subr.bf16.mxu0 0
      %1083 = vmatpush1.bf16.msra.mxu0 0
      %1084 = vmatprep.subr.bf16.mxu0 0
      %1085 = vmatpush1.bf16.msra.mxu0 0
      %1086 = vmatprep.subr.bf16.mxu0 0
      %1087 = vmatpush1.bf16.msra.mxu0 0
      %1088 = vmatprep.subr.bf16.mxu0 0
      %1089 = vmatpush1.bf16.msra.mxu0 0
      %1090 = vmatprep.subr.bf16.mxu0 0
      %1091 = vmatpush1.bf16.msra.mxu0 0
      %1092 = vmatprep.subr.bf16.mxu0 0
      %1093 = vmatpush1.bf16.msra.mxu0 0
      %1094 = vmatprep.subr.bf16.mxu0 0
      %1095 = vmatpush1.bf16.msra.mxu0 0
      %1096 = vmatprep.subr.bf16.mxu0 0
      %1097 = vmatpush1.bf16.msra.mxu0 0
      %1098 = vmatprep.subr.bf16.mxu0 0
      %1099 = vmatpush1.bf16.msra.mxu0 0
      %1100 = vmatprep.subr.bf16.mxu0 0
      %1101 = vmatpush1.bf16.msra.mxu0 0
      %1102 = vmatprep.subr.bf16.mxu0 0
      %1103 = vmatpush1.bf16.msra.mxu0 0
      %1104 = vmatprep.subr.bf16.mxu0 0
      %1105 = vmatpush1.bf16.msra.mxu0 0
      %1106 = vmatprep.subr.bf16.mxu0 0
      %1107 = vmatpush1.bf16.msra.mxu0 0
      %1108 = vmatprep.mubr.bf16.mxu0 0
      %1109 = vmatmul.mubr.bf16.gmra.mrb[0].mxu0 %v1062
      %v1110 = vpop.f32.mrb[0].mxu0
      %v1111 = vadd.f32 0.0, %v1110
      %v1112 = vpop.f32.mrb[0].mxu0
      %v1113 = vpop.f32.mrb[0].mxu0
      %v1114 = vadd.f32 0.0, %v1113
      %v1115 = vpop.f32.mrb[0].mxu0
      %1116 = vmatprep.mubr.bf16.mxu0 0
      %1117 = vmatmul.mubr.bf16.gmra.mrb[0].mxu0 %v1065
      %v1118 = vpop.f32.mrb[0].mxu0
      %v1119 = vadd.f32 0.0, %v1118
      %v1120 = vpop.f32.mrb[0].mxu0
      %v1121 = vpop.f32.mrb[0].mxu0
      %v1122 = vadd.f32 0.0, %v1121
      %v1123 = vpop.f32.mrb[0].mxu0
      %1124 = vmatprep.mubr.bf16.mxu0 0
      %1125 = vmatmul.mubr.bf16.gmra.mrb[0].mxu0 %v1068
      %v1126 = vpop.f32.mrb[0].mxu0
      %v1127 = vadd.f32 0.0, %v1126
      %v1128 = vpop.f32.mrb[0].mxu0
      %v1129 = vpop.f32.mrb[0].mxu0
      %v1130 = vadd.f32 0.0, %v1129
      %v1131 = vpop.f32.mrb[0].mxu0
      %1132 = vmatprep.mubr.bf16.mxu0 0
      %1133 = vmatmul.mubr.bf16.gmra.mrb[0].mxu0 %v1071
      %v1134 = vpop.f32.mrb[0].mxu0
      %v1135 = vadd.f32 0.0, %v1134
      %v1136 = vpop.f32.mrb[0].mxu0
      %v1137 = vpop.f32.mrb[0].mxu0
      %v1138 = vadd.f32 0.0, %v1137
      %v1139 = vpop.f32.mrb[0].mxu0
      %1140 = vdwg.mxu0
      %v1141 = vld [vmem:[%s231] sm:$0xff]
      %v1142 = vld [vmem:[%s231 + $0x8] sm:$0xff]
      %v1143 = vld [vmem:[%s231 + $0x10] sm:$0xff]
      %v1144 = vld [vmem:[%s231 + $0x18] sm:$0xff]
      %v1145 = vld [vmem:[%s231 + $0x20] sm:$0xff]
      %v1146 = vld [vmem:[%s231 + $0x28] sm:$0xff]
      %v1147 = vld [vmem:[%s231 + $0x30] sm:$0xff]
      %v1148 = vld [vmem:[%s231 + $0x38] sm:$0xff]
      %v1149 = vadd.f32 %v1141, %v1111
      %v1150 = vadd.f32 %v1142, %v1114
      %v1151 = vadd.f32 %v1143, %v1119
      %v1152 = vadd.f32 %v1144, %v1122
      %v1153 = vadd.f32 %v1145, %v1127
      %v1154 = vadd.f32 %v1146, %v1130
      %v1155 = vadd.f32 %v1147, %v1135
      %v1156 = vadd.f32 %v1148, %v1138
      %1157 = vst.msk [vmem:[%s231] sm:$0xff] %vm331, %v1149
      %1158 = vst.msk [vmem:[%s231 + $0x8] sm:$0xff] %vm331, %v1150
      %1159 = vst.msk [vmem:[%s231 + $0x10] sm:$0xff] %vm331, %v1151
      %1160 = vst.msk [vmem:[%s231 + $0x18] sm:$0xff] %vm331, %v1152
      %1161 = vst.msk [vmem:[%s231 + $0x20] sm:$0xff] %vm331, %v1153
      %1162 = vst.msk [vmem:[%s231 + $0x28] sm:$0xff] %vm331, %v1154
      %1163 = vst.msk [vmem:[%s231 + $0x30] sm:$0xff] %vm331, %v1155
      %1164 = vst.msk [vmem:[%s231 + $0x38] sm:$0xff] %vm331, %v1156
      %v1165 = vld [vmem:[%s1046 + $0x1] sm:$0xff]
      %v1166 = vld [vmem:[%s1046 + $0x11] sm:$0xff]
      %v1167 = vld [vmem:[%s1046 + $0x21] sm:$0xff]
      %v1168 = vld [vmem:[%s1046 + $0x31] sm:$0xff]
      %v1169 = vld [vmem:[%s1046 + $0x41] sm:$0xff]
      %v1170 = vld [vmem:[%s1046 + $0x51] sm:$0xff]
      %v1171 = vld [vmem:[%s1046 + $0x61] sm:$0xff]
      %v1172 = vld [vmem:[%s1046 + $0x71] sm:$0xff]
      %v1173 = vpack.c.bf16 %v1166, %v1165
      %v1174 = vpack.c.bf16 %v1168, %v1167
      %v1175 = vpack.c.bf16 %v1170, %v1169
      %v1176 = vpack.c.bf16 %v1172, %v1171
      %s1177 = scalar_lea.vmem %s3, 28
      %v1178 = vld [vmem:[%s1177] sm:$0xf]
      %v1180 = vsel %vm331, %v1173, 0
      %v1183 = vsel %vm331, %v1174, 0
      %v1186 = vsel %vm331, %v1175, 0
      %v1189 = vsel %vm331, %v1176, 0
      %v1192 = vsel %vm378, %v1178, 0
      %1194 = vmatprep.subr.bf16.mxu0 0
      %1195 = vmatpush1.bf16.msra.mxu0 %v1192
      %1196 = vmatprep.subr.bf16.mxu0 0
      %1197 = vmatpush1.bf16.msra.mxu0 0
      %1198 = vmatprep.subr.bf16.mxu0 0
      %1199 = vmatpush1.bf16.msra.mxu0 0
      %1200 = vmatprep.subr.bf16.mxu0 0
      %1201 = vmatpush1.bf16.msra.mxu0 0
      %1202 = vmatprep.subr.bf16.mxu0 0
      %1203 = vmatpush1.bf16.msra.mxu0 0
      %1204 = vmatprep.subr.bf16.mxu0 0
      %1205 = vmatpush1.bf16.msra.mxu0 0
      %1206 = vmatprep.subr.bf16.mxu0 0
      %1207 = vmatpush1.bf16.msra.mxu0 0
      %1208 = vmatprep.subr.bf16.mxu0 0
      %1209 = vmatpush1.bf16.msra.mxu0 0
      %1210 = vmatprep.subr.bf16.mxu0 0
      %1211 = vmatpush1.bf16.msra.mxu0 0
      %1212 = vmatprep.subr.bf16.mxu0 0
      %1213 = vmatpush1.bf16.msra.mxu0 0
      %1214 = vmatprep.subr.bf16.mxu0 0
      %1215 = vmatpush1.bf16.msra.mxu0 0
      %1216 = vmatprep.subr.bf16.mxu0 0
      %1217 = vmatpush1.bf16.msra.mxu0 0
      %1218 = vmatprep.subr.bf16.mxu0 0
      %1219 = vmatpush1.bf16.msra.mxu0 0
      %1220 = vmatprep.subr.bf16.mxu0 0
      %1221 = vmatpush1.bf16.msra.mxu0 0
      %1222 = vmatprep.subr.bf16.mxu0 0
      %1223 = vmatpush1.bf16.msra.mxu0 0
      %1224 = vmatprep.subr.bf16.mxu0 0
      %1225 = vmatpush1.bf16.msra.mxu0 0
      %1226 = vmatprep.mubr.bf16.mxu0 0
      %1227 = vmatmul.mubr.bf16.gmra.mrb[0].mxu0 %v1180
      %v1228 = vpop.f32.mrb[0].mxu0
      %v1229 = vadd.f32 0.0, %v1228
      %v1230 = vpop.f32.mrb[0].mxu0
      %v1231 = vpop.f32.mrb[0].mxu0
      %v1232 = vadd.f32 0.0, %v1231
      %v1233 = vpop.f32.mrb[0].mxu0
      %1234 = vmatprep.mubr.bf16.mxu0 0
      %1235 = vmatmul.mubr.bf16.gmra.mrb[0].mxu0 %v1183
      %v1236 = vpop.f32.mrb[0].mxu0
      %v1237 = vadd.f32 0.0, %v1236
      %v1238 = vpop.f32.mrb[0].mxu0
      %v1239 = vpop.f32.mrb[0].mxu0
      %v1240 = vadd.f32 0.0, %v1239
      %v1241 = vpop.f32.mrb[0].mxu0
      %1242 = vmatprep.mubr.bf16.mxu0 0
      %1243 = vmatmul.mubr.bf16.gmra.mrb[0].mxu0 %v1186
      %v1244 = vpop.f32.mrb[0].mxu0
      %v1245 = vadd.f32 0.0, %v1244
      %v1246 = vpop.f32.mrb[0].mxu0
      %v1247 = vpop.f32.mrb[0].mxu0
      %v1248 = vadd.f32 0.0, %v1247
      %v1249 = vpop.f32.mrb[0].mxu0
      %1250 = vmatprep.mubr.bf16.mxu0 0
      %1251 = vmatmul.mubr.bf16.gmra.mrb[0].mxu0 %v1189
      %v1252 = vpop.f32.mrb[0].mxu0
      %v1253 = vadd.f32 0.0, %v1252
      %v1254 = vpop.f32.mrb[0].mxu0
      %v1255 = vpop.f32.mrb[0].mxu0
      %v1256 = vadd.f32 0.0, %v1255
      %v1257 = vpop.f32.mrb[0].mxu0
      %1258 = vdwg.mxu0
      %v1259 = vld [vmem:[%s231] sm:$0xff]
      %v1260 = vld [vmem:[%s231 + $0x8] sm:$0xff]
      %v1261 = vld [vmem:[%s231 + $0x10] sm:$0xff]
      %v1262 = vld [vmem:[%s231 + $0x18] sm:$0xff]
      %v1263 = vld [vmem:[%s231 + $0x20] sm:$0xff]
      %v1264 = vld [vmem:[%s231 + $0x28] sm:$0xff]
      %v1265 = vld [vmem:[%s231 + $0x30] sm:$0xff]
      %v1266 = vld [vmem:[%s231 + $0x38] sm:$0xff]
      %v1267 = vadd.f32 %v1259, %v1229
      %v1268 = vadd.f32 %v1260, %v1232
      %v1269 = vadd.f32 %v1261, %v1237
      %v1270 = vadd.f32 %v1262, %v1240
      %v1271 = vadd.f32 %v1263, %v1245
      %v1272 = vadd.f32 %v1264, %v1248
      %v1273 = vadd.f32 %v1265, %v1253
      %v1274 = vadd.f32 %v1266, %v1256
      %1275 = vst.msk [vmem:[%s231] sm:$0xff] %vm331, %v1267
      %1276 = vst.msk [vmem:[%s231 + $0x8] sm:$0xff] %vm331, %v1268
      %1277 = vst.msk [vmem:[%s231 + $0x10] sm:$0xff] %vm331, %v1269
      %1278 = vst.msk [vmem:[%s231 + $0x18] sm:$0xff] %vm331, %v1270
      %1279 = vst.msk [vmem:[%s231 + $0x20] sm:$0xff] %vm331, %v1271
      %1280 = vst.msk [vmem:[%s231 + $0x28] sm:$0xff] %vm331, %v1272
      %1281 = vst.msk [vmem:[%s231 + $0x30] sm:$0xff] %vm331, %v1273
      %1282 = vst.msk [vmem:[%s231 + $0x38] sm:$0xff] %vm331, %v1274
      %v1283 = vld [vmem:[%s1046 + $0x2] sm:$0xff]
      %v1284 = vld [vmem:[%s1046 + $0x12] sm:$0xff]
      %v1285 = vld [vmem:[%s1046 + $0x22] sm:$0xff]
      %v1286 = vld [vmem:[%s1046 + $0x32] sm:$0xff]
      %v1287 = vld [vmem:[%s1046 + $0x42] sm:$0xff]
      %v1288 = vld [vmem:[%s1046 + $0x52] sm:$0xff]
      %v1289 = vld [vmem:[%s1046 + $0x62] sm:$0xff]
      %v1290 = vld [vmem:[%s1046 + $0x72] sm:$0xff]
      %v1291 = vpack.c.bf16 %v1284, %v1283
      %v1292 = vpack.c.bf16 %v1286, %v1285
      %v1293 = vpack.c.bf16 %v1288, %v1287
      %v1294 = vpack.c.bf16 %v1290, %v1289
      %s1295 = scalar_lea.vmem %s3, 32
      %v1296 = vld [vmem:[%s1295] sm:$0xf]
      %v1298 = vsel %vm331, %v1291, 0
      %v1301 = vsel %vm331, %v1292, 0
      %v1304 = vsel %vm331, %v1293, 0
      %v1307 = vsel %vm331, %v1294, 0
      %v1310 = vsel %vm378, %v1296, 0
      %1312 = vmatprep.subr.bf16.mxu0 0
      %1313 = vmatpush1.bf16.msra.mxu0 %v1310
      %1314 = vmatprep.subr.bf16.mxu0 0
      %1315 = vmatpush1.bf16.msra.mxu0 0
      %1316 = vmatprep.subr.bf16.mxu0 0
      %1317 = vmatpush1.bf16.msra.mxu0 0
      %1318 = vmatprep.subr.bf16.mxu0 0
      %1319 = vmatpush1.bf16.msra.mxu0 0
      %1320 = vmatprep.subr.bf16.mxu0 0
      %1321 = vmatpush1.bf16.msra.mxu0 0
      %1322 = vmatprep.subr.bf16.mxu0 0
      %1323 = vmatpush1.bf16.msra.mxu0 0
      %1324 = vmatprep.subr.bf16.mxu0 0
      %1325 = vmatpush1.bf16.msra.mxu0 0
      %1326 = vmatprep.subr.bf16.mxu0 0
      %1327 = vmatpush1.bf16.msra.mxu0 0
      %1328 = vmatprep.subr.bf16.mxu0 0
      %1329 = vmatpush1.bf16.msra.mxu0 0
      %1330 = vmatprep.subr.bf16.mxu0 0
      %1331 = vmatpush1.bf16.msra.mxu0 0
      %1332 = vmatprep.subr.bf16.mxu0 0
      %1333 = vmatpush1.bf16.msra.mxu0 0
      %1334 = vmatprep.subr.bf16.mxu0 0
      %1335 = vmatpush1.bf16.msra.mxu0 0
      %1336 = vmatprep.subr.bf16.mxu0 0
      %1337 = vmatpush1.bf16.msra.mxu0 0
      %1338 = vmatprep.subr.bf16.mxu0 0
      %1339 = vmatpush1.bf16.msra.mxu0 0
      %1340 = vmatprep.subr.bf16.mxu0 0
      %1341 = vmatpush1.bf16.msra.mxu0 0
      %1342 = vmatprep.subr.bf16.mxu0 0
      %1343 = vmatpush1.bf16.msra.mxu0 0
      %1344 = vmatprep.mubr.bf16.mxu0 0
      %1345 = vmatmul.mubr.bf16.gmra.mrb[0].mxu0 %v1298
      %v1346 = vpop.f32.mrb[0].mxu0
      %v1347 = vadd.f32 0.0, %v1346
      %v1348 = vpop.f32.mrb[0].mxu0
      %v1349 = vpop.f32.mrb[0].mxu0
      %v1350 = vadd.f32 0.0, %v1349
      %v1351 = vpop.f32.mrb[0].mxu0
      %1352 = vmatprep.mubr.bf16.mxu0 0
      %1353 = vmatmul.mubr.bf16.gmra.mrb[0].mxu0 %v1301
      %v1354 = vpop.f32.mrb[0].mxu0
      %v1355 = vadd.f32 0.0, %v1354
      %v1356 = vpop.f32.mrb[0].mxu0
      %v1357 = vpop.f32.mrb[0].mxu0
      %v1358 = vadd.f32 0.0, %v1357
      %v1359 = vpop.f32.mrb[0].mxu0
      %1360 = vmatprep.mubr.bf16.mxu0 0
      %1361 = vmatmul.mubr.bf16.gmra.mrb[0].mxu0 %v1304
      %v1362 = vpop.f32.mrb[0].mxu0
      %v1363 = vadd.f32 0.0, %v1362
      %v1364 = vpop.f32.mrb[0].mxu0
      %v1365 = vpop.f32.mrb[0].mxu0
      %v1366 = vadd.f32 0.0, %v1365
      %v1367 = vpop.f32.mrb[0].mxu0
      %1368 = vmatprep.mubr.bf16.mxu0 0
      %1369 = vmatmul.mubr.bf16.gmra.mrb[0].mxu0 %v1307
      %v1370 = vpop.f32.mrb[0].mxu0
      %v1371 = vadd.f32 0.0, %v1370
      %v1372 = vpop.f32.mrb[0].mxu0
      %v1373 = vpop.f32.mrb[0].mxu0
      %v1374 = vadd.f32 0.0, %v1373
      %v1375 = vpop.f32.mrb[0].mxu0
      %1376 = vdwg.mxu0
      %v1377 = vld [vmem:[%s231] sm:$0xff]
      %v1378 = vld [vmem:[%s231 + $0x8] sm:$0xff]
      %v1379 = vld [vmem:[%s231 + $0x10] sm:$0xff]
      %v1380 = vld [vmem:[%s231 + $0x18] sm:$0xff]
      %v1381 = vld [vmem:[%s231 + $0x20] sm:$0xff]
      %v1382 = vld [vmem:[%s231 + $0x28] sm:$0xff]
      %v1383 = vld [vmem:[%s231 + $0x30] sm:$0xff]
      %v1384 = vld [vmem:[%s231 + $0x38] sm:$0xff]
      %v1385 = vadd.f32 %v1377, %v1347
      %v1386 = vadd.f32 %v1378, %v1350
      %v1387 = vadd.f32 %v1379, %v1355
      %v1388 = vadd.f32 %v1380, %v1358
      %v1389 = vadd.f32 %v1381, %v1363
      %v1390 = vadd.f32 %v1382, %v1366
      %v1391 = vadd.f32 %v1383, %v1371
      %v1392 = vadd.f32 %v1384, %v1374
      %1393 = vst.msk [vmem:[%s231] sm:$0xff] %vm331, %v1385
      %1394 = vst.msk [vmem:[%s231 + $0x8] sm:$0xff] %vm331, %v1386
      %1395 = vst.msk [vmem:[%s231 + $0x10] sm:$0xff] %vm331, %v1387
      %1396 = vst.msk [vmem:[%s231 + $0x18] sm:$0xff] %vm331, %v1388
      %1397 = vst.msk [vmem:[%s231 + $0x20] sm:$0xff] %vm331, %v1389
      %1398 = vst.msk [vmem:[%s231 + $0x28] sm:$0xff] %vm331, %v1390
      %1399 = vst.msk [vmem:[%s231 + $0x30] sm:$0xff] %vm331, %v1391
      %1400 = vst.msk [vmem:[%s231 + $0x38] sm:$0xff] %vm331, %v1392
      %v1401 = vld [vmem:[%s231] sm:$0xff]
      %v1402 = vld [vmem:[%s231 + $0x8] sm:$0xff]
      %v1403 = vld [vmem:[%s231 + $0x10] sm:$0xff]
      %v1404 = vld [vmem:[%s231 + $0x18] sm:$0xff]
      %v1405 = vld [vmem:[%s231 + $0x20] sm:$0xff]
      %v1406 = vld [vmem:[%s231 + $0x28] sm:$0xff]
      %v1407 = vld [vmem:[%s231 + $0x30] sm:$0xff]
      %v1408 = vld [vmem:[%s231 + $0x38] sm:$0xff]
      %v1409 = vsel %vm331, %v1401, 0.0
      %v1410 = vsel %vm331, %v1402, 0.0
      %v1411 = vadd.f32 %v1409, %v1410
      %v1412 = vsel %vm331, %v1403, 0.0
      %v1413 = vadd.f32 %v1411, %v1412
      %v1414 = vsel %vm331, %v1404, 0.0
      %v1415 = vadd.f32 %v1413, %v1414
      %v1416 = vsel %vm331, %v1405, 0.0
      %v1417 = vadd.f32 %v1415, %v1416
      %v1418 = vsel %vm331, %v1406, 0.0
      %v1419 = vadd.f32 %v1417, %v1418
      %v1420 = vsel %vm331, %v1407, 0.0
      %v1421 = vadd.f32 %v1419, %v1420
      %v1422 = vsel %vm331, %v1408, 0.0
      %v1423 = vadd.f32 %v1421, %v1422
      %v1424 = vrot.slane %v1423, 4
      %v1425 = vadd.f32 %v1423, %v1424
      %v1426 = vrot.slane %v1425, 2
      %v1427 = vadd.f32 %v1425, %v1426
      %v1428 = vrot.slane %v1427, 1
      %v1429 = vadd.f32 %v1427, %v1428
      %vm1430 = vcmask 57344
      %1431 = vst.msk [vmem:[%s235] sm:$0x1] %vm1430, %v1429
      %v1432 = vmul.f32 %v1401, %v1401
      %v1433 = vmul.f32 %v1402, %v1402
      %v1434 = vmul.f32 %v1403, %v1403
      %v1435 = vmul.f32 %v1404, %v1404
      %v1436 = vmul.f32 %v1405, %v1405
      %v1437 = vmul.f32 %v1406, %v1406
      %v1438 = vmul.f32 %v1407, %v1407
      %v1439 = vmul.f32 %v1408, %v1408
      %v1440 = vsel %vm331, %v1432, 0.0
      %v1441 = vsel %vm331, %v1433, 0.0
      %v1442 = vadd.f32 %v1440, %v1441
      %v1443 = vsel %vm331, %v1434, 0.0
      %v1444 = vadd.f32 %v1442, %v1443
      %v1445 = vsel %vm331, %v1435, 0.0
      %v1446 = vadd.f32 %v1444, %v1445
      %v1447 = vsel %vm331, %v1436, 0.0
      %v1448 = vadd.f32 %v1446, %v1447
      %v1449 = vsel %vm331, %v1437, 0.0
      %v1450 = vadd.f32 %v1448, %v1449
      %v1451 = vsel %vm331, %v1438, 0.0
      %v1452 = vadd.f32 %v1450, %v1451
      %v1453 = vsel %vm331, %v1439, 0.0
      %v1454 = vadd.f32 %v1452, %v1453
      %v1455 = vrot.slane %v1454, 4
      %v1456 = vadd.f32 %v1454, %v1455
      %v1457 = vrot.slane %v1456, 2
      %v1458 = vadd.f32 %v1456, %v1457
      %v1459 = vrot.slane %v1458, 1
      %v1460 = vadd.f32 %v1458, %v1459
      %1461 = vst.msk [vmem:[%s235 + $0x1] sm:$0x1] %vm1430, %v1460
      %p1462 = scmp.lt.s32.totalorder %s17, 1
      %s1463 = scalar_select %p1462, %s17, 1
      %s1464 = smul.addr %s1463, 8
      %s1465 = smul.addr %s1464, 8
      %s1466 = scalar_lea.vmem %s4, %s1465
      %p1467 = scmp.lt.s32.totalorder %s17, 1
      %s1468 = scalar_select %p1467, %s17, 1
      %s1469 = smul.addr %s1468, 2
      %s1470 = scalar_lea.vmem %s5, %s1469
      // Predicated region
      $region37: #{down_pallas.4} parent=35 // pred_check
        %p1471 = pneg %p124
      $region38: #{down_pallas.4} parent=35 // pred_check_branch
        %1473 = sbr.rel (%p1471) target = $region40
      $region39: #{down_pallas.4} parent=35 // pred_region
        _
      $region40: #{down_pallas.4} parent=35 // pred_fallthru
        _
      // Predicated region
      $region41: #{down_pallas.4} parent=35 // pred_check
        %p1474 = pneg %p150
      $region42: #{down_pallas.4} parent=35 // pred_check_branch
        %1476 = sbr.rel (%p1474) target = $region44
      $region43: #{down_pallas.4} parent=35 // pred_region
        _
      $region44: #{down_pallas.4} parent=35 // pred_fallthru
        _
    $region36: #{down_pallas.4} parent=5 // pred_fallthru
      _
    %p1477 = scmp.le.s32.totalorder 2, %s12
    // Predicated region
    $region45: #{down_pallas.4} parent=5 // pred_check
      %p1478 = pneg %p1477
    $region46: #{down_pallas.4} parent=5 // pred_check_branch
      %1480 = sbr.rel (%p1478) target = $region48
    $region47: #{down_pallas.4} parent=5 // pred_region
      %s1481 = ssub.s32 %s12, 2
      // Predicated region
      $region49: #{down_pallas.4} parent=47 // pred_check
        %p1482 = pneg %p130
      $region50: #{down_pallas.4} parent=47 // pred_check_branch
        %1484 = sbr.rel (%p1482) target = $region52
      $region51: #{down_pallas.4} parent=47 // pred_region
        %p1485 = scmp.lt.s32.totalorder %s18, 1
        %s1486 = scalar_select %p1485, %s18, 1
        %s1487 = smul.addr %s1486, 8
        %s1488 = smul.addr %s1487, 8
        %s1489 = scalar_lea.vmem %s4, %s1488
      $region52: #{down_pallas.4} parent=47 // pred_fallthru
        _
      // Predicated region
      $region53: #{down_pallas.4} parent=47 // pred_check
        %p1490 = pneg %p156
      $region54: #{down_pallas.4} parent=47 // pred_check_branch
        %1492 = sbr.rel (%p1490) target = $region56
      $region55: #{down_pallas.4} parent=47 // pred_region
        %p1493 = scmp.lt.s32.totalorder %s18, 1
        %s1494 = scalar_select %p1493, %s18, 1
        %s1495 = smul.addr %s1494, 2
        %s1496 = scalar_lea.vmem %s5, %s1495
      $region56: #{down_pallas.4} parent=47 // pred_fallthru
        _
    $region48: #{down_pallas.4} parent=5 // pred_fallthru
      _
  $region6: #{down_pallas.4} parent=0 // loop_footer
    %s16 = sadd.s32 1, %s12
  $region7: #{down_pallas.4} parent=0 // loop_footer_branch
    %11 = sbr.rel target = $region3
  $region8: #{down_pallas.4} parent=0 // loop_exit
    _

// kernel: down_pallas.3
$region0: #{down_pallas.3}
  #allocation0 [shape = 'u32[]', space=smem, size = 0x4, offset = 0x4, fixed_abs, tag = 'smem constant byte address 0x4 - core index']
  #allocation1 [shape = 'u32[144,128]{1,0:T(1,128)}', space=vmem, size = 0x12000, scoped, tag = 'internal scratch']
  #allocation2 [shape = 'f32[12,12,4]{2,1,0:T(8,128)}', space=vmem, size = 0x18000, scoped, tag = 'scratch operand']
  %s0 = inlined_call_operand.vmem [shape: f32[2,8,2,8,8], index: 0, kind: input, shape index: {}]
  %s1 = inlined_call_operand.vmem [shape: bf16[9,4,8], index: 1, kind: input, shape index: {}]
  %s2 = inlined_call_operand.vmem [shape: f32[2,100,8], index: 2, kind: output, shape index: {0}]
  %s3 = inlined_call_operand.vmem [shape: f32[2,2,8], index: 3, kind: output, shape index: {1}]
  %4 = xla_tuple %s2, %s3
  %s5 = sld [smem:[#allocation0]]
  $region49: #{down_pallas.3} parent=0
    _
  %s7 = ssub.s32 1, %s5
  %s8 = scalar_select 0, %s7, %s5
  loop: start=0, step=1, limit=4
  $region2: #{down_pallas.3} parent=0 // loop_pre_header
    _
  $region3: #{down_pallas.3} parent=0 // loop_header
    %s10 = sphi 0, %s14
    %p11 = scmp.ge.s32.totalorder %s10, 4
    %s20 = sphi 0, %s22
    %s23 = sphi 0, %s20
    %s24 = sphi 0, %s23
    %s40 = sphi 0, %s24
    %s44 = sphi 0, %s44
    %s46 = sphi 0, %s44
    %s47 = sphi 0, %s46
    %s61 = sphi 0, %s47
    %s67 = sphi 0, %s69
    %s70 = sphi 0, %s67
    %s71 = sphi 0, %s70
    %s87 = sphi 0, %s71
    %s93 = sphi 0, %s95
    %s96 = sphi 0, %s93
    %s97 = sphi 0, %s96
    %s113 = sphi 0, %s97
  $region4: #{down_pallas.3} parent=0 // loop_header_branch
    %13 = sbr.rel (%p11) target = $region8
  $region5: #{down_pallas.3} parent=0 // loop_body
    %s15 = ssub.s32 %s10, 1
    %s16 = ssub.s32 %s10, 2
    %s17 = sadd.s32 %s10, 1
    %s18 = ssub.s32 %s10, %s17
    %p19 = scmp.eq.s32.totalorder %s18, 0
    %s21 = sadd.s32 %s20, 1
    %s22 = scalar_select %p19, %s20, %s21
    %p25 = pneg %p19
    %p26 = scmp.eq.s32.totalorder %s10, 1
    %p27 = por %p25, %p26
    %p28 = scmp.ne.s32.totalorder %s20, %s23
    %p29 = scmp.eq.s32.totalorder %s10, 0
    %p30 = por %p28, %p29
    %p31 = scmp.ne.s32.totalorder %s20, %s23
    %p32 = scmp.eq.s32.totalorder %s15, 1
    %p33 = por %p31, %p32
    %p34 = scmp.ne.s32.totalorder %s23, %s24
    %p35 = scmp.eq.s32.totalorder %s15, 0
    %p36 = por %p34, %p35
    %p37 = scmp.ne.s32.totalorder %s23, %s24
    %p38 = scmp.eq.s32.totalorder %s16, 1
    %p39 = por %p37, %p38
    %p41 = scmp.ne.s32.totalorder %s24, %s40
    %p42 = scmp.eq.s32.totalorder %s16, 0
    %p43 = por %p41, %p42
    %s45 = sadd.s32 %s44, 1
    %p48 = scmp.eq.s32.totalorder %s10, 1
    %p49 = scmp.ne.s32.totalorder %s44, %s46
    %p50 = scmp.eq.s32.totalorder %s10, 0
    %p51 = por %p49, %p50
    %p52 = scmp.ne.s32.totalorder %s44, %s46
    %p53 = scmp.eq.s32.totalorder %s15, 1
    %p54 = por %p52, %p53
    %p55 = scmp.ne.s32.totalorder %s46, %s47
    %p56 = scmp.eq.s32.totalorder %s15, 0
    %p57 = por %p55, %p56
    %p58 = scmp.ne.s32.totalorder %s46, %s47
    %p59 = scmp.eq.s32.totalorder %s16, 1
    %p60 = por %p58, %p59
    %p62 = scmp.ne.s32.totalorder %s47, %s61
    %p63 = scmp.eq.s32.totalorder %s16, 0
    %p64 = por %p62, %p63
    %s65 = ssub.s32 %s10, %s17
    %p66 = scmp.eq.s32.totalorder %s65, 0
    %s68 = sadd.s32 %s67, 1
    %s69 = scalar_select %p66, %s67, %s68
    %p72 = pneg %p66
    %p73 = scmp.eq.s32.totalorder %s10, 1
    %p74 = por %p72, %p73
    %p75 = scmp.ne.s32.totalorder %s67, %s70
    %p76 = scmp.eq.s32.totalorder %s10, 0
    %p77 = por %p75, %p76
    %p78 = scmp.ne.s32.totalorder %s67, %s70
    %p79 = scmp.eq.s32.totalorder %s15, 1
    %p80 = por %p78, %p79
    %p81 = scmp.ne.s32.totalorder %s70, %s71
    %p82 = scmp.eq.s32.totalorder %s15, 0
    %p83 = por %p81, %p82
    %p84 = scmp.ne.s32.totalorder %s70, %s71
    %p85 = scmp.eq.s32.totalorder %s16, 1
    %p86 = por %p84, %p85
    %p88 = scmp.ne.s32.totalorder %s71, %s87
    %p89 = scmp.eq.s32.totalorder %s16, 0
    %p90 = por %p88, %p89
    %s91 = ssub.s32 %s10, %s17
    %p92 = scmp.eq.s32.totalorder %s91, 0
    %s94 = sadd.s32 %s93, 1
    %s95 = scalar_select %p92, %s93, %s94
    %p98 = pneg %p92
    %p99 = scmp.eq.s32.totalorder %s10, 1
    %p100 = por %p98, %p99
    %p101 = scmp.ne.s32.totalorder %s93, %s96
    %p102 = scmp.eq.s32.totalorder %s10, 0
    %p103 = por %p101, %p102
    %p104 = scmp.ne.s32.totalorder %s93, %s96
    %p105 = scmp.eq.s32.totalorder %s15, 1
    %p106 = por %p104, %p105
    %p107 = scmp.ne.s32.totalorder %s96, %s97
    %p108 = scmp.eq.s32.totalorder %s15, 0
    %p109 = por %p107, %p108
    %p110 = scmp.ne.s32.totalorder %s96, %s97
    %p111 = scmp.eq.s32.totalorder %s16, 1
    %p112 = por %p110, %p111
    %p114 = scmp.ne.s32.totalorder %s97, %s113
    %p115 = scmp.eq.s32.totalorder %s16, 0
    %p116 = por %p114, %p115
    %p117 = scmp.le.s32.totalorder 1, %s10
    %p118 = scmp.lt.s32.totalorder %s10, 3
    %p119 = pnand %p117, %p118
    %p120 = pneg %p119
    // Predicated region
    $region9: #{down_pallas.3} parent=5 // pred_check
      _
    $region10: #{down_pallas.3} parent=5 // pred_check_branch
      %122 = sbr.rel (%p119) target = $region12
    $region11: #{down_pallas.3} parent=5 // pred_region
      %s123 = ssub.s32 %s10, 1
      // Predicated region
      $region13: #{down_pallas.3} parent=11 // pred_check
        %p124 = pneg %p57
      $region14: #{down_pallas.3} parent=11 // pred_check_branch
        %126 = sbr.rel (%p124) target = $region16
      $region15: #{down_pallas.3} parent=11 // pred_region
        _
      $region16: #{down_pallas.3} parent=11 // pred_fallthru
        _
    $region12: #{down_pallas.3} parent=5 // pred_fallthru
      _
    %p127 = scmp.lt.s32.totalorder %s10, 2
    // Predicated region
    $region17: #{down_pallas.3} parent=5 // pred_check
      %p128 = pneg %p127
    $region18: #{down_pallas.3} parent=5 // pred_check_branch
      %130 = sbr.rel (%p128) target = $region20
    $region19: #{down_pallas.3} parent=5 // pred_region
      // Predicated region
      $region21: #{down_pallas.3} parent=19 // pred_check
        %p131 = pneg %p30
      $region22: #{down_pallas.3} parent=19 // pred_check_branch
        %133 = sbr.rel (%p131) target = $region24
      $region23: #{down_pallas.3} parent=19 // pred_region
        %p134 = scmp.lt.s32.totalorder %s10, 1
        %s135 = scalar_select %p134, %s10, 1
        %s136 = smul.addr %s135, 16
        %s137 = smul.addr %s136, 8
        %s138 = scalar_lea.vmem %s0, %s137
      $region24: #{down_pallas.3} parent=19 // pred_fallthru
        _
    $region20: #{down_pallas.3} parent=5 // pred_fallthru
      _
    %p139 = scmp.le.s32.totalorder 1, %s10
    %p140 = scmp.lt.s32.totalorder %s10, 3
    %p141 = pnand %p139, %p140
    %p142 = pneg %p141
    // Predicated region
    $region25: #{down_pallas.3} parent=5 // pred_check
      _
    $region26: #{down_pallas.3} parent=5 // pred_check_branch
      %144 = sbr.rel (%p141) target = $region28
    $region27: #{down_pallas.3} parent=5 // pred_region
      %s145 = ssub.s32 %s10, 1
      %p146 = scmp.lt.s32.totalorder %s15, 1
      %s147 = scalar_select %p146, %s15, 1
      %s148 = smul.addr %s147, 16
      %s149 = smul.addr %s148, 8
      %s150 = scalar_lea.vmem %s0, %s149
      %p151 = pneg %p36
      %p152 = pneg %p33
      %p153 = pneg %p57
      %p154 = pneg %p54
      %p155 = pneg %p83
      %p156 = pneg %p80
      %p157 = scmp.lt.s32.totalorder %s15, 1
      %s158 = scalar_select %p157, %s15, 1
      %s159 = smul.addr %s158, 13
      %s160 = smul.addr %s159, 8
      %s161 = scalar_lea.vmem %s2, %s160
      %p162 = pneg %p109
      %p163 = pneg %p106
      %p164 = scmp.lt.s32.totalorder %s15, 1
      %s165 = scalar_select %p164, %s15, 1
      %s166 = smul.addr %s165, 2
      %s167 = scalar_lea.vmem %s3, %s166
      %p168 = scmp.lt.s32.totalorder %s15, 1
      %s169 = scalar_select %p168, %s15, 1
      %s170 = smul.addr %s169, 16
      %s171 = smul.addr %s170, 8
      %s172 = scalar_lea.vmem %s0, %s171
      %p173 = scmp.lt.s32.totalorder %s15, 1
      %s174 = scalar_select %p173, %s15, 1
      %s175 = smul.addr %s174, 13
      %s176 = smul.addr %s175, 8
      %s177 = scalar_lea.vmem %s2, %s176
      %p178 = scmp.lt.s32.totalorder %s15, 1
      %s179 = scalar_select %p178, %s15, 1
      %s180 = smul.addr %s179, 2
      %s181 = scalar_lea.vmem %s3, %s180
      %v183 = vld [vmem:[%s172] sm:$0xff]
      %v184 = vld [vmem:[%s172 + $0x8] sm:$0xff]
      %v185 = vld [vmem:[%s172 + $0x10] sm:$0xff]
      %v186 = vld [vmem:[%s172 + $0x18] sm:$0xff]
      %v187 = vld [vmem:[%s172 + $0x20] sm:$0xff]
      %v188 = vld [vmem:[%s172 + $0x28] sm:$0xff]
      %v189 = vld [vmem:[%s172 + $0x30] sm:$0xff]
      %v190 = vld [vmem:[%s172 + $0x38] sm:$0xff]
      %v191 = vld [vmem:[%s172 + $0x40] sm:$0xff]
      %v192 = vld [vmem:[%s172 + $0x48] sm:$0xff]
      %v193 = vld [vmem:[%s172 + $0x50] sm:$0xff]
      %v194 = vld [vmem:[%s172 + $0x58] sm:$0xff]
      %v195 = vld [vmem:[%s172 + $0x60] sm:$0xff]
      %v196 = vld [vmem:[%s172 + $0x68] sm:$0xff]
      %v197 = vld [vmem:[%s172 + $0x70] sm:$0xff]
      %v198 = vld [vmem:[%s172 + $0x78] sm:$0xff]
      %207 = vrot.lane.b32.xlu0 %v183, 124
      %v208 = vpop.permute.xlu0 %207
      %209 = vrot.lane.b32.xlu0 %v185, 124
      %v210 = vpop.permute.xlu0 %209
      %211 = vrot.lane.b32.xlu0 %v187, 124
      %v212 = vpop.permute.xlu0 %211
      %213 = vrot.lane.b32.xlu0 %v189, 124
      %v214 = vpop.permute.xlu0 %213
      %215 = vrot.lane.b32.xlu0 %v191, 124
      %v216 = vpop.permute.xlu0 %215
      %217 = vrot.lane.b32.xlu0 %v193, 124
      %v218 = vpop.permute.xlu0 %217
      %219 = vrot.lane.b32.xlu0 %v195, 124
      %v220 = vpop.permute.xlu0 %219
      %221 = vrot.lane.b32.xlu0 %v197, 124
      %v222 = vpop.permute.xlu0 %221
      %v231 = vmax.f32 %v183, %v208
      %v232 = vmax.f32 %v185, %v210
      %v233 = vmax.f32 %v187, %v212
      %v234 = vmax.f32 %v189, %v214
      %v235 = vmax.f32 %v191, %v216
      %v236 = vmax.f32 %v193, %v218
      %v237 = vmax.f32 %v195, %v220
      %v238 = vmax.f32 %v197, %v222
      %247 = vrot.lane.b32.xlu0 %v184, 124
      %v248 = vpop.permute.xlu0 %247
      %249 = vrot.lane.b32.xlu0 %v186, 124
      %v250 = vpop.permute.xlu0 %249
      %251 = vrot.lane.b32.xlu0 %v188, 124
      %v252 = vpop.permute.xlu0 %251
      %253 = vrot.lane.b32.xlu0 %v190, 124
      %v254 = vpop.permute.xlu0 %253
      %255 = vrot.lane.b32.xlu0 %v192, 124
      %v256 = vpop.permute.xlu0 %255
      %257 = vrot.lane.b32.xlu0 %v194, 124
      %v258 = vpop.permute.xlu0 %257
      %259 = vrot.lane.b32.xlu0 %v196, 124
      %v260 = vpop.permute.xlu0 %259
      %261 = vrot.lane.b32.xlu0 %v198, 124
      %v262 = vpop.permute.xlu0 %261
      %v271 = vmax.f32 %v184, %v248
      %v272 = vmax.f32 %v186, %v250
      %v273 = vmax.f32 %v188, %v252
      %v274 = vmax.f32 %v190, %v254
      %v275 = vmax.f32 %v192, %v256
      %v276 = vmax.f32 %v194, %v258
      %v277 = vmax.f32 %v196, %v260
      %v278 = vmax.f32 %v198, %v262
      %v279 = vmax.f32 %v231, %v271
      %v280 = vmax.f32 %v232, %v272
      %v281 = vmax.f32 %v233, %v273
      %v282 = vmax.f32 %v234, %v274
      %v283 = vmax.f32 %v235, %v275
      %v284 = vmax.f32 %v236, %v276
      %v285 = vmax.f32 %v237, %v277
      %v286 = vmax.f32 %v238, %v278
      %vm287 = vcmask 31744
      %288 = vst.msk [vmem:[#allocation2] sm:$0xff] %vm287, 0.0
      %vm289 = vcmask 27648
      %290 = vst.msk [vmem:[#allocation2 + $0x8] sm:$0xf] %vm289, 0.0
      %291 = vst.msk [vmem:[#allocation2 + $0x10] sm:$0xff] %vm287, 0.0
      %292 = vst.msk [vmem:[#allocation2 + $0x18] sm:$0xf] %vm289, 0.0
      %293 = vst.msk [vmem:[#allocation2 + $0x20] sm:$0xff] %vm287, 0.0
      %294 = vst.msk [vmem:[#allocation2 + $0x28] sm:$0xf] %vm289, 0.0
      %295 = vst.msk [vmem:[#allocation2 + $0x30] sm:$0xff] %vm287, 0.0
      %296 = vst.msk [vmem:[#allocation2 + $0x38] sm:$0xf] %vm289, 0.0
      %297 = vst.msk [vmem:[#allocation2 + $0x40] sm:$0xff] %vm287, 0.0
      %298 = vst.msk [vmem:[#allocation2 + $0x48] sm:$0xf] %vm289, 0.0
      %299 = vst.msk [vmem:[#allocation2 + $0x50] sm:$0xff] %vm287, 0.0
      %300 = vst.msk [vmem:[#allocation2 + $0x58] sm:$0xf] %vm289, 0.0
      %301 = vst.msk [vmem:[#allocation2 + $0x60] sm:$0xff] %vm287, 0.0
      %302 = vst.msk [vmem:[#allocation2 + $0x68] sm:$0xf] %vm289, 0.0
      %303 = vst.msk [vmem:[#allocation2 + $0x70] sm:$0xff] %vm287, 0.0
      %304 = vst.msk [vmem:[#allocation2 + $0x78] sm:$0xf] %vm289, 0.0
      %305 = vst.msk [vmem:[#allocation2 + $0x80] sm:$0xff] %vm287, 0.0
      %306 = vst.msk [vmem:[#allocation2 + $0x88] sm:$0xf] %vm289, 0.0
      %307 = vst.msk [vmem:[#allocation2 + $0x90] sm:$0xff] %vm287, 0.0
      %308 = vst.msk [vmem:[#allocation2 + $0x98] sm:$0xf] %vm289, 0.0
      %309 = vst.msk [vmem:[#allocation2 + $0xa0] sm:$0xff] %vm287, 0.0
      %310 = vst.msk [vmem:[#allocation2 + $0xa8] sm:$0xf] %vm289, 0.0
      %311 = vst.msk [vmem:[#allocation2 + $0xb0] sm:$0xff] %vm287, 0.0
      %312 = vst.msk [vmem:[#allocation2 + $0xb8] sm:$0xf] %vm289, 0.0
      %s313 = scalar_lea.vmem [#allocation2], 32
      %314 = vst.msk [vmem:[%s313 + $0x2] sm:$0xff] %vm287, %v279
      %315 = vst.msk [vmem:[%s313 + $0x12] sm:$0xff] %vm287, %v280
      %316 = vst.msk [vmem:[%s313 + $0x22] sm:$0xff] %vm287, %v281
      %317 = vst.msk [vmem:[%s313 + $0x32] sm:$0xff] %vm287, %v282
      %318 = vst.msk [vmem:[%s313 + $0x42] sm:$0xff] %vm287, %v283
      %319 = vst.msk [vmem:[%s313 + $0x52] sm:$0xff] %vm287, %v284
      %320 = vst.msk [vmem:[%s313 + $0x62] sm:$0xff] %vm287, %v285
      %321 = vst.msk [vmem:[%s313 + $0x72] sm:$0xff] %vm287, %v286
      %v322 = vld [vmem:[#allocation2] sm:$0xff]
      %v323 = vld [vmem:[#allocation2 + $0x8] sm:$0x3]
      %v324 = vld [vmem:[#allocation2 + $0x10] sm:$0xff]
      %v325 = vld [vmem:[#allocation2 + $0x18] sm:$0x3]
      %v326 = vld [vmem:[#allocation2 + $0x20] sm:$0xff]
      %v327 = vld [vmem:[#allocation2 + $0x28] sm:$0x3]
      %v328 = vld [vmem:[#allocation2 + $0x30] sm:$0xff]
      %v329 = vld [vmem:[#allocation2 + $0x38] sm:$0x3]
      %v330 = vld [vmem:[#allocation2 + $0x40] sm:$0xff]
      %v331 = vld [vmem:[#allocation2 + $0x48] sm:$0x3]
      %v332 = vld [vmem:[#allocation2 + $0x50] sm:$0xff]
      %v333 = vld [vmem:[#allocation2 + $0x58] sm:$0x3]
      %v334 = vld [vmem:[#allocation2 + $0x60] sm:$0xff]
      %v335 = vld [vmem:[#allocation2 + $0x68] sm:$0x3]
      %v336 = vld [vmem:[#allocation2 + $0x70] sm:$0xff]
      %v337 = vld [vmem:[#allocation2 + $0x78] sm:$0x3]
      %v338 = vld [vmem:[#allocation2 + $0x80] sm:$0xff]
      %v339 = vld [vmem:[#allocation2 + $0x88] sm:$0x3]
      %v340 = vld [vmem:[#allocation2 + $0x90] sm:$0xff]
      %v341 = vld [vmem:[#allocation2 + $0x98] sm:$0x3]
      %v362 = vcombine.high %v322, %v322
      %v364 = vunpack.c.l.s4 1983009808
      %v365 = vunpack.c.0.s8 %v364
      %v366 = vlaneseq
      %v367 = vshrl.u32 %v366, 7
      %v368 = vsub.s32 %v365, %v367
      %v369 = vrot.slane %v322, %v368
      %v371 = vunpack.c.l.s4 1983009808
      %v372 = vunpack.c.0.s8 %v371
      %v373 = vlaneseq
      %v374 = vshrl.u32 %v373, 7
      %v375 = vsub.s32 %v372, %v374
      %v376 = vrot.slane %v362, %v375
      %v377 = vcombine.high %v369, %v369
      %v378 = vcombine.high %v376, %v376
      %v380 = vunpack.c.l.s4 1983009808
      %v381 = vunpack.c.0.s8 %v380
      %v382 = vlaneseq
      %v383 = vshrl.u32 %v382, 7
      %v384 = vsub.s32 %v381, %v383
      %v385 = vrot.slane %v323, %v384
      %v386 = vcombine.high %v324, %v324
      %v388 = vunpack.c.l.s4 1983009808
      %v389 = vunpack.c.0.s8 %v388
      %v390 = vlaneseq
      %v391 = vshrl.u32 %v390, 7
      %v392 = vsub.s32 %v389, %v391
      %v393 = vrot.slane %v324, %v392
      %v395 = vunpack.c.l.s4 1983009808
      %v396 = vunpack.c.0.s8 %v395
      %v397 = vlaneseq
      %v398 = vshrl.u32 %v397, 7
      %v399 = vsub.s32 %v396, %v398
      %v400 = vrot.slane %v386, %v399
      %v401 = vcombine.high %v393, %v393
      %v402 = vcombine.high %v400, %v400
      %v404 = vunpack.c.l.s4 1983009808
      %v405 = vunpack.c.0.s8 %v404
      %v406 = vlaneseq
      %v407 = vshrl.u32 %v406, 7
      %v408 = vsub.s32 %v405, %v407
      %v409 = vrot.slane %v325, %v408
      %v410 = vcombine.high %v326, %v326
      %v412 = vunpack.c.l.s4 1983009808
      %v413 = vunpack.c.0.s8 %v412
      %v414 = vlaneseq
      %v415 = vshrl.u32 %v414, 7
      %v416 = vsub.s32 %v413, %v415
      %v417 = vrot.slane %v326, %v416
      %v419 = vunpack.c.l.s4 1983009808
      %v420 = vunpack.c.0.s8 %v419
      %v421 = vlaneseq
      %v422 = vshrl.u32 %v421, 7
      %v423 = vsub.s32 %v420, %v422
      %v424 = vrot.slane %v410, %v423
      %v425 = vcombine.high %v417, %v417
      %v426 = vcombine.high %v424, %v424
      %v428 = vunpack.c.l.s4 1983009808
      %v429 = vunpack.c.0.s8 %v428
      %v430 = vlaneseq
      %v431 = vshrl.u32 %v430, 7
      %v432 = vsub.s32 %v429, %v431
      %v433 = vrot.slane %v327, %v432
      %v434 = vcombine.high %v328, %v328
      %v436 = vunpack.c.l.s4 1983009808
      %v437 = vunpack.c.0.s8 %v436
      %v438 = vlaneseq
      %v439 = vshrl.u32 %v438, 7
      %v440 = vsub.s32 %v437, %v439
      %v441 = vrot.slane %v328, %v440
      %v443 = vunpack.c.l.s4 1983009808
      %v444 = vunpack.c.0.s8 %v443
      %v445 = vlaneseq
      %v446 = vshrl.u32 %v445, 7
      %v447 = vsub.s32 %v444, %v446
      %v448 = vrot.slane %v434, %v447
      %v449 = vcombine.high %v441, %v441
      %v450 = vcombine.high %v448, %v448
      %v452 = vunpack.c.l.s4 1983009808
      %v453 = vunpack.c.0.s8 %v452
      %v454 = vlaneseq
      %v455 = vshrl.u32 %v454, 7
      %v456 = vsub.s32 %v453, %v455
      %v457 = vrot.slane %v329, %v456
      %v458 = vcombine.high %v330, %v330
      %v460 = vunpack.c.l.s4 1983009808
      %v461 = vunpack.c.0.s8 %v460
      %v462 = vlaneseq
      %v463 = vshrl.u32 %v462, 7
      %v464 = vsub.s32 %v461, %v463
      %v465 = vrot.slane %v330, %v464
      %v467 = vunpack.c.l.s4 1983009808
      %v468 = vunpack.c.0.s8 %v467
      %v469 = vlaneseq
      %v470 = vshrl.u32 %v469, 7
      %v471 = vsub.s32 %v468, %v470
      %v472 = vrot.slane %v458, %v471
      %v473 = vcombine.high %v465, %v465
      %v474 = vcombine.high %v472, %v472
      %v476 = vunpack.c.l.s4 1983009808
      %v477 = vunpack.c.0.s8 %v476
      %v478 = vlaneseq
      %v479 = vshrl.u32 %v478, 7
      %v480 = vsub.s32 %v477, %v479
      %v481 = vrot.slane %v331, %v480
      %v482 = vcombine.high %v332, %v332
      %v484 = vunpack.c.l.s4 1983009808
      %v485 = vunpack.c.0.s8 %v484
      %v486 = vlaneseq
      %v487 = vshrl.u32 %v486, 7
      %v488 = vsub.s32 %v485, %v487
      %v489 = vrot.slane %v332, %v488
      %v491 = vunpack.c.l.s4 1983009808
      %v492 = vunpack.c.0.s8 %v491
      %v493 = vlaneseq
      %v494 = vshrl.u32 %v493, 7
      %v495 = vsub.s32 %v492, %v494
      %v496 = vrot.slane %v482, %v495
      %v497 = vcombine.high %v489, %v489
      %v498 = vcombine.high %v496, %v496
      %v500 = vunpack.c.l.s4 1983009808
      %v501 = vunpack.c.0.s8 %v500
      %v502 = vlaneseq
      %v503 = vshrl.u32 %v502, 7
      %v504 = vsub.s32 %v501, %v503
      %v505 = vrot.slane %v333, %v504
      %v506 = vcombine.high %v334, %v334
      %v508 = vunpack.c.l.s4 1983009808
      %v509 = vunpack.c.0.s8 %v508
      %v510 = vlaneseq
      %v511 = vshrl.u32 %v510, 7
      %v512 = vsub.s32 %v509, %v511
      %v513 = vrot.slane %v334, %v512
      %v515 = vunpack.c.l.s4 1983009808
      %v516 = vunpack.c.0.s8 %v515
      %v517 = vlaneseq
      %v518 = vshrl.u32 %v517, 7
      %v519 = vsub.s32 %v516, %v518
      %v520 = vrot.slane %v506, %v519
      %v521 = vcombine.high %v513, %v513
      %v522 = vcombine.high %v520, %v520
      %v524 = vunpack.c.l.s4 1983009808
      %v525 = vunpack.c.0.s8 %v524
      %v526 = vlaneseq
      %v527 = vshrl.u32 %v526, 7
      %v528 = vsub.s32 %v525, %v527
      %v529 = vrot.slane %v335, %v528
      %v530 = vcombine.high %v336, %v336
      %v532 = vunpack.c.l.s4 1983009808
      %v533 = vunpack.c.0.s8 %v532
      %v534 = vlaneseq
      %v535 = vshrl.u32 %v534, 7
      %v536 = vsub.s32 %v533, %v535
      %v537 = vrot.slane %v336, %v536
      %v539 = vunpack.c.l.s4 1983009808
      %v540 = vunpack.c.0.s8 %v539
      %v541 = vlaneseq
      %v542 = vshrl.u32 %v541, 7
      %v543 = vsub.s32 %v540, %v542
      %v544 = vrot.slane %v530, %v543
      %v545 = vcombine.high %v537, %v537
      %v546 = vcombine.high %v544, %v544
      %v548 = vunpack.c.l.s4 1983009808
      %v549 = vunpack.c.0.s8 %v548
      %v550 = vlaneseq
      %v551 = vshrl.u32 %v550, 7
      %v552 = vsub.s32 %v549, %v551
      %v553 = vrot.slane %v337, %v552
      %v554 = vcombine.high %v338, %v338
      %v556 = vunpack.c.l.s4 1983009808
      %v557 = vunpack.c.0.s8 %v556
      %v558 = vlaneseq
      %v559 = vshrl.u32 %v558, 7
      %v560 = vsub.s32 %v557, %v559
      %v561 = vrot.slane %v338, %v560
      %v563 = vunpack.c.l.s4 1983009808
      %v564 = vunpack.c.0.s8 %v563
      %v565 = vlaneseq
      %v566 = vshrl.u32 %v565, 7
      %v567 = vsub.s32 %v564, %v566
      %v568 = vrot.slane %v554, %v567
      %v569 = vcombine.high %v561, %v561
      %v570 = vcombine.high %v568, %v568
      %v572 = vunpack.c.l.s4 1983009808
      %v573 = vunpack.c.0.s8 %v572
      %v574 = vlaneseq
      %v575 = vshrl.u32 %v574, 7
      %v576 = vsub.s32 %v573, %v575
      %v577 = vrot.slane %v339, %v576
      %v578 = vcombine.high %v340, %v340
      %v580 = vunpack.c.l.s4 1983009808
      %v581 = vunpack.c.0.s8 %v580
      %v582 = vlaneseq
      %v583 = vshrl.u32 %v582, 7
      %v584 = vsub.s32 %v581, %v583
      %v585 = vrot.slane %v340, %v584
      %v587 = vunpack.c.l.s4 1983009808
      %v588 = vunpack.c.0.s8 %v587
      %v589 = vlaneseq
      %v590 = vshrl.u32 %v589, 7
      %v591 = vsub.s32 %v588, %v590
      %v592 = vrot.slane %v578, %v591
      %v593 = vcombine.high %v585, %v585
      %v594 = vcombine.high %v592, %v592
      %v596 = vunpack.c.l.s4 1983009808
      %v597 = vunpack.c.0.s8 %v596
      %v598 = vlaneseq
      %v599 = vshrl.u32 %v598, 7
      %v600 = vsub.s32 %v597, %v599
      %v601 = vrot.slane %v341, %v600
      %v602 = vcombine.low %v369, %v377
      %v603 = vcombine.low %v376, %v378
      %v605 = vunpack.c.l.s4 1983009808
      %v606 = vunpack.c.0.s8 %v605
      %v607 = vlaneseq
      %v608 = vshrl.u32 %v607, 7
      %v609 = vsub.s32 %v606, %v608
      %v610 = vrot.slane %v602, %v609
      %v612 = vunpack.c.l.s4 1983009808
      %v613 = vunpack.c.0.s8 %v612
      %v614 = vlaneseq
      %v615 = vshrl.u32 %v614, 7
      %v616 = vsub.s32 %v613, %v615
      %v617 = vrot.slane %v603, %v616
      %v618 = vcombine.low %v610, %v617
      %v619 = vcombine.low %v385, %v393
      %v620 = vcombine.low %v401, %v400
      %v622 = vunpack.c.l.s4 1983009808
      %v623 = vunpack.c.0.s8 %v622
      %v624 = vlaneseq
      %v625 = vshrl.u32 %v624, 7
      %v626 = vsub.s32 %v623, %v625
      %v627 = vrot.slane %v619, %v626
      %v629 = vunpack.c.l.s4 1983009808
      %v630 = vunpack.c.0.s8 %v629
      %v631 = vlaneseq
      %v632 = vshrl.u32 %v631, 7
      %v633 = vsub.s32 %v630, %v632
      %v634 = vrot.slane %v620, %v633
      %v635 = vcombine.low %v627, %v634
      %v636 = vcombine.low %v402, %v409
      %v637 = vcombine.low %v417, %v425
      %v639 = vunpack.c.l.s4 1983009808
      %v640 = vunpack.c.0.s8 %v639
      %v641 = vlaneseq
      %v642 = vshrl.u32 %v641, 7
      %v643 = vsub.s32 %v640, %v642
      %v644 = vrot.slane %v636, %v643
      %v646 = vunpack.c.l.s4 1983009808
      %v647 = vunpack.c.0.s8 %v646
      %v648 = vlaneseq
      %v649 = vshrl.u32 %v648, 7
      %v650 = vsub.s32 %v647, %v649
      %v651 = vrot.slane %v637, %v650
      %v652 = vcombine.low %v644, %v651
      %v653 = vcombine.low %v424, %v426
      %v654 = vcombine.low %v433, %v441
      %v656 = vunpack.c.l.s4 1983009808
      %v657 = vunpack.c.0.s8 %v656
      %v658 = vlaneseq
      %v659 = vshrl.u32 %v658, 7
      %v660 = vsub.s32 %v657, %v659
      %v661 = vrot.slane %v653, %v660
      %v663 = vunpack.c.l.s4 1983009808
      %v664 = vunpack.c.0.s8 %v663
      %v665 = vlaneseq
      %v666 = vshrl.u32 %v665, 7
      %v667 = vsub.s32 %v664, %v666
      %v668 = vrot.slane %v654, %v667
      %v669 = vcombine.low %v661, %v668
      %v670 = vcombine.low %v449, %v448
      %v671 = vcombine.low %v450, %v457
      %v673 = vunpack.c.l.s4 1983009808
      %v674 = vunpack.c.0.s8 %v673
      %v675 = vlaneseq
      %v676 = vshrl.u32 %v675, 7
      %v677 = vsub.s32 %v674, %v676
      %v678 = vrot.slane %v670, %v677
      %v680 = vunpack.c.l.s4 1983009808
      %v681 = vunpack.c.0.s8 %v680
      %v682 = vlaneseq
      %v683 = vshrl.u32 %v682, 7
      %v684 = vsub.s32 %v681, %v683
      %v685 = vrot.slane %v671, %v684
      %v686 = vcombine.low %v678, %v685
      %v687 = vcombine.low %v465, %v473
      %v688 = vcombine.low %v472, %v474
      %v690 = vunpack.c.l.s4 1983009808
      %v691 = vunpack.c.0.s8 %v690
      %v692 = vlaneseq
      %v693 = vshrl.u32 %v692, 7
      %v694 = vsub.s32 %v691, %v693
      %v695 = vrot.slane %v687, %v694
      %v697 = vunpack.c.l.s4 1983009808
      %v698 = vunpack.c.0.s8 %v697
      %v699 = vlaneseq
      %v700 = vshrl.u32 %v699, 7
      %v701 = vsub.s32 %v698, %v700
      %v702 = vrot.slane %v688, %v701
      %v703 = vcombine.low %v695, %v702
      %v704 = vcombine.low %v481, %v489
      %v705 = vcombine.low %v497, %v496
      %v707 = vunpack.c.l.s4 1983009808
      %v708 = vunpack.c.0.s8 %v707
      %v709 = vlaneseq
      %v710 = vshrl.u32 %v709, 7
      %v711 = vsub.s32 %v708, %v710
      %v712 = vrot.slane %v704, %v711
      %v714 = vunpack.c.l.s4 1983009808
      %v715 = vunpack.c.0.s8 %v714
      %v716 = vlaneseq
      %v717 = vshrl.u32 %v716, 7
      %v718 = vsub.s32 %v715, %v717
      %v719 = vrot.slane %v705, %v718
      %v720 = vcombine.low %v712, %v719
      %v721 = vcombine.low %v498, %v505
      %v722 = vcombine.low %v513, %v521
      %v724 = vunpack.c.l.s4 1983009808
      %v725 = vunpack.c.0.s8 %v724
      %v726 = vlaneseq
      %v727 = vshrl.u32 %v726, 7
      %v728 = vsub.s32 %v725, %v727
      %v729 = vrot.slane %v721, %v728
      %v731 = vunpack.c.l.s4 1983009808
      %v732 = vunpack.c.0.s8 %v731
      %v733 = vlaneseq
      %v734 = vshrl.u32 %v733, 7
      %v735 = vsub.s32 %v732, %v734
      %v736 = vrot.slane %v722, %v735
      %v737 = vcombine.low %v729, %v736
      %v738 = vcombine.low %v520, %v522
      %v739 = vcombine.low %v529, %v537
      %v741 = vunpack.c.l.s4 1983009808
      %v742 = vunpack.c.0.s8 %v741
      %v743 = vlaneseq
      %v744 = vshrl.u32 %v743, 7
      %v745 = vsub.s32 %v742, %v744
      %v746 = vrot.slane %v738, %v745
      %v748 = vunpack.c.l.s4 1983009808
      %v749 = vunpack.c.0.s8 %v748
      %v750 = vlaneseq
      %v751 = vshrl.u32 %v750, 7
      %v752 = vsub.s32 %v749, %v751
      %v753 = vrot.slane %v739, %v752
      %v754 = vcombine.low %v746, %v753
      %v755 = vcombine.low %v545, %v544
      %v756 = vcombine.low %v546, %v553
      %v758 = vunpack.c.l.s4 1983009808
      %v759 = vunpack.c.0.s8 %v758
      %v760 = vlaneseq
      %v761 = vshrl.u32 %v760, 7
      %v762 = vsub.s32 %v759, %v761
      %v763 = vrot.slane %v755, %v762
      %v765 = vunpack.c.l.s4 1983009808
      %v766 = vunpack.c.0.s8 %v765
      %v767 = vlaneseq
      %v768 = vshrl.u32 %v767, 7
      %v769 = vsub.s32 %v766, %v768
      %v770 = vrot.slane %v756, %v769
      %v771 = vcombine.low %v763, %v770
      %v772 = vcombine.low %v561, %v569
      %v773 = vcombine.low %v568, %v570
      %v775 = vunpack.c.l.s4 1983009808
      %v776 = vunpack.c.0.s8 %v775
      %v777 = vlaneseq
      %v778 = vshrl.u32 %v777, 7
      %v779 = vsub.s32 %v776, %v778
      %v780 = vrot.slane %v772, %v779
      %v782 = vunpack.c.l.s4 1983009808
      %v783 = vunpack.c.0.s8 %v782
      %v784 = vlaneseq
      %v785 = vshrl.u32 %v784, 7
      %v786 = vsub.s32 %v783, %v785
      %v787 = vrot.slane %v773, %v786
      %v788 = vcombine.low %v780, %v787
      %v789 = vcombine.low %v577, %v585
      %v790 = vcombine.low %v593, %v592
      %v792 = vunpack.c.l.s4 1983009808
      %v793 = vunpack.c.0.s8 %v792
      %v794 = vlaneseq
      %v795 = vshrl.u32 %v794, 7
      %v796 = vsub.s32 %v793, %v795
      %v797 = vrot.slane %v789, %v796
      %v799 = vunpack.c.l.s4 1983009808
      %v800 = vunpack.c.0.s8 %v799
      %v801 = vlaneseq
      %v802 = vshrl.u32 %v801, 7
      %v803 = vsub.s32 %v800, %v802
      %v804 = vrot.slane %v790, %v803
      %v805 = vcombine.low %v797, %v804
      %v806 = vcombine.low %v594, %v601
      %v808 = vunpack.c.l.s4 1983009808
      %v809 = vunpack.c.0.s8 %v808
      %v810 = vlaneseq
      %v811 = vshrl.u32 %v810, 7
      %v812 = vsub.s32 %v809, %v811
      %v813 = vrot.slane %v806, %v812
      %v827 = vpack.c.bf16 %v635, %v618
      %v828 = vpack.c.bf16 %v669, %v652
      %v829 = vpack.c.bf16 %v703, %v686
      %v830 = vpack.c.bf16 %v737, %v720
      %v831 = vpack.c.bf16 %v771, %v754
      %v832 = vpack.c.bf16 %v805, %v788
      %v833 = vpack.c.bf16 %v813, %v813
      %v834 = vld [vmem:[%s1] sm:$0x3]
      %v836 = vsel %vm287, %v827, 0
      %v839 = vsel %vm287, %v828, 0
      %v842 = vsel %vm287, %v829, 0
      %v845 = vsel %vm287, %v830, 0
      %v848 = vsel %vm287, %v831, 0
      %v851 = vsel %vm287, %v832, 0
      %v854 = vsel %vm287, %v833, 0
      %vm856 = vcmask 1041408
      %v858 = vsel %vm856, %v834, 0
      %860 = vmatprep.subr.bf16.mxu0 0
      %861 = vmatpush1.bf16.msra.mxu0 %v858
      %862 = vmatprep.subr.bf16.mxu0 0
      %863 = vmatpush1.bf16.msra.mxu0 0
      %864 = vmatprep.subr.bf16.mxu0 0
      %865 = vmatpush1.bf16.msra.mxu0 0
      %866 = vmatprep.subr.bf16.mxu0 0
      %867 = vmatpush1.bf16.msra.mxu0 0
      %868 = vmatprep.subr.bf16.mxu0 0
      %869 = vmatpush1.bf16.msra.mxu0 0
      %870 = vmatprep.subr.bf16.mxu0 0
      %871 = vmatpush1.bf16.msra.mxu0 0
      %872 = vmatprep.subr.bf16.mxu0 0
      %873 = vmatpush1.bf16.msra.mxu0 0
      %874 = vmatprep.subr.bf16.mxu0 0
      %875 = vmatpush1.bf16.msra.mxu0 0
      %876 = vmatprep.subr.bf16.mxu0 0
      %877 = vmatpush1.bf16.msra.mxu0 0
      %878 = vmatprep.subr.bf16.mxu0 0
      %879 = vmatpush1.bf16.msra.mxu0 0
      %880 = vmatprep.subr.bf16.mxu0 0
      %881 = vmatpush1.bf16.msra.mxu0 0
      %882 = vmatprep.subr.bf16.mxu0 0
      %883 = vmatpush1.bf16.msra.mxu0 0
      %884 = vmatprep.subr.bf16.mxu0 0
      %885 = vmatpush1.bf16.msra.mxu0 0
      %886 = vmatprep.subr.bf16.mxu0 0
      %887 = vmatpush1.bf16.msra.mxu0 0
      %888 = vmatprep.subr.bf16.mxu0 0
      %889 = vmatpush1.bf16.msra.mxu0 0
      %890 = vmatprep.subr.bf16.mxu0 0
      %891 = vmatpush1.bf16.msra.mxu0 0
      %892 = vmatprep.mubr.bf16.mxu0 0
      %893 = vmatmul.mubr.bf16.gmra.mrb[0].mxu0 %v836
      %v894 = vpop.f32.mrb[0].mxu0
      %v895 = vadd.f32 0.0, %v894
      %v896 = vpop.f32.mrb[0].mxu0
      %v897 = vpop.f32.mrb[0].mxu0
      %v898 = vadd.f32 0.0, %v897
      %v899 = vpop.f32.mrb[0].mxu0
      %900 = vmatprep.mubr.bf16.mxu0 0
      %901 = vmatmul.mubr.bf16.gmra.mrb[0].mxu0 %v839
      %v902 = vpop.f32.mrb[0].mxu0
      %v903 = vadd.f32 0.0, %v902
      %v904 = vpop.f32.mrb[0].mxu0
      %v905 = vpop.f32.mrb[0].mxu0
      %v906 = vadd.f32 0.0, %v905
      %v907 = vpop.f32.mrb[0].mxu0
      %908 = vmatprep.mubr.bf16.mxu0 0
      %909 = vmatmul.mubr.bf16.gmra.mrb[0].mxu0 %v842
      %v910 = vpop.f32.mrb[0].mxu0
      %v911 = vadd.f32 0.0, %v910
      %v912 = vpop.f32.mrb[0].mxu0
      %v913 = vpop.f32.mrb[0].mxu0
      %v914 = vadd.f32 0.0, %v913
      %v915 = vpop.f32.mrb[0].mxu0
      %916 = vmatprep.mubr.bf16.mxu0 0
      %917 = vmatmul.mubr.bf16.gmra.mrb[0].mxu0 %v845
      %v918 = vpop.f32.mrb[0].mxu0
      %v919 = vadd.f32 0.0, %v918
      %v920 = vpop.f32.mrb[0].mxu0
      %v921 = vpop.f32.mrb[0].mxu0
      %v922 = vadd.f32 0.0, %v921
      %v923 = vpop.f32.mrb[0].mxu0
      %924 = vmatprep.mubr.bf16.mxu0 0
      %925 = vmatmul.mubr.bf16.gmra.mrb[0].mxu0 %v848
      %v926 = vpop.f32.mrb[0].mxu0
      %v927 = vadd.f32 0.0, %v926
      %v928 = vpop.f32.mrb[0].mxu0
      %v929 = vpop.f32.mrb[0].mxu0
      %v930 = vadd.f32 0.0, %v929
      %v931 = vpop.f32.mrb[0].mxu0
      %932 = vmatprep.mubr.bf16.mxu0 0
      %933 = vmatmul.mubr.bf16.gmra.mrb[0].mxu0 %v851
      %v934 = vpop.f32.mrb[0].mxu0
      %v935 = vadd.f32 0.0, %v934
      %v936 = vpop.f32.mrb[0].mxu0
      %v937 = vpop.f32.mrb[0].mxu0
      %v938 = vadd.f32 0.0, %v937
      %v939 = vpop.f32.mrb[0].mxu0
      %940 = vmatprep.mubr.bf16.mxu0 0
      %941 = vmatmul.mubr.bf16.gmra.mrb[0].mxu0 %v854
      %v942 = vpop.f32.mrb[0].mxu0
      %v943 = vadd.f32 0.0, %v942
      %v944 = vpop.f32.mrb[0].mxu0
      %v945 = vpop.f32.mrb[0].mxu0
      %v946 = vpop.f32.mrb[0].mxu0
      %947 = vdwg.mxu0
      %vm948 = vcmask 64512
      %949 = vst.msk [vmem:[%s177] sm:$0xff] %vm948, %v895
      %950 = vst.msk [vmem:[%s177 + $0x8] sm:$0xff] %vm948, %v898
      %951 = vst.msk [vmem:[%s177 + $0x10] sm:$0xff] %vm948, %v903
      %952 = vst.msk [vmem:[%s177 + $0x18] sm:$0xff] %vm948, %v906
      %953 = vst.msk [vmem:[%s177 + $0x20] sm:$0xff] %vm948, %v911
      %954 = vst.msk [vmem:[%s177 + $0x28] sm:$0xff] %vm948, %v914
      %955 = vst.msk [vmem:[%s177 + $0x30] sm:$0xff] %vm948, %v919
      %956 = vst.msk [vmem:[%s177 + $0x38] sm:$0xff] %vm948, %v922
      %957 = vst.msk [vmem:[%s177 + $0x40] sm:$0xff] %vm948, %v927
      %958 = vst.msk [vmem:[%s177 + $0x48] sm:$0xff] %vm948, %v930
      %959 = vst.msk [vmem:[%s177 + $0x50] sm:$0xff] %vm948, %v935
      %960 = vst.msk [vmem:[%s177 + $0x58] sm:$0xff] %vm948, %v938
      %vm961 = vcmask 60416
      %962 = vst.msk [vmem:[%s177 + $0x60] sm:$0xf] %vm961, %v943
      %v963 = vld [vmem:[#allocation2 + $0x1] sm:$0xff]
      %v964 = vld [vmem:[#allocation2 + $0x9] sm:$0x3]
      %v965 = vld [vmem:[#allocation2 + $0x11] sm:$0xff]
      %v966 = vld [vmem:[#allocation2 + $0x19] sm:$0x3]
      %v967 = vld [vmem:[#allocation2 + $0x21] sm:$0xff]
      %v968 = vld [vmem:[#allocation2 + $0x29] sm:$0x3]
      %v969 = vld [vmem:[#allocation2 + $0x31] sm:$0xff]
      %v970 = vld [vmem:[#allocation2 + $0x39] sm:$0x3]
      %v971 = vld [vmem:[#allocation2 + $0x41] sm:$0xff]
      %v972 = vld [vmem:[#allocation2 + $0x49] sm:$0x3]
      %v973 = vld [vmem:[#allocation2 + $0x51] sm:$0xff]
      %v974 = vld [vmem:[#allocation2 + $0x59] sm:$0x3]
      %v975 = vld [vmem:[#allocation2 + $0x61] sm:$0xff]
      %v976 = vld [vmem:[#allocation2 + $0x69] sm:$0x3]
      %v977 = vld [vmem:[#allocation2 + $0x71] sm:$0xff]
      %v978 = vld [vmem:[#allocation2 + $0x79] sm:$0x3]
      %v979 = vld [vmem:[#allocation2 + $0x81] sm:$0xff]
      %v980 = vld [vmem:[#allocation2 + $0x89] sm:$0x3]
      %v981 = vld [vmem:[#allocation2 + $0x91] sm:$0xff]
      %v982 = vld [vmem:[#allocation2 + $0x99] sm:$0x3]
      %v1003 = vcombine.high %v963, %v963
      %v1005 = vunpack.c.l.s4 1983009808
      %v1006 = vunpack.c.0.s8 %v1005
      %v1007 = vlaneseq
      %v1008 = vshrl.u32 %v1007, 7
      %v1009 = vsub.s32 %v1006, %v1008
      %v1010 = vrot.slane %v963, %v1009
      %v1012 = vunpack.c.l.s4 1983009808
      %v1013 = vunpack.c.0.s8 %v1012
      %v1014 = vlaneseq
      %v1015 = vshrl.u32 %v1014, 7
      %v1016 = vsub.s32 %v1013, %v1015
      %v1017 = vrot.slane %v1003, %v1016
      %v1018 = vcombine.high %v1010, %v1010
      %v1019 = vcombine.high %v1017, %v1017
      %v1021 = vunpack.c.l.s4 1983009808
      %v1022 = vunpack.c.0.s8 %v1021
      %v1023 = vlaneseq
      %v1024 = vshrl.u32 %v1023, 7
      %v1025 = vsub.s32 %v1022, %v1024
      %v1026 = vrot.slane %v964, %v1025
      %v1027 = vcombine.high %v965, %v965
      %v1029 = vunpack.c.l.s4 1983009808
      %v1030 = vunpack.c.0.s8 %v1029
      %v1031 = vlaneseq
      %v1032 = vshrl.u32 %v1031, 7
      %v1033 = vsub.s32 %v1030, %v1032
      %v1034 = vrot.slane %v965, %v1033
      %v1036 = vunpack.c.l.s4 1983009808
      %v1037 = vunpack.c.0.s8 %v1036
      %v1038 = vlaneseq
      %v1039 = vshrl.u32 %v1038, 7
      %v1040 = vsub.s32 %v1037, %v1039
      %v1041 = vrot.slane %v1027, %v1040
      %v1042 = vcombine.high %v1034, %v1034
      %v1043 = vcombine.high %v1041, %v1041
      %v1045 = vunpack.c.l.s4 1983009808
      %v1046 = vunpack.c.0.s8 %v1045
      %v1047 = vlaneseq
      %v1048 = vshrl.u32 %v1047, 7
      %v1049 = vsub.s32 %v1046, %v1048
      %v1050 = vrot.slane %v966, %v1049
      %v1051 = vcombine.high %v967, %v967
      %v1053 = vunpack.c.l.s4 1983009808
      %v1054 = vunpack.c.0.s8 %v1053
      %v1055 = vlaneseq
      %v1056 = vshrl.u32 %v1055, 7
      %v1057 = vsub.s32 %v1054, %v1056
      %v1058 = vrot.slane %v967, %v1057
      %v1060 = vunpack.c.l.s4 1983009808
      %v1061 = vunpack.c.0.s8 %v1060
      %v1062 = vlaneseq
      %v1063 = vshrl.u32 %v1062, 7
      %v1064 = vsub.s32 %v1061, %v1063
      %v1065 = vrot.slane %v1051, %v1064
      %v1066 = vcombine.high %v1058, %v1058
      %v1067 = vcombine.high %v1065, %v1065
      %v1069 = vunpack.c.l.s4 1983009808
      %v1070 = vunpack.c.0.s8 %v1069
      %v1071 = vlaneseq
      %v1072 = vshrl.u32 %v1071, 7
      %v1073 = vsub.s32 %v1070, %v1072
      %v1074 = vrot.slane %v968, %v1073
      %v1075 = vcombine.high %v969, %v969
      %v1077 = vunpack.c.l.s4 1983009808
      %v1078 = vunpack.c.0.s8 %v1077
      %v1079 = vlaneseq
      %v1080 = vshrl.u32 %v1079, 7
      %v1081 = vsub.s32 %v1078, %v1080
      %v1082 = vrot.slane %v969, %v1081
      %v1084 = vunpack.c.l.s4 1983009808
      %v1085 = vunpack.c.0.s8 %v1084
      %v1086 = vlaneseq
      %v1087 = vshrl.u32 %v1086, 7
      %v1088 = vsub.s32 %v1085, %v1087
      %v1089 = vrot.slane %v1075, %v1088
      %v1090 = vcombine.high %v1082, %v1082
      %v1091 = vcombine.high %v1089, %v1089
      %v1093 = vunpack.c.l.s4 1983009808
      %v1094 = vunpack.c.0.s8 %v1093
      %v1095 = vlaneseq
      %v1096 = vshrl.u32 %v1095, 7
      %v1097 = vsub.s32 %v1094, %v1096
      %v1098 = vrot.slane %v970, %v1097
      %v1099 = vcombine.high %v971, %v971
      %v1101 = vunpack.c.l.s4 1983009808
      %v1102 = vunpack.c.0.s8 %v1101
      %v1103 = vlaneseq
      %v1104 = vshrl.u32 %v1103, 7
      %v1105 = vsub.s32 %v1102, %v1104
      %v1106 = vrot.slane %v971, %v1105
      %v1108 = vunpack.c.l.s4 1983009808
      %v1109 = vunpack.c.0.s8 %v1108
      %v1110 = vlaneseq
      %v1111 = vshrl.u32 %v1110, 7
      %v1112 = vsub.s32 %v1109, %v1111
      %v1113 = vrot.slane %v1099, %v1112
      %v1114 = vcombine.high %v1106, %v1106
      %v1115 = vcombine.high %v1113, %v1113
      %v1117 = vunpack.c.l.s4 1983009808
      %v1118 = vunpack.c.0.s8 %v1117
      %v1119 = vlaneseq
      %v1120 = vshrl.u32 %v1119, 7
      %v1121 = vsub.s32 %v1118, %v1120
      %v1122 = vrot.slane %v972, %v1121
      %v1123 = vcombine.high %v973, %v973
      %v1125 = vunpack.c.l.s4 1983009808
      %v1126 = vunpack.c.0.s8 %v1125
      %v1127 = vlaneseq
      %v1128 = vshrl.u32 %v1127, 7
      %v1129 = vsub.s32 %v1126, %v1128
      %v1130 = vrot.slane %v973, %v1129
      %v1132 = vunpack.c.l.s4 1983009808
      %v1133 = vunpack.c.0.s8 %v1132
      %v1134 = vlaneseq
      %v1135 = vshrl.u32 %v1134, 7
      %v1136 = vsub.s32 %v1133, %v1135
      %v1137 = vrot.slane %v1123, %v1136
      %v1138 = vcombine.high %v1130, %v1130
      %v1139 = vcombine.high %v1137, %v1137
      %v1141 = vunpack.c.l.s4 1983009808
      %v1142 = vunpack.c.0.s8 %v1141
      %v1143 = vlaneseq
      %v1144 = vshrl.u32 %v1143, 7
      %v1145 = vsub.s32 %v1142, %v1144
      %v1146 = vrot.slane %v974, %v1145
      %v1147 = vcombine.high %v975, %v975
      %v1149 = vunpack.c.l.s4 1983009808
      %v1150 = vunpack.c.0.s8 %v1149
      %v1151 = vlaneseq
      %v1152 = vshrl.u32 %v1151, 7
      %v1153 = vsub.s32 %v1150, %v1152
      %v1154 = vrot.slane %v975, %v1153
      %v1156 = vunpack.c.l.s4 1983009808
      %v1157 = vunpack.c.0.s8 %v1156
      %v1158 = vlaneseq
      %v1159 = vshrl.u32 %v1158, 7
      %v1160 = vsub.s32 %v1157, %v1159
      %v1161 = vrot.slane %v1147, %v1160
      %v1162 = vcombine.high %v1154, %v1154
      %v1163 = vcombine.high %v1161, %v1161
      %v1165 = vunpack.c.l.s4 1983009808
      %v1166 = vunpack.c.0.s8 %v1165
      %v1167 = vlaneseq
      %v1168 = vshrl.u32 %v1167, 7
      %v1169 = vsub.s32 %v1166, %v1168
      %v1170 = vrot.slane %v976, %v1169
      %v1171 = vcombine.high %v977, %v977
      %v1173 = vunpack.c.l.s4 1983009808
      %v1174 = vunpack.c.0.s8 %v1173
      %v1175 = vlaneseq
      %v1176 = vshrl.u32 %v1175, 7
      %v1177 = vsub.s32 %v1174, %v1176
      %v1178 = vrot.slane %v977, %v1177
      %v1180 = vunpack.c.l.s4 1983009808
      %v1181 = vunpack.c.0.s8 %v1180
      %v1182 = vlaneseq
      %v1183 = vshrl.u32 %v1182, 7
      %v1184 = vsub.s32 %v1181, %v1183
      %v1185 = vrot.slane %v1171, %v1184
      %v1186 = vcombine.high %v1178, %v1178
      %v1187 = vcombine.high %v1185, %v1185
      %v1189 = vunpack.c.l.s4 1983009808
      %v1190 = vunpack.c.0.s8 %v1189
      %v1191 = vlaneseq
      %v1192 = vshrl.u32 %v1191, 7
      %v1193 = vsub.s32 %v1190, %v1192
      %v1194 = vrot.slane %v978, %v1193
      %v1195 = vcombine.high %v979, %v979
      %v1197 = vunpack.c.l.s4 1983009808
      %v1198 = vunpack.c.0.s8 %v1197
      %v1199 = vlaneseq
      %v1200 = vshrl.u32 %v1199, 7
      %v1201 = vsub.s32 %v1198, %v1200
      %v1202 = vrot.slane %v979, %v1201
      %v1204 = vunpack.c.l.s4 1983009808
      %v1205 = vunpack.c.0.s8 %v1204
      %v1206 = vlaneseq
      %v1207 = vshrl.u32 %v1206, 7
      %v1208 = vsub.s32 %v1205, %v1207
      %v1209 = vrot.slane %v1195, %v1208
      %v1210 = vcombine.high %v1202, %v1202
      %v1211 = vcombine.high %v1209, %v1209
      %v1213 = vunpack.c.l.s4 1983009808
      %v1214 = vunpack.c.0.s8 %v1213
      %v1215 = vlaneseq
      %v1216 = vshrl.u32 %v1215, 7
      %v1217 = vsub.s32 %v1214, %v1216
      %v1218 = vrot.slane %v980, %v1217
      %v1219 = vcombine.high %v981, %v981
      %v1221 = vunpack.c.l.s4 1983009808
      %v1222 = vunpack.c.0.s8 %v1221
      %v1223 = vlaneseq
      %v1224 = vshrl.u32 %v1223, 7
      %v1225 = vsub.s32 %v1222, %v1224
      %v1226 = vrot.slane %v981, %v1225
      %v1228 = vunpack.c.l.s4 1983009808
      %v1229 = vunpack.c.0.s8 %v1228
      %v1230 = vlaneseq
      %v1231 = vshrl.u32 %v1230, 7
      %v1232 = vsub.s32 %v1229, %v1231
      %v1233 = vrot.slane %v1219, %v1232
      %v1234 = vcombine.high %v1226, %v1226
      %v1235 = vcombine.high %v1233, %v1233
      %v1237 = vunpack.c.l.s4 1983009808
      %v1238 = vunpack.c.0.s8 %v1237
      %v1239 = vlaneseq
      %v1240 = vshrl.u32 %v1239, 7
      %v1241 = vsub.s32 %v1238, %v1240
      %v1242 = vrot.slane %v982, %v1241
      %v1243 = vcombine.low %v1010, %v1018
      %v1244 = vcombine.low %v1017, %v1019
      %v1246 = vunpack.c.l.s4 1983009808
      %v1247 = vunpack.c.0.s8 %v1246
      %v1248 = vlaneseq
      %v1249 = vshrl.u32 %v1248, 7
      %v1250 = vsub.s32 %v1247, %v1249
      %v1251 = vrot.slane %v1243, %v1250
      %v1253 = vunpack.c.l.s4 1983009808
      %v1254 = vunpack.c.0.s8 %v1253
      %v1255 = vlaneseq
      %v1256 = vshrl.u32 %v1255, 7
      %v1257 = vsub.s32 %v1254, %v1256
      %v1258 = vrot.slane %v1244, %v1257
      %v1259 = vcombine.low %v1251, %v1258
      %v1260 = vcombine.low %v1026, %v1034
      %v1261 = vcombine.low %v1042, %v1041
      %v1263 = vunpack.c.l.s4 1983009808
      %v1264 = vunpack.c.0.s8 %v1263
      %v1265 = vlaneseq
      %v1266 = vshrl.u32 %v1265, 7
      %v1267 = vsub.s32 %v1264, %v1266
      %v1268 = vrot.slane %v1260, %v1267
      %v1270 = vunpack.c.l.s4 1983009808
      %v1271 = vunpack.c.0.s8 %v1270
      %v1272 = vlaneseq
      %v1273 = vshrl.u32 %v1272, 7
      %v1274 = vsub.s32 %v1271, %v1273
      %v1275 = vrot.slane %v1261, %v1274
      %v1276 = vcombine.low %v1268, %v1275
      %v1277 = vcombine.low %v1043, %v1050
      %v1278 = vcombine.low %v1058, %v1066
      %v1280 = vunpack.c.l.s4 1983009808
      %v1281 = vunpack.c.0.s8 %v1280
      %v1282 = vlaneseq
      %v1283 = vshrl.u32 %v1282, 7
      %v1284 = vsub.s32 %v1281, %v1283
      %v1285 = vrot.slane %v1277, %v1284
      %v1287 = vunpack.c.l.s4 1983009808
      %v1288 = vunpack.c.0.s8 %v1287
      %v1289 = vlaneseq
      %v1290 = vshrl.u32 %v1289, 7
      %v1291 = vsub.s32 %v1288, %v1290
      %v1292 = vrot.slane %v1278, %v1291
      %v1293 = vcombine.low %v1285, %v1292
      %v1294 = vcombine.low %v1065, %v1067
      %v1295 = vcombine.low %v1074, %v1082
      %v1297 = vunpack.c.l.s4 1983009808
      %v1298 = vunpack.c.0.s8 %v1297
      %v1299 = vlaneseq
      %v1300 = vshrl.u32 %v1299, 7
      %v1301 = vsub.s32 %v1298, %v1300
      %v1302 = vrot.slane %v1294, %v1301
      %v1304 = vunpack.c.l.s4 1983009808
      %v1305 = vunpack.c.0.s8 %v1304
      %v1306 = vlaneseq
      %v1307 = vshrl.u32 %v1306, 7
      %v1308 = vsub.s32 %v1305, %v1307
      %v1309 = vrot.slane %v1295, %v1308
      %v1310 = vcombine.low %v1302, %v1309
      %v1311 = vcombine.low %v1090, %v1089
      %v1312 = vcombine.low %v1091, %v1098
      %v1314 = vunpack.c.l.s4 1983009808
      %v1315 = vunpack.c.0.s8 %v1314
      %v1316 = vlaneseq
      %v1317 = vshrl.u32 %v1316, 7
      %v1318 = vsub.s32 %v1315, %v1317
      %v1319 = vrot.slane %v1311, %v1318
      %v1321 = vunpack.c.l.s4 1983009808
      %v1322 = vunpack.c.0.s8 %v1321
      %v1323 = vlaneseq
      %v1324 = vshrl.u32 %v1323, 7
      %v1325 = vsub.s32 %v1322, %v1324
      %v1326 = vrot.slane %v1312, %v1325
      %v1327 = vcombine.low %v1319, %v1326
      %v1328 = vcombine.low %v1106, %v1114
      %v1329 = vcombine.low %v1113, %v1115
      %v1331 = vunpack.c.l.s4 1983009808
      %v1332 = vunpack.c.0.s8 %v1331
      %v1333 = vlaneseq
      %v1334 = vshrl.u32 %v1333, 7
      %v1335 = vsub.s32 %v1332, %v1334
      %v1336 = vrot.slane %v1328, %v1335
      %v1338 = vunpack.c.l.s4 1983009808
      %v1339 = vunpack.c.0.s8 %v1338
      %v1340 = vlaneseq
      %v1341 = vshrl.u32 %v1340, 7
      %v1342 = vsub.s32 %v1339, %v1341
      %v1343 = vrot.slane %v1329, %v1342
      %v1344 = vcombine.low %v1336, %v1343
      %v1345 = vcombine.low %v1122, %v1130
      %v1346 = vcombine.low %v1138, %v1137
      %v1348 = vunpack.c.l.s4 1983009808
      %v1349 = vunpack.c.0.s8 %v1348
      %v1350 = vlaneseq
      %v1351 = vshrl.u32 %v1350, 7
      %v1352 = vsub.s32 %v1349, %v1351
      %v1353 = vrot.slane %v1345, %v1352
      %v1355 = vunpack.c.l.s4 1983009808
      %v1356 = vunpack.c.0.s8 %v1355
      %v1357 = vlaneseq
      %v1358 = vshrl.u32 %v1357, 7
      %v1359 = vsub.s32 %v1356, %v1358
      %v1360 = vrot.slane %v1346, %v1359
      %v1361 = vcombine.low %v1353, %v1360
      %v1362 = vcombine.low %v1139, %v1146
      %v1363 = vcombine.low %v1154, %v1162
      %v1365 = vunpack.c.l.s4 1983009808
      %v1366 = vunpack.c.0.s8 %v1365
      %v1367 = vlaneseq
      %v1368 = vshrl.u32 %v1367, 7
      %v1369 = vsub.s32 %v1366, %v1368
      %v1370 = vrot.slane %v1362, %v1369
      %v1372 = vunpack.c.l.s4 1983009808
      %v1373 = vunpack.c.0.s8 %v1372
      %v1374 = vlaneseq
      %v1375 = vshrl.u32 %v1374, 7
      %v1376 = vsub.s32 %v1373, %v1375
      %v1377 = vrot.slane %v1363, %v1376
      %v1378 = vcombine.low %v1370, %v1377
      %v1379 = vcombine.low %v1161, %v1163
      %v1380 = vcombine.low %v1170, %v1178
      %v1382 = vunpack.c.l.s4 1983009808
      %v1383 = vunpack.c.0.s8 %v1382
      %v1384 = vlaneseq
      %v1385 = vshrl.u32 %v1384, 7
      %v1386 = vsub.s32 %v1383, %v1385
      %v1387 = vrot.slane %v1379, %v1386
      %v1389 = vunpack.c.l.s4 1983009808
      %v1390 = vunpack.c.0.s8 %v1389
      %v1391 = vlaneseq
      %v1392 = vshrl.u32 %v1391, 7
      %v1393 = vsub.s32 %v1390, %v1392
      %v1394 = vrot.slane %v1380, %v1393
      %v1395 = vcombine.low %v1387, %v1394
      %v1396 = vcombine.low %v1186, %v1185
      %v1397 = vcombine.low %v1187, %v1194
      %v1399 = vunpack.c.l.s4 1983009808
      %v1400 = vunpack.c.0.s8 %v1399
      %v1401 = vlaneseq
      %v1402 = vshrl.u32 %v1401, 7
      %v1403 = vsub.s32 %v1400, %v1402
      %v1404 = vrot.slane %v1396, %v1403
      %v1406 = vunpack.c.l.s4 1983009808
      %v1407 = vunpack.c.0.s8 %v1406
      %v1408 = vlaneseq
      %v1409 = vshrl.u32 %v1408, 7
      %v1410 = vsub.s32 %v1407, %v1409
      %v1411 = vrot.slane %v1397, %v1410
      %v1412 = vcombine.low %v1404, %v1411
      %v1413 = vcombine.low %v1202, %v1210
      %v1414 = vcombine.low %v1209, %v1211
      %v1416 = vunpack.c.l.s4 1983009808
      %v1417 = vunpack.c.0.s8 %v1416
      %v1418 = vlaneseq
      %v1419 = vshrl.u32 %v1418, 7
      %v1420 = vsub.s32 %v1417, %v1419
      %v1421 = vrot.slane %v1413, %v1420
      %v1423 = vunpack.c.l.s4 1983009808
      %v1424 = vunpack.c.0.s8 %v1423
      %v1425 = vlaneseq
      %v1426 = vshrl.u32 %v1425, 7
      %v1427 = vsub.s32 %v1424, %v1426
      %v1428 = vrot.slane %v1414, %v1427
      %v1429 = vcombine.low %v1421, %v1428
      %v1430 = vcombine.low %v1218, %v1226
      %v1431 = vcombine.low %v1234, %v1233
      %v1433 = vunpack.c.l.s4 1983009808
      %v1434 = vunpack.c.0.s8 %v1433
      %v1435 = vlaneseq
      %v1436 = vshrl.u32 %v1435, 7
      %v1437 = vsub.s32 %v1434, %v1436
      %v1438 = vrot.slane %v1430, %v1437
      %v1440 = vunpack.c.l.s4 1983009808
      %v1441 = vunpack.c.0.s8 %v1440
      %v1442 = vlaneseq
      %v1443 = vshrl.u32 %v1442, 7
      %v1444 = vsub.s32 %v1441, %v1443
      %v1445 = vrot.slane %v1431, %v1444
      %v1446 = vcombine.low %v1438, %v1445
      %v1447 = vcombine.low %v1235, %v1242
      %v1449 = vunpack.c.l.s4 1983009808
      %v1450 = vunpack.c.0.s8 %v1449
      %v1451 = vlaneseq
      %v1452 = vshrl.u32 %v1451, 7
      %v1453 = vsub.s32 %v1450, %v1452
      %v1454 = vrot.slane %v1447, %v1453
      %v1468 = vpack.c.bf16 %v1276, %v1259
      %v1469 = vpack.c.bf16 %v1310, %v1293
      %v1470 = vpack.c.bf16 %v1344, %v1327
      %v1471 = vpack.c.bf16 %v1378, %v1361
      %v1472 = vpack.c.bf16 %v1412, %v1395
      %v1473 = vpack.c.bf16 %v1446, %v1429
      %v1474 = vpack.c.bf16 %v1454, %v1454
      %s1475 = scalar_lea.vmem %s1, 2
      %v1476 = vld [vmem:[%s1475] sm:$0x3]
      %v1478 = vsel %vm287, %v1468, 0
      %v1481 = vsel %vm287, %v1469, 0
      %v1484 = vsel %vm287, %v1470, 0
      %v1487 = vsel %vm287, %v1471, 0
      %v1490 = vsel %vm287, %v1472, 0
      %v1493 = vsel %vm287, %v1473, 0
      %v1496 = vsel %vm287, %v1474, 0
      %v1499 = vsel %vm856, %v1476, 0
      %1501 = vmatprep.subr.bf16.mxu0 0
      %1502 = vmatpush1.bf16.msra.mxu0 %v1499
      %1503 = vmatprep.subr.bf16.mxu0 0
      %1504 = vmatpush1.bf16.msra.mxu0 0
      %1505 = vmatprep.subr.bf16.mxu0 0
      %1506 = vmatpush1.bf16.msra.mxu0 0
      %1507 = vmatprep.subr.bf16.mxu0 0
      %1508 = vmatpush1.bf16.msra.mxu0 0
      %1509 = vmatprep.subr.bf16.mxu0 0
      %1510 = vmatpush1.bf16.msra.mxu0 0
      %1511 = vmatprep.subr.bf16.mxu0 0
      %1512 = vmatpush1.bf16.msra.mxu0 0
      %1513 = vmatprep.subr.bf16.mxu0 0
      %1514 = vmatpush1.bf16.msra.mxu0 0
      %1515 = vmatprep.subr.bf16.mxu0 0
      %1516 = vmatpush1.bf16.msra.mxu0 0
      %1517 = vmatprep.subr.bf16.mxu0 0
      %1518 = vmatpush1.bf16.msra.mxu0 0
      %1519 = vmatprep.subr.bf16.mxu0 0
      %1520 = vmatpush1.bf16.msra.mxu0 0
      %1521 = vmatprep.subr.bf16.mxu0 0
      %1522 = vmatpush1.bf16.msra.mxu0 0
      %1523 = vmatprep.subr.bf16.mxu0 0
      %1524 = vmatpush1.bf16.msra.mxu0 0
      %1525 = vmatprep.subr.bf16.mxu0 0
      %1526 = vmatpush1.bf16.msra.mxu0 0
      %1527 = vmatprep.subr.bf16.mxu0 0
      %1528 = vmatpush1.bf16.msra.mxu0 0
      %1529 = vmatprep.subr.bf16.mxu0 0
      %1530 = vmatpush1.bf16.msra.mxu0 0
      %1531 = vmatprep.subr.bf16.mxu0 0
      %1532 = vmatpush1.bf16.msra.mxu0 0
      %1533 = vmatprep.mubr.bf16.mxu0 0
      %1534 = vmatmul.mubr.bf16.gmra.mrb[0].mxu0 %v1478
      %v1535 = vpop.f32.mrb[0].mxu0
      %v1536 = vadd.f32 0.0, %v1535
      %v1537 = vpop.f32.mrb[0].mxu0
      %v1538 = vpop.f32.mrb[0].mxu0
      %v1539 = vadd.f32 0.0, %v1538
      %v1540 = vpop.f32.mrb[0].mxu0
      %1541 = vmatprep.mubr.bf16.mxu0 0
      %1542 = vmatmul.mubr.bf16.gmra.mrb[0].mxu0 %v1481
      %v1543 = vpop.f32.mrb[0].mxu0
      %v1544 = vadd.f32 0.0, %v1543
      %v1545 = vpop.f32.mrb[0].mxu0
      %v1546 = vpop.f32.mrb[0].mxu0
      %v1547 = vadd.f32 0.0, %v1546
      %v1548 = vpop.f32.mrb[0].mxu0
      %1549 = vmatprep.mubr.bf16.mxu0 0
      %1550 = vmatmul.mubr.bf16.gmra.mrb[0].mxu0 %v1484
      %v1551 = vpop.f32.mrb[0].mxu0
      %v1552 = vadd.f32 0.0, %v1551
      %v1553 = vpop.f32.mrb[0].mxu0
      %v1554 = vpop.f32.mrb[0].mxu0
      %v1555 = vadd.f32 0.0, %v1554
      %v1556 = vpop.f32.mrb[0].mxu0
      %1557 = vmatprep.mubr.bf16.mxu0 0
      %1558 = vmatmul.mubr.bf16.gmra.mrb[0].mxu0 %v1487
      %v1559 = vpop.f32.mrb[0].mxu0
      %v1560 = vadd.f32 0.0, %v1559
      %v1561 = vpop.f32.mrb[0].mxu0
      %v1562 = vpop.f32.mrb[0].mxu0
      %v1563 = vadd.f32 0.0, %v1562
      %v1564 = vpop.f32.mrb[0].mxu0
      %1565 = vmatprep.mubr.bf16.mxu0 0
      %1566 = vmatmul.mubr.bf16.gmra.mrb[0].mxu0 %v1490
      %v1567 = vpop.f32.mrb[0].mxu0
      %v1568 = vadd.f32 0.0, %v1567
      %v1569 = vpop.f32.mrb[0].mxu0
      %v1570 = vpop.f32.mrb[0].mxu0
      %v1571 = vadd.f32 0.0, %v1570
      %v1572 = vpop.f32.mrb[0].mxu0
      %1573 = vmatprep.mubr.bf16.mxu0 0
      %1574 = vmatmul.mubr.bf16.gmra.mrb[0].mxu0 %v1493
      %v1575 = vpop.f32.mrb[0].mxu0
      %v1576 = vadd.f32 0.0, %v1575
      %v1577 = vpop.f32.mrb[0].mxu0
      %v1578 = vpop.f32.mrb[0].mxu0
      %v1579 = vadd.f32 0.0, %v1578
      %v1580 = vpop.f32.mrb[0].mxu0
      %1581 = vmatprep.mubr.bf16.mxu0 0
      %1582 = vmatmul.mubr.bf16.gmra.mrb[0].mxu0 %v1496
      %v1583 = vpop.f32.mrb[0].mxu0
      %v1584 = vadd.f32 0.0, %v1583
      %v1585 = vpop.f32.mrb[0].mxu0
      %v1586 = vpop.f32.mrb[0].mxu0
      %v1587 = vpop.f32.mrb[0].mxu0
      %1588 = vdwg.mxu0
      %v1589 = vld [vmem:[%s177] sm:$0xff]
      %v1590 = vld [vmem:[%s177 + $0x8] sm:$0xff]
      %v1591 = vld [vmem:[%s177 + $0x10] sm:$0xff]
      %v1592 = vld [vmem:[%s177 + $0x18] sm:$0xff]
      %v1593 = vld [vmem:[%s177 + $0x20] sm:$0xff]
      %v1594 = vld [vmem:[%s177 + $0x28] sm:$0xff]
      %v1595 = vld [vmem:[%s177 + $0x30] sm:$0xff]
      %v1596 = vld [vmem:[%s177 + $0x38] sm:$0xff]
      %v1597 = vld [vmem:[%s177 + $0x40] sm:$0xff]
      %v1598 = vld [vmem:[%s177 + $0x48] sm:$0xff]
      %v1599 = vld [vmem:[%s177 + $0x50] sm:$0xff]
      %v1600 = vld [vmem:[%s177 + $0x58] sm:$0xff]
      %v1601 = vld [vmem:[%s177 + $0x60] sm:$0xf]
      %v1602 = vadd.f32 %v1589, %v1536
      %v1603 = vadd.f32 %v1590, %v1539
      %v1604 = vadd.f32 %v1591, %v1544
      %v1605 = vadd.f32 %v1592, %v1547
      %v1606 = vadd.f32 %v1593, %v1552
      %v1607 = vadd.f32 %v1594, %v1555
      %v1608 = vadd.f32 %v1595, %v1560
      %v1609 = vadd.f32 %v1596, %v1563
      %v1610 = vadd.f32 %v1597, %v1568
      %v1611 = vadd.f32 %v1598, %v1571
      %v1612 = vadd.f32 %v1599, %v1576
      %v1613 = vadd.f32 %v1600, %v1579
      %v1614 = vadd.f32 %v1601, %v1584
      %1615 = vst.msk [vmem:[%s177] sm:$0xff] %vm948, %v1602
      %1616 = vst.msk [vmem:[%s177 + $0x8] sm:$0xff] %vm948, %v1603
      %1617 = vst.msk [vmem:[%s177 + $0x10] sm:$0xff] %vm948, %v1604
      %1618 = vst.msk [vmem:[%s177 + $0x18] sm:$0xff] %vm948, %v1605
      %1619 = vst.msk [vmem:[%s177 + $0x20] sm:$0xff] %vm948, %v1606
      %1620 = vst.msk [vmem:[%s177 + $0x28] sm:$0xff] %vm948, %v1607
      %1621 = vst.msk [vmem:[%s177 + $0x30] sm:$0xff] %vm948, %v1608
      %1622 = vst.msk [vmem:[%s177 + $0x38] sm:$0xff] %vm948, %v1609
      %1623 = vst.msk [vmem:[%s177 + $0x40] sm:$0xff] %vm948, %v1610
      %1624 = vst.msk [vmem:[%s177 + $0x48] sm:$0xff] %vm948, %v1611
      %1625 = vst.msk [vmem:[%s177 + $0x50] sm:$0xff] %vm948, %v1612
      %1626 = vst.msk [vmem:[%s177 + $0x58] sm:$0xff] %vm948, %v1613
      %1627 = vst.msk [vmem:[%s177 + $0x60] sm:$0xf] %vm961, %v1614
      %v1628 = vld [vmem:[#allocation2 + $0x2] sm:$0xff]
      %v1629 = vld [vmem:[#allocation2 + $0xa] sm:$0x3]
      %v1630 = vld [vmem:[#allocation2 + $0x12] sm:$0xff]
      %v1631 = vld [vmem:[#allocation2 + $0x1a] sm:$0x3]
      %v1632 = vld [vmem:[#allocation2 + $0x22] sm:$0xff]
      %v1633 = vld [vmem:[#allocation2 + $0x2a] sm:$0x3]
      %v1634 = vld [vmem:[#allocation2 + $0x32] sm:$0xff]
      %v1635 = vld [vmem:[#allocation2 + $0x3a] sm:$0x3]
      %v1636 = vld [vmem:[#allocation2 + $0x42] sm:$0xff]
      %v1637 = vld [vmem:[#allocation2 + $0x4a] sm:$0x3]
      %v1638 = vld [vmem:[#allocation2 + $0x52] sm:$0xff]
      %v1639 = vld [vmem:[#allocation2 + $0x5a] sm:$0x3]
      %v1640 = vld [vmem:[#allocation2 + $0x62] sm:$0xff]
      %v1641 = vld [vmem:[#allocation2 + $0x6a] sm:$0x3]
      %v1642 = vld [vmem:[#allocation2 + $0x72] sm:$0xff]
      %v1643 = vld [vmem:[#allocation2 + $0x7a] sm:$0x3]
      %v1644 = vld [vmem:[#allocation2 + $0x82] sm:$0xff]
      %v1645 = vld [vmem:[#allocation2 + $0x8a] sm:$0x3]
      %v1646 = vld [vmem:[#allocation2 + $0x92] sm:$0xff]
      %v1647 = vld [vmem:[#allocation2 + $0x9a] sm:$0x3]
      %v1668 = vcombine.high %v1628, %v1628
      %v1670 = vunpack.c.l.s4 1983009808
      %v1671 = vunpack.c.0.s8 %v1670
      %v1672 = vlaneseq
      %v1673 = vshrl.u32 %v1672, 7
      %v1674 = vsub.s32 %v1671, %v1673
      %v1675 = vrot.slane %v1628, %v1674
      %v1677 = vunpack.c.l.s4 1983009808
      %v1678 = vunpack.c.0.s8 %v1677
      %v1679 = vlaneseq
      %v1680 = vshrl.u32 %v1679, 7
      %v1681 = vsub.s32 %v1678, %v1680
      %v1682 = vrot.slane %v1668, %v1681
      %v1683 = vcombine.high %v1675, %v1675
      %v1684 = vcombine.high %v1682, %v1682
      %v1686 = vunpack.c.l.s4 1983009808
      %v1687 = vunpack.c.0.s8 %v1686
      %v1688 = vlaneseq
      %v1689 = vshrl.u32 %v1688, 7
      %v1690 = vsub.s32 %v1687, %v1689
      %v1691 = vrot.slane %v1629, %v1690
      %v1692 = vcombine.high %v1630, %v1630
      %v1694 = vunpack.c.l.s4 1983009808
      %v1695 = vunpack.c.0.s8 %v1694
      %v1696 = vlaneseq
      %v1697 = vshrl.u32 %v1696, 7
      %v1698 = vsub.s32 %v1695, %v1697
      %v1699 = vrot.slane %v1630, %v1698
      %v1701 = vunpack.c.l.s4 1983009808
      %v1702 = vunpack.c.0.s8 %v1701
      %v1703 = vlaneseq
      %v1704 = vshrl.u32 %v1703, 7
      %v1705 = vsub.s32 %v1702, %v1704
      %v1706 = vrot.slane %v1692, %v1705
      %v1707 = vcombine.high %v1699, %v1699
      %v1708 = vcombine.high %v1706, %v1706
      %v1710 = vunpack.c.l.s4 1983009808
      %v1711 = vunpack.c.0.s8 %v1710
      %v1712 = vlaneseq
      %v1713 = vshrl.u32 %v1712, 7
      %v1714 = vsub.s32 %v1711, %v1713
      %v1715 = vrot.slane %v1631, %v1714
      %v1716 = vcombine.high %v1632, %v1632
      %v1718 = vunpack.c.l.s4 1983009808
      %v1719 = vunpack.c.0.s8 %v1718
      %v1720 = vlaneseq
      %v1721 = vshrl.u32 %v1720, 7
      %v1722 = vsub.s32 %v1719, %v1721
      %v1723 = vrot.slane %v1632, %v1722
      %v1725 = vunpack.c.l.s4 1983009808
      %v1726 = vunpack.c.0.s8 %v1725
      %v1727 = vlaneseq
      %v1728 = vshrl.u32 %v1727, 7
      %v1729 = vsub.s32 %v1726, %v1728
      %v1730 = vrot.slane %v1716, %v1729
      %v1731 = vcombine.high %v1723, %v1723
      %v1732 = vcombine.high %v1730, %v1730
      %v1734 = vunpack.c.l.s4 1983009808
      %v1735 = vunpack.c.0.s8 %v1734
      %v1736 = vlaneseq
      %v1737 = vshrl.u32 %v1736, 7
      %v1738 = vsub.s32 %v1735, %v1737
      %v1739 = vrot.slane %v1633, %v1738
      %v1740 = vcombine.high %v1634, %v1634
      %v1742 = vunpack.c.l.s4 1983009808
      %v1743 = vunpack.c.0.s8 %v1742
      %v1744 = vlaneseq
      %v1745 = vshrl.u32 %v1744, 7
      %v1746 = vsub.s32 %v1743, %v1745
      %v1747 = vrot.slane %v1634, %v1746
      %v1749 = vunpack.c.l.s4 1983009808
      %v1750 = vunpack.c.0.s8 %v1749
      %v1751 = vlaneseq
      %v1752 = vshrl.u32 %v1751, 7
      %v1753 = vsub.s32 %v1750, %v1752
      %v1754 = vrot.slane %v1740, %v1753
      %v1755 = vcombine.high %v1747, %v1747
      %v1756 = vcombine.high %v1754, %v1754
      %v1758 = vunpack.c.l.s4 1983009808
      %v1759 = vunpack.c.0.s8 %v1758
      %v1760 = vlaneseq
      %v1761 = vshrl.u32 %v1760, 7
      %v1762 = vsub.s32 %v1759, %v1761
      %v1763 = vrot.slane %v1635, %v1762
      %v1764 = vcombine.high %v1636, %v1636
      %v1766 = vunpack.c.l.s4 1983009808
      %v1767 = vunpack.c.0.s8 %v1766
      %v1768 = vlaneseq
      %v1769 = vshrl.u32 %v1768, 7
      %v1770 = vsub.s32 %v1767, %v1769
      %v1771 = vrot.slane %v1636, %v1770
      %v1773 = vunpack.c.l.s4 1983009808
      %v1774 = vunpack.c.0.s8 %v1773
      %v1775 = vlaneseq
      %v1776 = vshrl.u32 %v1775, 7
      %v1777 = vsub.s32 %v1774, %v1776
      %v1778 = vrot.slane %v1764, %v1777
      %v1779 = vcombine.high %v1771, %v1771
      %v1780 = vcombine.high %v1778, %v1778
      %v1782 = vunpack.c.l.s4 1983009808
      %v1783 = vunpack.c.0.s8 %v1782
      %v1784 = vlaneseq
      %v1785 = vshrl.u32 %v1784, 7
      %v1786 = vsub.s32 %v1783, %v1785
      %v1787 = vrot.slane %v1637, %v1786
      %v1788 = vcombine.high %v1638, %v1638
      %v1790 = vunpack.c.l.s4 1983009808
      %v1791 = vunpack.c.0.s8 %v1790
      %v1792 = vlaneseq
      %v1793 = vshrl.u32 %v1792, 7
      %v1794 = vsub.s32 %v1791, %v1793
      %v1795 = vrot.slane %v1638, %v1794
      %v1797 = vunpack.c.l.s4 1983009808
      %v1798 = vunpack.c.0.s8 %v1797
      %v1799 = vlaneseq
      %v1800 = vshrl.u32 %v1799, 7
      %v1801 = vsub.s32 %v1798, %v1800
      %v1802 = vrot.slane %v1788, %v1801
      %v1803 = vcombine.high %v1795, %v1795
      %v1804 = vcombine.high %v1802, %v1802
      %v1806 = vunpack.c.l.s4 1983009808
      %v1807 = vunpack.c.0.s8 %v1806
      %v1808 = vlaneseq
      %v1809 = vshrl.u32 %v1808, 7
      %v1810 = vsub.s32 %v1807, %v1809
      %v1811 = vrot.slane %v1639, %v1810
      %v1812 = vcombine.high %v1640, %v1640
      %v1814 = vunpack.c.l.s4 1983009808
      %v1815 = vunpack.c.0.s8 %v1814
      %v1816 = vlaneseq
      %v1817 = vshrl.u32 %v1816, 7
      %v1818 = vsub.s32 %v1815, %v1817
      %v1819 = vrot.slane %v1640, %v1818
      %v1821 = vunpack.c.l.s4 1983009808
      %v1822 = vunpack.c.0.s8 %v1821
      %v1823 = vlaneseq
      %v1824 = vshrl.u32 %v1823, 7
      %v1825 = vsub.s32 %v1822, %v1824
      %v1826 = vrot.slane %v1812, %v1825
      %v1827 = vcombine.high %v1819, %v1819
      %v1828 = vcombine.high %v1826, %v1826
      %v1830 = vunpack.c.l.s4 1983009808
      %v1831 = vunpack.c.0.s8 %v1830
      %v1832 = vlaneseq
      %v1833 = vshrl.u32 %v1832, 7
      %v1834 = vsub.s32 %v1831, %v1833
      %v1835 = vrot.slane %v1641, %v1834
      %v1836 = vcombine.high %v1642, %v1642
      %v1838 = vunpack.c.l.s4 1983009808
      %v1839 = vunpack.c.0.s8 %v1838
      %v1840 = vlaneseq
      %v1841 = vshrl.u32 %v1840, 7
      %v1842 = vsub.s32 %v1839, %v1841
      %v1843 = vrot.slane %v1642, %v1842
      %v1845 = vunpack.c.l.s4 1983009808
      %v1846 = vunpack.c.0.s8 %v1845
      %v1847 = vlaneseq
      %v1848 = vshrl.u32 %v1847, 7
      %v1849 = vsub.s32 %v1846, %v1848
      %v1850 = vrot.slane %v1836, %v1849
      %v1851 = vcombine.high %v1843, %v1843
      %v1852 = vcombine.high %v1850, %v1850
      %v1854 = vunpack.c.l.s4 1983009808
      %v1855 = vunpack.c.0.s8 %v1854
      %v1856 = vlaneseq
      %v1857 = vshrl.u32 %v1856, 7
      %v1858 = vsub.s32 %v1855, %v1857
      %v1859 = vrot.slane %v1643, %v1858
      %v1860 = vcombine.high %v1644, %v1644
      %v1862 = vunpack.c.l.s4 1983009808
      %v1863 = vunpack.c.0.s8 %v1862
      %v1864 = vlaneseq
      %v1865 = vshrl.u32 %v1864, 7
      %v1866 = vsub.s32 %v1863, %v1865
      %v1867 = vrot.slane %v1644, %v1866
      %v1869 = vunpack.c.l.s4 1983009808
      %v1870 = vunpack.c.0.s8 %v1869
      %v1871 = vlaneseq
      %v1872 = vshrl.u32 %v1871, 7
      %v1873 = vsub.s32 %v1870, %v1872
      %v1874 = vrot.slane %v1860, %v1873
      %v1875 = vcombine.high %v1867, %v1867
      %v1876 = vcombine.high %v1874, %v1874
      %v1878 = vunpack.c.l.s4 1983009808
      %v1879 = vunpack.c.0.s8 %v1878
      %v1880 = vlaneseq
      %v1881 = vshrl.u32 %v1880, 7
      %v1882 = vsub.s32 %v1879, %v1881
      %v1883 = vrot.slane %v1645, %v1882
      %v1884 = vcombine.high %v1646, %v1646
      %v1886 = vunpack.c.l.s4 1983009808
      %v1887 = vunpack.c.0.s8 %v1886
      %v1888 = vlaneseq
      %v1889 = vshrl.u32 %v1888, 7
      %v1890 = vsub.s32 %v1887, %v1889
      %v1891 = vrot.slane %v1646, %v1890
      %v1893 = vunpack.c.l.s4 1983009808
      %v1894 = vunpack.c.0.s8 %v1893
      %v1895 = vlaneseq
      %v1896 = vshrl.u32 %v1895, 7
      %v1897 = vsub.s32 %v1894, %v1896
      %v1898 = vrot.slane %v1884, %v1897
      %v1899 = vcombine.high %v1891, %v1891
      %v1900 = vcombine.high %v1898, %v1898
      %v1902 = vunpack.c.l.s4 1983009808
      %v1903 = vunpack.c.0.s8 %v1902
      %v1904 = vlaneseq
      %v1905 = vshrl.u32 %v1904, 7
      %v1906 = vsub.s32 %v1903, %v1905
      %v1907 = vrot.slane %v1647, %v1906
      %v1908 = vcombine.low %v1675, %v1683
      %v1909 = vcombine.low %v1682, %v1684
      %v1911 = vunpack.c.l.s4 1983009808
      %v1912 = vunpack.c.0.s8 %v1911
      %v1913 = vlaneseq
      %v1914 = vshrl.u32 %v1913, 7
      %v1915 = vsub.s32 %v1912, %v1914
      %v1916 = vrot.slane %v1908, %v1915
      %v1918 = vunpack.c.l.s4 1983009808
      %v1919 = vunpack.c.0.s8 %v1918
      %v1920 = vlaneseq
      %v1921 = vshrl.u32 %v1920, 7
      %v1922 = vsub.s32 %v1919, %v1921
      %v1923 = vrot.slane %v1909, %v1922
      %v1924 = vcombine.low %v1916, %v1923
      %v1925 = vcombine.low %v1691, %v1699
      %v1926 = vcombine.low %v1707, %v1706
      %v1928 = vunpack.c.l.s4 1983009808
      %v1929 = vunpack.c.0.s8 %v1928
      %v1930 = vlaneseq
      %v1931 = vshrl.u32 %v1930, 7
      %v1932 = vsub.s32 %v1929, %v1931
      %v1933 = vrot.slane %v1925, %v1932
      %v1935 = vunpack.c.l.s4 1983009808
      %v1936 = vunpack.c.0.s8 %v1935
      %v1937 = vlaneseq
      %v1938 = vshrl.u32 %v1937, 7
      %v1939 = vsub.s32 %v1936, %v1938
      %v1940 = vrot.slane %v1926, %v1939
      %v1941 = vcombine.low %v1933, %v1940
      %v1942 = vcombine.low %v1708, %v1715
      %v1943 = vcombine.low %v1723, %v1731
      %v1945 = vunpack.c.l.s4 1983009808
      %v1946 = vunpack.c.0.s8 %v1945
      %v1947 = vlaneseq
      %v1948 = vshrl.u32 %v1947, 7
      %v1949 = vsub.s32 %v1946, %v1948
      %v1950 = vrot.slane %v1942, %v1949
      %v1952 = vunpack.c.l.s4 1983009808
      %v1953 = vunpack.c.0.s8 %v1952
      %v1954 = vlaneseq
      %v1955 = vshrl.u32 %v1954, 7
      %v1956 = vsub.s32 %v1953, %v1955
      %v1957 = vrot.slane %v1943, %v1956
      %v1958 = vcombine.low %v1950, %v1957
      %v1959 = vcombine.low %v1730, %v1732
      %v1960 = vcombine.low %v1739, %v1747
      %v1962 = vunpack.c.l.s4 1983009808
      %v1963 = vunpack.c.0.s8 %v1962
      %v1964 = vlaneseq
      %v1965 = vshrl.u32 %v1964, 7
      %v1966 = vsub.s32 %v1963, %v1965
      %v1967 = vrot.slane %v1959, %v1966
      %v1969 = vunpack.c.l.s4 1983009808
      %v1970 = vunpack.c.0.s8 %v1969
      %v1971 = vlaneseq
      %v1972 = vshrl.u32 %v1971, 7
      %v1973 = vsub.s32 %v1970, %v1972
      %v1974 = vrot.slane %v1960, %v1973
      %v1975 = vcombine.low %v1967, %v1974
      %v1976 = vcombine.low %v1755, %v1754
      %v1977 = vcombine.low %v1756, %v1763
      %v1979 = vunpack.c.l.s4 1983009808
      %v1980 = vunpack.c.0.s8 %v1979
      %v1981 = vlaneseq
      %v1982 = vshrl.u32 %v1981, 7
      %v1983 = vsub.s32 %v1980, %v1982
      %v1984 = vrot.slane %v1976, %v1983
      %v1986 = vunpack.c.l.s4 1983009808
      %v1987 = vunpack.c.0.s8 %v1986
      %v1988 = vlaneseq
      %v1989 = vshrl.u32 %v1988, 7
      %v1990 = vsub.s32 %v1987, %v1989
      %v1991 = vrot.slane %v1977, %v1990
      %v1992 = vcombine.low %v1984, %v1991
      %v1993 = vcombine.low %v1771, %v1779
      %v1994 = vcombine.low %v1778, %v1780
      %v1996 = vunpack.c.l.s4 1983009808
      %v1997 = vunpack.c.0.s8 %v1996
      %v1998 = vlaneseq
      %v1999 = vshrl.u32 %v1998, 7
      %v2000 = vsub.s32 %v1997, %v1999
      %v2001 = vrot.slane %v1993, %v2000
      %v2003 = vunpack.c.l.s4 1983009808
      %v2004 = vunpack.c.0.s8 %v2003
      %v2005 = vlaneseq
      %v2006 = vshrl.u32 %v2005, 7
      %v2007 = vsub.s32 %v2004, %v2006
      %v2008 = vrot.slane %v1994, %v2007
      %v2009 = vcombine.low %v2001, %v2008
      %v2010 = vcombine.low %v1787, %v1795
      %v2011 = vcombine.low %v1803, %v1802
      %v2013 = vunpack.c.l.s4 1983009808
      %v2014 = vunpack.c.0.s8 %v2013
      %v2015 = vlaneseq
      %v2016 = vshrl.u32 %v2015, 7
      %v2017 = vsub.s32 %v2014, %v2016
      %v2018 = vrot.slane %v2010, %v2017
      %v2020 = vunpack.c.l.s4 1983009808
      %v2021 = vunpack.c.0.s8 %v2020
      %v2022 = vlaneseq
      %v2023 = vshrl.u32 %v2022, 7
      %v2024 = vsub.s32 %v2021, %v2023
      %v2025 = vrot.slane %v2011, %v2024
      %v2026 = vcombine.low %v2018, %v2025
      %v2027 = vcombine.low %v1804, %v1811
      %v2028 = vcombine.low %v1819, %v1827
      %v2030 = vunpack.c.l.s4 1983009808
      %v2031 = vunpack.c.0.s8 %v2030
      %v2032 = vlaneseq
      %v2033 = vshrl.u32 %v2032, 7
      %v2034 = vsub.s32 %v2031, %v2033
      %v2035 = vrot.slane %v2027, %v2034
      %v2037 = vunpack.c.l.s4 1983009808
      %v2038 = vunpack.c.0.s8 %v2037
      %v2039 = vlaneseq
      %v2040 = vshrl.u32 %v2039, 7
      %v2041 = vsub.s32 %v2038, %v2040
      %v2042 = vrot.slane %v2028, %v2041
      %v2043 = vcombine.low %v2035, %v2042
      %v2044 = vcombine.low %v1826, %v1828
      %v2045 = vcombine.low %v1835, %v1843
      %v2047 = vunpack.c.l.s4 1983009808
      %v2048 = vunpack.c.0.s8 %v2047
      %v2049 = vlaneseq
      %v2050 = vshrl.u32 %v2049, 7
      %v2051 = vsub.s32 %v2048, %v2050
      %v2052 = vrot.slane %v2044, %v2051
      %v2054 = vunpack.c.l.s4 1983009808
      %v2055 = vunpack.c.0.s8 %v2054
      %v2056 = vlaneseq
      %v2057 = vshrl.u32 %v2056, 7
      %v2058 = vsub.s32 %v2055, %v2057
      %v2059 = vrot.slane %v2045, %v2058
      %v2060 = vcombine.low %v2052, %v2059
      %v2061 = vcombine.low %v1851, %v1850
      %v2062 = vcombine.low %v1852, %v1859
      %v2064 = vunpack.c.l.s4 1983009808
      %v2065 = vunpack.c.0.s8 %v2064
      %v2066 = vlaneseq
      %v2067 = vshrl.u32 %v2066, 7
      %v2068 = vsub.s32 %v2065, %v2067
      %v2069 = vrot.slane %v2061, %v2068
      %v2071 = vunpack.c.l.s4 1983009808
      %v2072 = vunpack.c.0.s8 %v2071
      %v2073 = vlaneseq
      %v2074 = vshrl.u32 %v2073, 7
      %v2075 = vsub.s32 %v2072, %v2074
      %v2076 = vrot.slane %v2062, %v2075
      %v2077 = vcombine.low %v2069, %v2076
      %v2078 = vcombine.low %v1867, %v1875
      %v2079 = vcombine.low %v1874, %v1876
      %v2081 = vunpack.c.l.s4 1983009808
      %v2082 = vunpack.c.0.s8 %v2081
      %v2083 = vlaneseq
      %v2084 = vshrl.u32 %v2083, 7
      %v2085 = vsub.s32 %v2082, %v2084
      %v2086 = vrot.slane %v2078, %v2085
      %v2088 = vunpack.c.l.s4 1983009808
      %v2089 = vunpack.c.0.s8 %v2088
      %v2090 = vlaneseq
      %v2091 = vshrl.u32 %v2090, 7
      %v2092 = vsub.s32 %v2089, %v2091
      %v2093 = vrot.slane %v2079, %v2092
      %v2094 = vcombine.low %v2086, %v2093
      %v2095 = vcombine.low %v1883, %v1891
      %v2096 = vcombine.low %v1899, %v1898
      %v2098 = vunpack.c.l.s4 1983009808
      %v2099 = vunpack.c.0.s8 %v2098
      %v2100 = vlaneseq
      %v2101 = vshrl.u32 %v2100, 7
      %v2102 = vsub.s32 %v2099, %v2101
      %v2103 = vrot.slane %v2095, %v2102
      %v2105 = vunpack.c.l.s4 1983009808
      %v2106 = vunpack.c.0.s8 %v2105
      %v2107 = vlaneseq
      %v2108 = vshrl.u32 %v2107, 7
      %v2109 = vsub.s32 %v2106, %v2108
      %v2110 = vrot.slane %v2096, %v2109
      %v2111 = vcombine.low %v2103, %v2110
      %v2112 = vcombine.low %v1900, %v1907
      %v2114 = vunpack.c.l.s4 1983009808
      %v2115 = vunpack.c.0.s8 %v2114
      %v2116 = vlaneseq
      %v2117 = vshrl.u32 %v2116, 7
      %v2118 = vsub.s32 %v2115, %v2117
      %v2119 = vrot.slane %v2112, %v2118
      %v2133 = vpack.c.bf16 %v1941, %v1924
      %v2134 = vpack.c.bf16 %v1975, %v1958
      %v2135 = vpack.c.bf16 %v2009, %v1992
      %v2136 = vpack.c.bf16 %v2043, %v2026
      %v2137 = vpack.c.bf16 %v2077, %v2060
      %v2138 = vpack.c.bf16 %v2111, %v2094
      %v2139 = vpack.c.bf16 %v2119, %v2119
      %s2140 = scalar_lea.vmem %s1, 4
      %v2141 = vld [vmem:[%s2140] sm:$0x3]
      %v2143 = vsel %vm287, %v2133, 0
      %v2146 = vsel %vm287, %v2134, 0
      %v2149 = vsel %vm287, %v2135, 0
      %v2152 = vsel %vm287, %v2136, 0
      %v2155 = vsel %vm287, %v2137, 0
      %v2158 = vsel %vm287, %v2138, 0
      %v2161 = vsel %vm287, %v2139, 0
      %v2164 = vsel %vm856, %v2141, 0
      %2166 = vmatprep.subr.bf16.mxu0 0
      %2167 = vmatpush1.bf16.msra.mxu0 %v2164
      %2168 = vmatprep.subr.bf16.mxu0 0
      %2169 = vmatpush1.bf16.msra.mxu0 0
      %2170 = vmatprep.subr.bf16.mxu0 0
      %2171 = vmatpush1.bf16.msra.mxu0 0
      %2172 = vmatprep.subr.bf16.mxu0 0
      %2173 = vmatpush1.bf16.msra.mxu0 0
      %2174 = vmatprep.subr.bf16.mxu0 0
      %2175 = vmatpush1.bf16.msra.mxu0 0
      %2176 = vmatprep.subr.bf16.mxu0 0
      %2177 = vmatpush1.bf16.msra.mxu0 0
      %2178 = vmatprep.subr.bf16.mxu0 0
      %2179 = vmatpush1.bf16.msra.mxu0 0
      %2180 = vmatprep.subr.bf16.mxu0 0
      %2181 = vmatpush1.bf16.msra.mxu0 0
      %2182 = vmatprep.subr.bf16.mxu0 0
      %2183 = vmatpush1.bf16.msra.mxu0 0
      %2184 = vmatprep.subr.bf16.mxu0 0
      %2185 = vmatpush1.bf16.msra.mxu0 0
      %2186 = vmatprep.subr.bf16.mxu0 0
      %2187 = vmatpush1.bf16.msra.mxu0 0
      %2188 = vmatprep.subr.bf16.mxu0 0
      %2189 = vmatpush1.bf16.msra.mxu0 0
      %2190 = vmatprep.subr.bf16.mxu0 0
      %2191 = vmatpush1.bf16.msra.mxu0 0
      %2192 = vmatprep.subr.bf16.mxu0 0
      %2193 = vmatpush1.bf16.msra.mxu0 0
      %2194 = vmatprep.subr.bf16.mxu0 0
      %2195 = vmatpush1.bf16.msra.mxu0 0
      %2196 = vmatprep.subr.bf16.mxu0 0
      %2197 = vmatpush1.bf16.msra.mxu0 0
      %2198 = vmatprep.mubr.bf16.mxu0 0
      %2199 = vmatmul.mubr.bf16.gmra.mrb[0].mxu0 %v2143
      %v2200 = vpop.f32.mrb[0].mxu0
      %v2201 = vadd.f32 0.0, %v2200
      %v2202 = vpop.f32.mrb[0].mxu0
      %v2203 = vpop.f32.mrb[0].mxu0
      %v2204 = vadd.f32 0.0, %v2203
      %v2205 = vpop.f32.mrb[0].mxu0
      %2206 = vmatprep.mubr.bf16.mxu0 0
      %2207 = vmatmul.mubr.bf16.gmra.mrb[0].mxu0 %v2146
      %v2208 = vpop.f32.mrb[0].mxu0
      %v2209 = vadd.f32 0.0, %v2208
      %v2210 = vpop.f32.mrb[0].mxu0
      %v2211 = vpop.f32.mrb[0].mxu0
      %v2212 = vadd.f32 0.0, %v2211
      %v2213 = vpop.f32.mrb[0].mxu0
      %2214 = vmatprep.mubr.bf16.mxu0 0
      %2215 = vmatmul.mubr.bf16.gmra.mrb[0].mxu0 %v2149
      %v2216 = vpop.f32.mrb[0].mxu0
      %v2217 = vadd.f32 0.0, %v2216
      %v2218 = vpop.f32.mrb[0].mxu0
      %v2219 = vpop.f32.mrb[0].mxu0
      %v2220 = vadd.f32 0.0, %v2219
      %v2221 = vpop.f32.mrb[0].mxu0
      %2222 = vmatprep.mubr.bf16.mxu0 0
      %2223 = vmatmul.mubr.bf16.gmra.mrb[0].mxu0 %v2152
      %v2224 = vpop.f32.mrb[0].mxu0
      %v2225 = vadd.f32 0.0, %v2224
      %v2226 = vpop.f32.mrb[0].mxu0
      %v2227 = vpop.f32.mrb[0].mxu0
      %v2228 = vadd.f32 0.0, %v2227
      %v2229 = vpop.f32.mrb[0].mxu0
      %2230 = vmatprep.mubr.bf16.mxu0 0
      %2231 = vmatmul.mubr.bf16.gmra.mrb[0].mxu0 %v2155
      %v2232 = vpop.f32.mrb[0].mxu0
      %v2233 = vadd.f32 0.0, %v2232
      %v2234 = vpop.f32.mrb[0].mxu0
      %v2235 = vpop.f32.mrb[0].mxu0
      %v2236 = vadd.f32 0.0, %v2235
      %v2237 = vpop.f32.mrb[0].mxu0
      %2238 = vmatprep.mubr.bf16.mxu0 0
      %2239 = vmatmul.mubr.bf16.gmra.mrb[0].mxu0 %v2158
      %v2240 = vpop.f32.mrb[0].mxu0
      %v2241 = vadd.f32 0.0, %v2240
      %v2242 = vpop.f32.mrb[0].mxu0
      %v2243 = vpop.f32.mrb[0].mxu0
      %v2244 = vadd.f32 0.0, %v2243
      %v2245 = vpop.f32.mrb[0].mxu0
      %2246 = vmatprep.mubr.bf16.mxu0 0
      %2247 = vmatmul.mubr.bf16.gmra.mrb[0].mxu0 %v2161
      %v2248 = vpop.f32.mrb[0].mxu0
      %v2249 = vadd.f32 0.0, %v2248
      %v2250 = vpop.f32.mrb[0].mxu0
      %v2251 = vpop.f32.mrb[0].mxu0
      %v2252 = vpop.f32.mrb[0].mxu0
      %2253 = vdwg.mxu0
      %v2254 = vld [vmem:[%s177] sm:$0xff]
      %v2255 = vld [vmem:[%s177 + $0x8] sm:$0xff]
      %v2256 = vld [vmem:[%s177 + $0x10] sm:$0xff]
      %v2257 = vld [vmem:[%s177 + $0x18] sm:$0xff]
      %v2258 = vld [vmem:[%s177 + $0x20] sm:$0xff]
      %v2259 = vld [vmem:[%s177 + $0x28] sm:$0xff]
      %v2260 = vld [vmem:[%s177 + $0x30] sm:$0xff]
      %v2261 = vld [vmem:[%s177 + $0x38] sm:$0xff]
      %v2262 = vld [vmem:[%s177 + $0x40] sm:$0xff]
      %v2263 = vld [vmem:[%s177 + $0x48] sm:$0xff]
      %v2264 = vld [vmem:[%s177 + $0x50] sm:$0xff]
      %v2265 = vld [vmem:[%s177 + $0x58] sm:$0xff]
      %v2266 = vld [vmem:[%s177 + $0x60] sm:$0xf]
      %v2267 = vadd.f32 %v2254, %v2201
      %v2268 = vadd.f32 %v2255, %v2204
      %v2269 = vadd.f32 %v2256, %v2209
      %v2270 = vadd.f32 %v2257, %v2212
      %v2271 = vadd.f32 %v2258, %v2217
      %v2272 = vadd.f32 %v2259, %v2220
      %v2273 = vadd.f32 %v2260, %v2225
      %v2274 = vadd.f32 %v2261, %v2228
      %v2275 = vadd.f32 %v2262, %v2233
      %v2276 = vadd.f32 %v2263, %v2236
      %v2277 = vadd.f32 %v2264, %v2241
      %v2278 = vadd.f32 %v2265, %v2244
      %v2279 = vadd.f32 %v2266, %v2249
      %2280 = vst.msk [vmem:[%s177] sm:$0xff] %vm948, %v2267
      %2281 = vst.msk [vmem:[%s177 + $0x8] sm:$0xff] %vm948, %v2268
      %2282 = vst.msk [vmem:[%s177 + $0x10] sm:$0xff] %vm948, %v2269
      %2283 = vst.msk [vmem:[%s177 + $0x18] sm:$0xff] %vm948, %v2270
      %2284 = vst.msk [vmem:[%s177 + $0x20] sm:$0xff] %vm948, %v2271
      %2285 = vst.msk [vmem:[%s177 + $0x28] sm:$0xff] %vm948, %v2272
      %2286 = vst.msk [vmem:[%s177 + $0x30] sm:$0xff] %vm948, %v2273
      %2287 = vst.msk [vmem:[%s177 + $0x38] sm:$0xff] %vm948, %v2274
      %2288 = vst.msk [vmem:[%s177 + $0x40] sm:$0xff] %vm948, %v2275
      %2289 = vst.msk [vmem:[%s177 + $0x48] sm:$0xff] %vm948, %v2276
      %2290 = vst.msk [vmem:[%s177 + $0x50] sm:$0xff] %vm948, %v2277
      %2291 = vst.msk [vmem:[%s177 + $0x58] sm:$0xff] %vm948, %v2278
      %2292 = vst.msk [vmem:[%s177 + $0x60] sm:$0xf] %vm961, %v2279
      %s2293 = scalar_lea.vmem [#allocation2], 16
      %v2294 = vld [vmem:[%s2293] sm:$0xff]
      %v2295 = vld [vmem:[%s2293 + $0x8] sm:$0x3]
      %v2296 = vld [vmem:[%s2293 + $0x10] sm:$0xff]
      %v2297 = vld [vmem:[%s2293 + $0x18] sm:$0x3]
      %v2298 = vld [vmem:[%s2293 + $0x20] sm:$0xff]
      %v2299 = vld [vmem:[%s2293 + $0x28] sm:$0x3]
      %v2300 = vld [vmem:[%s2293 + $0x30] sm:$0xff]
      %v2301 = vld [vmem:[%s2293 + $0x38] sm:$0x3]
      %v2302 = vld [vmem:[%s2293 + $0x40] sm:$0xff]
      %v2303 = vld [vmem:[%s2293 + $0x48] sm:$0x3]
      %v2304 = vld [vmem:[%s2293 + $0x50] sm:$0xff]
      %v2305 = vld [vmem:[%s2293 + $0x58] sm:$0x3]
      %v2306 = vld [vmem:[%s2293 + $0x60] sm:$0xff]
      %v2307 = vld [vmem:[%s2293 + $0x68] sm:$0x3]
      %v2308 = vld [vmem:[%s2293 + $0x70] sm:$0xff]
      %v2309 = vld [vmem:[%s2293 + $0x78] sm:$0x3]
      %v2310 = vld [vmem:[%s2293 + $0x80] sm:$0xff]
      %v2311 = vld [vmem:[%s2293 + $0x88] sm:$0x3]
      %v2312 = vld [vmem:[%s2293 + $0x90] sm:$0xff]
      %v2313 = vld [vmem:[%s2293 + $0x98] sm:$0x3]
      %v2334 = vcombine.high %v2294, %v2294
      %v2336 = vunpack.c.l.s4 1983009808
      %v2337 = vunpack.c.0.s8 %v2336
      %v2338 = vlaneseq
      %v2339 = vshrl.u32 %v2338, 7
      %v2340 = vsub.s32 %v2337, %v2339
      %v2341 = vrot.slane %v2294, %v2340
      %v2343 = vunpack.c.l.s4 1983009808
      %v2344 = vunpack.c.0.s8 %v2343
      %v2345 = vlaneseq
      %v2346 = vshrl.u32 %v2345, 7
      %v2347 = vsub.s32 %v2344, %v2346
      %v2348 = vrot.slane %v2334, %v2347
      %v2349 = vcombine.high %v2341, %v2341
      %v2350 = vcombine.high %v2348, %v2348
      %v2352 = vunpack.c.l.s4 1983009808
      %v2353 = vunpack.c.0.s8 %v2352
      %v2354 = vlaneseq
      %v2355 = vshrl.u32 %v2354, 7
      %v2356 = vsub.s32 %v2353, %v2355
      %v2357 = vrot.slane %v2295, %v2356
      %v2358 = vcombine.high %v2296, %v2296
      %v2360 = vunpack.c.l.s4 1983009808
      %v2361 = vunpack.c.0.s8 %v2360
      %v2362 = vlaneseq
      %v2363 = vshrl.u32 %v2362, 7
      %v2364 = vsub.s32 %v2361, %v2363
      %v2365 = vrot.slane %v2296, %v2364
      %v2367 = vunpack.c.l.s4 1983009808
      %v2368 = vunpack.c.0.s8 %v2367
      %v2369 = vlaneseq
      %v2370 = vshrl.u32 %v2369, 7
      %v2371 = vsub.s32 %v2368, %v2370
      %v2372 = vrot.slane %v2358, %v2371
      %v2373 = vcombine.high %v2365, %v2365
      %v2374 = vcombine.high %v2372, %v2372
      %v2376 = vunpack.c.l.s4 1983009808
      %v2377 = vunpack.c.0.s8 %v2376
      %v2378 = vlaneseq
      %v2379 = vshrl.u32 %v2378, 7
      %v2380 = vsub.s32 %v2377, %v2379
      %v2381 = vrot.slane %v2297, %v2380
      %v2382 = vcombine.high %v2298, %v2298
      %v2384 = vunpack.c.l.s4 1983009808
      %v2385 = vunpack.c.0.s8 %v2384
      %v2386 = vlaneseq
      %v2387 = vshrl.u32 %v2386, 7
      %v2388 = vsub.s32 %v2385, %v2387
      %v2389 = vrot.slane %v2298, %v2388
      %v2391 = vunpack.c.l.s4 1983009808
      %v2392 = vunpack.c.0.s8 %v2391
      %v2393 = vlaneseq
      %v2394 = vshrl.u32 %v2393, 7
      %v2395 = vsub.s32 %v2392, %v2394
      %v2396 = vrot.slane %v2382, %v2395
      %v2397 = vcombine.high %v2389, %v2389
      %v2398 = vcombine.high %v2396, %v2396
      %v2400 = vunpack.c.l.s4 1983009808
      %v2401 = vunpack.c.0.s8 %v2400
      %v2402 = vlaneseq
      %v2403 = vshrl.u32 %v2402, 7
      %v2404 = vsub.s32 %v2401, %v2403
      %v2405 = vrot.slane %v2299, %v2404
      %v2406 = vcombine.high %v2300, %v2300
      %v2408 = vunpack.c.l.s4 1983009808
      %v2409 = vunpack.c.0.s8 %v2408
      %v2410 = vlaneseq
      %v2411 = vshrl.u32 %v2410, 7
      %v2412 = vsub.s32 %v2409, %v2411
      %v2413 = vrot.slane %v2300, %v2412
      %v2415 = vunpack.c.l.s4 1983009808
      %v2416 = vunpack.c.0.s8 %v2415
      %v2417 = vlaneseq
      %v2418 = vshrl.u32 %v2417, 7
      %v2419 = vsub.s32 %v2416, %v2418
      %v2420 = vrot.slane %v2406, %v2419
      %v2421 = vcombine.high %v2413, %v2413
      %v2422 = vcombine.high %v2420, %v2420
      %v2424 = vunpack.c.l.s4 1983009808
      %v2425 = vunpack.c.0.s8 %v2424
      %v2426 = vlaneseq
      %v2427 = vshrl.u32 %v2426, 7
      %v2428 = vsub.s32 %v2425, %v2427
      %v2429 = vrot.slane %v2301, %v2428
      %v2430 = vcombine.high %v2302, %v2302
      %v2432 = vunpack.c.l.s4 1983009808
      %v2433 = vunpack.c.0.s8 %v2432
      %v2434 = vlaneseq
      %v2435 = vshrl.u32 %v2434, 7
      %v2436 = vsub.s32 %v2433, %v2435
      %v2437 = vrot.slane %v2302, %v2436
      %v2439 = vunpack.c.l.s4 1983009808
      %v2440 = vunpack.c.0.s8 %v2439
      %v2441 = vlaneseq
      %v2442 = vshrl.u32 %v2441, 7
      %v2443 = vsub.s32 %v2440, %v2442
      %v2444 = vrot.slane %v2430, %v2443
      %v2445 = vcombine.high %v2437, %v2437
      %v2446 = vcombine.high %v2444, %v2444
      %v2448 = vunpack.c.l.s4 1983009808
      %v2449 = vunpack.c.0.s8 %v2448
      %v2450 = vlaneseq
      %v2451 = vshrl.u32 %v2450, 7
      %v2452 = vsub.s32 %v2449, %v2451
      %v2453 = vrot.slane %v2303, %v2452
      %v2454 = vcombine.high %v2304, %v2304
      %v2456 = vunpack.c.l.s4 1983009808
      %v2457 = vunpack.c.0.s8 %v2456
      %v2458 = vlaneseq
      %v2459 = vshrl.u32 %v2458, 7
      %v2460 = vsub.s32 %v2457, %v2459
      %v2461 = vrot.slane %v2304, %v2460
      %v2463 = vunpack.c.l.s4 1983009808
      %v2464 = vunpack.c.0.s8 %v2463
      %v2465 = vlaneseq
      %v2466 = vshrl.u32 %v2465, 7
      %v2467 = vsub.s32 %v2464, %v2466
      %v2468 = vrot.slane %v2454, %v2467
      %v2469 = vcombine.high %v2461, %v2461
      %v2470 = vcombine.high %v2468, %v2468
      %v2472 = vunpack.c.l.s4 1983009808
      %v2473 = vunpack.c.0.s8 %v2472
      %v2474 = vlaneseq
      %v2475 = vshrl.u32 %v2474, 7
      %v2476 = vsub.s32 %v2473, %v2475
      %v2477 = vrot.slane %v2305, %v2476
      %v2478 = vcombine.high %v2306, %v2306
      %v2480 = vunpack.c.l.s4 1983009808
      %v2481 = vunpack.c.0.s8 %v2480
      %v2482 = vlaneseq
      %v2483 = vshrl.u32 %v2482, 7
      %v2484 = vsub.s32 %v2481, %v2483
      %v2485 = vrot.slane %v2306, %v2484
      %v2487 = vunpack.c.l.s4 1983009808
      %v2488 = vunpack.c.0.s8 %v2487
      %v2489 = vlaneseq
      %v2490 = vshrl.u32 %v2489, 7
      %v2491 = vsub.s32 %v2488, %v2490
      %v2492 = vrot.slane %v2478, %v2491
      %v2493 = vcombine.high %v2485, %v2485
      %v2494 = vcombine.high %v2492, %v2492
      %v2496 = vunpack.c.l.s4 1983009808
      %v2497 = vunpack.c.0.s8 %v2496
      %v2498 = vlaneseq
      %v2499 = vshrl.u32 %v2498, 7
      %v2500 = vsub.s32 %v2497, %v2499
      %v2501 = vrot.slane %v2307, %v2500
      %v2502 = vcombine.high %v2308, %v2308
      %v2504 = vunpack.c.l.s4 1983009808
      %v2505 = vunpack.c.0.s8 %v2504
      %v2506 = vlaneseq
      %v2507 = vshrl.u32 %v2506, 7
      %v2508 = vsub.s32 %v2505, %v2507
      %v2509 = vrot.slane %v2308, %v2508
      %v2511 = vunpack.c.l.s4 1983009808
      %v2512 = vunpack.c.0.s8 %v2511
      %v2513 = vlaneseq
      %v2514 = vshrl.u32 %v2513, 7
      %v2515 = vsub.s32 %v2512, %v2514
      %v2516 = vrot.slane %v2502, %v2515
      %v2517 = vcombine.high %v2509, %v2509
      %v2518 = vcombine.high %v2516, %v2516
      %v2520 = vunpack.c.l.s4 1983009808
      %v2521 = vunpack.c.0.s8 %v2520
      %v2522 = vlaneseq
      %v2523 = vshrl.u32 %v2522, 7
      %v2524 = vsub.s32 %v2521, %v2523
      %v2525 = vrot.slane %v2309, %v2524
      %v2526 = vcombine.high %v2310, %v2310
      %v2528 = vunpack.c.l.s4 1983009808
      %v2529 = vunpack.c.0.s8 %v2528
      %v2530 = vlaneseq
      %v2531 = vshrl.u32 %v2530, 7
      %v2532 = vsub.s32 %v2529, %v2531
      %v2533 = vrot.slane %v2310, %v2532
      %v2535 = vunpack.c.l.s4 1983009808
      %v2536 = vunpack.c.0.s8 %v2535
      %v2537 = vlaneseq
      %v2538 = vshrl.u32 %v2537, 7
      %v2539 = vsub.s32 %v2536, %v2538
      %v2540 = vrot.slane %v2526, %v2539
      %v2541 = vcombine.high %v2533, %v2533
      %v2542 = vcombine.high %v2540, %v2540
      %v2544 = vunpack.c.l.s4 1983009808
      %v2545 = vunpack.c.0.s8 %v2544
      %v2546 = vlaneseq
      %v2547 = vshrl.u32 %v2546, 7
      %v2548 = vsub.s32 %v2545, %v2547
      %v2549 = vrot.slane %v2311, %v2548
      %v2550 = vcombine.high %v2312, %v2312
      %v2552 = vunpack.c.l.s4 1983009808
      %v2553 = vunpack.c.0.s8 %v2552
      %v2554 = vlaneseq
      %v2555 = vshrl.u32 %v2554, 7
      %v2556 = vsub.s32 %v2553, %v2555
      %v2557 = vrot.slane %v2312, %v2556
      %v2559 = vunpack.c.l.s4 1983009808
      %v2560 = vunpack.c.0.s8 %v2559
      %v2561 = vlaneseq
      %v2562 = vshrl.u32 %v2561, 7
      %v2563 = vsub.s32 %v2560, %v2562
      %v2564 = vrot.slane %v2550, %v2563
      %v2565 = vcombine.high %v2557, %v2557
      %v2566 = vcombine.high %v2564, %v2564
      %v2568 = vunpack.c.l.s4 1983009808
      %v2569 = vunpack.c.0.s8 %v2568
      %v2570 = vlaneseq
      %v2571 = vshrl.u32 %v2570, 7
      %v2572 = vsub.s32 %v2569, %v2571
      %v2573 = vrot.slane %v2313, %v2572
      %v2574 = vcombine.low %v2341, %v2349
      %v2575 = vcombine.low %v2348, %v2350
      %v2577 = vunpack.c.l.s4 1983009808
      %v2578 = vunpack.c.0.s8 %v2577
      %v2579 = vlaneseq
      %v2580 = vshrl.u32 %v2579, 7
      %v2581 = vsub.s32 %v2578, %v2580
      %v2582 = vrot.slane %v2574, %v2581
      %v2584 = vunpack.c.l.s4 1983009808
      %v2585 = vunpack.c.0.s8 %v2584
      %v2586 = vlaneseq
      %v2587 = vshrl.u32 %v2586, 7
      %v2588 = vsub.s32 %v2585, %v2587
      %v2589 = vrot.slane %v2575, %v2588
      %v2590 = vcombine.low %v2582, %v2589
      %v2591 = vcombine.low %v2357, %v2365
      %v2592 = vcombine.low %v2373, %v2372
      %v2594 = vunpack.c.l.s4 1983009808
      %v2595 = vunpack.c.0.s8 %v2594
      %v2596 = vlaneseq
      %v2597 = vshrl.u32 %v2596, 7
      %v2598 = vsub.s32 %v2595, %v2597
      %v2599 = vrot.slane %v2591, %v2598
      %v2601 = vunpack.c.l.s4 1983009808
      %v2602 = vunpack.c.0.s8 %v2601
      %v2603 = vlaneseq
      %v2604 = vshrl.u32 %v2603, 7
      %v2605 = vsub.s32 %v2602, %v2604
      %v2606 = vrot.slane %v2592, %v2605
      %v2607 = vcombine.low %v2599, %v2606
      %v2608 = vcombine.low %v2374, %v2381
      %v2609 = vcombine.low %v2389, %v2397
      %v2611 = vunpack.c.l.s4 1983009808
      %v2612 = vunpack.c.0.s8 %v2611
      %v2613 = vlaneseq
      %v2614 = vshrl.u32 %v2613, 7
      %v2615 = vsub.s32 %v2612, %v2614
      %v2616 = vrot.slane %v2608, %v2615
      %v2618 = vunpack.c.l.s4 1983009808
      %v2619 = vunpack.c.0.s8 %v2618
      %v2620 = vlaneseq
      %v2621 = vshrl.u32 %v2620, 7
      %v2622 = vsub.s32 %v2619, %v2621
      %v2623 = vrot.slane %v2609, %v2622
      %v2624 = vcombine.low %v2616, %v2623
      %v2625 = vcombine.low %v2396, %v2398
      %v2626 = vcombine.low %v2405, %v2413
      %v2628 = vunpack.c.l.s4 1983009808
      %v2629 = vunpack.c.0.s8 %v2628
      %v2630 = vlaneseq
      %v2631 = vshrl.u32 %v2630, 7
      %v2632 = vsub.s32 %v2629, %v2631
      %v2633 = vrot.slane %v2625, %v2632
      %v2635 = vunpack.c.l.s4 1983009808
      %v2636 = vunpack.c.0.s8 %v2635
      %v2637 = vlaneseq
      %v2638 = vshrl.u32 %v2637, 7
      %v2639 = vsub.s32 %v2636, %v2638
      %v2640 = vrot.slane %v2626, %v2639
      %v2641 = vcombine.low %v2633, %v2640
      %v2642 = vcombine.low %v2421, %v2420
      %v2643 = vcombine.low %v2422, %v2429
      %v2645 = vunpack.c.l.s4 1983009808
      %v2646 = vunpack.c.0.s8 %v2645
      %v2647 = vlaneseq
      %v2648 = vshrl.u32 %v2647, 7
      %v2649 = vsub.s32 %v2646, %v2648
      %v2650 = vrot.slane %v2642, %v2649
      %v2652 = vunpack.c.l.s4 1983009808
      %v2653 = vunpack.c.0.s8 %v2652
      %v2654 = vlaneseq
      %v2655 = vshrl.u32 %v2654, 7
      %v2656 = vsub.s32 %v2653, %v2655
      %v2657 = vrot.slane %v2643, %v2656
      %v2658 = vcombine.low %v2650, %v2657
      %v2659 = vcombine.low %v2437, %v2445
      %v2660 = vcombine.low %v2444, %v2446
      %v2662 = vunpack.c.l.s4 1983009808
      %v2663 = vunpack.c.0.s8 %v2662
      %v2664 = vlaneseq
      %v2665 = vshrl.u32 %v2664, 7
      %v2666 = vsub.s32 %v2663, %v2665
      %v2667 = vrot.slane %v2659, %v2666
      %v2669 = vunpack.c.l.s4 1983009808
      %v2670 = vunpack.c.0.s8 %v2669
      %v2671 = vlaneseq
      %v2672 = vshrl.u32 %v2671, 7
      %v2673 = vsub.s32 %v2670, %v2672
      %v2674 = vrot.slane %v2660, %v2673
      %v2675 = vcombine.low %v2667, %v2674
      %v2676 = vcombine.low %v2453, %v2461
      %v2677 = vcombine.low %v2469, %v2468
      %v2679 = vunpack.c.l.s4 1983009808
      %v2680 = vunpack.c.0.s8 %v2679
      %v2681 = vlaneseq
      %v2682 = vshrl.u32 %v2681, 7
      %v2683 = vsub.s32 %v2680, %v2682
      %v2684 = vrot.slane %v2676, %v2683
      %v2686 = vunpack.c.l.s4 1983009808
      %v2687 = vunpack.c.0.s8 %v2686
      %v2688 = vlaneseq
      %v2689 = vshrl.u32 %v2688, 7
      %v2690 = vsub.s32 %v2687, %v2689
      %v2691 = vrot.slane %v2677, %v2690
      %v2692 = vcombine.low %v2684, %v2691
      %v2693 = vcombine.low %v2470, %v2477
      %v2694 = vcombine.low %v2485, %v2493
      %v2696 = vunpack.c.l.s4 1983009808
      %v2697 = vunpack.c.0.s8 %v2696
      %v2698 = vlaneseq
      %v2699 = vshrl.u32 %v2698, 7
      %v2700 = vsub.s32 %v2697, %v2699
      %v2701 = vrot.slane %v2693, %v2700
      %v2703 = vunpack.c.l.s4 1983009808
      %v2704 = vunpack.c.0.s8 %v2703
      %v2705 = vlaneseq
      %v2706 = vshrl.u32 %v2705, 7
      %v2707 = vsub.s32 %v2704, %v2706
      %v2708 = vrot.slane %v2694, %v2707
      %v2709 = vcombine.low %v2701, %v2708
      %v2710 = vcombine.low %v2492, %v2494
      %v2711 = vcombine.low %v2501, %v2509
      %v2713 = vunpack.c.l.s4 1983009808
      %v2714 = vunpack.c.0.s8 %v2713
      %v2715 = vlaneseq
      %v2716 = vshrl.u32 %v2715, 7
      %v2717 = vsub.s32 %v2714, %v2716
      %v2718 = vrot.slane %v2710, %v2717
      %v2720 = vunpack.c.l.s4 1983009808
      %v2721 = vunpack.c.0.s8 %v2720
      %v2722 = vlaneseq
      %v2723 = vshrl.u32 %v2722, 7
      %v2724 = vsub.s32 %v2721, %v2723
      %v2725 = vrot.slane %v2711, %v2724
      %v2726 = vcombine.low %v2718, %v2725
      %v2727 = vcombine.low %v2517, %v2516
      %v2728 = vcombine.low %v2518, %v2525
      %v2730 = vunpack.c.l.s4 1983009808
      %v2731 = vunpack.c.0.s8 %v2730
      %v2732 = vlaneseq
      %v2733 = vshrl.u32 %v2732, 7
      %v2734 = vsub.s32 %v2731, %v2733
      %v2735 = vrot.slane %v2727, %v2734
      %v2737 = vunpack.c.l.s4 1983009808
      %v2738 = vunpack.c.0.s8 %v2737
      %v2739 = vlaneseq
      %v2740 = vshrl.u32 %v2739, 7
      %v2741 = vsub.s32 %v2738, %v2740
      %v2742 = vrot.slane %v2728, %v2741
      %v2743 = vcombine.low %v2735, %v2742
      %v2744 = vcombine.low %v2533, %v2541
      %v2745 = vcombine.low %v2540, %v2542
      %v2747 = vunpack.c.l.s4 1983009808
      %v2748 = vunpack.c.0.s8 %v2747
      %v2749 = vlaneseq
      %v2750 = vshrl.u32 %v2749, 7
      %v2751 = vsub.s32 %v2748, %v2750
      %v2752 = vrot.slane %v2744, %v2751
      %v2754 = vunpack.c.l.s4 1983009808
      %v2755 = vunpack.c.0.s8 %v2754
      %v2756 = vlaneseq
      %v2757 = vshrl.u32 %v2756, 7
      %v2758 = vsub.s32 %v2755, %v2757
      %v2759 = vrot.slane %v2745, %v2758
      %v2760 = vcombine.low %v2752, %v2759
      %v2761 = vcombine.low %v2549, %v2557
      %v2762 = vcombine.low %v2565, %v2564
      %v2764 = vunpack.c.l.s4 1983009808
      %v2765 = vunpack.c.0.s8 %v2764
      %v2766 = vlaneseq
      %v2767 = vshrl.u32 %v2766, 7
      %v2768 = vsub.s32 %v2765, %v2767
      %v2769 = vrot.slane %v2761, %v2768
      %v2771 = vunpack.c.l.s4 1983009808
      %v2772 = vunpack.c.0.s8 %v2771
      %v2773 = vlaneseq
      %v2774 = vshrl.u32 %v2773, 7
      %v2775 = vsub.s32 %v2772, %v2774
      %v2776 = vrot.slane %v2762, %v2775
      %v2777 = vcombine.low %v2769, %v2776
      %v2778 = vcombine.low %v2566, %v2573
      %v2780 = vunpack.c.l.s4 1983009808
      %v2781 = vunpack.c.0.s8 %v2780
      %v2782 = vlaneseq
      %v2783 = vshrl.u32 %v2782, 7
      %v2784 = vsub.s32 %v2781, %v2783
      %v2785 = vrot.slane %v2778, %v2784
      %v2799 = vpack.c.bf16 %v2607, %v2590
      %v2800 = vpack.c.bf16 %v2641, %v2624
      %v2801 = vpack.c.bf16 %v2675, %v2658
      %v2802 = vpack.c.bf16 %v2709, %v2692
      %v2803 = vpack.c.bf16 %v2743, %v2726
      %v2804 = vpack.c.bf16 %v2777, %v2760
      %v2805 = vpack.c.bf16 %v2785, %v2785
      %s2806 = scalar_lea.vmem %s1, 6
      %v2807 = vld [vmem:[%s2806] sm:$0x3]
      %v2809 = vsel %vm287, %v2799, 0
      %v2812 = vsel %vm287, %v2800, 0
      %v2815 = vsel %vm287, %v2801, 0
      %v2818 = vsel %vm287, %v2802, 0
      %v2821 = vsel %vm287, %v2803, 0
      %v2824 = vsel %vm287, %v2804, 0
      %v2827 = vsel %vm287, %v2805, 0
      %v2830 = vsel %vm856, %v2807, 0
      %2832 = vmatprep.subr.bf16.mxu0 0
      %2833 = vmatpush1.bf16.msra.mxu0 %v2830
      %2834 = vmatprep.subr.bf16.mxu0 0
      %2835 = vmatpush1.bf16.msra.mxu0 0
      %2836 = vmatprep.subr.bf16.mxu0 0
      %2837 = vmatpush1.bf16.msra.mxu0 0
      %2838 = vmatprep.subr.bf16.mxu0 0
      %2839 = vmatpush1.bf16.msra.mxu0 0
      %2840 = vmatprep.subr.bf16.mxu0 0
      %2841 = vmatpush1.bf16.msra.mxu0 0
      %2842 = vmatprep.subr.bf16.mxu0 0
      %2843 = vmatpush1.bf16.msra.mxu0 0
      %2844 = vmatprep.subr.bf16.mxu0 0
      %2845 = vmatpush1.bf16.msra.mxu0 0
      %2846 = vmatprep.subr.bf16.mxu0 0
      %2847 = vmatpush1.bf16.msra.mxu0 0
      %2848 = vmatprep.subr.bf16.mxu0 0
      %2849 = vmatpush1.bf16.msra.mxu0 0
      %2850 = vmatprep.subr.bf16.mxu0 0
      %2851 = vmatpush1.bf16.msra.mxu0 0
      %2852 = vmatprep.subr.bf16.mxu0 0
      %2853 = vmatpush1.bf16.msra.mxu0 0
      %2854 = vmatprep.subr.bf16.mxu0 0
      %2855 = vmatpush1.bf16.msra.mxu0 0
      %2856 = vmatprep.subr.bf16.mxu0 0
      %2857 = vmatpush1.bf16.msra.mxu0 0
      %2858 = vmatprep.subr.bf16.mxu0 0
      %2859 = vmatpush1.bf16.msra.mxu0 0
      %2860 = vmatprep.subr.bf16.mxu0 0
      %2861 = vmatpush1.bf16.msra.mxu0 0
      %2862 = vmatprep.subr.bf16.mxu0 0
      %2863 = vmatpush1.bf16.msra.mxu0 0
      %2864 = vmatprep.mubr.bf16.mxu0 0
      %2865 = vmatmul.mubr.bf16.gmra.mrb[0].mxu0 %v2809
      %v2866 = vpop.f32.mrb[0].mxu0
      %v2867 = vadd.f32 0.0, %v2866
      %v2868 = vpop.f32.mrb[0].mxu0
      %v2869 = vpop.f32.mrb[0].mxu0
      %v2870 = vadd.f32 0.0, %v2869
      %v2871 = vpop.f32.mrb[0].mxu0
      %2872 = vmatprep.mubr.bf16.mxu0 0
      %2873 = vmatmul.mubr.bf16.gmra.mrb[0].mxu0 %v2812
      %v2874 = vpop.f32.mrb[0].mxu0
      %v2875 = vadd.f32 0.0, %v2874
      %v2876 = vpop.f32.mrb[0].mxu0
      %v2877 = vpop.f32.mrb[0].mxu0
      %v2878 = vadd.f32 0.0, %v2877
      %v2879 = vpop.f32.mrb[0].mxu0
      %2880 = vmatprep.mubr.bf16.mxu0 0
      %2881 = vmatmul.mubr.bf16.gmra.mrb[0].mxu0 %v2815
      %v2882 = vpop.f32.mrb[0].mxu0
      %v2883 = vadd.f32 0.0, %v2882
      %v2884 = vpop.f32.mrb[0].mxu0
      %v2885 = vpop.f32.mrb[0].mxu0
      %v2886 = vadd.f32 0.0, %v2885
      %v2887 = vpop.f32.mrb[0].mxu0
      %2888 = vmatprep.mubr.bf16.mxu0 0
      %2889 = vmatmul.mubr.bf16.gmra.mrb[0].mxu0 %v2818
      %v2890 = vpop.f32.mrb[0].mxu0
      %v2891 = vadd.f32 0.0, %v2890
      %v2892 = vpop.f32.mrb[0].mxu0
      %v2893 = vpop.f32.mrb[0].mxu0
      %v2894 = vadd.f32 0.0, %v2893
      %v2895 = vpop.f32.mrb[0].mxu0
      %2896 = vmatprep.mubr.bf16.mxu0 0
      %2897 = vmatmul.mubr.bf16.gmra.mrb[0].mxu0 %v2821
      %v2898 = vpop.f32.mrb[0].mxu0
      %v2899 = vadd.f32 0.0, %v2898
      %v2900 = vpop.f32.mrb[0].mxu0
      %v2901 = vpop.f32.mrb[0].mxu0
      %v2902 = vadd.f32 0.0, %v2901
      %v2903 = vpop.f32.mrb[0].mxu0
      %2904 = vmatprep.mubr.bf16.mxu0 0
      %2905 = vmatmul.mubr.bf16.gmra.mrb[0].mxu0 %v2824
      %v2906 = vpop.f32.mrb[0].mxu0
      %v2907 = vadd.f32 0.0, %v2906
      %v2908 = vpop.f32.mrb[0].mxu0
      %v2909 = vpop.f32.mrb[0].mxu0
      %v2910 = vadd.f32 0.0, %v2909
      %v2911 = vpop.f32.mrb[0].mxu0
      %2912 = vmatprep.mubr.bf16.mxu0 0
      %2913 = vmatmul.mubr.bf16.gmra.mrb[0].mxu0 %v2827
      %v2914 = vpop.f32.mrb[0].mxu0
      %v2915 = vadd.f32 0.0, %v2914
      %v2916 = vpop.f32.mrb[0].mxu0
      %v2917 = vpop.f32.mrb[0].mxu0
      %v2918 = vpop.f32.mrb[0].mxu0
      %2919 = vdwg.mxu0
      %v2920 = vld [vmem:[%s177] sm:$0xff]
      %v2921 = vld [vmem:[%s177 + $0x8] sm:$0xff]
      %v2922 = vld [vmem:[%s177 + $0x10] sm:$0xff]
      %v2923 = vld [vmem:[%s177 + $0x18] sm:$0xff]
      %v2924 = vld [vmem:[%s177 + $0x20] sm:$0xff]
      %v2925 = vld [vmem:[%s177 + $0x28] sm:$0xff]
      %v2926 = vld [vmem:[%s177 + $0x30] sm:$0xff]
      %v2927 = vld [vmem:[%s177 + $0x38] sm:$0xff]
      %v2928 = vld [vmem:[%s177 + $0x40] sm:$0xff]
      %v2929 = vld [vmem:[%s177 + $0x48] sm:$0xff]
      %v2930 = vld [vmem:[%s177 + $0x50] sm:$0xff]
      %v2931 = vld [vmem:[%s177 + $0x58] sm:$0xff]
      %v2932 = vld [vmem:[%s177 + $0x60] sm:$0xf]
      %v2933 = vadd.f32 %v2920, %v2867
      %v2934 = vadd.f32 %v2921, %v2870
      %v2935 = vadd.f32 %v2922, %v2875
      %v2936 = vadd.f32 %v2923, %v2878
      %v2937 = vadd.f32 %v2924, %v2883
      %v2938 = vadd.f32 %v2925, %v2886
      %v2939 = vadd.f32 %v2926, %v2891
      %v2940 = vadd.f32 %v2927, %v2894
      %v2941 = vadd.f32 %v2928, %v2899
      %v2942 = vadd.f32 %v2929, %v2902
      %v2943 = vadd.f32 %v2930, %v2907
      %v2944 = vadd.f32 %v2931, %v2910
      %v2945 = vadd.f32 %v2932, %v2915
      %2946 = vst.msk [vmem:[%s177] sm:$0xff] %vm948, %v2933
      %2947 = vst.msk [vmem:[%s177 + $0x8] sm:$0xff] %vm948, %v2934
      %2948 = vst.msk [vmem:[%s177 + $0x10] sm:$0xff] %vm948, %v2935
      %2949 = vst.msk [vmem:[%s177 + $0x18] sm:$0xff] %vm948, %v2936
      %2950 = vst.msk [vmem:[%s177 + $0x20] sm:$0xff] %vm948, %v2937
      %2951 = vst.msk [vmem:[%s177 + $0x28] sm:$0xff] %vm948, %v2938
      %2952 = vst.msk [vmem:[%s177 + $0x30] sm:$0xff] %vm948, %v2939
      %2953 = vst.msk [vmem:[%s177 + $0x38] sm:$0xff] %vm948, %v2940
      %2954 = vst.msk [vmem:[%s177 + $0x40] sm:$0xff] %vm948, %v2941
      %2955 = vst.msk [vmem:[%s177 + $0x48] sm:$0xff] %vm948, %v2942
      %2956 = vst.msk [vmem:[%s177 + $0x50] sm:$0xff] %vm948, %v2943
      %2957 = vst.msk [vmem:[%s177 + $0x58] sm:$0xff] %vm948, %v2944
      %2958 = vst.msk [vmem:[%s177 + $0x60] sm:$0xf] %vm961, %v2945
      %v2959 = vld [vmem:[%s2293 + $0x1] sm:$0xff]
      %v2960 = vld [vmem:[%s2293 + $0x9] sm:$0x3]
      %v2961 = vld [vmem:[%s2293 + $0x11] sm:$0xff]
      %v2962 = vld [vmem:[%s2293 + $0x19] sm:$0x3]
      %v2963 = vld [vmem:[%s2293 + $0x21] sm:$0xff]
      %v2964 = vld [vmem:[%s2293 + $0x29] sm:$0x3]
      %v2965 = vld [vmem:[%s2293 + $0x31] sm:$0xff]
      %v2966 = vld [vmem:[%s2293 + $0x39] sm:$0x3]
      %v2967 = vld [vmem:[%s2293 + $0x41] sm:$0xff]
      %v2968 = vld [vmem:[%s2293 + $0x49] sm:$0x3]
      %v2969 = vld [vmem:[%s2293 + $0x51] sm:$0xff]
      %v2970 = vld [vmem:[%s2293 + $0x59] sm:$0x3]
      %v2971 = vld [vmem:[%s2293 + $0x61] sm:$0xff]
      %v2972 = vld [vmem:[%s2293 + $0x69] sm:$0x3]
      %v2973 = vld [vmem:[%s2293 + $0x71] sm:$0xff]
      %v2974 = vld [vmem:[%s2293 + $0x79] sm:$0x3]
      %v2975 = vld [vmem:[%s2293 + $0x81] sm:$0xff]
      %v2976 = vld [vmem:[%s2293 + $0x89] sm:$0x3]
      %v2977 = vld [vmem:[%s2293 + $0x91] sm:$0xff]
      %v2978 = vld [vmem:[%s2293 + $0x99] sm:$0x3]
      %v2999 = vcombine.high %v2959, %v2959
      %v3001 = vunpack.c.l.s4 1983009808
      %v3002 = vunpack.c.0.s8 %v3001
      %v3003 = vlaneseq
      %v3004 = vshrl.u32 %v3003, 7
      %v3005 = vsub.s32 %v3002, %v3004
      %v3006 = vrot.slane %v2959, %v3005
      %v3008 = vunpack.c.l.s4 1983009808
      %v3009 = vunpack.c.0.s8 %v3008
      %v3010 = vlaneseq
      %v3011 = vshrl.u32 %v3010, 7
      %v3012 = vsub.s32 %v3009, %v3011
      %v3013 = vrot.slane %v2999, %v3012
      %v3014 = vcombine.high %v3006, %v3006
      %v3015 = vcombine.high %v3013, %v3013
      %v3017 = vunpack.c.l.s4 1983009808
      %v3018 = vunpack.c.0.s8 %v3017
      %v3019 = vlaneseq
      %v3020 = vshrl.u32 %v3019, 7
      %v3021 = vsub.s32 %v3018, %v3020
      %v3022 = vrot.slane %v2960, %v3021
      %v3023 = vcombine.high %v2961, %v2961
      %v3025 = vunpack.c.l.s4 1983009808
      %v3026 = vunpack.c.0.s8 %v3025
      %v3027 = vlaneseq
      %v3028 = vshrl.u32 %v3027, 7
      %v3029 = vsub.s32 %v3026, %v3028
      %v3030 = vrot.slane %v2961, %v3029
      %v3032 = vunpack.c.l.s4 1983009808
      %v3033 = vunpack.c.0.s8 %v3032
      %v3034 = vlaneseq
      %v3035 = vshrl.u32 %v3034, 7
      %v3036 = vsub.s32 %v3033, %v3035
      %v3037 = vrot.slane %v3023, %v3036
      %v3038 = vcombine.high %v3030, %v3030
      %v3039 = vcombine.high %v3037, %v3037
      %v3041 = vunpack.c.l.s4 1983009808
      %v3042 = vunpack.c.0.s8 %v3041
      %v3043 = vlaneseq
      %v3044 = vshrl.u32 %v3043, 7
      %v3045 = vsub.s32 %v3042, %v3044
      %v3046 = vrot.slane %v2962, %v3045
      %v3047 = vcombine.high %v2963, %v2963
      %v3049 = vunpack.c.l.s4 1983009808
      %v3050 = vunpack.c.0.s8 %v3049
      %v3051 = vlaneseq
      %v3052 = vshrl.u32 %v3051, 7
      %v3053 = vsub.s32 %v3050, %v3052
      %v3054 = vrot.slane %v2963, %v3053
      %v3056 = vunpack.c.l.s4 1983009808
      %v3057 = vunpack.c.0.s8 %v3056
      %v3058 = vlaneseq
      %v3059 = vshrl.u32 %v3058, 7
      %v3060 = vsub.s32 %v3057, %v3059
      %v3061 = vrot.slane %v3047, %v3060
      %v3062 = vcombine.high %v3054, %v3054
      %v3063 = vcombine.high %v3061, %v3061
      %v3065 = vunpack.c.l.s4 1983009808
      %v3066 = vunpack.c.0.s8 %v3065
      %v3067 = vlaneseq
      %v3068 = vshrl.u32 %v3067, 7
      %v3069 = vsub.s32 %v3066, %v3068
      %v3070 = vrot.slane %v2964, %v3069
      %v3071 = vcombine.high %v2965, %v2965
      %v3073 = vunpack.c.l.s4 1983009808
      %v3074 = vunpack.c.0.s8 %v3073
      %v3075 = vlaneseq
      %v3076 = vshrl.u32 %v3075, 7
      %v3077 = vsub.s32 %v3074, %v3076
      %v3078 = vrot.slane %v2965, %v3077
      %v3080 = vunpack.c.l.s4 1983009808
      %v3081 = vunpack.c.0.s8 %v3080
      %v3082 = vlaneseq
      %v3083 = vshrl.u32 %v3082, 7
      %v3084 = vsub.s32 %v3081, %v3083
      %v3085 = vrot.slane %v3071, %v3084
      %v3086 = vcombine.high %v3078, %v3078
      %v3087 = vcombine.high %v3085, %v3085
      %v3089 = vunpack.c.l.s4 1983009808
      %v3090 = vunpack.c.0.s8 %v3089
      %v3091 = vlaneseq
      %v3092 = vshrl.u32 %v3091, 7
      %v3093 = vsub.s32 %v3090, %v3092
      %v3094 = vrot.slane %v2966, %v3093
      %v3095 = vcombine.high %v2967, %v2967
      %v3097 = vunpack.c.l.s4 1983009808
      %v3098 = vunpack.c.0.s8 %v3097
      %v3099 = vlaneseq
      %v3100 = vshrl.u32 %v3099, 7
      %v3101 = vsub.s32 %v3098, %v3100
      %v3102 = vrot.slane %v2967, %v3101
      %v3104 = vunpack.c.l.s4 1983009808
      %v3105 = vunpack.c.0.s8 %v3104
      %v3106 = vlaneseq
      %v3107 = vshrl.u32 %v3106, 7
      %v3108 = vsub.s32 %v3105, %v3107
      %v3109 = vrot.slane %v3095, %v3108
      %v3110 = vcombine.high %v3102, %v3102
      %v3111 = vcombine.high %v3109, %v3109
      %v3113 = vunpack.c.l.s4 1983009808
      %v3114 = vunpack.c.0.s8 %v3113
      %v3115 = vlaneseq
      %v3116 = vshrl.u32 %v3115, 7
      %v3117 = vsub.s32 %v3114, %v3116
      %v3118 = vrot.slane %v2968, %v3117
      %v3119 = vcombine.high %v2969, %v2969
      %v3121 = vunpack.c.l.s4 1983009808
      %v3122 = vunpack.c.0.s8 %v3121
      %v3123 = vlaneseq
      %v3124 = vshrl.u32 %v3123, 7
      %v3125 = vsub.s32 %v3122, %v3124
      %v3126 = vrot.slane %v2969, %v3125
      %v3128 = vunpack.c.l.s4 1983009808
      %v3129 = vunpack.c.0.s8 %v3128
      %v3130 = vlaneseq
      %v3131 = vshrl.u32 %v3130, 7
      %v3132 = vsub.s32 %v3129, %v3131
      %v3133 = vrot.slane %v3119, %v3132
      %v3134 = vcombine.high %v3126, %v3126
      %v3135 = vcombine.high %v3133, %v3133
      %v3137 = vunpack.c.l.s4 1983009808
      %v3138 = vunpack.c.0.s8 %v3137
      %v3139 = vlaneseq
      %v3140 = vshrl.u32 %v3139, 7
      %v3141 = vsub.s32 %v3138, %v3140
      %v3142 = vrot.slane %v2970, %v3141
      %v3143 = vcombine.high %v2971, %v2971
      %v3145 = vunpack.c.l.s4 1983009808
      %v3146 = vunpack.c.0.s8 %v3145
      %v3147 = vlaneseq
      %v3148 = vshrl.u32 %v3147, 7
      %v3149 = vsub.s32 %v3146, %v3148
      %v3150 = vrot.slane %v2971, %v3149
      %v3152 = vunpack.c.l.s4 1983009808
      %v3153 = vunpack.c.0.s8 %v3152
      %v3154 = vlaneseq
      %v3155 = vshrl.u32 %v3154, 7
      %v3156 = vsub.s32 %v3153, %v3155
      %v3157 = vrot.slane %v3143, %v3156
      %v3158 = vcombine.high %v3150, %v3150
      %v3159 = vcombine.high %v3157, %v3157
      %v3161 = vunpack.c.l.s4 1983009808
      %v3162 = vunpack.c.0.s8 %v3161
      %v3163 = vlaneseq
      %v3164 = vshrl.u32 %v3163, 7
      %v3165 = vsub.s32 %v3162, %v3164
      %v3166 = vrot.slane %v2972, %v3165
      %v3167 = vcombine.high %v2973, %v2973
      %v3169 = vunpack.c.l.s4 1983009808
      %v3170 = vunpack.c.0.s8 %v3169
      %v3171 = vlaneseq
      %v3172 = vshrl.u32 %v3171, 7
      %v3173 = vsub.s32 %v3170, %v3172
      %v3174 = vrot.slane %v2973, %v3173
      %v3176 = vunpack.c.l.s4 1983009808
      %v3177 = vunpack.c.0.s8 %v3176
      %v3178 = vlaneseq
      %v3179 = vshrl.u32 %v3178, 7
      %v3180 = vsub.s32 %v3177, %v3179
      %v3181 = vrot.slane %v3167, %v3180
      %v3182 = vcombine.high %v3174, %v3174
      %v3183 = vcombine.high %v3181, %v3181
      %v3185 = vunpack.c.l.s4 1983009808
      %v3186 = vunpack.c.0.s8 %v3185
      %v3187 = vlaneseq
      %v3188 = vshrl.u32 %v3187, 7
      %v3189 = vsub.s32 %v3186, %v3188
      %v3190 = vrot.slane %v2974, %v3189
      %v3191 = vcombine.high %v2975, %v2975
      %v3193 = vunpack.c.l.s4 1983009808
      %v3194 = vunpack.c.0.s8 %v3193
      %v3195 = vlaneseq
      %v3196 = vshrl.u32 %v3195, 7
      %v3197 = vsub.s32 %v3194, %v3196
      %v3198 = vrot.slane %v2975, %v3197
      %v3200 = vunpack.c.l.s4 1983009808
      %v3201 = vunpack.c.0.s8 %v3200
      %v3202 = vlaneseq
      %v3203 = vshrl.u32 %v3202, 7
      %v3204 = vsub.s32 %v3201, %v3203
      %v3205 = vrot.slane %v3191, %v3204
      %v3206 = vcombine.high %v3198, %v3198
      %v3207 = vcombine.high %v3205, %v3205
      %v3209 = vunpack.c.l.s4 1983009808
      %v3210 = vunpack.c.0.s8 %v3209
      %v3211 = vlaneseq
      %v3212 = vshrl.u32 %v3211, 7
      %v3213 = vsub.s32 %v3210, %v3212
      %v3214 = vrot.slane %v2976, %v3213
      %v3215 = vcombine.high %v2977, %v2977
      %v3217 = vunpack.c.l.s4 1983009808
      %v3218 = vunpack.c.0.s8 %v3217
      %v3219 = vlaneseq
      %v3220 = vshrl.u32 %v3219, 7
      %v3221 = vsub.s32 %v3218, %v3220
      %v3222 = vrot.slane %v2977, %v3221
      %v3224 = vunpack.c.l.s4 1983009808
      %v3225 = vunpack.c.0.s8 %v3224
      %v3226 = vlaneseq
      %v3227 = vshrl.u32 %v3226, 7
      %v3228 = vsub.s32 %v3225, %v3227
      %v3229 = vrot.slane %v3215, %v3228
      %v3230 = vcombine.high %v3222, %v3222
      %v3231 = vcombine.high %v3229, %v3229
      %v3233 = vunpack.c.l.s4 1983009808
      %v3234 = vunpack.c.0.s8 %v3233
      %v3235 = vlaneseq
      %v3236 = vshrl.u32 %v3235, 7
      %v3237 = vsub.s32 %v3234, %v3236
      %v3238 = vrot.slane %v2978, %v3237
      %v3239 = vcombine.low %v3006, %v3014
      %v3240 = vcombine.low %v3013, %v3015
      %v3242 = vunpack.c.l.s4 1983009808
      %v3243 = vunpack.c.0.s8 %v3242
      %v3244 = vlaneseq
      %v3245 = vshrl.u32 %v3244, 7
      %v3246 = vsub.s32 %v3243, %v3245
      %v3247 = vrot.slane %v3239, %v3246
      %v3249 = vunpack.c.l.s4 1983009808
      %v3250 = vunpack.c.0.s8 %v3249
      %v3251 = vlaneseq
      %v3252 = vshrl.u32 %v3251, 7
      %v3253 = vsub.s32 %v3250, %v3252
      %v3254 = vrot.slane %v3240, %v3253
      %v3255 = vcombine.low %v3247, %v3254
      %v3256 = vcombine.low %v3022, %v3030
      %v3257 = vcombine.low %v3038, %v3037
      %v3259 = vunpack.c.l.s4 1983009808
      %v3260 = vunpack.c.0.s8 %v3259
      %v3261 = vlaneseq
      %v3262 = vshrl.u32 %v3261, 7
      %v3263 = vsub.s32 %v3260, %v3262
      %v3264 = vrot.slane %v3256, %v3263
      %v3266 = vunpack.c.l.s4 1983009808
      %v3267 = vunpack.c.0.s8 %v3266
      %v3268 = vlaneseq
      %v3269 = vshrl.u32 %v3268, 7
      %v3270 = vsub.s32 %v3267, %v3269
      %v3271 = vrot.slane %v3257, %v3270
      %v3272 = vcombine.low %v3264, %v3271
      %v3273 = vcombine.low %v3039, %v3046
      %v3274 = vcombine.low %v3054, %v3062
      %v3276 = vunpack.c.l.s4 1983009808
      %v3277 = vunpack.c.0.s8 %v3276
      %v3278 = vlaneseq
      %v3279 = vshrl.u32 %v3278, 7
      %v3280 = vsub.s32 %v3277, %v3279
      %v3281 = vrot.slane %v3273, %v3280
      %v3283 = vunpack.c.l.s4 1983009808
      %v3284 = vunpack.c.0.s8 %v3283
      %v3285 = vlaneseq
      %v3286 = vshrl.u32 %v3285, 7
      %v3287 = vsub.s32 %v3284, %v3286
      %v3288 = vrot.slane %v3274, %v3287
      %v3289 = vcombine.low %v3281, %v3288
      %v3290 = vcombine.low %v3061, %v3063
      %v3291 = vcombine.low %v3070, %v3078
      %v3293 = vunpack.c.l.s4 1983009808
      %v3294 = vunpack.c.0.s8 %v3293
      %v3295 = vlaneseq
      %v3296 = vshrl.u32 %v3295, 7
      %v3297 = vsub.s32 %v3294, %v3296
      %v3298 = vrot.slane %v3290, %v3297
      %v3300 = vunpack.c.l.s4 1983009808
      %v3301 = vunpack.c.0.s8 %v3300
      %v3302 = vlaneseq
      %v3303 = vshrl.u32 %v3302, 7
      %v3304 = vsub.s32 %v3301, %v3303
      %v3305 = vrot.slane %v3291, %v3304
      %v3306 = vcombine.low %v3298, %v3305
      %v3307 = vcombine.low %v3086, %v3085
      %v3308 = vcombine.low %v3087, %v3094
      %v3310 = vunpack.c.l.s4 1983009808
      %v3311 = vunpack.c.0.s8 %v3310
      %v3312 = vlaneseq
      %v3313 = vshrl.u32 %v3312, 7
      %v3314 = vsub.s32 %v3311, %v3313
      %v3315 = vrot.slane %v3307, %v3314
      %v3317 = vunpack.c.l.s4 1983009808
      %v3318 = vunpack.c.0.s8 %v3317
      %v3319 = vlaneseq
      %v3320 = vshrl.u32 %v3319, 7
      %v3321 = vsub.s32 %v3318, %v3320
      %v3322 = vrot.slane %v3308, %v3321
      %v3323 = vcombine.low %v3315, %v3322
      %v3324 = vcombine.low %v3102, %v3110
      %v3325 = vcombine.low %v3109, %v3111
      %v3327 = vunpack.c.l.s4 1983009808
      %v3328 = vunpack.c.0.s8 %v3327
      %v3329 = vlaneseq
      %v3330 = vshrl.u32 %v3329, 7
      %v3331 = vsub.s32 %v3328, %v3330
      %v3332 = vrot.slane %v3324, %v3331
      %v3334 = vunpack.c.l.s4 1983009808
      %v3335 = vunpack.c.0.s8 %v3334
      %v3336 = vlaneseq
      %v3337 = vshrl.u32 %v3336, 7
      %v3338 = vsub.s32 %v3335, %v3337
      %v3339 = vrot.slane %v3325, %v3338
      %v3340 = vcombine.low %v3332, %v3339
      %v3341 = vcombine.low %v3118, %v3126
      %v3342 = vcombine.low %v3134, %v3133
      %v3344 = vunpack.c.l.s4 1983009808
      %v3345 = vunpack.c.0.s8 %v3344
      %v3346 = vlaneseq
      %v3347 = vshrl.u32 %v3346, 7
      %v3348 = vsub.s32 %v3345, %v3347
      %v3349 = vrot.slane %v3341, %v3348
      %v3351 = vunpack.c.l.s4 1983009808
      %v3352 = vunpack.c.0.s8 %v3351
      %v3353 = vlaneseq
      %v3354 = vshrl.u32 %v3353, 7
      %v3355 = vsub.s32 %v3352, %v3354
      %v3356 = vrot.slane %v3342, %v3355
      %v3357 = vcombine.low %v3349, %v3356
      %v3358 = vcombine.low %v3135, %v3142
      %v3359 = vcombine.low %v3150, %v3158
      %v3361 = vunpack.c.l.s4 1983009808
      %v3362 = vunpack.c.0.s8 %v3361
      %v3363 = vlaneseq
      %v3364 = vshrl.u32 %v3363, 7
      %v3365 = vsub.s32 %v3362, %v3364
      %v3366 = vrot.slane %v3358, %v3365
      %v3368 = vunpack.c.l.s4 1983009808
      %v3369 = vunpack.c.0.s8 %v3368
      %v3370 = vlaneseq
      %v3371 = vshrl.u32 %v3370, 7
      %v3372 = vsub.s32 %v3369, %v3371
      %v3373 = vrot.slane %v3359, %v3372
      %v3374 = vcombine.low %v3366, %v3373
      %v3375 = vcombine.low %v3157, %v3159
      %v3376 = vcombine.low %v3166, %v3174
      %v3378 = vunpack.c.l.s4 1983009808
      %v3379 = vunpack.c.0.s8 %v3378
      %v3380 = vlaneseq
      %v3381 = vshrl.u32 %v3380, 7
      %v3382 = vsub.s32 %v3379, %v3381
      %v3383 = vrot.slane %v3375, %v3382
      %v3385 = vunpack.c.l.s4 1983009808
      %v3386 = vunpack.c.0.s8 %v3385
      %v3387 = vlaneseq
      %v3388 = vshrl.u32 %v3387, 7
      %v3389 = vsub.s32 %v3386, %v3388
      %v3390 = vrot.slane %v3376, %v3389
      %v3391 = vcombine.low %v3383, %v3390
      %v3392 = vcombine.low %v3182, %v3181
      %v3393 = vcombine.low %v3183, %v3190
      %v3395 = vunpack.c.l.s4 1983009808
      %v3396 = vunpack.c.0.s8 %v3395
      %v3397 = vlaneseq
      %v3398 = vshrl.u32 %v3397, 7
      %v3399 = vsub.s32 %v3396, %v3398
      %v3400 = vrot.slane %v3392, %v3399
      %v3402 = vunpack.c.l.s4 1983009808
      %v3403 = vunpack.c.0.s8 %v3402
      %v3404 = vlaneseq
      %v3405 = vshrl.u32 %v3404, 7
      %v3406 = vsub.s32 %v3403, %v3405
      %v3407 = vrot.slane %v3393, %v3406
      %v3408 = vcombine.low %v3400, %v3407
      %v3409 = vcombine.low %v3198, %v3206
      %v3410 = vcombine.low %v3205, %v3207
      %v3412 = vunpack.c.l.s4 1983009808
      %v3413 = vunpack.c.0.s8 %v3412
      %v3414 = vlaneseq
      %v3415 = vshrl.u32 %v3414, 7
      %v3416 = vsub.s32 %v3413, %v3415
      %v3417 = vrot.slane %v3409, %v3416
      %v3419 = vunpack.c.l.s4 1983009808
      %v3420 = vunpack.c.0.s8 %v3419
      %v3421 = vlaneseq
      %v3422 = vshrl.u32 %v3421, 7
      %v3423 = vsub.s32 %v3420, %v3422
      %v3424 = vrot.slane %v3410, %v3423
      %v3425 = vcombine.low %v3417, %v3424
      %v3426 = vcombine.low %v3214, %v3222
      %v3427 = vcombine.low %v3230, %v3229
      %v3429 = vunpack.c.l.s4 1983009808
      %v3430 = vunpack.c.0.s8 %v3429
      %v3431 = vlaneseq
      %v3432 = vshrl.u32 %v3431, 7
      %v3433 = vsub.s32 %v3430, %v3432
      %v3434 = vrot.slane %v3426, %v3433
      %v3436 = vunpack.c.l.s4 1983009808
      %v3437 = vunpack.c.0.s8 %v3436
      %v3438 = vlaneseq
      %v3439 = vshrl.u32 %v3438, 7
      %v3440 = vsub.s32 %v3437, %v3439
      %v3441 = vrot.slane %v3427, %v3440
      %v3442 = vcombine.low %v3434, %v3441
      %v3443 = vcombine.low %v3231, %v3238
      %v3445 = vunpack.c.l.s4 1983009808
      %v3446 = vunpack.c.0.s8 %v3445
      %v3447 = vlaneseq
      %v3448 = vshrl.u32 %v3447, 7
      %v3449 = vsub.s32 %v3446, %v3448
      %v3450 = vrot.slane %v3443, %v3449
      %v3464 = vpack.c.bf16 %v3272, %v3255
      %v3465 = vpack.c.bf16 %v3306, %v3289
      %v3466 = vpack.c.bf16 %v3340, %v3323
      %v3467 = vpack.c.bf16 %v3374, %v3357
      %v3468 = vpack.c.bf16 %v3408, %v3391
      %v3469 = vpack.c.bf16 %v3442, %v3425
      %v3470 = vpack.c.bf16 %v3450, %v3450
      %s3471 = scalar_lea.vmem %s1, 8
      %v3472 = vld [vmem:[%s3471] sm:$0x3]
      %v3474 = vsel %vm287, %v3464, 0
      %v3477 = vsel %vm287, %v3465, 0
      %v3480 = vsel %vm287, %v3466, 0
      %v3483 = vsel %vm287, %v3467, 0
      %v3486 = vsel %vm287, %v3468, 0
      %v3489 = vsel %vm287, %v3469, 0
      %v3492 = vsel %vm287, %v3470, 0
      %v3495 = vsel %vm856, %v3472, 0
      %3497 = vmatprep.subr.bf16.mxu0 0
      %3498 = vmatpush1.bf16.msra.mxu0 %v3495
      %3499 = vmatprep.subr.bf16.mxu0 0
      %3500 = vmatpush1.bf16.msra.mxu0 0
      %3501 = vmatprep.subr.bf16.mxu0 0
      %3502 = vmatpush1.bf16.msra.mxu0 0
      %3503 = vmatprep.subr.bf16.mxu0 0
      %3504 = vmatpush1.bf16.msra.mxu0 0
      %3505 = vmatprep.subr.bf16.mxu0 0
      %3506 = vmatpush1.bf16.msra.mxu0 0
      %3507 = vmatprep.subr.bf16.mxu0 0
      %3508 = vmatpush1.bf16.msra.mxu0 0
      %3509 = vmatprep.subr.bf16.mxu0 0
      %3510 = vmatpush1.bf16.msra.mxu0 0
      %3511 = vmatprep.subr.bf16.mxu0 0
      %3512 = vmatpush1.bf16.msra.mxu0 0
      %3513 = vmatprep.subr.bf16.mxu0 0
      %3514 = vmatpush1.bf16.msra.mxu0 0
      %3515 = vmatprep.subr.bf16.mxu0 0
      %3516 = vmatpush1.bf16.msra.mxu0 0
      %3517 = vmatprep.subr.bf16.mxu0 0
      %3518 = vmatpush1.bf16.msra.mxu0 0
      %3519 = vmatprep.subr.bf16.mxu0 0
      %3520 = vmatpush1.bf16.msra.mxu0 0
      %3521 = vmatprep.subr.bf16.mxu0 0
      %3522 = vmatpush1.bf16.msra.mxu0 0
      %3523 = vmatprep.subr.bf16.mxu0 0
      %3524 = vmatpush1.bf16.msra.mxu0 0
      %3525 = vmatprep.subr.bf16.mxu0 0
      %3526 = vmatpush1.bf16.msra.mxu0 0
      %3527 = vmatprep.subr.bf16.mxu0 0
      %3528 = vmatpush1.bf16.msra.mxu0 0
      %3529 = vmatprep.mubr.bf16.mxu0 0
      %3530 = vmatmul.mubr.bf16.gmra.mrb[0].mxu0 %v3474
      %v3531 = vpop.f32.mrb[0].mxu0
      %v3532 = vadd.f32 0.0, %v3531
      %v3533 = vpop.f32.mrb[0].mxu0
      %v3534 = vpop.f32.mrb[0].mxu0
      %v3535 = vadd.f32 0.0, %v3534
      %v3536 = vpop.f32.mrb[0].mxu0
      %3537 = vmatprep.mubr.bf16.mxu0 0
      %3538 = vmatmul.mubr.bf16.gmra.mrb[0].mxu0 %v3477
      %v3539 = vpop.f32.mrb[0].mxu0
      %v3540 = vadd.f32 0.0, %v3539
      %v3541 = vpop.f32.mrb[0].mxu0
      %v3542 = vpop.f32.mrb[0].mxu0
      %v3543 = vadd.f32 0.0, %v3542
      %v3544 = vpop.f32.mrb[0].mxu0
      %3545 = vmatprep.mubr.bf16.mxu0 0
      %3546 = vmatmul.mubr.bf16.gmra.mrb[0].mxu0 %v3480
      %v3547 = vpop.f32.mrb[0].mxu0
      %v3548 = vadd.f32 0.0, %v3547
      %v3549 = vpop.f32.mrb[0].mxu0
      %v3550 = vpop.f32.mrb[0].mxu0
      %v3551 = vadd.f32 0.0, %v3550
      %v3552 = vpop.f32.mrb[0].mxu0
      %3553 = vmatprep.mubr.bf16.mxu0 0
      %3554 = vmatmul.mubr.bf16.gmra.mrb[0].mxu0 %v3483
      %v3555 = vpop.f32.mrb[0].mxu0
      %v3556 = vadd.f32 0.0, %v3555
      %v3557 = vpop.f32.mrb[0].mxu0
      %v3558 = vpop.f32.mrb[0].mxu0
      %v3559 = vadd.f32 0.0, %v3558
      %v3560 = vpop.f32.mrb[0].mxu0
      %3561 = vmatprep.mubr.bf16.mxu0 0
      %3562 = vmatmul.mubr.bf16.gmra.mrb[0].mxu0 %v3486
      %v3563 = vpop.f32.mrb[0].mxu0
      %v3564 = vadd.f32 0.0, %v3563
      %v3565 = vpop.f32.mrb[0].mxu0
      %v3566 = vpop.f32.mrb[0].mxu0
      %v3567 = vadd.f32 0.0, %v3566
      %v3568 = vpop.f32.mrb[0].mxu0
      %3569 = vmatprep.mubr.bf16.mxu0 0
      %3570 = vmatmul.mubr.bf16.gmra.mrb[0].mxu0 %v3489
      %v3571 = vpop.f32.mrb[0].mxu0
      %v3572 = vadd.f32 0.0, %v3571
      %v3573 = vpop.f32.mrb[0].mxu0
      %v3574 = vpop.f32.mrb[0].mxu0
      %v3575 = vadd.f32 0.0, %v3574
      %v3576 = vpop.f32.mrb[0].mxu0
      %3577 = vmatprep.mubr.bf16.mxu0 0
      %3578 = vmatmul.mubr.bf16.gmra.mrb[0].mxu0 %v3492
      %v3579 = vpop.f32.mrb[0].mxu0
      %v3580 = vadd.f32 0.0, %v3579
      %v3581 = vpop.f32.mrb[0].mxu0
      %v3582 = vpop.f32.mrb[0].mxu0
      %v3583 = vpop.f32.mrb[0].mxu0
      %3584 = vdwg.mxu0
      %v3585 = vld [vmem:[%s177] sm:$0xff]
      %v3586 = vld [vmem:[%s177 + $0x8] sm:$0xff]
      %v3587 = vld [vmem:[%s177 + $0x10] sm:$0xff]
      %v3588 = vld [vmem:[%s177 + $0x18] sm:$0xff]
      %v3589 = vld [vmem:[%s177 + $0x20] sm:$0xff]
      %v3590 = vld [vmem:[%s177 + $0x28] sm:$0xff]
      %v3591 = vld [vmem:[%s177 + $0x30] sm:$0xff]
      %v3592 = vld [vmem:[%s177 + $0x38] sm:$0xff]
      %v3593 = vld [vmem:[%s177 + $0x40] sm:$0xff]
      %v3594 = vld [vmem:[%s177 + $0x48] sm:$0xff]
      %v3595 = vld [vmem:[%s177 + $0x50] sm:$0xff]
      %v3596 = vld [vmem:[%s177 + $0x58] sm:$0xff]
      %v3597 = vld [vmem:[%s177 + $0x60] sm:$0xf]
      %v3598 = vadd.f32 %v3585, %v3532
      %v3599 = vadd.f32 %v3586, %v3535
      %v3600 = vadd.f32 %v3587, %v3540
      %v3601 = vadd.f32 %v3588, %v3543
      %v3602 = vadd.f32 %v3589, %v3548
      %v3603 = vadd.f32 %v3590, %v3551
      %v3604 = vadd.f32 %v3591, %v3556
      %v3605 = vadd.f32 %v3592, %v3559
      %v3606 = vadd.f32 %v3593, %v3564
      %v3607 = vadd.f32 %v3594, %v3567
      %v3608 = vadd.f32 %v3595, %v3572
      %v3609 = vadd.f32 %v3596, %v3575
      %v3610 = vadd.f32 %v3597, %v3580
      %3611 = vst.msk [vmem:[%s177] sm:$0xff] %vm948, %v3598
      %3612 = vst.msk [vmem:[%s177 + $0x8] sm:$0xff] %vm948, %v3599
      %3613 = vst.msk [vmem:[%s177 + $0x10] sm:$0xff] %vm948, %v3600
      %3614 = vst.msk [vmem:[%s177 + $0x18] sm:$0xff] %vm948, %v3601
      %3615 = vst.msk [vmem:[%s177 + $0x20] sm:$0xff] %vm948, %v3602
      %3616 = vst.msk [vmem:[%s177 + $0x28] sm:$0xff] %vm948, %v3603
      %3617 = vst.msk [vmem:[%s177 + $0x30] sm:$0xff] %vm948, %v3604
      %3618 = vst.msk [vmem:[%s177 + $0x38] sm:$0xff] %vm948, %v3605
      %3619 = vst.msk [vmem:[%s177 + $0x40] sm:$0xff] %vm948, %v3606
      %3620 = vst.msk [vmem:[%s177 + $0x48] sm:$0xff] %vm948, %v3607
      %3621 = vst.msk [vmem:[%s177 + $0x50] sm:$0xff] %vm948, %v3608
      %3622 = vst.msk [vmem:[%s177 + $0x58] sm:$0xff] %vm948, %v3609
      %3623 = vst.msk [vmem:[%s177 + $0x60] sm:$0xf] %vm961, %v3610
      %v3624 = vld [vmem:[%s2293 + $0x2] sm:$0xff]
      %v3625 = vld [vmem:[%s2293 + $0xa] sm:$0x3]
      %v3626 = vld [vmem:[%s2293 + $0x12] sm:$0xff]
      %v3627 = vld [vmem:[%s2293 + $0x1a] sm:$0x3]
      %v3628 = vld [vmem:[%s2293 + $0x22] sm:$0xff]
      %v3629 = vld [vmem:[%s2293 + $0x2a] sm:$0x3]
      %v3630 = vld [vmem:[%s2293 + $0x32] sm:$0xff]
      %v3631 = vld [vmem:[%s2293 + $0x3a] sm:$0x3]
      %v3632 = vld [vmem:[%s2293 + $0x42] sm:$0xff]
      %v3633 = vld [vmem:[%s2293 + $0x4a] sm:$0x3]
      %v3634 = vld [vmem:[%s2293 + $0x52] sm:$0xff]
      %v3635 = vld [vmem:[%s2293 + $0x5a] sm:$0x3]
      %v3636 = vld [vmem:[%s2293 + $0x62] sm:$0xff]
      %v3637 = vld [vmem:[%s2293 + $0x6a] sm:$0x3]
      %v3638 = vld [vmem:[%s2293 + $0x72] sm:$0xff]
      %v3639 = vld [vmem:[%s2293 + $0x7a] sm:$0x3]
      %v3640 = vld [vmem:[%s2293 + $0x82] sm:$0xff]
      %v3641 = vld [vmem:[%s2293 + $0x8a] sm:$0x3]
      %v3642 = vld [vmem:[%s2293 + $0x92] sm:$0xff]
      %v3643 = vld [vmem:[%s2293 + $0x9a] sm:$0x3]
      %v3664 = vcombine.high %v3624, %v3624
      %v3666 = vunpack.c.l.s4 1983009808
      %v3667 = vunpack.c.0.s8 %v3666
      %v3668 = vlaneseq
      %v3669 = vshrl.u32 %v3668, 7
      %v3670 = vsub.s32 %v3667, %v3669
      %v3671 = vrot.slane %v3624, %v3670
      %v3673 = vunpack.c.l.s4 1983009808
      %v3674 = vunpack.c.0.s8 %v3673
      %v3675 = vlaneseq
      %v3676 = vshrl.u32 %v3675, 7
      %v3677 = vsub.s32 %v3674, %v3676
      %v3678 = vrot.slane %v3664, %v3677
      %v3679 = vcombine.high %v3671, %v3671
      %v3680 = vcombine.high %v3678, %v3678
      %v3682 = vunpack.c.l.s4 1983009808
      %v3683 = vunpack.c.0.s8 %v3682
      %v3684 = vlaneseq
      %v3685 = vshrl.u32 %v3684, 7
      %v3686 = vsub.s32 %v3683, %v3685
      %v3687 = vrot.slane %v3625, %v3686
      %v3688 = vcombine.high %v3626, %v3626
      %v3690 = vunpack.c.l.s4 1983009808
      %v3691 = vunpack.c.0.s8 %v3690
      %v3692 = vlaneseq
      %v3693 = vshrl.u32 %v3692, 7
      %v3694 = vsub.s32 %v3691, %v3693
      %v3695 = vrot.slane %v3626, %v3694
      %v3697 = vunpack.c.l.s4 1983009808
      %v3698 = vunpack.c.0.s8 %v3697
      %v3699 = vlaneseq
      %v3700 = vshrl.u32 %v3699, 7
      %v3701 = vsub.s32 %v3698, %v3700
      %v3702 = vrot.slane %v3688, %v3701
      %v3703 = vcombine.high %v3695, %v3695
      %v3704 = vcombine.high %v3702, %v3702
      %v3706 = vunpack.c.l.s4 1983009808
      %v3707 = vunpack.c.0.s8 %v3706
      %v3708 = vlaneseq
      %v3709 = vshrl.u32 %v3708, 7
      %v3710 = vsub.s32 %v3707, %v3709
      %v3711 = vrot.slane %v3627, %v3710
      %v3712 = vcombine.high %v3628, %v3628
      %v3714 = vunpack.c.l.s4 1983009808
      %v3715 = vunpack.c.0.s8 %v3714
      %v3716 = vlaneseq
      %v3717 = vshrl.u32 %v3716, 7
      %v3718 = vsub.s32 %v3715, %v3717
      %v3719 = vrot.slane %v3628, %v3718
      %v3721 = vunpack.c.l.s4 1983009808
      %v3722 = vunpack.c.0.s8 %v3721
      %v3723 = vlaneseq
      %v3724 = vshrl.u32 %v3723, 7
      %v3725 = vsub.s32 %v3722, %v3724
      %v3726 = vrot.slane %v3712, %v3725
      %v3727 = vcombine.high %v3719, %v3719
      %v3728 = vcombine.high %v3726, %v3726
      %v3730 = vunpack.c.l.s4 1983009808
      %v3731 = vunpack.c.0.s8 %v3730
      %v3732 = vlaneseq
      %v3733 = vshrl.u32 %v3732, 7
      %v3734 = vsub.s32 %v3731, %v3733
      %v3735 = vrot.slane %v3629, %v3734
      %v3736 = vcombine.high %v3630, %v3630
      %v3738 = vunpack.c.l.s4 1983009808
      %v3739 = vunpack.c.0.s8 %v3738
      %v3740 = vlaneseq
      %v3741 = vshrl.u32 %v3740, 7
      %v3742 = vsub.s32 %v3739, %v3741
      %v3743 = vrot.slane %v3630, %v3742
      %v3745 = vunpack.c.l.s4 1983009808
      %v3746 = vunpack.c.0.s8 %v3745
      %v3747 = vlaneseq
      %v3748 = vshrl.u32 %v3747, 7
      %v3749 = vsub.s32 %v3746, %v3748
      %v3750 = vrot.slane %v3736, %v3749
      %v3751 = vcombine.high %v3743, %v3743
      %v3752 = vcombine.high %v3750, %v3750
      %v3754 = vunpack.c.l.s4 1983009808
      %v3755 = vunpack.c.0.s8 %v3754
      %v3756 = vlaneseq
      %v3757 = vshrl.u32 %v3756, 7
      %v3758 = vsub.s32 %v3755, %v3757
      %v3759 = vrot.slane %v3631, %v3758
      %v3760 = vcombine.high %v3632, %v3632
      %v3762 = vunpack.c.l.s4 1983009808
      %v3763 = vunpack.c.0.s8 %v3762
      %v3764 = vlaneseq
      %v3765 = vshrl.u32 %v3764, 7
      %v3766 = vsub.s32 %v3763, %v3765
      %v3767 = vrot.slane %v3632, %v3766
      %v3769 = vunpack.c.l.s4 1983009808
      %v3770 = vunpack.c.0.s8 %v3769
      %v3771 = vlaneseq
      %v3772 = vshrl.u32 %v3771, 7
      %v3773 = vsub.s32 %v3770, %v3772
      %v3774 = vrot.slane %v3760, %v3773
      %v3775 = vcombine.high %v3767, %v3767
      %v3776 = vcombine.high %v3774, %v3774
      %v3778 = vunpack.c.l.s4 1983009808
      %v3779 = vunpack.c.0.s8 %v3778
      %v3780 = vlaneseq
      %v3781 = vshrl.u32 %v3780, 7
      %v3782 = vsub.s32 %v3779, %v3781
      %v3783 = vrot.slane %v3633, %v3782
      %v3784 = vcombine.high %v3634, %v3634
      %v3786 = vunpack.c.l.s4 1983009808
      %v3787 = vunpack.c.0.s8 %v3786
      %v3788 = vlaneseq
      %v3789 = vshrl.u32 %v3788, 7
      %v3790 = vsub.s32 %v3787, %v3789
      %v3791 = vrot.slane %v3634, %v3790
      %v3793 = vunpack.c.l.s4 1983009808
      %v3794 = vunpack.c.0.s8 %v3793
      %v3795 = vlaneseq
      %v3796 = vshrl.u32 %v3795, 7
      %v3797 = vsub.s32 %v3794, %v3796
      %v3798 = vrot.slane %v3784, %v3797
      %v3799 = vcombine.high %v3791, %v3791
      %v3800 = vcombine.high %v3798, %v3798
      %v3802 = vunpack.c.l.s4 1983009808
      %v3803 = vunpack.c.0.s8 %v3802
      %v3804 = vlaneseq
      %v3805 = vshrl.u32 %v3804, 7
      %v3806 = vsub.s32 %v3803, %v3805
      %v3807 = vrot.slane %v3635, %v3806
      %v3808 = vcombine.high %v3636, %v3636
      %v3810 = vunpack.c.l.s4 1983009808
      %v3811 = vunpack.c.0.s8 %v3810
      %v3812 = vlaneseq
      %v3813 = vshrl.u32 %v3812, 7
      %v3814 = vsub.s32 %v3811, %v3813
      %v3815 = vrot.slane %v3636, %v3814
      %v3817 = vunpack.c.l.s4 1983009808
      %v3818 = vunpack.c.0.s8 %v3817
      %v3819 = vlaneseq
      %v3820 = vshrl.u32 %v3819, 7
      %v3821 = vsub.s32 %v3818, %v3820
      %v3822 = vrot.slane %v3808, %v3821
      %v3823 = vcombine.high %v3815, %v3815
      %v3824 = vcombine.high %v3822, %v3822
      %v3826 = vunpack.c.l.s4 1983009808
      %v3827 = vunpack.c.0.s8 %v3826
      %v3828 = vlaneseq
      %v3829 = vshrl.u32 %v3828, 7
      %v3830 = vsub.s32 %v3827, %v3829
      %v3831 = vrot.slane %v3637, %v3830
      %v3832 = vcombine.high %v3638, %v3638
      %v3834 = vunpack.c.l.s4 1983009808
      %v3835 = vunpack.c.0.s8 %v3834
      %v3836 = vlaneseq
      %v3837 = vshrl.u32 %v3836, 7
      %v3838 = vsub.s32 %v3835, %v3837
      %v3839 = vrot.slane %v3638, %v3838
      %v3841 = vunpack.c.l.s4 1983009808
      %v3842 = vunpack.c.0.s8 %v3841
      %v3843 = vlaneseq
      %v3844 = vshrl.u32 %v3843, 7
      %v3845 = vsub.s32 %v3842, %v3844
      %v3846 = vrot.slane %v3832, %v3845
      %v3847 = vcombine.high %v3839, %v3839
      %v3848 = vcombine.high %v3846, %v3846
      %v3850 = vunpack.c.l.s4 1983009808
      %v3851 = vunpack.c.0.s8 %v3850
      %v3852 = vlaneseq
      %v3853 = vshrl.u32 %v3852, 7
      %v3854 = vsub.s32 %v3851, %v3853
      %v3855 = vrot.slane %v3639, %v3854
      %v3856 = vcombine.high %v3640, %v3640
      %v3858 = vunpack.c.l.s4 1983009808
      %v3859 = vunpack.c.0.s8 %v3858
      %v3860 = vlaneseq
      %v3861 = vshrl.u32 %v3860, 7
      %v3862 = vsub.s32 %v3859, %v3861
      %v3863 = vrot.slane %v3640, %v3862
      %v3865 = vunpack.c.l.s4 1983009808
      %v3866 = vunpack.c.0.s8 %v3865
      %v3867 = vlaneseq
      %v3868 = vshrl.u32 %v3867, 7
      %v3869 = vsub.s32 %v3866, %v3868
      %v3870 = vrot.slane %v3856, %v3869
      %v3871 = vcombine.high %v3863, %v3863
      %v3872 = vcombine.high %v3870, %v3870
      %v3874 = vunpack.c.l.s4 1983009808
      %v3875 = vunpack.c.0.s8 %v3874
      %v3876 = vlaneseq
      %v3877 = vshrl.u32 %v3876, 7
      %v3878 = vsub.s32 %v3875, %v3877
      %v3879 = vrot.slane %v3641, %v3878
      %v3880 = vcombine.high %v3642, %v3642
      %v3882 = vunpack.c.l.s4 1983009808
      %v3883 = vunpack.c.0.s8 %v3882
      %v3884 = vlaneseq
      %v3885 = vshrl.u32 %v3884, 7
      %v3886 = vsub.s32 %v3883, %v3885
      %v3887 = vrot.slane %v3642, %v3886
      %v3889 = vunpack.c.l.s4 1983009808
      %v3890 = vunpack.c.0.s8 %v3889
      %v3891 = vlaneseq
      %v3892 = vshrl.u32 %v3891, 7
      %v3893 = vsub.s32 %v3890, %v3892
      %v3894 = vrot.slane %v3880, %v3893
      %v3895 = vcombine.high %v3887, %v3887
      %v3896 = vcombine.high %v3894, %v3894
      %v3898 = vunpack.c.l.s4 1983009808
      %v3899 = vunpack.c.0.s8 %v3898
      %v3900 = vlaneseq
      %v3901 = vshrl.u32 %v3900, 7
      %v3902 = vsub.s32 %v3899, %v3901
      %v3903 = vrot.slane %v3643, %v3902
      %v3904 = vcombine.low %v3671, %v3679
      %v3905 = vcombine.low %v3678, %v3680
      %v3907 = vunpack.c.l.s4 1983009808
      %v3908 = vunpack.c.0.s8 %v3907
      %v3909 = vlaneseq
      %v3910 = vshrl.u32 %v3909, 7
      %v3911 = vsub.s32 %v3908, %v3910
      %v3912 = vrot.slane %v3904, %v3911
      %v3914 = vunpack.c.l.s4 1983009808
      %v3915 = vunpack.c.0.s8 %v3914
      %v3916 = vlaneseq
      %v3917 = vshrl.u32 %v3916, 7
      %v3918 = vsub.s32 %v3915, %v3917
      %v3919 = vrot.slane %v3905, %v3918
      %v3920 = vcombine.low %v3912, %v3919
      %v3921 = vcombine.low %v3687, %v3695
      %v3922 = vcombine.low %v3703, %v3702
      %v3924 = vunpack.c.l.s4 1983009808
      %v3925 = vunpack.c.0.s8 %v3924
      %v3926 = vlaneseq
      %v3927 = vshrl.u32 %v3926, 7
      %v3928 = vsub.s32 %v3925, %v3927
      %v3929 = vrot.slane %v3921, %v3928
      %v3931 = vunpack.c.l.s4 1983009808
      %v3932 = vunpack.c.0.s8 %v3931
      %v3933 = vlaneseq
      %v3934 = vshrl.u32 %v3933, 7
      %v3935 = vsub.s32 %v3932, %v3934
      %v3936 = vrot.slane %v3922, %v3935
      %v3937 = vcombine.low %v3929, %v3936
      %v3938 = vcombine.low %v3704, %v3711
      %v3939 = vcombine.low %v3719, %v3727
      %v3941 = vunpack.c.l.s4 1983009808
      %v3942 = vunpack.c.0.s8 %v3941
      %v3943 = vlaneseq
      %v3944 = vshrl.u32 %v3943, 7
      %v3945 = vsub.s32 %v3942, %v3944
      %v3946 = vrot.slane %v3938, %v3945
      %v3948 = vunpack.c.l.s4 1983009808
      %v3949 = vunpack.c.0.s8 %v3948
      %v3950 = vlaneseq
      %v3951 = vshrl.u32 %v3950, 7
      %v3952 = vsub.s32 %v3949, %v3951
      %v3953 = vrot.slane %v3939, %v3952
      %v3954 = vcombine.low %v3946, %v3953
      %v3955 = vcombine.low %v3726, %v3728
      %v3956 = vcombine.low %v3735, %v3743
      %v3958 = vunpack.c.l.s4 1983009808
      %v3959 = vunpack.c.0.s8 %v3958
      %v3960 = vlaneseq
      %v3961 = vshrl.u32 %v3960, 7
      %v3962 = vsub.s32 %v3959, %v3961
      %v3963 = vrot.slane %v3955, %v3962
      %v3965 = vunpack.c.l.s4 1983009808
      %v3966 = vunpack.c.0.s8 %v3965
      %v3967 = vlaneseq
      %v3968 = vshrl.u32 %v3967, 7
      %v3969 = vsub.s32 %v3966, %v3968
      %v3970 = vrot.slane %v3956, %v3969
      %v3971 = vcombine.low %v3963, %v3970
      %v3972 = vcombine.low %v3751, %v3750
      %v3973 = vcombine.low %v3752, %v3759
      %v3975 = vunpack.c.l.s4 1983009808
      %v3976 = vunpack.c.0.s8 %v3975
      %v3977 = vlaneseq
      %v3978 = vshrl.u32 %v3977, 7
      %v3979 = vsub.s32 %v3976, %v3978
      %v3980 = vrot.slane %v3972, %v3979
      %v3982 = vunpack.c.l.s4 1983009808
      %v3983 = vunpack.c.0.s8 %v3982
      %v3984 = vlaneseq
      %v3985 = vshrl.u32 %v3984, 7
      %v3986 = vsub.s32 %v3983, %v3985
      %v3987 = vrot.slane %v3973, %v3986
      %v3988 = vcombine.low %v3980, %v3987
      %v3989 = vcombine.low %v3767, %v3775
      %v3990 = vcombine.low %v3774, %v3776
      %v3992 = vunpack.c.l.s4 1983009808
      %v3993 = vunpack.c.0.s8 %v3992
      %v3994 = vlaneseq
      %v3995 = vshrl.u32 %v3994, 7
      %v3996 = vsub.s32 %v3993, %v3995
      %v3997 = vrot.slane %v3989, %v3996
      %v3999 = vunpack.c.l.s4 1983009808
      %v4000 = vunpack.c.0.s8 %v3999
      %v4001 = vlaneseq
      %v4002 = vshrl.u32 %v4001, 7
      %v4003 = vsub.s32 %v4000, %v4002
      %v4004 = vrot.slane %v3990, %v4003
      %v4005 = vcombine.low %v3997, %v4004
      %v4006 = vcombine.low %v3783, %v3791
      %v4007 = vcombine.low %v3799, %v3798
      %v4009 = vunpack.c.l.s4 1983009808
      %v4010 = vunpack.c.0.s8 %v4009
      %v4011 = vlaneseq
      %v4012 = vshrl.u32 %v4011, 7
      %v4013 = vsub.s32 %v4010, %v4012
      %v4014 = vrot.slane %v4006, %v4013
      %v4016 = vunpack.c.l.s4 1983009808
      %v4017 = vunpack.c.0.s8 %v4016
      %v4018 = vlaneseq
      %v4019 = vshrl.u32 %v4018, 7
      %v4020 = vsub.s32 %v4017, %v4019
      %v4021 = vrot.slane %v4007, %v4020
      %v4022 = vcombine.low %v4014, %v4021
      %v4023 = vcombine.low %v3800, %v3807
      %v4024 = vcombine.low %v3815, %v3823
      %v4026 = vunpack.c.l.s4 1983009808
      %v4027 = vunpack.c.0.s8 %v4026
      %v4028 = vlaneseq
      %v4029 = vshrl.u32 %v4028, 7
      %v4030 = vsub.s32 %v4027, %v4029
      %v4031 = vrot.slane %v4023, %v4030
      %v4033 = vunpack.c.l.s4 1983009808
      %v4034 = vunpack.c.0.s8 %v4033
      %v4035 = vlaneseq
      %v4036 = vshrl.u32 %v4035, 7
      %v4037 = vsub.s32 %v4034, %v4036
      %v4038 = vrot.slane %v4024, %v4037
      %v4039 = vcombine.low %v4031, %v4038
      %v4040 = vcombine.low %v3822, %v3824
      %v4041 = vcombine.low %v3831, %v3839
      %v4043 = vunpack.c.l.s4 1983009808
      %v4044 = vunpack.c.0.s8 %v4043
      %v4045 = vlaneseq
      %v4046 = vshrl.u32 %v4045, 7
      %v4047 = vsub.s32 %v4044, %v4046
      %v4048 = vrot.slane %v4040, %v4047
      %v4050 = vunpack.c.l.s4 1983009808
      %v4051 = vunpack.c.0.s8 %v4050
      %v4052 = vlaneseq
      %v4053 = vshrl.u32 %v4052, 7
      %v4054 = vsub.s32 %v4051, %v4053
      %v4055 = vrot.slane %v4041, %v4054
      %v4056 = vcombine.low %v4048, %v4055
      %v4057 = vcombine.low %v3847, %v3846
      %v4058 = vcombine.low %v3848, %v3855
      %v4060 = vunpack.c.l.s4 1983009808
      %v4061 = vunpack.c.0.s8 %v4060
      %v4062 = vlaneseq
      %v4063 = vshrl.u32 %v4062, 7
      %v4064 = vsub.s32 %v4061, %v4063
      %v4065 = vrot.slane %v4057, %v4064
      %v4067 = vunpack.c.l.s4 1983009808
      %v4068 = vunpack.c.0.s8 %v4067
      %v4069 = vlaneseq
      %v4070 = vshrl.u32 %v4069, 7
      %v4071 = vsub.s32 %v4068, %v4070
      %v4072 = vrot.slane %v4058, %v4071
      %v4073 = vcombine.low %v4065, %v4072
      %v4074 = vcombine.low %v3863, %v3871
      %v4075 = vcombine.low %v3870, %v3872
      %v4077 = vunpack.c.l.s4 1983009808
      %v4078 = vunpack.c.0.s8 %v4077
      %v4079 = vlaneseq
      %v4080 = vshrl.u32 %v4079, 7
      %v4081 = vsub.s32 %v4078, %v4080
      %v4082 = vrot.slane %v4074, %v4081
      %v4084 = vunpack.c.l.s4 1983009808
      %v4085 = vunpack.c.0.s8 %v4084
      %v4086 = vlaneseq
      %v4087 = vshrl.u32 %v4086, 7
      %v4088 = vsub.s32 %v4085, %v4087
      %v4089 = vrot.slane %v4075, %v4088
      %v4090 = vcombine.low %v4082, %v4089
      %v4091 = vcombine.low %v3879, %v3887
      %v4092 = vcombine.low %v3895, %v3894
      %v4094 = vunpack.c.l.s4 1983009808
      %v4095 = vunpack.c.0.s8 %v4094
      %v4096 = vlaneseq
      %v4097 = vshrl.u32 %v4096, 7
      %v4098 = vsub.s32 %v4095, %v4097
      %v4099 = vrot.slane %v4091, %v4098
      %v4101 = vunpack.c.l.s4 1983009808
      %v4102 = vunpack.c.0.s8 %v4101
      %v4103 = vlaneseq
      %v4104 = vshrl.u32 %v4103, 7
      %v4105 = vsub.s32 %v4102, %v4104
      %v4106 = vrot.slane %v4092, %v4105
      %v4107 = vcombine.low %v4099, %v4106
      %v4108 = vcombine.low %v3896, %v3903
      %v4110 = vunpack.c.l.s4 1983009808
      %v4111 = vunpack.c.0.s8 %v4110
      %v4112 = vlaneseq
      %v4113 = vshrl.u32 %v4112, 7
      %v4114 = vsub.s32 %v4111, %v4113
      %v4115 = vrot.slane %v4108, %v4114
      %v4129 = vpack.c.bf16 %v3937, %v3920
      %v4130 = vpack.c.bf16 %v3971, %v3954
      %v4131 = vpack.c.bf16 %v4005, %v3988
      %v4132 = vpack.c.bf16 %v4039, %v4022
      %v4133 = vpack.c.bf16 %v4073, %v4056
      %v4134 = vpack.c.bf16 %v4107, %v4090
      %v4135 = vpack.c.bf16 %v4115, %v4115
      %s4136 = scalar_lea.vmem %s1, 10
      %v4137 = vld [vmem:[%s4136] sm:$0x3]
      %v4139 = vsel %vm287, %v4129, 0
      %v4142 = vsel %vm287, %v4130, 0
      %v4145 = vsel %vm287, %v4131, 0
      %v4148 = vsel %vm287, %v4132, 0
      %v4151 = vsel %vm287, %v4133, 0
      %v4154 = vsel %vm287, %v4134, 0
      %v4157 = vsel %vm287, %v4135, 0
      %v4160 = vsel %vm856, %v4137, 0
      %4162 = vmatprep.subr.bf16.mxu0 0
      %4163 = vmatpush1.bf16.msra.mxu0 %v4160
      %4164 = vmatprep.subr.bf16.mxu0 0
      %4165 = vmatpush1.bf16.msra.mxu0 0
      %4166 = vmatprep.subr.bf16.mxu0 0
      %4167 = vmatpush1.bf16.msra.mxu0 0
      %4168 = vmatprep.subr.bf16.mxu0 0
      %4169 = vmatpush1.bf16.msra.mxu0 0
      %4170 = vmatprep.subr.bf16.mxu0 0
      %4171 = vmatpush1.bf16.msra.mxu0 0
      %4172 = vmatprep.subr.bf16.mxu0 0
      %4173 = vmatpush1.bf16.msra.mxu0 0
      %4174 = vmatprep.subr.bf16.mxu0 0
      %4175 = vmatpush1.bf16.msra.mxu0 0
      %4176 = vmatprep.subr.bf16.mxu0 0
      %4177 = vmatpush1.bf16.msra.mxu0 0
      %4178 = vmatprep.subr.bf16.mxu0 0
      %4179 = vmatpush1.bf16.msra.mxu0 0
      %4180 = vmatprep.subr.bf16.mxu0 0
      %4181 = vmatpush1.bf16.msra.mxu0 0
      %4182 = vmatprep.subr.bf16.mxu0 0
      %4183 = vmatpush1.bf16.msra.mxu0 0
      %4184 = vmatprep.subr.bf16.mxu0 0
      %4185 = vmatpush1.bf16.msra.mxu0 0
      %4186 = vmatprep.subr.bf16.mxu0 0
      %4187 = vmatpush1.bf16.msra.mxu0 0
      %4188 = vmatprep.subr.bf16.mxu0 0
      %4189 = vmatpush1.bf16.msra.mxu0 0
      %4190 = vmatprep.subr.bf16.mxu0 0
      %4191 = vmatpush1.bf16.msra.mxu0 0
      %4192 = vmatprep.subr.bf16.mxu0 0
      %4193 = vmatpush1.bf16.msra.mxu0 0
      %4194 = vmatprep.mubr.bf16.mxu0 0
      %4195 = vmatmul.mubr.bf16.gmra.mrb[0].mxu0 %v4139
      %v4196 = vpop.f32.mrb[0].mxu0
      %v4197 = vadd.f32 0.0, %v4196
      %v4198 = vpop.f32.mrb[0].mxu0
      %v4199 = vpop.f32.mrb[0].mxu0
      %v4200 = vadd.f32 0.0, %v4199
      %v4201 = vpop.f32.mrb[0].mxu0
      %4202 = vmatprep.mubr.bf16.mxu0 0
      %4203 = vmatmul.mubr.bf16.gmra.mrb[0].mxu0 %v4142
      %v4204 = vpop.f32.mrb[0].mxu0
      %v4205 = vadd.f32 0.0, %v4204
      %v4206 = vpop.f32.mrb[0].mxu0
      %v4207 = vpop.f32.mrb[0].mxu0
      %v4208 = vadd.f32 0.0, %v4207
      %v4209 = vpop.f32.mrb[0].mxu0
      %4210 = vmatprep.mubr.bf16.mxu0 0
      %4211 = vmatmul.mubr.bf16.gmra.mrb[0].mxu0 %v4145
      %v4212 = vpop.f32.mrb[0].mxu0
      %v4213 = vadd.f32 0.0, %v4212
      %v4214 = vpop.f32.mrb[0].mxu0
      %v4215 = vpop.f32.mrb[0].mxu0
      %v4216 = vadd.f32 0.0, %v4215
      %v4217 = vpop.f32.mrb[0].mxu0
      %4218 = vmatprep.mubr.bf16.mxu0 0
      %4219 = vmatmul.mubr.bf16.gmra.mrb[0].mxu0 %v4148
      %v4220 = vpop.f32.mrb[0].mxu0
      %v4221 = vadd.f32 0.0, %v4220
      %v4222 = vpop.f32.mrb[0].mxu0
      %v4223 = vpop.f32.mrb[0].mxu0
      %v4224 = vadd.f32 0.0, %v4223
      %v4225 = vpop.f32.mrb[0].mxu0
      %4226 = vmatprep.mubr.bf16.mxu0 0
      %4227 = vmatmul.mubr.bf16.gmra.mrb[0].mxu0 %v4151
      %v4228 = vpop.f32.mrb[0].mxu0
      %v4229 = vadd.f32 0.0, %v4228
      %v4230 = vpop.f32.mrb[0].mxu0
      %v4231 = vpop.f32.mrb[0].mxu0
      %v4232 = vadd.f32 0.0, %v4231
      %v4233 = vpop.f32.mrb[0].mxu0
      %4234 = vmatprep.mubr.bf16.mxu0 0
      %4235 = vmatmul.mubr.bf16.gmra.mrb[0].mxu0 %v4154
      %v4236 = vpop.f32.mrb[0].mxu0
      %v4237 = vadd.f32 0.0, %v4236
      %v4238 = vpop.f32.mrb[0].mxu0
      %v4239 = vpop.f32.mrb[0].mxu0
      %v4240 = vadd.f32 0.0, %v4239
      %v4241 = vpop.f32.mrb[0].mxu0
      %4242 = vmatprep.mubr.bf16.mxu0 0
      %4243 = vmatmul.mubr.bf16.gmra.mrb[0].mxu0 %v4157
      %v4244 = vpop.f32.mrb[0].mxu0
      %v4245 = vadd.f32 0.0, %v4244
      %v4246 = vpop.f32.mrb[0].mxu0
      %v4247 = vpop.f32.mrb[0].mxu0
      %v4248 = vpop.f32.mrb[0].mxu0
      %4249 = vdwg.mxu0
      %v4250 = vld [vmem:[%s177] sm:$0xff]
      %v4251 = vld [vmem:[%s177 + $0x8] sm:$0xff]
      %v4252 = vld [vmem:[%s177 + $0x10] sm:$0xff]
      %v4253 = vld [vmem:[%s177 + $0x18] sm:$0xff]
      %v4254 = vld [vmem:[%s177 + $0x20] sm:$0xff]
      %v4255 = vld [vmem:[%s177 + $0x28] sm:$0xff]
      %v4256 = vld [vmem:[%s177 + $0x30] sm:$0xff]
      %v4257 = vld [vmem:[%s177 + $0x38] sm:$0xff]
      %v4258 = vld [vmem:[%s177 + $0x40] sm:$0xff]
      %v4259 = vld [vmem:[%s177 + $0x48] sm:$0xff]
      %v4260 = vld [vmem:[%s177 + $0x50] sm:$0xff]
      %v4261 = vld [vmem:[%s177 + $0x58] sm:$0xff]
      %v4262 = vld [vmem:[%s177 + $0x60] sm:$0xf]
      %v4263 = vadd.f32 %v4250, %v4197
      %v4264 = vadd.f32 %v4251, %v4200
      %v4265 = vadd.f32 %v4252, %v4205
      %v4266 = vadd.f32 %v4253, %v4208
      %v4267 = vadd.f32 %v4254, %v4213
      %v4268 = vadd.f32 %v4255, %v4216
      %v4269 = vadd.f32 %v4256, %v4221
      %v4270 = vadd.f32 %v4257, %v4224
      %v4271 = vadd.f32 %v4258, %v4229
      %v4272 = vadd.f32 %v4259, %v4232
      %v4273 = vadd.f32 %v4260, %v4237
      %v4274 = vadd.f32 %v4261, %v4240
      %v4275 = vadd.f32 %v4262, %v4245
      %4276 = vst.msk [vmem:[%s177] sm:$0xff] %vm948, %v4263
      %4277 = vst.msk [vmem:[%s177 + $0x8] sm:$0xff] %vm948, %v4264
      %4278 = vst.msk [vmem:[%s177 + $0x10] sm:$0xff] %vm948, %v4265
      %4279 = vst.msk [vmem:[%s177 + $0x18] sm:$0xff] %vm948, %v4266
      %4280 = vst.msk [vmem:[%s177 + $0x20] sm:$0xff] %vm948, %v4267
      %4281 = vst.msk [vmem:[%s177 + $0x28] sm:$0xff] %vm948, %v4268
      %4282 = vst.msk [vmem:[%s177 + $0x30] sm:$0xff] %vm948, %v4269
      %4283 = vst.msk [vmem:[%s177 + $0x38] sm:$0xff] %vm948, %v4270
      %4284 = vst.msk [vmem:[%s177 + $0x40] sm:$0xff] %vm948, %v4271
      %4285 = vst.msk [vmem:[%s177 + $0x48] sm:$0xff] %vm948, %v4272
      %4286 = vst.msk [vmem:[%s177 + $0x50] sm:$0xff] %vm948, %v4273
      %4287 = vst.msk [vmem:[%s177 + $0x58] sm:$0xff] %vm948, %v4274
      %4288 = vst.msk [vmem:[%s177 + $0x60] sm:$0xf] %vm961, %v4275
      %v4289 = vld [vmem:[%s313] sm:$0xff]
      %v4290 = vld [vmem:[%s313 + $0x8] sm:$0x3]
      %v4291 = vld [vmem:[%s313 + $0x10] sm:$0xff]
      %v4292 = vld [vmem:[%s313 + $0x18] sm:$0x3]
      %v4293 = vld [vmem:[%s313 + $0x20] sm:$0xff]
      %v4294 = vld [vmem:[%s313 + $0x28] sm:$0x3]
      %v4295 = vld [vmem:[%s313 + $0x30] sm:$0xff]
      %v4296 = vld [vmem:[%s313 + $0x38] sm:$0x3]
      %v4297 = vld [vmem:[%s313 + $0x40] sm:$0xff]
      %v4298 = vld [vmem:[%s313 + $0x48] sm:$0x3]
      %v4299 = vld [vmem:[%s313 + $0x50] sm:$0xff]
      %v4300 = vld [vmem:[%s313 + $0x58] sm:$0x3]
      %v4301 = vld [vmem:[%s313 + $0x60] sm:$0xff]
      %v4302 = vld [vmem:[%s313 + $0x68] sm:$0x3]
      %v4303 = vld [vmem:[%s313 + $0x70] sm:$0xff]
      %v4304 = vld [vmem:[%s313 + $0x78] sm:$0x3]
      %v4305 = vld [vmem:[%s313 + $0x80] sm:$0xff]
      %v4306 = vld [vmem:[%s313 + $0x88] sm:$0x3]
      %v4307 = vld [vmem:[%s313 + $0x90] sm:$0xff]
      %v4308 = vld [vmem:[%s313 + $0x98] sm:$0x3]
      %v4329 = vcombine.high %v4289, %v4289
      %v4331 = vunpack.c.l.s4 1983009808
      %v4332 = vunpack.c.0.s8 %v4331
      %v4333 = vlaneseq
      %v4334 = vshrl.u32 %v4333, 7
      %v4335 = vsub.s32 %v4332, %v4334
      %v4336 = vrot.slane %v4289, %v4335
      %v4338 = vunpack.c.l.s4 1983009808
      %v4339 = vunpack.c.0.s8 %v4338
      %v4340 = vlaneseq
      %v4341 = vshrl.u32 %v4340, 7
      %v4342 = vsub.s32 %v4339, %v4341
      %v4343 = vrot.slane %v4329, %v4342
      %v4344 = vcombine.high %v4336, %v4336
      %v4345 = vcombine.high %v4343, %v4343
      %v4347 = vunpack.c.l.s4 1983009808
      %v4348 = vunpack.c.0.s8 %v4347
      %v4349 = vlaneseq
      %v4350 = vshrl.u32 %v4349, 7
      %v4351 = vsub.s32 %v4348, %v4350
      %v4352 = vrot.slane %v4290, %v4351
      %v4353 = vcombine.high %v4291, %v4291
      %v4355 = vunpack.c.l.s4 1983009808
      %v4356 = vunpack.c.0.s8 %v4355
      %v4357 = vlaneseq
      %v4358 = vshrl.u32 %v4357, 7
      %v4359 = vsub.s32 %v4356, %v4358
      %v4360 = vrot.slane %v4291, %v4359
      %v4362 = vunpack.c.l.s4 1983009808
      %v4363 = vunpack.c.0.s8 %v4362
      %v4364 = vlaneseq
      %v4365 = vshrl.u32 %v4364, 7
      %v4366 = vsub.s32 %v4363, %v4365
      %v4367 = vrot.slane %v4353, %v4366
      %v4368 = vcombine.high %v4360, %v4360
      %v4369 = vcombine.high %v4367, %v4367
      %v4371 = vunpack.c.l.s4 1983009808
      %v4372 = vunpack.c.0.s8 %v4371
      %v4373 = vlaneseq
      %v4374 = vshrl.u32 %v4373, 7
      %v4375 = vsub.s32 %v4372, %v4374
      %v4376 = vrot.slane %v4292, %v4375
      %v4377 = vcombine.high %v4293, %v4293
      %v4379 = vunpack.c.l.s4 1983009808
      %v4380 = vunpack.c.0.s8 %v4379
      %v4381 = vlaneseq
      %v4382 = vshrl.u32 %v4381, 7
      %v4383 = vsub.s32 %v4380, %v4382
      %v4384 = vrot.slane %v4293, %v4383
      %v4386 = vunpack.c.l.s4 1983009808
      %v4387 = vunpack.c.0.s8 %v4386
      %v4388 = vlaneseq
      %v4389 = vshrl.u32 %v4388, 7
      %v4390 = vsub.s32 %v4387, %v4389
      %v4391 = vrot.slane %v4377, %v4390
      %v4392 = vcombine.high %v4384, %v4384
      %v4393 = vcombine.high %v4391, %v4391
      %v4395 = vunpack.c.l.s4 1983009808
      %v4396 = vunpack.c.0.s8 %v4395
      %v4397 = vlaneseq
      %v4398 = vshrl.u32 %v4397, 7
      %v4399 = vsub.s32 %v4396, %v4398
      %v4400 = vrot.slane %v4294, %v4399
      %v4401 = vcombine.high %v4295, %v4295
      %v4403 = vunpack.c.l.s4 1983009808
      %v4404 = vunpack.c.0.s8 %v4403
      %v4405 = vlaneseq
      %v4406 = vshrl.u32 %v4405, 7
      %v4407 = vsub.s32 %v4404, %v4406
      %v4408 = vrot.slane %v4295, %v4407
      %v4410 = vunpack.c.l.s4 1983009808
      %v4411 = vunpack.c.0.s8 %v4410
      %v4412 = vlaneseq
      %v4413 = vshrl.u32 %v4412, 7
      %v4414 = vsub.s32 %v4411, %v4413
      %v4415 = vrot.slane %v4401, %v4414
      %v4416 = vcombine.high %v4408, %v4408
      %v4417 = vcombine.high %v4415, %v4415
      %v4419 = vunpack.c.l.s4 1983009808
      %v4420 = vunpack.c.0.s8 %v4419
      %v4421 = vlaneseq
      %v4422 = vshrl.u32 %v4421, 7
      %v4423 = vsub.s32 %v4420, %v4422
      %v4424 = vrot.slane %v4296, %v4423
      %v4425 = vcombine.high %v4297, %v4297
      %v4427 = vunpack.c.l.s4 1983009808
      %v4428 = vunpack.c.0.s8 %v4427
      %v4429 = vlaneseq
      %v4430 = vshrl.u32 %v4429, 7
      %v4431 = vsub.s32 %v4428, %v4430
      %v4432 = vrot.slane %v4297, %v4431
      %v4434 = vunpack.c.l.s4 1983009808
      %v4435 = vunpack.c.0.s8 %v4434
      %v4436 = vlaneseq
      %v4437 = vshrl.u32 %v4436, 7
      %v4438 = vsub.s32 %v4435, %v4437
      %v4439 = vrot.slane %v4425, %v4438
      %v4440 = vcombine.high %v4432, %v4432
      %v4441 = vcombine.high %v4439, %v4439
      %v4443 = vunpack.c.l.s4 1983009808
      %v4444 = vunpack.c.0.s8 %v4443
      %v4445 = vlaneseq
      %v4446 = vshrl.u32 %v4445, 7
      %v4447 = vsub.s32 %v4444, %v4446
      %v4448 = vrot.slane %v4298, %v4447
      %v4449 = vcombine.high %v4299, %v4299
      %v4451 = vunpack.c.l.s4 1983009808
      %v4452 = vunpack.c.0.s8 %v4451
      %v4453 = vlaneseq
      %v4454 = vshrl.u32 %v4453, 7
      %v4455 = vsub.s32 %v4452, %v4454
      %v4456 = vrot.slane %v4299, %v4455
      %v4458 = vunpack.c.l.s4 1983009808
      %v4459 = vunpack.c.0.s8 %v4458
      %v4460 = vlaneseq
      %v4461 = vshrl.u32 %v4460, 7
      %v4462 = vsub.s32 %v4459, %v4461
      %v4463 = vrot.slane %v4449, %v4462
      %v4464 = vcombine.high %v4456, %v4456
      %v4465 = vcombine.high %v4463, %v4463
      %v4467 = vunpack.c.l.s4 1983009808
      %v4468 = vunpack.c.0.s8 %v4467
      %v4469 = vlaneseq
      %v4470 = vshrl.u32 %v4469, 7
      %v4471 = vsub.s32 %v4468, %v4470
      %v4472 = vrot.slane %v4300, %v4471
      %v4473 = vcombine.high %v4301, %v4301
      %v4475 = vunpack.c.l.s4 1983009808
      %v4476 = vunpack.c.0.s8 %v4475
      %v4477 = vlaneseq
      %v4478 = vshrl.u32 %v4477, 7
      %v4479 = vsub.s32 %v4476, %v4478
      %v4480 = vrot.slane %v4301, %v4479
      %v4482 = vunpack.c.l.s4 1983009808
      %v4483 = vunpack.c.0.s8 %v4482
      %v4484 = vlaneseq
      %v4485 = vshrl.u32 %v4484, 7
      %v4486 = vsub.s32 %v4483, %v4485
      %v4487 = vrot.slane %v4473, %v4486
      %v4488 = vcombine.high %v4480, %v4480
      %v4489 = vcombine.high %v4487, %v4487
      %v4491 = vunpack.c.l.s4 1983009808
      %v4492 = vunpack.c.0.s8 %v4491
      %v4493 = vlaneseq
      %v4494 = vshrl.u32 %v4493, 7
      %v4495 = vsub.s32 %v4492, %v4494
      %v4496 = vrot.slane %v4302, %v4495
      %v4497 = vcombine.high %v4303, %v4303
      %v4499 = vunpack.c.l.s4 1983009808
      %v4500 = vunpack.c.0.s8 %v4499
      %v4501 = vlaneseq
      %v4502 = vshrl.u32 %v4501, 7
      %v4503 = vsub.s32 %v4500, %v4502
      %v4504 = vrot.slane %v4303, %v4503
      %v4506 = vunpack.c.l.s4 1983009808
      %v4507 = vunpack.c.0.s8 %v4506
      %v4508 = vlaneseq
      %v4509 = vshrl.u32 %v4508, 7
      %v4510 = vsub.s32 %v4507, %v4509
      %v4511 = vrot.slane %v4497, %v4510
      %v4512 = vcombine.high %v4504, %v4504
      %v4513 = vcombine.high %v4511, %v4511
      %v4515 = vunpack.c.l.s4 1983009808
      %v4516 = vunpack.c.0.s8 %v4515
      %v4517 = vlaneseq
      %v4518 = vshrl.u32 %v4517, 7
      %v4519 = vsub.s32 %v4516, %v4518
      %v4520 = vrot.slane %v4304, %v4519
      %v4521 = vcombine.high %v4305, %v4305
      %v4523 = vunpack.c.l.s4 1983009808
      %v4524 = vunpack.c.0.s8 %v4523
      %v4525 = vlaneseq
      %v4526 = vshrl.u32 %v4525, 7
      %v4527 = vsub.s32 %v4524, %v4526
      %v4528 = vrot.slane %v4305, %v4527
      %v4530 = vunpack.c.l.s4 1983009808
      %v4531 = vunpack.c.0.s8 %v4530
      %v4532 = vlaneseq
      %v4533 = vshrl.u32 %v4532, 7
      %v4534 = vsub.s32 %v4531, %v4533
      %v4535 = vrot.slane %v4521, %v4534
      %v4536 = vcombine.high %v4528, %v4528
      %v4537 = vcombine.high %v4535, %v4535
      %v4539 = vunpack.c.l.s4 1983009808
      %v4540 = vunpack.c.0.s8 %v4539
      %v4541 = vlaneseq
      %v4542 = vshrl.u32 %v4541, 7
      %v4543 = vsub.s32 %v4540, %v4542
      %v4544 = vrot.slane %v4306, %v4543
      %v4545 = vcombine.high %v4307, %v4307
      %v4547 = vunpack.c.l.s4 1983009808
      %v4548 = vunpack.c.0.s8 %v4547
      %v4549 = vlaneseq
      %v4550 = vshrl.u32 %v4549, 7
      %v4551 = vsub.s32 %v4548, %v4550
      %v4552 = vrot.slane %v4307, %v4551
      %v4554 = vunpack.c.l.s4 1983009808
      %v4555 = vunpack.c.0.s8 %v4554
      %v4556 = vlaneseq
      %v4557 = vshrl.u32 %v4556, 7
      %v4558 = vsub.s32 %v4555, %v4557
      %v4559 = vrot.slane %v4545, %v4558
      %v4560 = vcombine.high %v4552, %v4552
      %v4561 = vcombine.high %v4559, %v4559
      %v4563 = vunpack.c.l.s4 1983009808
      %v4564 = vunpack.c.0.s8 %v4563
      %v4565 = vlaneseq
      %v4566 = vshrl.u32 %v4565, 7
      %v4567 = vsub.s32 %v4564, %v4566
      %v4568 = vrot.slane %v4308, %v4567
      %v4569 = vcombine.low %v4336, %v4344
      %v4570 = vcombine.low %v4343, %v4345
      %v4572 = vunpack.c.l.s4 1983009808
      %v4573 = vunpack.c.0.s8 %v4572
      %v4574 = vlaneseq
      %v4575 = vshrl.u32 %v4574, 7
      %v4576 = vsub.s32 %v4573, %v4575
      %v4577 = vrot.slane %v4569, %v4576
      %v4579 = vunpack.c.l.s4 1983009808
      %v4580 = vunpack.c.0.s8 %v4579
      %v4581 = vlaneseq
      %v4582 = vshrl.u32 %v4581, 7
      %v4583 = vsub.s32 %v4580, %v4582
      %v4584 = vrot.slane %v4570, %v4583
      %v4585 = vcombine.low %v4577, %v4584
      %v4586 = vcombine.low %v4352, %v4360
      %v4587 = vcombine.low %v4368, %v4367
      %v4589 = vunpack.c.l.s4 1983009808
      %v4590 = vunpack.c.0.s8 %v4589
      %v4591 = vlaneseq
      %v4592 = vshrl.u32 %v4591, 7
      %v4593 = vsub.s32 %v4590, %v4592
      %v4594 = vrot.slane %v4586, %v4593
      %v4596 = vunpack.c.l.s4 1983009808
      %v4597 = vunpack.c.0.s8 %v4596
      %v4598 = vlaneseq
      %v4599 = vshrl.u32 %v4598, 7
      %v4600 = vsub.s32 %v4597, %v4599
      %v4601 = vrot.slane %v4587, %v4600
      %v4602 = vcombine.low %v4594, %v4601
      %v4603 = vcombine.low %v4369, %v4376
      %v4604 = vcombine.low %v4384, %v4392
      %v4606 = vunpack.c.l.s4 1983009808
      %v4607 = vunpack.c.0.s8 %v4606
      %v4608 = vlaneseq
      %v4609 = vshrl.u32 %v4608, 7
      %v4610 = vsub.s32 %v4607, %v4609
      %v4611 = vrot.slane %v4603, %v4610
      %v4613 = vunpack.c.l.s4 1983009808
      %v4614 = vunpack.c.0.s8 %v4613
      %v4615 = vlaneseq
      %v4616 = vshrl.u32 %v4615, 7
      %v4617 = vsub.s32 %v4614, %v4616
      %v4618 = vrot.slane %v4604, %v4617
      %v4619 = vcombine.low %v4611, %v4618
      %v4620 = vcombine.low %v4391, %v4393
      %v4621 = vcombine.low %v4400, %v4408
      %v4623 = vunpack.c.l.s4 1983009808
      %v4624 = vunpack.c.0.s8 %v4623
      %v4625 = vlaneseq
      %v4626 = vshrl.u32 %v4625, 7
      %v4627 = vsub.s32 %v4624, %v4626
      %v4628 = vrot.slane %v4620, %v4627
      %v4630 = vunpack.c.l.s4 1983009808
      %v4631 = vunpack.c.0.s8 %v4630
      %v4632 = vlaneseq
      %v4633 = vshrl.u32 %v4632, 7
      %v4634 = vsub.s32 %v4631, %v4633
      %v4635 = vrot.slane %v4621, %v4634
      %v4636 = vcombine.low %v4628, %v4635
      %v4637 = vcombine.low %v4416, %v4415
      %v4638 = vcombine.low %v4417, %v4424
      %v4640 = vunpack.c.l.s4 1983009808
      %v4641 = vunpack.c.0.s8 %v4640
      %v4642 = vlaneseq
      %v4643 = vshrl.u32 %v4642, 7
      %v4644 = vsub.s32 %v4641, %v4643
      %v4645 = vrot.slane %v4637, %v4644
      %v4647 = vunpack.c.l.s4 1983009808
      %v4648 = vunpack.c.0.s8 %v4647
      %v4649 = vlaneseq
      %v4650 = vshrl.u32 %v4649, 7
      %v4651 = vsub.s32 %v4648, %v4650
      %v4652 = vrot.slane %v4638, %v4651
      %v4653 = vcombine.low %v4645, %v4652
      %v4654 = vcombine.low %v4432, %v4440
      %v4655 = vcombine.low %v4439, %v4441
      %v4657 = vunpack.c.l.s4 1983009808
      %v4658 = vunpack.c.0.s8 %v4657
      %v4659 = vlaneseq
      %v4660 = vshrl.u32 %v4659, 7
      %v4661 = vsub.s32 %v4658, %v4660
      %v4662 = vrot.slane %v4654, %v4661
      %v4664 = vunpack.c.l.s4 1983009808
      %v4665 = vunpack.c.0.s8 %v4664
      %v4666 = vlaneseq
      %v4667 = vshrl.u32 %v4666, 7
      %v4668 = vsub.s32 %v4665, %v4667
      %v4669 = vrot.slane %v4655, %v4668
      %v4670 = vcombine.low %v4662, %v4669
      %v4671 = vcombine.low %v4448, %v4456
      %v4672 = vcombine.low %v4464, %v4463
      %v4674 = vunpack.c.l.s4 1983009808
      %v4675 = vunpack.c.0.s8 %v4674
      %v4676 = vlaneseq
      %v4677 = vshrl.u32 %v4676, 7
      %v4678 = vsub.s32 %v4675, %v4677
      %v4679 = vrot.slane %v4671, %v4678
      %v4681 = vunpack.c.l.s4 1983009808
      %v4682 = vunpack.c.0.s8 %v4681
      %v4683 = vlaneseq
      %v4684 = vshrl.u32 %v4683, 7
      %v4685 = vsub.s32 %v4682, %v4684
      %v4686 = vrot.slane %v4672, %v4685
      %v4687 = vcombine.low %v4679, %v4686
      %v4688 = vcombine.low %v4465, %v4472
      %v4689 = vcombine.low %v4480, %v4488
      %v4691 = vunpack.c.l.s4 1983009808
      %v4692 = vunpack.c.0.s8 %v4691
      %v4693 = vlaneseq
      %v4694 = vshrl.u32 %v4693, 7
      %v4695 = vsub.s32 %v4692, %v4694
      %v4696 = vrot.slane %v4688, %v4695
      %v4698 = vunpack.c.l.s4 1983009808
      %v4699 = vunpack.c.0.s8 %v4698
      %v4700 = vlaneseq
      %v4701 = vshrl.u32 %v4700, 7
      %v4702 = vsub.s32 %v4699, %v4701
      %v4703 = vrot.slane %v4689, %v4702
      %v4704 = vcombine.low %v4696, %v4703
      %v4705 = vcombine.low %v4487, %v4489
      %v4706 = vcombine.low %v4496, %v4504
      %v4708 = vunpack.c.l.s4 1983009808
      %v4709 = vunpack.c.0.s8 %v4708
      %v4710 = vlaneseq
      %v4711 = vshrl.u32 %v4710, 7
      %v4712 = vsub.s32 %v4709, %v4711
      %v4713 = vrot.slane %v4705, %v4712
      %v4715 = vunpack.c.l.s4 1983009808
      %v4716 = vunpack.c.0.s8 %v4715
      %v4717 = vlaneseq
      %v4718 = vshrl.u32 %v4717, 7
      %v4719 = vsub.s32 %v4716, %v4718
      %v4720 = vrot.slane %v4706, %v4719
      %v4721 = vcombine.low %v4713, %v4720
      %v4722 = vcombine.low %v4512, %v4511
      %v4723 = vcombine.low %v4513, %v4520
      %v4725 = vunpack.c.l.s4 1983009808
      %v4726 = vunpack.c.0.s8 %v4725
      %v4727 = vlaneseq
      %v4728 = vshrl.u32 %v4727, 7
      %v4729 = vsub.s32 %v4726, %v4728
      %v4730 = vrot.slane %v4722, %v4729
      %v4732 = vunpack.c.l.s4 1983009808
      %v4733 = vunpack.c.0.s8 %v4732
      %v4734 = vlaneseq
      %v4735 = vshrl.u32 %v4734, 7
      %v4736 = vsub.s32 %v4733, %v4735
      %v4737 = vrot.slane %v4723, %v4736
      %v4738 = vcombine.low %v4730, %v4737
      %v4739 = vcombine.low %v4528, %v4536
      %v4740 = vcombine.low %v4535, %v4537
      %v4742 = vunpack.c.l.s4 1983009808
      %v4743 = vunpack.c.0.s8 %v4742
      %v4744 = vlaneseq
      %v4745 = vshrl.u32 %v4744, 7
      %v4746 = vsub.s32 %v4743, %v4745
      %v4747 = vrot.slane %v4739, %v4746
      %v4749 = vunpack.c.l.s4 1983009808
      %v4750 = vunpack.c.0.s8 %v4749
      %v4751 = vlaneseq
      %v4752 = vshrl.u32 %v4751, 7
      %v4753 = vsub.s32 %v4750, %v4752
      %v4754 = vrot.slane %v4740, %v4753
      %v4755 = vcombine.low %v4747, %v4754
      %v4756 = vcombine.low %v4544, %v4552
      %v4757 = vcombine.low %v4560, %v4559
      %v4759 = vunpack.c.l.s4 1983009808
      %v4760 = vunpack.c.0.s8 %v4759
      %v4761 = vlaneseq
      %v4762 = vshrl.u32 %v4761, 7
      %v4763 = vsub.s32 %v4760, %v4762
      %v4764 = vrot.slane %v4756, %v4763
      %v4766 = vunpack.c.l.s4 1983009808
      %v4767 = vunpack.c.0.s8 %v4766
      %v4768 = vlaneseq
      %v4769 = vshrl.u32 %v4768, 7
      %v4770 = vsub.s32 %v4767, %v4769
      %v4771 = vrot.slane %v4757, %v4770
      %v4772 = vcombine.low %v4764, %v4771
      %v4773 = vcombine.low %v4561, %v4568
      %v4775 = vunpack.c.l.s4 1983009808
      %v4776 = vunpack.c.0.s8 %v4775
      %v4777 = vlaneseq
      %v4778 = vshrl.u32 %v4777, 7
      %v4779 = vsub.s32 %v4776, %v4778
      %v4780 = vrot.slane %v4773, %v4779
      %v4794 = vpack.c.bf16 %v4602, %v4585
      %v4795 = vpack.c.bf16 %v4636, %v4619
      %v4796 = vpack.c.bf16 %v4670, %v4653
      %v4797 = vpack.c.bf16 %v4704, %v4687
      %v4798 = vpack.c.bf16 %v4738, %v4721
      %v4799 = vpack.c.bf16 %v4772, %v4755
      %v4800 = vpack.c.bf16 %v4780, %v4780
      %s4801 = scalar_lea.vmem %s1, 12
      %v4802 = vld [vmem:[%s4801] sm:$0x3]
      %v4804 = vsel %vm287, %v4794, 0
      %v4807 = vsel %vm287, %v4795, 0
      %v4810 = vsel %vm287, %v4796, 0
      %v4813 = vsel %vm287, %v4797, 0
      %v4816 = vsel %vm287, %v4798, 0
      %v4819 = vsel %vm287, %v4799, 0
      %v4822 = vsel %vm287, %v4800, 0
      %v4825 = vsel %vm856, %v4802, 0
      %4827 = vmatprep.subr.bf16.mxu0 0
      %4828 = vmatpush1.bf16.msra.mxu0 %v4825
      %4829 = vmatprep.subr.bf16.mxu0 0
      %4830 = vmatpush1.bf16.msra.mxu0 0
      %4831 = vmatprep.subr.bf16.mxu0 0
      %4832 = vmatpush1.bf16.msra.mxu0 0
      %4833 = vmatprep.subr.bf16.mxu0 0
      %4834 = vmatpush1.bf16.msra.mxu0 0
      %4835 = vmatprep.subr.bf16.mxu0 0
      %4836 = vmatpush1.bf16.msra.mxu0 0
      %4837 = vmatprep.subr.bf16.mxu0 0
      %4838 = vmatpush1.bf16.msra.mxu0 0
      %4839 = vmatprep.subr.bf16.mxu0 0
      %4840 = vmatpush1.bf16.msra.mxu0 0
      %4841 = vmatprep.subr.bf16.mxu0 0
      %4842 = vmatpush1.bf16.msra.mxu0 0
      %4843 = vmatprep.subr.bf16.mxu0 0
      %4844 = vmatpush1.bf16.msra.mxu0 0
      %4845 = vmatprep.subr.bf16.mxu0 0
      %4846 = vmatpush1.bf16.msra.mxu0 0
      %4847 = vmatprep.subr.bf16.mxu0 0
      %4848 = vmatpush1.bf16.msra.mxu0 0
      %4849 = vmatprep.subr.bf16.mxu0 0
      %4850 = vmatpush1.bf16.msra.mxu0 0
      %4851 = vmatprep.subr.bf16.mxu0 0
      %4852 = vmatpush1.bf16.msra.mxu0 0
      %4853 = vmatprep.subr.bf16.mxu0 0
      %4854 = vmatpush1.bf16.msra.mxu0 0
      %4855 = vmatprep.subr.bf16.mxu0 0
      %4856 = vmatpush1.bf16.msra.mxu0 0
      %4857 = vmatprep.subr.bf16.mxu0 0
      %4858 = vmatpush1.bf16.msra.mxu0 0
      %4859 = vmatprep.mubr.bf16.mxu0 0
      %4860 = vmatmul.mubr.bf16.gmra.mrb[0].mxu0 %v4804
      %v4861 = vpop.f32.mrb[0].mxu0
      %v4862 = vadd.f32 0.0, %v4861
      %v4863 = vpop.f32.mrb[0].mxu0
      %v4864 = vpop.f32.mrb[0].mxu0
      %v4865 = vadd.f32 0.0, %v4864
      %v4866 = vpop.f32.mrb[0].mxu0
      %4867 = vmatprep.mubr.bf16.mxu0 0
      %4868 = vmatmul.mubr.bf16.gmra.mrb[0].mxu0 %v4807
      %v4869 = vpop.f32.mrb[0].mxu0
      %v4870 = vadd.f32 0.0, %v4869
      %v4871 = vpop.f32.mrb[0].mxu0
      %v4872 = vpop.f32.mrb[0].mxu0
      %v4873 = vadd.f32 0.0, %v4872
      %v4874 = vpop.f32.mrb[0].mxu0
      %4875 = vmatprep.mubr.bf16.mxu0 0
      %4876 = vmatmul.mubr.bf16.gmra.mrb[0].mxu0 %v4810
      %v4877 = vpop.f32.mrb[0].mxu0
      %v4878 = vadd.f32 0.0, %v4877
      %v4879 = vpop.f32.mrb[0].mxu0
      %v4880 = vpop.f32.mrb[0].mxu0
      %v4881 = vadd.f32 0.0, %v4880
      %v4882 = vpop.f32.mrb[0].mxu0
      %4883 = vmatprep.mubr.bf16.mxu0 0
      %4884 = vmatmul.mubr.bf16.gmra.mrb[0].mxu0 %v4813
      %v4885 = vpop.f32.mrb[0].mxu0
      %v4886 = vadd.f32 0.0, %v4885
      %v4887 = vpop.f32.mrb[0].mxu0
      %v4888 = vpop.f32.mrb[0].mxu0
      %v4889 = vadd.f32 0.0, %v4888
      %v4890 = vpop.f32.mrb[0].mxu0
      %4891 = vmatprep.mubr.bf16.mxu0 0
      %4892 = vmatmul.mubr.bf16.gmra.mrb[0].mxu0 %v4816
      %v4893 = vpop.f32.mrb[0].mxu0
      %v4894 = vadd.f32 0.0, %v4893
      %v4895 = vpop.f32.mrb[0].mxu0
      %v4896 = vpop.f32.mrb[0].mxu0
      %v4897 = vadd.f32 0.0, %v4896
      %v4898 = vpop.f32.mrb[0].mxu0
      %4899 = vmatprep.mubr.bf16.mxu0 0
      %4900 = vmatmul.mubr.bf16.gmra.mrb[0].mxu0 %v4819
      %v4901 = vpop.f32.mrb[0].mxu0
      %v4902 = vadd.f32 0.0, %v4901
      %v4903 = vpop.f32.mrb[0].mxu0
      %v4904 = vpop.f32.mrb[0].mxu0
      %v4905 = vadd.f32 0.0, %v4904
      %v4906 = vpop.f32.mrb[0].mxu0
      %4907 = vmatprep.mubr.bf16.mxu0 0
      %4908 = vmatmul.mubr.bf16.gmra.mrb[0].mxu0 %v4822
      %v4909 = vpop.f32.mrb[0].mxu0
      %v4910 = vadd.f32 0.0, %v4909
      %v4911 = vpop.f32.mrb[0].mxu0
      %v4912 = vpop.f32.mrb[0].mxu0
      %v4913 = vpop.f32.mrb[0].mxu0
      %4914 = vdwg.mxu0
      %v4915 = vld [vmem:[%s177] sm:$0xff]
      %v4916 = vld [vmem:[%s177 + $0x8] sm:$0xff]
      %v4917 = vld [vmem:[%s177 + $0x10] sm:$0xff]
      %v4918 = vld [vmem:[%s177 + $0x18] sm:$0xff]
      %v4919 = vld [vmem:[%s177 + $0x20] sm:$0xff]
      %v4920 = vld [vmem:[%s177 + $0x28] sm:$0xff]
      %v4921 = vld [vmem:[%s177 + $0x30] sm:$0xff]
      %v4922 = vld [vmem:[%s177 + $0x38] sm:$0xff]
      %v4923 = vld [vmem:[%s177 + $0x40] sm:$0xff]
      %v4924 = vld [vmem:[%s177 + $0x48] sm:$0xff]
      %v4925 = vld [vmem:[%s177 + $0x50] sm:$0xff]
      %v4926 = vld [vmem:[%s177 + $0x58] sm:$0xff]
      %v4927 = vld [vmem:[%s177 + $0x60] sm:$0xf]
      %v4928 = vadd.f32 %v4915, %v4862
      %v4929 = vadd.f32 %v4916, %v4865
      %v4930 = vadd.f32 %v4917, %v4870
      %v4931 = vadd.f32 %v4918, %v4873
      %v4932 = vadd.f32 %v4919, %v4878
      %v4933 = vadd.f32 %v4920, %v4881
      %v4934 = vadd.f32 %v4921, %v4886
      %v4935 = vadd.f32 %v4922, %v4889
      %v4936 = vadd.f32 %v4923, %v4894
      %v4937 = vadd.f32 %v4924, %v4897
      %v4938 = vadd.f32 %v4925, %v4902
      %v4939 = vadd.f32 %v4926, %v4905
      %v4940 = vadd.f32 %v4927, %v4910
      %4941 = vst.msk [vmem:[%s177] sm:$0xff] %vm948, %v4928
      %4942 = vst.msk [vmem:[%s177 + $0x8] sm:$0xff] %vm948, %v4929
      %4943 = vst.msk [vmem:[%s177 + $0x10] sm:$0xff] %vm948, %v4930
      %4944 = vst.msk [vmem:[%s177 + $0x18] sm:$0xff] %vm948, %v4931
      %4945 = vst.msk [vmem:[%s177 + $0x20] sm:$0xff] %vm948, %v4932
      %4946 = vst.msk [vmem:[%s177 + $0x28] sm:$0xff] %vm948, %v4933
      %4947 = vst.msk [vmem:[%s177 + $0x30] sm:$0xff] %vm948, %v4934
      %4948 = vst.msk [vmem:[%s177 + $0x38] sm:$0xff] %vm948, %v4935
      %4949 = vst.msk [vmem:[%s177 + $0x40] sm:$0xff] %vm948, %v4936
      %4950 = vst.msk [vmem:[%s177 + $0x48] sm:$0xff] %vm948, %v4937
      %4951 = vst.msk [vmem:[%s177 + $0x50] sm:$0xff] %vm948, %v4938
      %4952 = vst.msk [vmem:[%s177 + $0x58] sm:$0xff] %vm948, %v4939
      %4953 = vst.msk [vmem:[%s177 + $0x60] sm:$0xf] %vm961, %v4940
      %v4954 = vld [vmem:[%s313 + $0x1] sm:$0xff]
      %v4955 = vld [vmem:[%s313 + $0x9] sm:$0x3]
      %v4956 = vld [vmem:[%s313 + $0x11] sm:$0xff]
      %v4957 = vld [vmem:[%s313 + $0x19] sm:$0x3]
      %v4958 = vld [vmem:[%s313 + $0x21] sm:$0xff]
      %v4959 = vld [vmem:[%s313 + $0x29] sm:$0x3]
      %v4960 = vld [vmem:[%s313 + $0x31] sm:$0xff]
      %v4961 = vld [vmem:[%s313 + $0x39] sm:$0x3]
      %v4962 = vld [vmem:[%s313 + $0x41] sm:$0xff]
      %v4963 = vld [vmem:[%s313 + $0x49] sm:$0x3]
      %v4964 = vld [vmem:[%s313 + $0x51] sm:$0xff]
      %v4965 = vld [vmem:[%s313 + $0x59] sm:$0x3]
      %v4966 = vld [vmem:[%s313 + $0x61] sm:$0xff]
      %v4967 = vld [vmem:[%s313 + $0x69] sm:$0x3]
      %v4968 = vld [vmem:[%s313 + $0x71] sm:$0xff]
      %v4969 = vld [vmem:[%s313 + $0x79] sm:$0x3]
      %v4970 = vld [vmem:[%s313 + $0x81] sm:$0xff]
      %v4971 = vld [vmem:[%s313 + $0x89] sm:$0x3]
      %v4972 = vld [vmem:[%s313 + $0x91] sm:$0xff]
      %v4973 = vld [vmem:[%s313 + $0x99] sm:$0x3]
      %v4994 = vcombine.high %v4954, %v4954
      %v4996 = vunpack.c.l.s4 1983009808
      %v4997 = vunpack.c.0.s8 %v4996
      %v4998 = vlaneseq
      %v4999 = vshrl.u32 %v4998, 7
      %v5000 = vsub.s32 %v4997, %v4999
      %v5001 = vrot.slane %v4954, %v5000
      %v5003 = vunpack.c.l.s4 1983009808
      %v5004 = vunpack.c.0.s8 %v5003
      %v5005 = vlaneseq
      %v5006 = vshrl.u32 %v5005, 7
      %v5007 = vsub.s32 %v5004, %v5006
      %v5008 = vrot.slane %v4994, %v5007
      %v5009 = vcombine.high %v5001, %v5001
      %v5010 = vcombine.high %v5008, %v5008
      %v5012 = vunpack.c.l.s4 1983009808
      %v5013 = vunpack.c.0.s8 %v5012
      %v5014 = vlaneseq
      %v5015 = vshrl.u32 %v5014, 7
      %v5016 = vsub.s32 %v5013, %v5015
      %v5017 = vrot.slane %v4955, %v5016
      %v5018 = vcombine.high %v4956, %v4956
      %v5020 = vunpack.c.l.s4 1983009808
      %v5021 = vunpack.c.0.s8 %v5020
      %v5022 = vlaneseq
      %v5023 = vshrl.u32 %v5022, 7
      %v5024 = vsub.s32 %v5021, %v5023
      %v5025 = vrot.slane %v4956, %v5024
      %v5027 = vunpack.c.l.s4 1983009808
      %v5028 = vunpack.c.0.s8 %v5027
      %v5029 = vlaneseq
      %v5030 = vshrl.u32 %v5029, 7
      %v5031 = vsub.s32 %v5028, %v5030
      %v5032 = vrot.slane %v5018, %v5031
      %v5033 = vcombine.high %v5025, %v5025
      %v5034 = vcombine.high %v5032, %v5032
      %v5036 = vunpack.c.l.s4 1983009808
      %v5037 = vunpack.c.0.s8 %v5036
      %v5038 = vlaneseq
      %v5039 = vshrl.u32 %v5038, 7
      %v5040 = vsub.s32 %v5037, %v5039
      %v5041 = vrot.slane %v4957, %v5040
      %v5042 = vcombine.high %v4958, %v4958
      %v5044 = vunpack.c.l.s4 1983009808
      %v5045 = vunpack.c.0.s8 %v5044
      %v5046 = vlaneseq
      %v5047 = vshrl.u32 %v5046, 7
      %v5048 = vsub.s32 %v5045, %v5047
      %v5049 = vrot.slane %v4958, %v5048
      %v5051 = vunpack.c.l.s4 1983009808
      %v5052 = vunpack.c.0.s8 %v5051
      %v5053 = vlaneseq
      %v5054 = vshrl.u32 %v5053, 7
      %v5055 = vsub.s32 %v5052, %v5054
      %v5056 = vrot.slane %v5042, %v5055
      %v5057 = vcombine.high %v5049, %v5049
      %v5058 = vcombine.high %v5056, %v5056
      %v5060 = vunpack.c.l.s4 1983009808
      %v5061 = vunpack.c.0.s8 %v5060
      %v5062 = vlaneseq
      %v5063 = vshrl.u32 %v5062, 7
      %v5064 = vsub.s32 %v5061, %v5063
      %v5065 = vrot.slane %v4959, %v5064
      %v5066 = vcombine.high %v4960, %v4960
      %v5068 = vunpack.c.l.s4 1983009808
      %v5069 = vunpack.c.0.s8 %v5068
      %v5070 = vlaneseq
      %v5071 = vshrl.u32 %v5070, 7
      %v5072 = vsub.s32 %v5069, %v5071
      %v5073 = vrot.slane %v4960, %v5072
      %v5075 = vunpack.c.l.s4 1983009808
      %v5076 = vunpack.c.0.s8 %v5075
      %v5077 = vlaneseq
      %v5078 = vshrl.u32 %v5077, 7
      %v5079 = vsub.s32 %v5076, %v5078
      %v5080 = vrot.slane %v5066, %v5079
      %v5081 = vcombine.high %v5073, %v5073
      %v5082 = vcombine.high %v5080, %v5080
      %v5084 = vunpack.c.l.s4 1983009808
      %v5085 = vunpack.c.0.s8 %v5084
      %v5086 = vlaneseq
      %v5087 = vshrl.u32 %v5086, 7
      %v5088 = vsub.s32 %v5085, %v5087
      %v5089 = vrot.slane %v4961, %v5088
      %v5090 = vcombine.high %v4962, %v4962
      %v5092 = vunpack.c.l.s4 1983009808
      %v5093 = vunpack.c.0.s8 %v5092
      %v5094 = vlaneseq
      %v5095 = vshrl.u32 %v5094, 7
      %v5096 = vsub.s32 %v5093, %v5095
      %v5097 = vrot.slane %v4962, %v5096
      %v5099 = vunpack.c.l.s4 1983009808
      %v5100 = vunpack.c.0.s8 %v5099
      %v5101 = vlaneseq
      %v5102 = vshrl.u32 %v5101, 7
      %v5103 = vsub.s32 %v5100, %v5102
      %v5104 = vrot.slane %v5090, %v5103
      %v5105 = vcombine.high %v5097, %v5097
      %v5106 = vcombine.high %v5104, %v5104
      %v5108 = vunpack.c.l.s4 1983009808
      %v5109 = vunpack.c.0.s8 %v5108
      %v5110 = vlaneseq
      %v5111 = vshrl.u32 %v5110, 7
      %v5112 = vsub.s32 %v5109, %v5111
      %v5113 = vrot.slane %v4963, %v5112
      %v5114 = vcombine.high %v4964, %v4964
      %v5116 = vunpack.c.l.s4 1983009808
      %v5117 = vunpack.c.0.s8 %v5116
      %v5118 = vlaneseq
      %v5119 = vshrl.u32 %v5118, 7
      %v5120 = vsub.s32 %v5117, %v5119
      %v5121 = vrot.slane %v4964, %v5120
      %v5123 = vunpack.c.l.s4 1983009808
      %v5124 = vunpack.c.0.s8 %v5123
      %v5125 = vlaneseq
      %v5126 = vshrl.u32 %v5125, 7
      %v5127 = vsub.s32 %v5124, %v5126
      %v5128 = vrot.slane %v5114, %v5127
      %v5129 = vcombine.high %v5121, %v5121
      %v5130 = vcombine.high %v5128, %v5128
      %v5132 = vunpack.c.l.s4 1983009808
      %v5133 = vunpack.c.0.s8 %v5132
      %v5134 = vlaneseq
      %v5135 = vshrl.u32 %v5134, 7
      %v5136 = vsub.s32 %v5133, %v5135
      %v5137 = vrot.slane %v4965, %v5136
      %v5138 = vcombine.high %v4966, %v4966
      %v5140 = vunpack.c.l.s4 1983009808
      %v5141 = vunpack.c.0.s8 %v5140
      %v5142 = vlaneseq
      %v5143 = vshrl.u32 %v5142, 7
      %v5144 = vsub.s32 %v5141, %v5143
      %v5145 = vrot.slane %v4966, %v5144
      %v5147 = vunpack.c.l.s4 1983009808
      %v5148 = vunpack.c.0.s8 %v5147
      %v5149 = vlaneseq
      %v5150 = vshrl.u32 %v5149, 7
      %v5151 = vsub.s32 %v5148, %v5150
      %v5152 = vrot.slane %v5138, %v5151
      %v5153 = vcombine.high %v5145, %v5145
      %v5154 = vcombine.high %v5152, %v5152
      %v5156 = vunpack.c.l.s4 1983009808
      %v5157 = vunpack.c.0.s8 %v5156
      %v5158 = vlaneseq
      %v5159 = vshrl.u32 %v5158, 7
      %v5160 = vsub.s32 %v5157, %v5159
      %v5161 = vrot.slane %v4967, %v5160
      %v5162 = vcombine.high %v4968, %v4968
      %v5164 = vunpack.c.l.s4 1983009808
      %v5165 = vunpack.c.0.s8 %v5164
      %v5166 = vlaneseq
      %v5167 = vshrl.u32 %v5166, 7
      %v5168 = vsub.s32 %v5165, %v5167
      %v5169 = vrot.slane %v4968, %v5168
      %v5171 = vunpack.c.l.s4 1983009808
      %v5172 = vunpack.c.0.s8 %v5171
      %v5173 = vlaneseq
      %v5174 = vshrl.u32 %v5173, 7
      %v5175 = vsub.s32 %v5172, %v5174
      %v5176 = vrot.slane %v5162, %v5175
      %v5177 = vcombine.high %v5169, %v5169
      %v5178 = vcombine.high %v5176, %v5176
      %v5180 = vunpack.c.l.s4 1983009808
      %v5181 = vunpack.c.0.s8 %v5180
      %v5182 = vlaneseq
      %v5183 = vshrl.u32 %v5182, 7
      %v5184 = vsub.s32 %v5181, %v5183
      %v5185 = vrot.slane %v4969, %v5184
      %v5186 = vcombine.high %v4970, %v4970
      %v5188 = vunpack.c.l.s4 1983009808
      %v5189 = vunpack.c.0.s8 %v5188
      %v5190 = vlaneseq
      %v5191 = vshrl.u32 %v5190, 7
      %v5192 = vsub.s32 %v5189, %v5191
      %v5193 = vrot.slane %v4970, %v5192
      %v5195 = vunpack.c.l.s4 1983009808
      %v5196 = vunpack.c.0.s8 %v5195
      %v5197 = vlaneseq
      %v5198 = vshrl.u32 %v5197, 7
      %v5199 = vsub.s32 %v5196, %v5198
      %v5200 = vrot.slane %v5186, %v5199
      %v5201 = vcombine.high %v5193, %v5193
      %v5202 = vcombine.high %v5200, %v5200
      %v5204 = vunpack.c.l.s4 1983009808
      %v5205 = vunpack.c.0.s8 %v5204
      %v5206 = vlaneseq
      %v5207 = vshrl.u32 %v5206, 7
      %v5208 = vsub.s32 %v5205, %v5207
      %v5209 = vrot.slane %v4971, %v5208
      %v5210 = vcombine.high %v4972, %v4972
      %v5212 = vunpack.c.l.s4 1983009808
      %v5213 = vunpack.c.0.s8 %v5212
      %v5214 = vlaneseq
      %v5215 = vshrl.u32 %v5214, 7
      %v5216 = vsub.s32 %v5213, %v5215
      %v5217 = vrot.slane %v4972, %v5216
      %v5219 = vunpack.c.l.s4 1983009808
      %v5220 = vunpack.c.0.s8 %v5219
      %v5221 = vlaneseq
      %v5222 = vshrl.u32 %v5221, 7
      %v5223 = vsub.s32 %v5220, %v5222
      %v5224 = vrot.slane %v5210, %v5223
      %v5225 = vcombine.high %v5217, %v5217
      %v5226 = vcombine.high %v5224, %v5224
      %v5228 = vunpack.c.l.s4 1983009808
      %v5229 = vunpack.c.0.s8 %v5228
      %v5230 = vlaneseq
      %v5231 = vshrl.u32 %v5230, 7
      %v5232 = vsub.s32 %v5229, %v5231
      %v5233 = vrot.slane %v4973, %v5232
      %v5234 = vcombine.low %v5001, %v5009
      %v5235 = vcombine.low %v5008, %v5010
      %v5237 = vunpack.c.l.s4 1983009808
      %v5238 = vunpack.c.0.s8 %v5237
      %v5239 = vlaneseq
      %v5240 = vshrl.u32 %v5239, 7
      %v5241 = vsub.s32 %v5238, %v5240
      %v5242 = vrot.slane %v5234, %v5241
      %v5244 = vunpack.c.l.s4 1983009808
      %v5245 = vunpack.c.0.s8 %v5244
      %v5246 = vlaneseq
      %v5247 = vshrl.u32 %v5246, 7
      %v5248 = vsub.s32 %v5245, %v5247
      %v5249 = vrot.slane %v5235, %v5248
      %v5250 = vcombine.low %v5242, %v5249
      %v5251 = vcombine.low %v5017, %v5025
      %v5252 = vcombine.low %v5033, %v5032
      %v5254 = vunpack.c.l.s4 1983009808
      %v5255 = vunpack.c.0.s8 %v5254
      %v5256 = vlaneseq
      %v5257 = vshrl.u32 %v5256, 7
      %v5258 = vsub.s32 %v5255, %v5257
      %v5259 = vrot.slane %v5251, %v5258
      %v5261 = vunpack.c.l.s4 1983009808
      %v5262 = vunpack.c.0.s8 %v5261
      %v5263 = vlaneseq
      %v5264 = vshrl.u32 %v5263, 7
      %v5265 = vsub.s32 %v5262, %v5264
      %v5266 = vrot.slane %v5252, %v5265
      %v5267 = vcombine.low %v5259, %v5266
      %v5268 = vcombine.low %v5034, %v5041
      %v5269 = vcombine.low %v5049, %v5057
      %v5271 = vunpack.c.l.s4 1983009808
      %v5272 = vunpack.c.0.s8 %v5271
      %v5273 = vlaneseq
      %v5274 = vshrl.u32 %v5273, 7
      %v5275 = vsub.s32 %v5272, %v5274
      %v5276 = vrot.slane %v5268, %v5275
      %v5278 = vunpack.c.l.s4 1983009808
      %v5279 = vunpack.c.0.s8 %v5278
      %v5280 = vlaneseq
      %v5281 = vshrl.u32 %v5280, 7
      %v5282 = vsub.s32 %v5279, %v5281
      %v5283 = vrot.slane %v5269, %v5282
      %v5284 = vcombine.low %v5276, %v5283
      %v5285 = vcombine.low %v5056, %v5058
      %v5286 = vcombine.low %v5065, %v5073
      %v5288 = vunpack.c.l.s4 1983009808
      %v5289 = vunpack.c.0.s8 %v5288
      %v5290 = vlaneseq
      %v5291 = vshrl.u32 %v5290, 7
      %v5292 = vsub.s32 %v5289, %v5291
      %v5293 = vrot.slane %v5285, %v5292
      %v5295 = vunpack.c.l.s4 1983009808
      %v5296 = vunpack.c.0.s8 %v5295
      %v5297 = vlaneseq
      %v5298 = vshrl.u32 %v5297, 7
      %v5299 = vsub.s32 %v5296, %v5298
      %v5300 = vrot.slane %v5286, %v5299
      %v5301 = vcombine.low %v5293, %v5300
      %v5302 = vcombine.low %v5081, %v5080
      %v5303 = vcombine.low %v5082, %v5089
      %v5305 = vunpack.c.l.s4 1983009808
      %v5306 = vunpack.c.0.s8 %v5305
      %v5307 = vlaneseq
      %v5308 = vshrl.u32 %v5307, 7
      %v5309 = vsub.s32 %v5306, %v5308
      %v5310 = vrot.slane %v5302, %v5309
      %v5312 = vunpack.c.l.s4 1983009808
      %v5313 = vunpack.c.0.s8 %v5312
      %v5314 = vlaneseq
      %v5315 = vshrl.u32 %v5314, 7
      %v5316 = vsub.s32 %v5313, %v5315
      %v5317 = vrot.slane %v5303, %v5316
      %v5318 = vcombine.low %v5310, %v5317
      %v5319 = vcombine.low %v5097, %v5105
      %v5320 = vcombine.low %v5104, %v5106
      %v5322 = vunpack.c.l.s4 1983009808
      %v5323 = vunpack.c.0.s8 %v5322
      %v5324 = vlaneseq
      %v5325 = vshrl.u32 %v5324, 7
      %v5326 = vsub.s32 %v5323, %v5325
      %v5327 = vrot.slane %v5319, %v5326
      %v5329 = vunpack.c.l.s4 1983009808
      %v5330 = vunpack.c.0.s8 %v5329
      %v5331 = vlaneseq
      %v5332 = vshrl.u32 %v5331, 7
      %v5333 = vsub.s32 %v5330, %v5332
      %v5334 = vrot.slane %v5320, %v5333
      %v5335 = vcombine.low %v5327, %v5334
      %v5336 = vcombine.low %v5113, %v5121
      %v5337 = vcombine.low %v5129, %v5128
      %v5339 = vunpack.c.l.s4 1983009808
      %v5340 = vunpack.c.0.s8 %v5339
      %v5341 = vlaneseq
      %v5342 = vshrl.u32 %v5341, 7
      %v5343 = vsub.s32 %v5340, %v5342
      %v5344 = vrot.slane %v5336, %v5343
      %v5346 = vunpack.c.l.s4 1983009808
      %v5347 = vunpack.c.0.s8 %v5346
      %v5348 = vlaneseq
      %v5349 = vshrl.u32 %v5348, 7
      %v5350 = vsub.s32 %v5347, %v5349
      %v5351 = vrot.slane %v5337, %v5350
      %v5352 = vcombine.low %v5344, %v5351
      %v5353 = vcombine.low %v5130, %v5137
      %v5354 = vcombine.low %v5145, %v5153
      %v5356 = vunpack.c.l.s4 1983009808
      %v5357 = vunpack.c.0.s8 %v5356
      %v5358 = vlaneseq
      %v5359 = vshrl.u32 %v5358, 7
      %v5360 = vsub.s32 %v5357, %v5359
      %v5361 = vrot.slane %v5353, %v5360
      %v5363 = vunpack.c.l.s4 1983009808
      %v5364 = vunpack.c.0.s8 %v5363
      %v5365 = vlaneseq
      %v5366 = vshrl.u32 %v5365, 7
      %v5367 = vsub.s32 %v5364, %v5366
      %v5368 = vrot.slane %v5354, %v5367
      %v5369 = vcombine.low %v5361, %v5368
      %v5370 = vcombine.low %v5152, %v5154
      %v5371 = vcombine.low %v5161, %v5169
      %v5373 = vunpack.c.l.s4 1983009808
      %v5374 = vunpack.c.0.s8 %v5373
      %v5375 = vlaneseq
      %v5376 = vshrl.u32 %v5375, 7
      %v5377 = vsub.s32 %v5374, %v5376
      %v5378 = vrot.slane %v5370, %v5377
      %v5380 = vunpack.c.l.s4 1983009808
      %v5381 = vunpack.c.0.s8 %v5380
      %v5382 = vlaneseq
      %v5383 = vshrl.u32 %v5382, 7
      %v5384 = vsub.s32 %v5381, %v5383
      %v5385 = vrot.slane %v5371, %v5384
      %v5386 = vcombine.low %v5378, %v5385
      %v5387 = vcombine.low %v5177, %v5176
      %v5388 = vcombine.low %v5178, %v5185
      %v5390 = vunpack.c.l.s4 1983009808
      %v5391 = vunpack.c.0.s8 %v5390
      %v5392 = vlaneseq
      %v5393 = vshrl.u32 %v5392, 7
      %v5394 = vsub.s32 %v5391, %v5393
      %v5395 = vrot.slane %v5387, %v5394
      %v5397 = vunpack.c.l.s4 1983009808
      %v5398 = vunpack.c.0.s8 %v5397
      %v5399 = vlaneseq
      %v5400 = vshrl.u32 %v5399, 7
      %v5401 = vsub.s32 %v5398, %v5400
      %v5402 = vrot.slane %v5388, %v5401
      %v5403 = vcombine.low %v5395, %v5402
      %v5404 = vcombine.low %v5193, %v5201
      %v5405 = vcombine.low %v5200, %v5202
      %v5407 = vunpack.c.l.s4 1983009808
      %v5408 = vunpack.c.0.s8 %v5407
      %v5409 = vlaneseq
      %v5410 = vshrl.u32 %v5409, 7
      %v5411 = vsub.s32 %v5408, %v5410
      %v5412 = vrot.slane %v5404, %v5411
      %v5414 = vunpack.c.l.s4 1983009808
      %v5415 = vunpack.c.0.s8 %v5414
      %v5416 = vlaneseq
      %v5417 = vshrl.u32 %v5416, 7
      %v5418 = vsub.s32 %v5415, %v5417
      %v5419 = vrot.slane %v5405, %v5418
      %v5420 = vcombine.low %v5412, %v5419
      %v5421 = vcombine.low %v5209, %v5217
      %v5422 = vcombine.low %v5225, %v5224
      %v5424 = vunpack.c.l.s4 1983009808
      %v5425 = vunpack.c.0.s8 %v5424
      %v5426 = vlaneseq
      %v5427 = vshrl.u32 %v5426, 7
      %v5428 = vsub.s32 %v5425, %v5427
      %v5429 = vrot.slane %v5421, %v5428
      %v5431 = vunpack.c.l.s4 1983009808
      %v5432 = vunpack.c.0.s8 %v5431
      %v5433 = vlaneseq
      %v5434 = vshrl.u32 %v5433, 7
      %v5435 = vsub.s32 %v5432, %v5434
      %v5436 = vrot.slane %v5422, %v5435
      %v5437 = vcombine.low %v5429, %v5436
      %v5438 = vcombine.low %v5226, %v5233
      %v5440 = vunpack.c.l.s4 1983009808
      %v5441 = vunpack.c.0.s8 %v5440
      %v5442 = vlaneseq
      %v5443 = vshrl.u32 %v5442, 7
      %v5444 = vsub.s32 %v5441, %v5443
      %v5445 = vrot.slane %v5438, %v5444
      %v5459 = vpack.c.bf16 %v5267, %v5250
      %v5460 = vpack.c.bf16 %v5301, %v5284
      %v5461 = vpack.c.bf16 %v5335, %v5318
      %v5462 = vpack.c.bf16 %v5369, %v5352
      %v5463 = vpack.c.bf16 %v5403, %v5386
      %v5464 = vpack.c.bf16 %v5437, %v5420
      %v5465 = vpack.c.bf16 %v5445, %v5445
      %s5466 = scalar_lea.vmem %s1, 14
      %v5467 = vld [vmem:[%s5466] sm:$0x3]
      %v5469 = vsel %vm287, %v5459, 0
      %v5472 = vsel %vm287, %v5460, 0
      %v5475 = vsel %vm287, %v5461, 0
      %v5478 = vsel %vm287, %v5462, 0
      %v5481 = vsel %vm287, %v5463, 0
      %v5484 = vsel %vm287, %v5464, 0
      %v5487 = vsel %vm287, %v5465, 0
      %v5490 = vsel %vm856, %v5467, 0
      %5492 = vmatprep.subr.bf16.mxu0 0
      %5493 = vmatpush1.bf16.msra.mxu0 %v5490
      %5494 = vmatprep.subr.bf16.mxu0 0
      %5495 = vmatpush1.bf16.msra.mxu0 0
      %5496 = vmatprep.subr.bf16.mxu0 0
      %5497 = vmatpush1.bf16.msra.mxu0 0
      %5498 = vmatprep.subr.bf16.mxu0 0
      %5499 = vmatpush1.bf16.msra.mxu0 0
      %5500 = vmatprep.subr.bf16.mxu0 0
      %5501 = vmatpush1.bf16.msra.mxu0 0
      %5502 = vmatprep.subr.bf16.mxu0 0
      %5503 = vmatpush1.bf16.msra.mxu0 0
      %5504 = vmatprep.subr.bf16.mxu0 0
      %5505 = vmatpush1.bf16.msra.mxu0 0
      %5506 = vmatprep.subr.bf16.mxu0 0
      %5507 = vmatpush1.bf16.msra.mxu0 0
      %5508 = vmatprep.subr.bf16.mxu0 0
      %5509 = vmatpush1.bf16.msra.mxu0 0
      %5510 = vmatprep.subr.bf16.mxu0 0
      %5511 = vmatpush1.bf16.msra.mxu0 0
      %5512 = vmatprep.subr.bf16.mxu0 0
      %5513 = vmatpush1.bf16.msra.mxu0 0
      %5514 = vmatprep.subr.bf16.mxu0 0
      %5515 = vmatpush1.bf16.msra.mxu0 0
      %5516 = vmatprep.subr.bf16.mxu0 0
      %5517 = vmatpush1.bf16.msra.mxu0 0
      %5518 = vmatprep.subr.bf16.mxu0 0
      %5519 = vmatpush1.bf16.msra.mxu0 0
      %5520 = vmatprep.subr.bf16.mxu0 0
      %5521 = vmatpush1.bf16.msra.mxu0 0
      %5522 = vmatprep.subr.bf16.mxu0 0
      %5523 = vmatpush1.bf16.msra.mxu0 0
      %5524 = vmatprep.mubr.bf16.mxu0 0
      %5525 = vmatmul.mubr.bf16.gmra.mrb[0].mxu0 %v5469
      %v5526 = vpop.f32.mrb[0].mxu0
      %v5527 = vadd.f32 0.0, %v5526
      %v5528 = vpop.f32.mrb[0].mxu0
      %v5529 = vpop.f32.mrb[0].mxu0
      %v5530 = vadd.f32 0.0, %v5529
      %v5531 = vpop.f32.mrb[0].mxu0
      %5532 = vmatprep.mubr.bf16.mxu0 0
      %5533 = vmatmul.mubr.bf16.gmra.mrb[0].mxu0 %v5472
      %v5534 = vpop.f32.mrb[0].mxu0
      %v5535 = vadd.f32 0.0, %v5534
      %v5536 = vpop.f32.mrb[0].mxu0
      %v5537 = vpop.f32.mrb[0].mxu0
      %v5538 = vadd.f32 0.0, %v5537
      %v5539 = vpop.f32.mrb[0].mxu0
      %5540 = vmatprep.mubr.bf16.mxu0 0
      %5541 = vmatmul.mubr.bf16.gmra.mrb[0].mxu0 %v5475
      %v5542 = vpop.f32.mrb[0].mxu0
      %v5543 = vadd.f32 0.0, %v5542
      %v5544 = vpop.f32.mrb[0].mxu0
      %v5545 = vpop.f32.mrb[0].mxu0
      %v5546 = vadd.f32 0.0, %v5545
      %v5547 = vpop.f32.mrb[0].mxu0
      %5548 = vmatprep.mubr.bf16.mxu0 0
      %5549 = vmatmul.mubr.bf16.gmra.mrb[0].mxu0 %v5478
      %v5550 = vpop.f32.mrb[0].mxu0
      %v5551 = vadd.f32 0.0, %v5550
      %v5552 = vpop.f32.mrb[0].mxu0
      %v5553 = vpop.f32.mrb[0].mxu0
      %v5554 = vadd.f32 0.0, %v5553
      %v5555 = vpop.f32.mrb[0].mxu0
      %5556 = vmatprep.mubr.bf16.mxu0 0
      %5557 = vmatmul.mubr.bf16.gmra.mrb[0].mxu0 %v5481
      %v5558 = vpop.f32.mrb[0].mxu0
      %v5559 = vadd.f32 0.0, %v5558
      %v5560 = vpop.f32.mrb[0].mxu0
      %v5561 = vpop.f32.mrb[0].mxu0
      %v5562 = vadd.f32 0.0, %v5561
      %v5563 = vpop.f32.mrb[0].mxu0
      %5564 = vmatprep.mubr.bf16.mxu0 0
      %5565 = vmatmul.mubr.bf16.gmra.mrb[0].mxu0 %v5484
      %v5566 = vpop.f32.mrb[0].mxu0
      %v5567 = vadd.f32 0.0, %v5566
      %v5568 = vpop.f32.mrb[0].mxu0
      %v5569 = vpop.f32.mrb[0].mxu0
      %v5570 = vadd.f32 0.0, %v5569
      %v5571 = vpop.f32.mrb[0].mxu0
      %5572 = vmatprep.mubr.bf16.mxu0 0
      %5573 = vmatmul.mubr.bf16.gmra.mrb[0].mxu0 %v5487
      %v5574 = vpop.f32.mrb[0].mxu0
      %v5575 = vadd.f32 0.0, %v5574
      %v5576 = vpop.f32.mrb[0].mxu0
      %v5577 = vpop.f32.mrb[0].mxu0
      %v5578 = vpop.f32.mrb[0].mxu0
      %5579 = vdwg.mxu0
      %v5580 = vld [vmem:[%s177] sm:$0xff]
      %v5581 = vld [vmem:[%s177 + $0x8] sm:$0xff]
      %v5582 = vld [vmem:[%s177 + $0x10] sm:$0xff]
      %v5583 = vld [vmem:[%s177 + $0x18] sm:$0xff]
      %v5584 = vld [vmem:[%s177 + $0x20] sm:$0xff]
      %v5585 = vld [vmem:[%s177 + $0x28] sm:$0xff]
      %v5586 = vld [vmem:[%s177 + $0x30] sm:$0xff]
      %v5587 = vld [vmem:[%s177 + $0x38] sm:$0xff]
      %v5588 = vld [vmem:[%s177 + $0x40] sm:$0xff]
      %v5589 = vld [vmem:[%s177 + $0x48] sm:$0xff]
      %v5590 = vld [vmem:[%s177 + $0x50] sm:$0xff]
      %v5591 = vld [vmem:[%s177 + $0x58] sm:$0xff]
      %v5592 = vld [vmem:[%s177 + $0x60] sm:$0xf]
      %v5593 = vadd.f32 %v5580, %v5527
      %v5594 = vadd.f32 %v5581, %v5530
      %v5595 = vadd.f32 %v5582, %v5535
      %v5596 = vadd.f32 %v5583, %v5538
      %v5597 = vadd.f32 %v5584, %v5543
      %v5598 = vadd.f32 %v5585, %v5546
      %v5599 = vadd.f32 %v5586, %v5551
      %v5600 = vadd.f32 %v5587, %v5554
      %v5601 = vadd.f32 %v5588, %v5559
      %v5602 = vadd.f32 %v5589, %v5562
      %v5603 = vadd.f32 %v5590, %v5567
      %v5604 = vadd.f32 %v5591, %v5570
      %v5605 = vadd.f32 %v5592, %v5575
      %5606 = vst.msk [vmem:[%s177] sm:$0xff] %vm948, %v5593
      %5607 = vst.msk [vmem:[%s177 + $0x8] sm:$0xff] %vm948, %v5594
      %5608 = vst.msk [vmem:[%s177 + $0x10] sm:$0xff] %vm948, %v5595
      %5609 = vst.msk [vmem:[%s177 + $0x18] sm:$0xff] %vm948, %v5596
      %5610 = vst.msk [vmem:[%s177 + $0x20] sm:$0xff] %vm948, %v5597
      %5611 = vst.msk [vmem:[%s177 + $0x28] sm:$0xff] %vm948, %v5598
      %5612 = vst.msk [vmem:[%s177 + $0x30] sm:$0xff] %vm948, %v5599
      %5613 = vst.msk [vmem:[%s177 + $0x38] sm:$0xff] %vm948, %v5600
      %5614 = vst.msk [vmem:[%s177 + $0x40] sm:$0xff] %vm948, %v5601
      %5615 = vst.msk [vmem:[%s177 + $0x48] sm:$0xff] %vm948, %v5602
      %5616 = vst.msk [vmem:[%s177 + $0x50] sm:$0xff] %vm948, %v5603
      %5617 = vst.msk [vmem:[%s177 + $0x58] sm:$0xff] %vm948, %v5604
      %5618 = vst.msk [vmem:[%s177 + $0x60] sm:$0xf] %vm961, %v5605
      %v5619 = vld [vmem:[%s313 + $0x2] sm:$0xff]
      %v5620 = vld [vmem:[%s313 + $0xa] sm:$0x3]
      %v5621 = vld [vmem:[%s313 + $0x12] sm:$0xff]
      %v5622 = vld [vmem:[%s313 + $0x1a] sm:$0x3]
      %v5623 = vld [vmem:[%s313 + $0x22] sm:$0xff]
      %v5624 = vld [vmem:[%s313 + $0x2a] sm:$0x3]
      %v5625 = vld [vmem:[%s313 + $0x32] sm:$0xff]
      %v5626 = vld [vmem:[%s313 + $0x3a] sm:$0x3]
      %v5627 = vld [vmem:[%s313 + $0x42] sm:$0xff]
      %v5628 = vld [vmem:[%s313 + $0x4a] sm:$0x3]
      %v5629 = vld [vmem:[%s313 + $0x52] sm:$0xff]
      %v5630 = vld [vmem:[%s313 + $0x5a] sm:$0x3]
      %v5631 = vld [vmem:[%s313 + $0x62] sm:$0xff]
      %v5632 = vld [vmem:[%s313 + $0x6a] sm:$0x3]
      %v5633 = vld [vmem:[%s313 + $0x72] sm:$0xff]
      %v5634 = vld [vmem:[%s313 + $0x7a] sm:$0x3]
      %v5635 = vld [vmem:[%s313 + $0x82] sm:$0xff]
      %v5636 = vld [vmem:[%s313 + $0x8a] sm:$0x3]
      %v5637 = vld [vmem:[%s313 + $0x92] sm:$0xff]
      %v5638 = vld [vmem:[%s313 + $0x9a] sm:$0x3]
      %v5659 = vcombine.high %v5619, %v5619
      %v5661 = vunpack.c.l.s4 1983009808
      %v5662 = vunpack.c.0.s8 %v5661
      %v5663 = vlaneseq
      %v5664 = vshrl.u32 %v5663, 7
      %v5665 = vsub.s32 %v5662, %v5664
      %v5666 = vrot.slane %v5619, %v5665
      %v5668 = vunpack.c.l.s4 1983009808
      %v5669 = vunpack.c.0.s8 %v5668
      %v5670 = vlaneseq
      %v5671 = vshrl.u32 %v5670, 7
      %v5672 = vsub.s32 %v5669, %v5671
      %v5673 = vrot.slane %v5659, %v5672
      %v5674 = vcombine.high %v5666, %v5666
      %v5675 = vcombine.high %v5673, %v5673
      %v5677 = vunpack.c.l.s4 1983009808
      %v5678 = vunpack.c.0.s8 %v5677
      %v5679 = vlaneseq
      %v5680 = vshrl.u32 %v5679, 7
      %v5681 = vsub.s32 %v5678, %v5680
      %v5682 = vrot.slane %v5620, %v5681
      %v5683 = vcombine.high %v5621, %v5621
      %v5685 = vunpack.c.l.s4 1983009808
      %v5686 = vunpack.c.0.s8 %v5685
      %v5687 = vlaneseq
      %v5688 = vshrl.u32 %v5687, 7
      %v5689 = vsub.s32 %v5686, %v5688
      %v5690 = vrot.slane %v5621, %v5689
      %v5692 = vunpack.c.l.s4 1983009808
      %v5693 = vunpack.c.0.s8 %v5692
      %v5694 = vlaneseq
      %v5695 = vshrl.u32 %v5694, 7
      %v5696 = vsub.s32 %v5693, %v5695
      %v5697 = vrot.slane %v5683, %v5696
      %v5698 = vcombine.high %v5690, %v5690
      %v5699 = vcombine.high %v5697, %v5697
      %v5701 = vunpack.c.l.s4 1983009808
      %v5702 = vunpack.c.0.s8 %v5701
      %v5703 = vlaneseq
      %v5704 = vshrl.u32 %v5703, 7
      %v5705 = vsub.s32 %v5702, %v5704
      %v5706 = vrot.slane %v5622, %v5705
      %v5707 = vcombine.high %v5623, %v5623
      %v5709 = vunpack.c.l.s4 1983009808
      %v5710 = vunpack.c.0.s8 %v5709
      %v5711 = vlaneseq
      %v5712 = vshrl.u32 %v5711, 7
      %v5713 = vsub.s32 %v5710, %v5712
      %v5714 = vrot.slane %v5623, %v5713
      %v5716 = vunpack.c.l.s4 1983009808
      %v5717 = vunpack.c.0.s8 %v5716
      %v5718 = vlaneseq
      %v5719 = vshrl.u32 %v5718, 7
      %v5720 = vsub.s32 %v5717, %v5719
      %v5721 = vrot.slane %v5707, %v5720
      %v5722 = vcombine.high %v5714, %v5714
      %v5723 = vcombine.high %v5721, %v5721
      %v5725 = vunpack.c.l.s4 1983009808
      %v5726 = vunpack.c.0.s8 %v5725
      %v5727 = vlaneseq
      %v5728 = vshrl.u32 %v5727, 7
      %v5729 = vsub.s32 %v5726, %v5728
      %v5730 = vrot.slane %v5624, %v5729
      %v5731 = vcombine.high %v5625, %v5625
      %v5733 = vunpack.c.l.s4 1983009808
      %v5734 = vunpack.c.0.s8 %v5733
      %v5735 = vlaneseq
      %v5736 = vshrl.u32 %v5735, 7
      %v5737 = vsub.s32 %v5734, %v5736
      %v5738 = vrot.slane %v5625, %v5737
      %v5740 = vunpack.c.l.s4 1983009808
      %v5741 = vunpack.c.0.s8 %v5740
      %v5742 = vlaneseq
      %v5743 = vshrl.u32 %v5742, 7
      %v5744 = vsub.s32 %v5741, %v5743
      %v5745 = vrot.slane %v5731, %v5744
      %v5746 = vcombine.high %v5738, %v5738
      %v5747 = vcombine.high %v5745, %v5745
      %v5749 = vunpack.c.l.s4 1983009808
      %v5750 = vunpack.c.0.s8 %v5749
      %v5751 = vlaneseq
      %v5752 = vshrl.u32 %v5751, 7
      %v5753 = vsub.s32 %v5750, %v5752
      %v5754 = vrot.slane %v5626, %v5753
      %v5755 = vcombine.high %v5627, %v5627
      %v5757 = vunpack.c.l.s4 1983009808
      %v5758 = vunpack.c.0.s8 %v5757
      %v5759 = vlaneseq
      %v5760 = vshrl.u32 %v5759, 7
      %v5761 = vsub.s32 %v5758, %v5760
      %v5762 = vrot.slane %v5627, %v5761
      %v5764 = vunpack.c.l.s4 1983009808
      %v5765 = vunpack.c.0.s8 %v5764
      %v5766 = vlaneseq
      %v5767 = vshrl.u32 %v5766, 7
      %v5768 = vsub.s32 %v5765, %v5767
      %v5769 = vrot.slane %v5755, %v5768
      %v5770 = vcombine.high %v5762, %v5762
      %v5771 = vcombine.high %v5769, %v5769
      %v5773 = vunpack.c.l.s4 1983009808
      %v5774 = vunpack.c.0.s8 %v5773
      %v5775 = vlaneseq
      %v5776 = vshrl.u32 %v5775, 7
      %v5777 = vsub.s32 %v5774, %v5776
      %v5778 = vrot.slane %v5628, %v5777
      %v5779 = vcombine.high %v5629, %v5629
      %v5781 = vunpack.c.l.s4 1983009808
      %v5782 = vunpack.c.0.s8 %v5781
      %v5783 = vlaneseq
      %v5784 = vshrl.u32 %v5783, 7
      %v5785 = vsub.s32 %v5782, %v5784
      %v5786 = vrot.slane %v5629, %v5785
      %v5788 = vunpack.c.l.s4 1983009808
      %v5789 = vunpack.c.0.s8 %v5788
      %v5790 = vlaneseq
      %v5791 = vshrl.u32 %v5790, 7
      %v5792 = vsub.s32 %v5789, %v5791
      %v5793 = vrot.slane %v5779, %v5792
      %v5794 = vcombine.high %v5786, %v5786
      %v5795 = vcombine.high %v5793, %v5793
      %v5797 = vunpack.c.l.s4 1983009808
      %v5798 = vunpack.c.0.s8 %v5797
      %v5799 = vlaneseq
      %v5800 = vshrl.u32 %v5799, 7
      %v5801 = vsub.s32 %v5798, %v5800
      %v5802 = vrot.slane %v5630, %v5801
      %v5803 = vcombine.high %v5631, %v5631
      %v5805 = vunpack.c.l.s4 1983009808
      %v5806 = vunpack.c.0.s8 %v5805
      %v5807 = vlaneseq
      %v5808 = vshrl.u32 %v5807, 7
      %v5809 = vsub.s32 %v5806, %v5808
      %v5810 = vrot.slane %v5631, %v5809
      %v5812 = vunpack.c.l.s4 1983009808
      %v5813 = vunpack.c.0.s8 %v5812
      %v5814 = vlaneseq
      %v5815 = vshrl.u32 %v5814, 7
      %v5816 = vsub.s32 %v5813, %v5815
      %v5817 = vrot.slane %v5803, %v5816
      %v5818 = vcombine.high %v5810, %v5810
      %v5819 = vcombine.high %v5817, %v5817
      %v5821 = vunpack.c.l.s4 1983009808
      %v5822 = vunpack.c.0.s8 %v5821
      %v5823 = vlaneseq
      %v5824 = vshrl.u32 %v5823, 7
      %v5825 = vsub.s32 %v5822, %v5824
      %v5826 = vrot.slane %v5632, %v5825
      %v5827 = vcombine.high %v5633, %v5633
      %v5829 = vunpack.c.l.s4 1983009808
      %v5830 = vunpack.c.0.s8 %v5829
      %v5831 = vlaneseq
      %v5832 = vshrl.u32 %v5831, 7
      %v5833 = vsub.s32 %v5830, %v5832
      %v5834 = vrot.slane %v5633, %v5833
      %v5836 = vunpack.c.l.s4 1983009808
      %v5837 = vunpack.c.0.s8 %v5836
      %v5838 = vlaneseq
      %v5839 = vshrl.u32 %v5838, 7
      %v5840 = vsub.s32 %v5837, %v5839
      %v5841 = vrot.slane %v5827, %v5840
      %v5842 = vcombine.high %v5834, %v5834
      %v5843 = vcombine.high %v5841, %v5841
      %v5845 = vunpack.c.l.s4 1983009808
      %v5846 = vunpack.c.0.s8 %v5845
      %v5847 = vlaneseq
      %v5848 = vshrl.u32 %v5847, 7
      %v5849 = vsub.s32 %v5846, %v5848
      %v5850 = vrot.slane %v5634, %v5849
      %v5851 = vcombine.high %v5635, %v5635
      %v5853 = vunpack.c.l.s4 1983009808
      %v5854 = vunpack.c.0.s8 %v5853
      %v5855 = vlaneseq
      %v5856 = vshrl.u32 %v5855, 7
      %v5857 = vsub.s32 %v5854, %v5856
      %v5858 = vrot.slane %v5635, %v5857
      %v5860 = vunpack.c.l.s4 1983009808
      %v5861 = vunpack.c.0.s8 %v5860
      %v5862 = vlaneseq
      %v5863 = vshrl.u32 %v5862, 7
      %v5864 = vsub.s32 %v5861, %v5863
      %v5865 = vrot.slane %v5851, %v5864
      %v5866 = vcombine.high %v5858, %v5858
      %v5867 = vcombine.high %v5865, %v5865
      %v5869 = vunpack.c.l.s4 1983009808
      %v5870 = vunpack.c.0.s8 %v5869
      %v5871 = vlaneseq
      %v5872 = vshrl.u32 %v5871, 7
      %v5873 = vsub.s32 %v5870, %v5872
      %v5874 = vrot.slane %v5636, %v5873
      %v5875 = vcombine.high %v5637, %v5637
      %v5877 = vunpack.c.l.s4 1983009808
      %v5878 = vunpack.c.0.s8 %v5877
      %v5879 = vlaneseq
      %v5880 = vshrl.u32 %v5879, 7
      %v5881 = vsub.s32 %v5878, %v5880
      %v5882 = vrot.slane %v5637, %v5881
      %v5884 = vunpack.c.l.s4 1983009808
      %v5885 = vunpack.c.0.s8 %v5884
      %v5886 = vlaneseq
      %v5887 = vshrl.u32 %v5886, 7
      %v5888 = vsub.s32 %v5885, %v5887
      %v5889 = vrot.slane %v5875, %v5888
      %v5890 = vcombine.high %v5882, %v5882
      %v5891 = vcombine.high %v5889, %v5889
      %v5893 = vunpack.c.l.s4 1983009808
      %v5894 = vunpack.c.0.s8 %v5893
      %v5895 = vlaneseq
      %v5896 = vshrl.u32 %v5895, 7
      %v5897 = vsub.s32 %v5894, %v5896
      %v5898 = vrot.slane %v5638, %v5897
      %v5899 = vcombine.low %v5666, %v5674
      %v5900 = vcombine.low %v5673, %v5675
      %v5902 = vunpack.c.l.s4 1983009808
      %v5903 = vunpack.c.0.s8 %v5902
      %v5904 = vlaneseq
      %v5905 = vshrl.u32 %v5904, 7
      %v5906 = vsub.s32 %v5903, %v5905
      %v5907 = vrot.slane %v5899, %v5906
      %v5909 = vunpack.c.l.s4 1983009808
      %v5910 = vunpack.c.0.s8 %v5909
      %v5911 = vlaneseq
      %v5912 = vshrl.u32 %v5911, 7
      %v5913 = vsub.s32 %v5910, %v5912
      %v5914 = vrot.slane %v5900, %v5913
      %v5915 = vcombine.low %v5907, %v5914
      %v5916 = vcombine.low %v5682, %v5690
      %v5917 = vcombine.low %v5698, %v5697
      %v5919 = vunpack.c.l.s4 1983009808
      %v5920 = vunpack.c.0.s8 %v5919
      %v5921 = vlaneseq
      %v5922 = vshrl.u32 %v5921, 7
      %v5923 = vsub.s32 %v5920, %v5922
      %v5924 = vrot.slane %v5916, %v5923
      %v5926 = vunpack.c.l.s4 1983009808
      %v5927 = vunpack.c.0.s8 %v5926
      %v5928 = vlaneseq
      %v5929 = vshrl.u32 %v5928, 7
      %v5930 = vsub.s32 %v5927, %v5929
      %v5931 = vrot.slane %v5917, %v5930
      %v5932 = vcombine.low %v5924, %v5931
      %v5933 = vcombine.low %v5699, %v5706
      %v5934 = vcombine.low %v5714, %v5722
      %v5936 = vunpack.c.l.s4 1983009808
      %v5937 = vunpack.c.0.s8 %v5936
      %v5938 = vlaneseq
      %v5939 = vshrl.u32 %v5938, 7
      %v5940 = vsub.s32 %v5937, %v5939
      %v5941 = vrot.slane %v5933, %v5940
      %v5943 = vunpack.c.l.s4 1983009808
      %v5944 = vunpack.c.0.s8 %v5943
      %v5945 = vlaneseq
      %v5946 = vshrl.u32 %v5945, 7
      %v5947 = vsub.s32 %v5944, %v5946
      %v5948 = vrot.slane %v5934, %v5947
      %v5949 = vcombine.low %v5941, %v5948
      %v5950 = vcombine.low %v5721, %v5723
      %v5951 = vcombine.low %v5730, %v5738
      %v5953 = vunpack.c.l.s4 1983009808
      %v5954 = vunpack.c.0.s8 %v5953
      %v5955 = vlaneseq
      %v5956 = vshrl.u32 %v5955, 7
      %v5957 = vsub.s32 %v5954, %v5956
      %v5958 = vrot.slane %v5950, %v5957
      %v5960 = vunpack.c.l.s4 1983009808
      %v5961 = vunpack.c.0.s8 %v5960
      %v5962 = vlaneseq
      %v5963 = vshrl.u32 %v5962, 7
      %v5964 = vsub.s32 %v5961, %v5963
      %v5965 = vrot.slane %v5951, %v5964
      %v5966 = vcombine.low %v5958, %v5965
      %v5967 = vcombine.low %v5746, %v5745
      %v5968 = vcombine.low %v5747, %v5754
      %v5970 = vunpack.c.l.s4 1983009808
      %v5971 = vunpack.c.0.s8 %v5970
      %v5972 = vlaneseq
      %v5973 = vshrl.u32 %v5972, 7
      %v5974 = vsub.s32 %v5971, %v5973
      %v5975 = vrot.slane %v5967, %v5974
      %v5977 = vunpack.c.l.s4 1983009808
      %v5978 = vunpack.c.0.s8 %v5977
      %v5979 = vlaneseq
      %v5980 = vshrl.u32 %v5979, 7
      %v5981 = vsub.s32 %v5978, %v5980
      %v5982 = vrot.slane %v5968, %v5981
      %v5983 = vcombine.low %v5975, %v5982
      %v5984 = vcombine.low %v5762, %v5770
      %v5985 = vcombine.low %v5769, %v5771
      %v5987 = vunpack.c.l.s4 1983009808
      %v5988 = vunpack.c.0.s8 %v5987
      %v5989 = vlaneseq
      %v5990 = vshrl.u32 %v5989, 7
      %v5991 = vsub.s32 %v5988, %v5990
      %v5992 = vrot.slane %v5984, %v5991
      %v5994 = vunpack.c.l.s4 1983009808
      %v5995 = vunpack.c.0.s8 %v5994
      %v5996 = vlaneseq
      %v5997 = vshrl.u32 %v5996, 7
      %v5998 = vsub.s32 %v5995, %v5997
      %v5999 = vrot.slane %v5985, %v5998
      %v6000 = vcombine.low %v5992, %v5999
      %v6001 = vcombine.low %v5778, %v5786
      %v6002 = vcombine.low %v5794, %v5793
      %v6004 = vunpack.c.l.s4 1983009808
      %v6005 = vunpack.c.0.s8 %v6004
      %v6006 = vlaneseq
      %v6007 = vshrl.u32 %v6006, 7
      %v6008 = vsub.s32 %v6005, %v6007
      %v6009 = vrot.slane %v6001, %v6008
      %v6011 = vunpack.c.l.s4 1983009808
      %v6012 = vunpack.c.0.s8 %v6011
      %v6013 = vlaneseq
      %v6014 = vshrl.u32 %v6013, 7
      %v6015 = vsub.s32 %v6012, %v6014
      %v6016 = vrot.slane %v6002, %v6015
      %v6017 = vcombine.low %v6009, %v6016
      %v6018 = vcombine.low %v5795, %v5802
      %v6019 = vcombine.low %v5810, %v5818
      %v6021 = vunpack.c.l.s4 1983009808
      %v6022 = vunpack.c.0.s8 %v6021
      %v6023 = vlaneseq
      %v6024 = vshrl.u32 %v6023, 7
      %v6025 = vsub.s32 %v6022, %v6024
      %v6026 = vrot.slane %v6018, %v6025
      %v6028 = vunpack.c.l.s4 1983009808
      %v6029 = vunpack.c.0.s8 %v6028
      %v6030 = vlaneseq
      %v6031 = vshrl.u32 %v6030, 7
      %v6032 = vsub.s32 %v6029, %v6031
      %v6033 = vrot.slane %v6019, %v6032
      %v6034 = vcombine.low %v6026, %v6033
      %v6035 = vcombine.low %v5817, %v5819
      %v6036 = vcombine.low %v5826, %v5834
      %v6038 = vunpack.c.l.s4 1983009808
      %v6039 = vunpack.c.0.s8 %v6038
      %v6040 = vlaneseq
      %v6041 = vshrl.u32 %v6040, 7
      %v6042 = vsub.s32 %v6039, %v6041
      %v6043 = vrot.slane %v6035, %v6042
      %v6045 = vunpack.c.l.s4 1983009808
      %v6046 = vunpack.c.0.s8 %v6045
      %v6047 = vlaneseq
      %v6048 = vshrl.u32 %v6047, 7
      %v6049 = vsub.s32 %v6046, %v6048
      %v6050 = vrot.slane %v6036, %v6049
      %v6051 = vcombine.low %v6043, %v6050
      %v6052 = vcombine.low %v5842, %v5841
      %v6053 = vcombine.low %v5843, %v5850
      %v6055 = vunpack.c.l.s4 1983009808
      %v6056 = vunpack.c.0.s8 %v6055
      %v6057 = vlaneseq
      %v6058 = vshrl.u32 %v6057, 7
      %v6059 = vsub.s32 %v6056, %v6058
      %v6060 = vrot.slane %v6052, %v6059
      %v6062 = vunpack.c.l.s4 1983009808
      %v6063 = vunpack.c.0.s8 %v6062
      %v6064 = vlaneseq
      %v6065 = vshrl.u32 %v6064, 7
      %v6066 = vsub.s32 %v6063, %v6065
      %v6067 = vrot.slane %v6053, %v6066
      %v6068 = vcombine.low %v6060, %v6067
      %v6069 = vcombine.low %v5858, %v5866
      %v6070 = vcombine.low %v5865, %v5867
      %v6072 = vunpack.c.l.s4 1983009808
      %v6073 = vunpack.c.0.s8 %v6072
      %v6074 = vlaneseq
      %v6075 = vshrl.u32 %v6074, 7
      %v6076 = vsub.s32 %v6073, %v6075
      %v6077 = vrot.slane %v6069, %v6076
      %v6079 = vunpack.c.l.s4 1983009808
      %v6080 = vunpack.c.0.s8 %v6079
      %v6081 = vlaneseq
      %v6082 = vshrl.u32 %v6081, 7
      %v6083 = vsub.s32 %v6080, %v6082
      %v6084 = vrot.slane %v6070, %v6083
      %v6085 = vcombine.low %v6077, %v6084
      %v6086 = vcombine.low %v5874, %v5882
      %v6087 = vcombine.low %v5890, %v5889
      %v6089 = vunpack.c.l.s4 1983009808
      %v6090 = vunpack.c.0.s8 %v6089
      %v6091 = vlaneseq
      %v6092 = vshrl.u32 %v6091, 7
      %v6093 = vsub.s32 %v6090, %v6092
      %v6094 = vrot.slane %v6086, %v6093
      %v6096 = vunpack.c.l.s4 1983009808
      %v6097 = vunpack.c.0.s8 %v6096
      %v6098 = vlaneseq
      %v6099 = vshrl.u32 %v6098, 7
      %v6100 = vsub.s32 %v6097, %v6099
      %v6101 = vrot.slane %v6087, %v6100
      %v6102 = vcombine.low %v6094, %v6101
      %v6103 = vcombine.low %v5891, %v5898
      %v6105 = vunpack.c.l.s4 1983009808
      %v6106 = vunpack.c.0.s8 %v6105
      %v6107 = vlaneseq
      %v6108 = vshrl.u32 %v6107, 7
      %v6109 = vsub.s32 %v6106, %v6108
      %v6110 = vrot.slane %v6103, %v6109
      %v6124 = vpack.c.bf16 %v5932, %v5915
      %v6125 = vpack.c.bf16 %v5966, %v5949
      %v6126 = vpack.c.bf16 %v6000, %v5983
      %v6127 = vpack.c.bf16 %v6034, %v6017
      %v6128 = vpack.c.bf16 %v6068, %v6051
      %v6129 = vpack.c.bf16 %v6102, %v6085
      %v6130 = vpack.c.bf16 %v6110, %v6110
      %s6131 = scalar_lea.vmem %s1, 16
      %v6132 = vld [vmem:[%s6131] sm:$0x3]
      %v6134 = vsel %vm287, %v6124, 0
      %v6137 = vsel %vm287, %v6125, 0
      %v6140 = vsel %vm287, %v6126, 0
      %v6143 = vsel %vm287, %v6127, 0
      %v6146 = vsel %vm287, %v6128, 0
      %v6149 = vsel %vm287, %v6129, 0
      %v6152 = vsel %vm287, %v6130, 0
      %v6155 = vsel %vm856, %v6132, 0
      %6157 = vmatprep.subr.bf16.mxu0 0
      %6158 = vmatpush1.bf16.msra.mxu0 %v6155
      %6159 = vmatprep.subr.bf16.mxu0 0
      %6160 = vmatpush1.bf16.msra.mxu0 0
      %6161 = vmatprep.subr.bf16.mxu0 0
      %6162 = vmatpush1.bf16.msra.mxu0 0
      %6163 = vmatprep.subr.bf16.mxu0 0
      %6164 = vmatpush1.bf16.msra.mxu0 0
      %6165 = vmatprep.subr.bf16.mxu0 0
      %6166 = vmatpush1.bf16.msra.mxu0 0
      %6167 = vmatprep.subr.bf16.mxu0 0
      %6168 = vmatpush1.bf16.msra.mxu0 0
      %6169 = vmatprep.subr.bf16.mxu0 0
      %6170 = vmatpush1.bf16.msra.mxu0 0
      %6171 = vmatprep.subr.bf16.mxu0 0
      %6172 = vmatpush1.bf16.msra.mxu0 0
      %6173 = vmatprep.subr.bf16.mxu0 0
      %6174 = vmatpush1.bf16.msra.mxu0 0
      %6175 = vmatprep.subr.bf16.mxu0 0
      %6176 = vmatpush1.bf16.msra.mxu0 0
      %6177 = vmatprep.subr.bf16.mxu0 0
      %6178 = vmatpush1.bf16.msra.mxu0 0
      %6179 = vmatprep.subr.bf16.mxu0 0
      %6180 = vmatpush1.bf16.msra.mxu0 0
      %6181 = vmatprep.subr.bf16.mxu0 0
      %6182 = vmatpush1.bf16.msra.mxu0 0
      %6183 = vmatprep.subr.bf16.mxu0 0
      %6184 = vmatpush1.bf16.msra.mxu0 0
      %6185 = vmatprep.subr.bf16.mxu0 0
      %6186 = vmatpush1.bf16.msra.mxu0 0
      %6187 = vmatprep.subr.bf16.mxu0 0
      %6188 = vmatpush1.bf16.msra.mxu0 0
      %6189 = vmatprep.mubr.bf16.mxu0 0
      %6190 = vmatmul.mubr.bf16.gmra.mrb[0].mxu0 %v6134
      %v6191 = vpop.f32.mrb[0].mxu0
      %v6192 = vadd.f32 0.0, %v6191
      %v6193 = vpop.f32.mrb[0].mxu0
      %v6194 = vpop.f32.mrb[0].mxu0
      %v6195 = vadd.f32 0.0, %v6194
      %v6196 = vpop.f32.mrb[0].mxu0
      %6197 = vmatprep.mubr.bf16.mxu0 0
      %6198 = vmatmul.mubr.bf16.gmra.mrb[0].mxu0 %v6137
      %v6199 = vpop.f32.mrb[0].mxu0
      %v6200 = vadd.f32 0.0, %v6199
      %v6201 = vpop.f32.mrb[0].mxu0
      %v6202 = vpop.f32.mrb[0].mxu0
      %v6203 = vadd.f32 0.0, %v6202
      %v6204 = vpop.f32.mrb[0].mxu0
      %6205 = vmatprep.mubr.bf16.mxu0 0
      %6206 = vmatmul.mubr.bf16.gmra.mrb[0].mxu0 %v6140
      %v6207 = vpop.f32.mrb[0].mxu0
      %v6208 = vadd.f32 0.0, %v6207
      %v6209 = vpop.f32.mrb[0].mxu0
      %v6210 = vpop.f32.mrb[0].mxu0
      %v6211 = vadd.f32 0.0, %v6210
      %v6212 = vpop.f32.mrb[0].mxu0
      %6213 = vmatprep.mubr.bf16.mxu0 0
      %6214 = vmatmul.mubr.bf16.gmra.mrb[0].mxu0 %v6143
      %v6215 = vpop.f32.mrb[0].mxu0
      %v6216 = vadd.f32 0.0, %v6215
      %v6217 = vpop.f32.mrb[0].mxu0
      %v6218 = vpop.f32.mrb[0].mxu0
      %v6219 = vadd.f32 0.0, %v6218
      %v6220 = vpop.f32.mrb[0].mxu0
      %6221 = vmatprep.mubr.bf16.mxu0 0
      %6222 = vmatmul.mubr.bf16.gmra.mrb[0].mxu0 %v6146
      %v6223 = vpop.f32.mrb[0].mxu0
      %v6224 = vadd.f32 0.0, %v6223
      %v6225 = vpop.f32.mrb[0].mxu0
      %v6226 = vpop.f32.mrb[0].mxu0
      %v6227 = vadd.f32 0.0, %v6226
      %v6228 = vpop.f32.mrb[0].mxu0
      %6229 = vmatprep.mubr.bf16.mxu0 0
      %6230 = vmatmul.mubr.bf16.gmra.mrb[0].mxu0 %v6149
      %v6231 = vpop.f32.mrb[0].mxu0
      %v6232 = vadd.f32 0.0, %v6231
      %v6233 = vpop.f32.mrb[0].mxu0
      %v6234 = vpop.f32.mrb[0].mxu0
      %v6235 = vadd.f32 0.0, %v6234
      %v6236 = vpop.f32.mrb[0].mxu0
      %6237 = vmatprep.mubr.bf16.mxu0 0
      %6238 = vmatmul.mubr.bf16.gmra.mrb[0].mxu0 %v6152
      %v6239 = vpop.f32.mrb[0].mxu0
      %v6240 = vadd.f32 0.0, %v6239
      %v6241 = vpop.f32.mrb[0].mxu0
      %v6242 = vpop.f32.mrb[0].mxu0
      %v6243 = vpop.f32.mrb[0].mxu0
      %6244 = vdwg.mxu0
      %v6245 = vld [vmem:[%s177] sm:$0xff]
      %v6246 = vld [vmem:[%s177 + $0x8] sm:$0xff]
      %v6247 = vld [vmem:[%s177 + $0x10] sm:$0xff]
      %v6248 = vld [vmem:[%s177 + $0x18] sm:$0xff]
      %v6249 = vld [vmem:[%s177 + $0x20] sm:$0xff]
      %v6250 = vld [vmem:[%s177 + $0x28] sm:$0xff]
      %v6251 = vld [vmem:[%s177 + $0x30] sm:$0xff]
      %v6252 = vld [vmem:[%s177 + $0x38] sm:$0xff]
      %v6253 = vld [vmem:[%s177 + $0x40] sm:$0xff]
      %v6254 = vld [vmem:[%s177 + $0x48] sm:$0xff]
      %v6255 = vld [vmem:[%s177 + $0x50] sm:$0xff]
      %v6256 = vld [vmem:[%s177 + $0x58] sm:$0xff]
      %v6257 = vld [vmem:[%s177 + $0x60] sm:$0xf]
      %v6258 = vadd.f32 %v6245, %v6192
      %v6259 = vadd.f32 %v6246, %v6195
      %v6260 = vadd.f32 %v6247, %v6200
      %v6261 = vadd.f32 %v6248, %v6203
      %v6262 = vadd.f32 %v6249, %v6208
      %v6263 = vadd.f32 %v6250, %v6211
      %v6264 = vadd.f32 %v6251, %v6216
      %v6265 = vadd.f32 %v6252, %v6219
      %v6266 = vadd.f32 %v6253, %v6224
      %v6267 = vadd.f32 %v6254, %v6227
      %v6268 = vadd.f32 %v6255, %v6232
      %v6269 = vadd.f32 %v6256, %v6235
      %v6270 = vadd.f32 %v6257, %v6240
      %6271 = vst.msk [vmem:[%s177] sm:$0xff] %vm948, %v6258
      %6272 = vst.msk [vmem:[%s177 + $0x8] sm:$0xff] %vm948, %v6259
      %6273 = vst.msk [vmem:[%s177 + $0x10] sm:$0xff] %vm948, %v6260
      %6274 = vst.msk [vmem:[%s177 + $0x18] sm:$0xff] %vm948, %v6261
      %6275 = vst.msk [vmem:[%s177 + $0x20] sm:$0xff] %vm948, %v6262
      %6276 = vst.msk [vmem:[%s177 + $0x28] sm:$0xff] %vm948, %v6263
      %6277 = vst.msk [vmem:[%s177 + $0x30] sm:$0xff] %vm948, %v6264
      %6278 = vst.msk [vmem:[%s177 + $0x38] sm:$0xff] %vm948, %v6265
      %6279 = vst.msk [vmem:[%s177 + $0x40] sm:$0xff] %vm948, %v6266
      %6280 = vst.msk [vmem:[%s177 + $0x48] sm:$0xff] %vm948, %v6267
      %6281 = vst.msk [vmem:[%s177 + $0x50] sm:$0xff] %vm948, %v6268
      %6282 = vst.msk [vmem:[%s177 + $0x58] sm:$0xff] %vm948, %v6269
      %6283 = vst.msk [vmem:[%s177 + $0x60] sm:$0xf] %vm961, %v6270
      %v6284 = vld [vmem:[%s177] sm:$0xff]
      %v6285 = vld [vmem:[%s177 + $0x8] sm:$0xff]
      %v6286 = vld [vmem:[%s177 + $0x10] sm:$0xff]
      %v6287 = vld [vmem:[%s177 + $0x18] sm:$0xff]
      %v6288 = vld [vmem:[%s177 + $0x20] sm:$0xff]
      %v6289 = vld [vmem:[%s177 + $0x28] sm:$0xff]
      %v6290 = vld [vmem:[%s177 + $0x30] sm:$0xff]
      %v6291 = vld [vmem:[%s177 + $0x38] sm:$0xff]
      %v6292 = vld [vmem:[%s177 + $0x40] sm:$0xff]
      %v6293 = vld [vmem:[%s177 + $0x48] sm:$0xff]
      %v6294 = vld [vmem:[%s177 + $0x50] sm:$0xff]
      %v6295 = vld [vmem:[%s177 + $0x58] sm:$0xff]
      %v6296 = vld [vmem:[%s177 + $0x60] sm:$0xf]
      %v6297 = vsel %vm948, %v6284, 0.0
      %v6298 = vsel %vm948, %v6285, 0.0
      %v6299 = vadd.f32 %v6297, %v6298
      %v6300 = vsel %vm948, %v6286, 0.0
      %v6301 = vadd.f32 %v6299, %v6300
      %v6302 = vsel %vm948, %v6287, 0.0
      %v6303 = vadd.f32 %v6301, %v6302
      %v6304 = vsel %vm948, %v6288, 0.0
      %v6305 = vadd.f32 %v6303, %v6304
      %v6306 = vsel %vm948, %v6289, 0.0
      %v6307 = vadd.f32 %v6305, %v6306
      %v6308 = vsel %vm948, %v6290, 0.0
      %v6309 = vadd.f32 %v6307, %v6308
      %v6310 = vsel %vm948, %v6291, 0.0
      %v6311 = vadd.f32 %v6309, %v6310
      %v6312 = vsel %vm948, %v6292, 0.0
      %v6313 = vadd.f32 %v6311, %v6312
      %v6314 = vsel %vm948, %v6293, 0.0
      %v6315 = vadd.f32 %v6313, %v6314
      %v6316 = vsel %vm948, %v6294, 0.0
      %v6317 = vadd.f32 %v6315, %v6316
      %v6318 = vsel %vm948, %v6295, 0.0
      %v6319 = vadd.f32 %v6317, %v6318
      %v6320 = vsel %vm961, %v6296, 0.0
      %v6321 = vadd.f32 %v6319, %v6320
      %v6322 = vrot.slane %v6321, 4
      %v6323 = vadd.f32 %v6321, %v6322
      %v6324 = vrot.slane %v6323, 2
      %v6325 = vadd.f32 %v6323, %v6324
      %v6326 = vrot.slane %v6325, 1
      %v6327 = vadd.f32 %v6325, %v6326
      %vm6328 = vcmask 57344
      %6329 = vst.msk [vmem:[%s181] sm:$0x1] %vm6328, %v6327
      %v6330 = vmul.f32 %v6284, %v6284
      %v6331 = vmul.f32 %v6285, %v6285
      %v6332 = vmul.f32 %v6286, %v6286
      %v6333 = vmul.f32 %v6287, %v6287
      %v6334 = vmul.f32 %v6288, %v6288
      %v6335 = vmul.f32 %v6289, %v6289
      %v6336 = vmul.f32 %v6290, %v6290
      %v6337 = vmul.f32 %v6291, %v6291
      %v6338 = vmul.f32 %v6292, %v6292
      %v6339 = vmul.f32 %v6293, %v6293
      %v6340 = vmul.f32 %v6294, %v6294
      %v6341 = vmul.f32 %v6295, %v6295
      %v6342 = vmul.f32 %v6296, %v6296
      %v6343 = vsel %vm948, %v6330, 0.0
      %v6344 = vsel %vm948, %v6331, 0.0
      %v6345 = vadd.f32 %v6343, %v6344
      %v6346 = vsel %vm948, %v6332, 0.0
      %v6347 = vadd.f32 %v6345, %v6346
      %v6348 = vsel %vm948, %v6333, 0.0
      %v6349 = vadd.f32 %v6347, %v6348
      %v6350 = vsel %vm948, %v6334, 0.0
      %v6351 = vadd.f32 %v6349, %v6350
      %v6352 = vsel %vm948, %v6335, 0.0
      %v6353 = vadd.f32 %v6351, %v6352
      %v6354 = vsel %vm948, %v6336, 0.0
      %v6355 = vadd.f32 %v6353, %v6354
      %v6356 = vsel %vm948, %v6337, 0.0
      %v6357 = vadd.f32 %v6355, %v6356
      %v6358 = vsel %vm948, %v6338, 0.0
      %v6359 = vadd.f32 %v6357, %v6358
      %v6360 = vsel %vm948, %v6339, 0.0
      %v6361 = vadd.f32 %v6359, %v6360
      %v6362 = vsel %vm948, %v6340, 0.0
      %v6363 = vadd.f32 %v6361, %v6362
      %v6364 = vsel %vm948, %v6341, 0.0
      %v6365 = vadd.f32 %v6363, %v6364
      %v6366 = vsel %vm961, %v6342, 0.0
      %v6367 = vadd.f32 %v6365, %v6366
      %v6368 = vrot.slane %v6367, 4
      %v6369 = vadd.f32 %v6367, %v6368
      %v6370 = vrot.slane %v6369, 2
      %v6371 = vadd.f32 %v6369, %v6370
      %v6372 = vrot.slane %v6371, 1
      %v6373 = vadd.f32 %v6371, %v6372
      %6374 = vst.msk [vmem:[%s181 + $0x1] sm:$0x1] %vm6328, %v6373
      %p6375 = scmp.lt.s32.totalorder %s15, 1
      %s6376 = scalar_select %p6375, %s15, 1
      %s6377 = smul.addr %s6376, 13
      %s6378 = smul.addr %s6377, 8
      %s6379 = scalar_lea.vmem %s2, %s6378
      %p6380 = scmp.lt.s32.totalorder %s15, 1
      %s6381 = scalar_select %p6380, %s15, 1
      %s6382 = smul.addr %s6381, 2
      %s6383 = scalar_lea.vmem %s3, %s6382
      // Predicated region
      $region29: #{down_pallas.3} parent=27 // pred_check
        %p6384 = pneg %p80
      $region30: #{down_pallas.3} parent=27 // pred_check_branch
        %6386 = sbr.rel (%p6384) target = $region32
      $region31: #{down_pallas.3} parent=27 // pred_region
        _
      $region32: #{down_pallas.3} parent=27 // pred_fallthru
        _
      // Predicated region
      $region33: #{down_pallas.3} parent=27 // pred_check
        %p6387 = pneg %p106
      $region34: #{down_pallas.3} parent=27 // pred_check_branch
        %6389 = sbr.rel (%p6387) target = $region36
      $region35: #{down_pallas.3} parent=27 // pred_region
        _
      $region36: #{down_pallas.3} parent=27 // pred_fallthru
        _
    $region28: #{down_pallas.3} parent=5 // pred_fallthru
      _
    %p6390 = scmp.le.s32.totalorder 2, %s10
    // Predicated region
    $region37: #{down_pallas.3} parent=5 // pred_check
      %p6391 = pneg %p6390
    $region38: #{down_pallas.3} parent=5 // pred_check_branch
      %6393 = sbr.rel (%p6391) target = $region40
    $region39: #{down_pallas.3} parent=5 // pred_region
      %s6394 = ssub.s32 %s10, 2
      // Predicated region
      $region41: #{down_pallas.3} parent=39 // pred_check
        %p6395 = pneg %p86
      $region42: #{down_pallas.3} parent=39 // pred_check_branch
        %6397 = sbr.rel (%p6395) target = $region44
      $region43: #{down_pallas.3} parent=39 // pred_region
        %p6398 = scmp.lt.s32.totalorder %s16, 1
        %s6399 = scalar_select %p6398, %s16, 1
        %s6400 = smul.addr %s6399, 13
        %s6401 = smul.addr %s6400, 8
        %s6402 = scalar_lea.vmem %s2, %s6401
      $region44: #{down_pallas.3} parent=39 // pred_fallthru
        _
      // Predicated region
      $region45: #{down_pallas.3} parent=39 // pred_check
        %p6403 = pneg %p112
      $region46: #{down_pallas.3} parent=39 // pred_check_branch
        %6405 = sbr.rel (%p6403) target = $region48
      $region47: #{down_pallas.3} parent=39 // pred_region
        %p6406 = scmp.lt.s32.totalorder %s16, 1
        %s6407 = scalar_select %p6406, %s16, 1
        %s6408 = smul.addr %s6407, 2
        %s6409 = scalar_lea.vmem %s3, %s6408
      $region48: #{down_pallas.3} parent=39 // pred_fallthru
        _
    $region40: #{down_pallas.3} parent=5 // pred_fallthru
      _
  $region6: #{down_pallas.3} parent=0 // loop_footer
    %s14 = sadd.s32 1, %s10
  $region7: #{down_pallas.3} parent=0 // loop_footer_branch
    %9 = sbr.rel target = $region3
  $region8: #{down_pallas.3} parent=0 // loop_exit
    _

</llo_original>
